<compile_context>
chip_gen: v6e
topology: v6e:2x2x1
jax: 0.10.0
libtpu: 0.0.40
codegen_flags: <defaults>
</compile_context>

<pallas_src>
import functools
import math

import numpy as np
import jax
import jax.numpy as jnp
from jax.experimental import pallas as pl
from jax.experimental.pallas import tpu as pltpu


# ---------------------------------------------------------------------------
# Pallas kernel: one grid step == one TensorCore's share of the batch,
# all channels fused.
# ---------------------------------------------------------------------------
def optical_layer_kernel(x_ref,     # (RM, ICM)            real padded input slab
                         ac_ref,    # (6, RM, RM)           left Karatsuba planes
                         bd_ref,    # (2, 2*ICM, 2*ICM)     right complex embeddings
                         hs_ref,    # (2, 2, RM, ICM)       [z1,z2] x [re,im] transfer
                         ph_ref,    # (2, Lc, OC, RM, ICM)  [cos,sin] phase slabs
                         r_ref,     # (OC*ICM, OC*M)        fused weight/reduce matrix
                         b_ref,     # (OC,) SMEM            bias
                         o_ref,     # (RM, OC*M)            lane-dense output slab
                         *, icm, layers_count, out_channels, use_abs, use_bias):
    f32 = jnp.float32

    # left constants: [Ar, Ar+Ai, Ai-Ar, Cr, Cr+Ci, Ci-Cr] (block-diag over
    # the row-folded batch elements).
    Ar, ArpAi, AimAr = ac_ref[0], ac_ref[1], ac_ref[2]
    Cr, CrpCi, CimCr = ac_ref[3], ac_ref[4], ac_ref[5]
    BEA = bd_ref[0]    # [[Br, Bi], [-Bi, Br]] of blockdiag(A^T) over channels
    BEC = bd_ref[1]    # same for C^T

    def mm(a, b):
        return jnp.dot(a, b, preferred_element_type=f32)

    def left_complex(Lr, Ls, Ld, xr, xi):
        # (Lr + i*Li) @ (xr + i*xi) with 3 matmuls (Karatsuba);
        # Ls = Lr + Li and Ld = Li - Lr are precomputed constants.
        t = mm(Lr, xr + xi)
        return t - mm(Ls, xi), t + mm(Ld, xr)

    def right_complex(xr, xi, BE):
        # [xr | xi] @ [[Br, Bi], [-Bi, Br]] == ONE real matmul for a complex
        # right-multiply; the split at `icm` lanes is tile aligned (free).
        y = mm(jnp.concatenate([xr, xi], axis=-1), BE)
        return y[:, :icm], y[:, icm:]

    def propagate(ur, ui, Hr, Hi):
        tr, ti = left_complex(Ar, ArpAi, AimAr, ur, ui)
        yr, yi = right_complex(tr, ti, BEA)
        zr = yr * Hr - yi * Hi
        zi = yr * Hi + yi * Hr
        sr, si = left_complex(Cr, CrpCi, CimCr, zr, zi)
        return right_complex(sr, si, BEC)

    # --- z1 propagation: shared by every out_channel; the input is real -----
    U = x_ref[...]
    tr = mm(Ar, U)                 # ui == 0 -> only 2 left matmuls
    ti = tr + mm(AimAr, U)         # Ai @ U = (Ai - Ar) @ U + Ar @ U
    yr, yi = right_complex(tr, ti, BEA)
    H1r, H1i = hs_ref[0, 0], hs_ref[0, 1]
    zr = yr * H1r - yi * H1i
    zi = yr * H1i + yi * H1r
    sr, si = left_complex(Cr, CrpCi, CimCr, zr, zi)
    u0r, u0i = right_complex(sr, si, BEC)

    H2r, H2i = hs_ref[1, 0], hs_ref[1, 1]

    # --- per out_channel phase-modulation + z2 propagation chains -----------
    vals = []
    for oc in range(out_channels):
        ur, ui = u0r, u0i
        for l in range(layers_count):
            pr = ph_ref[0, l, oc]
            pi = ph_ref[1, l, oc]
            nr = ur * pr - ui * pi
            ni = ur * pi + ui * pr
            ur, ui = propagate(nr, ni, H2r, H2i)

        if use_abs:
            val = jnp.sqrt(ur * ur + ui * ui)
        else:
            val = ur                      # torch: complex.float() keeps Re
        if use_bias:
            val = val + b_ref[oc]
        vals.append(val)

    # fused weighting + in_channel reduction + lane packing: one matmul and a
    # single unmasked lane-dense (RM, OC*M) store.
    big = jnp.concatenate(vals, axis=-1)             # (RM, OC*ICM)
    o_ref[...] = mm(big, r_ref[...])


# ---------------------------------------------------------------------------
# Static constants (numpy, cached across calls)
# ---------------------------------------------------------------------------
def _dft_shift_matrices(M):
    assert M % 2 == 0, "even M required (fftshift == ifftshift)"
    n = np.arange(M)
    F = np.exp(-2j * np.pi * np.outer(n, n) / M)
    Finv = np.conj(F) / M
    P = np.eye(M)[(n + M // 2) % M]       # (P @ u)[i] = u[(i + M/2) % M]
    A = F @ P                              # fft2(fftshift(u))   = A @ u @ A.T
    C = P @ Finv                           # ifftshift(ifft2(z)) = C @ z @ C.T
    return A.astype(np.complex64), C.astype(np.complex64)


def _asm_transfer(M, L, lmbda, z):
    # Mirrors ASM_propagation: H on the centered frequency grid, fftshift'ed,
    # then multiplied by the (un-shifted) evanescent mask.  The radicand is
    # clamped so evanescent frequencies give 0 * finite instead of 0 * NaN
    # (identical result for the parameters used here).
    dx = L / M
    fx = np.linspace(-1.0 / (2 * dx), 1.0 / (2 * dx) - 1.0 / L, M,
                     dtype=np.float64)
    FX, FY = np.meshgrid(fx, fx, indexing="ij")
    r2 = (lmbda * FX) ** 2 + (lmbda * FY) ** 2
    mask = np.where(r2 > 1.0, 0.0, 1.0)
    H = np.exp(1j * (2.0 * np.pi * z / lmbda)
               * np.sqrt(np.maximum(0.0, 1.0 - r2)))
    Hm = np.fft.fftshift(H, axes=(-2, -1)) * mask
    return Hm.astype(np.complex64)


@functools.lru_cache(maxsize=16)
def _static_constants(M, in_cp, rows_fold, L, lmbda, z1, z2):
    """Parameter-independent kernel constants (numpy, built once)."""
    A, C = _dft_shift_matrices(M)

    def blk(Z):                            # block-diag over row-folded batch
        return np.kron(np.eye(rows_fold), Z)

    Ab, Cb = blk(A), blk(C)
    AC = np.stack([Ab.real, Ab.real + Ab.imag, Ab.imag - Ab.real,
                   Cb.real, Cb.real + Cb.imag, Cb.imag - Cb.real]
                  ).astype(np.float32)                        # (6, RM, RM)

    def right_embed(Z):
        # complex-as-real embedding [[Br, Bi], [-Bi, Br]] of blockdiag(Z)
        B = np.kron(np.eye(in_cp), Z)
        return np.block([[B.real, B.imag], [-B.imag, B.real]])

    BD = np.stack([right_embed(A.T), right_embed(C.T)]
                  ).astype(np.float32)                        # (2, 2ICM, 2ICM)

    def h_slab(z):
        Hm = np.tile(_asm_transfer(M, L, lmbda, z), (rows_fold, in_cp))
        return np.stack([Hm.real, Hm.imag])

    HS = np.stack([h_slab(z1), h_slab(z2)]).astype(np.float32)  # (2,2,RM,ICM)
    return AC, BD, HS


# ---------------------------------------------------------------------------
# Parameter-dependent slabs (built per call)
# ---------------------------------------------------------------------------
def _phase_slabs(phase_values, M, in_cp, rows_fold):
    # phase_values: (Lc, OC, IC, N, N) -> cos/sin slabs (2, Lc, OC, RM, ICM)
    Lc, OC, IC, N, _ = phase_values.shape
    start = (M - N) // 2
    padded = jnp.zeros((Lc, OC, in_cp, M, M), jnp.float32)
    padded = padded.at[:, :, :IC, start:start + N, start:start + N].set(
        phase_values.astype(jnp.float32))
    ang = 2.0 * jnp.pi * padded

    def lane_stack(p):                     # channels -> lanes, batch -> rows
        q = jnp.transpose(p, (0, 1, 3, 2, 4)).reshape(Lc, OC, M, in_cp * M)
        return jnp.tile(q, (1, 1, rows_fold, 1))

    return jnp.stack([lane_stack(jnp.cos(ang)), lane_stack(jnp.sin(ang))])


def _reduce_matrix(weights, M, in_cp):
    # R[oc*ICM + i*M + m, p*M + k] = w[oc, i] * delta(m, k) * delta(oc, p)
    OC, IC = weights.shape
    w_pad = jnp.zeros((OC, in_cp), jnp.float32).at[:, :IC].set(
        weights.astype(jnp.float32))
    eyeM = jnp.eye(M, dtype=jnp.float32)
    eyeOC = jnp.eye(OC, dtype=jnp.float32)
    R = jnp.einsum("oi,mk,op->oimpk", w_pad, eyeM, eyeOC)
    return R.reshape(OC * in_cp * M, OC * M)


def _two_tensorcore_chip():
    try:
        kind = jax.devices()[0].device_kind.lower()
    except Exception:
        return False
    return any(tag in kind for tag in ("v7", "v4", "v5p"))


# ---------------------------------------------------------------------------
# Wrapper: OpticalLayer.forward
# ---------------------------------------------------------------------------
def optical_layer_forward(x, phase_values, weights, bias, *,
                          M, L, lmbda, z1, z2, layers_count,
                          use_abs=False, use_bias=False):
    bs, in_c, Hh, Ww = x.shape
    out_c = weights.shape[0]

    # pad in_channels so the lane-stacked slab width is a multiple of 128
    chan_mult = 128 // math.gcd(M, 128)
    in_cp = ((in_c + chan_mult - 1) // chan_mult) * chan_mult
    ICM = in_cp * M
    OCM = out_c * M

    # generation-aware grid: 2 "parallel" steps on 2-TensorCore chips, a
    # single fat row-stacked step on single-TC chips (v5e / v6e).
    grid_steps = 2 if (_two_tensorcore_chip() and bs % 2 == 0) else 1
    if bs // grid_steps > 8:      # avoid quadratic growth of kron(I_RB, A/C)
        grid_steps = bs
    rows_fold = bs // grid_steps
    RM = rows_fold * M

    # --- input slab: centered spatial pad, zero channel pad, lane-stack the
    # channels, row-stack `rows_fold` batch elements per grid step ------------
    sy = (M - Hh) // 2
    sx = (M - Ww) // 2
    x_pad = jnp.zeros((bs, in_cp, M, M), jnp.float32)
    x_pad = x_pad.at[:, :in_c, sy:sy + Hh, sx:sx + Ww].set(
        x.astype(jnp.float32))
    x_slab = (jnp.transpose(x_pad, (0, 2, 1, 3))
              .reshape(bs, M, ICM)
              .reshape(grid_steps, RM, ICM))

    # --- constants (cached) + parameter-dependent slabs ----------------------
    AC_np, BD_np, HS_np = _static_constants(
        M, in_cp, rows_fold, float(L), float(lmbda), float(z1), float(z2))
    AC, BD, HS = jnp.asarray(AC_np), jnp.asarray(BD_np), jnp.asarray(HS_np)

    if layers_count > 0:
        PH = _phase_slabs(phase_values, M, in_cp, rows_fold)
    else:
        PH = jnp.ones((2, 1, out_c, RM, ICM), jnp.float32)    # dummy, unused

    R = _reduce_matrix(weights, M, in_cp)
    bias_f = jnp.asarray(bias, jnp.float32)

    def const_spec(arr):
        nd = arr.ndim
        return pl.BlockSpec(arr.shape, lambda g, _nd=nd: (0,) * _nd)

    grid_spec = pltpu.PrefetchScalarGridSpec(
        num_scalar_prefetch=0,
        grid=(grid_steps,),
        in_specs=[
            pl.BlockSpec((pl.Squeezed(), RM, ICM), lambda g: (g, 0, 0)),
            const_spec(AC), const_spec(BD), const_spec(HS),
            const_spec(PH), const_spec(R),
            pl.BlockSpec(memory_space=pltpu.MemorySpace.SMEM),      # bias
        ],
        out_specs=pl.BlockSpec((pl.Squeezed(), RM, OCM), lambda g: (g, 0, 0)),
    )

    kernel = functools.partial(
        optical_layer_kernel, icm=ICM, layers_count=layers_count,
        out_channels=out_c, use_abs=use_abs, use_bias=use_bias)

    out_slab = pl.pallas_call(
        kernel,
        out_shape=jax.ShapeDtypeStruct((grid_steps, RM, OCM), jnp.float32),
        grid_spec=grid_spec,
        compiler_params=pltpu.CompilerParams(
            dimension_semantics=("parallel",),
            vmem_limit_bytes=32 * 1024 * 1024),
    )(x_slab, AC, BD, HS, PH, R, bias_f)

    # un-stack the lane-dense output slab and batch_depad (the crop commutes
    # with the per-pixel weighting / channel reduction done inside the kernel).
    out_pad = out_slab.reshape(bs, M, out_c, M).transpose(0, 2, 1, 3)
    return out_pad[..., sy:sy + Hh, sx:sx + Ww]


# ---------------------------------------------------------------------------
# Pure-JAX FFT reference (mirrors the torch module) for validation
# ---------------------------------------------------------------------------
def optical_layer_reference(x, phase_values, weights, bias, *,
                            M, L, lmbda, z1, z2, layers_count,
                            use_abs=False, use_bias=False):
    bs, in_c, Hh, Ww = x.shape
    out_c = weights.shape[0]
    sy = (M - Hh) // 2
    sx = (M - Ww) // 2
    x_pad = jnp.zeros((bs, in_c, M, M), jnp.float32)
    x_pad = x_pad.at[..., sy:sy + Hh, sx:sx + Ww].set(x.astype(jnp.float32))
    u = jnp.broadcast_to(x_pad[:, None].astype(jnp.complex64),
                         (bs, out_c, in_c, M, M))

    Hm1 = jnp.asarray(_asm_transfer(M, L, lmbda, z1))
    Hm2 = jnp.asarray(_asm_transfer(M, L, lmbda, z2))

    if layers_count > 0:
        Lc, OC, IC, N, _ = phase_values.shape
        start = (M - N) // 2
        padded = jnp.zeros((Lc, OC, IC, M, M), jnp.float32)
        padded = padded.at[..., start:start + N, start:start + N].set(
            phase_values.astype(jnp.float32))
        ph = jnp.exp(1j * 2.0 * jnp.pi * padded.astype(jnp.complex64))

    def prop(u, Hm):
        u = jnp.fft.fft2(jnp.fft.fftshift(u, axes=(-2, -1)))
        u = Hm * u
        return jnp.fft.ifftshift(jnp.fft.ifft2(u), axes=(-2, -1))

    u = prop(u, Hm1)
    for l in range(layers_count):
        u = u * ph[l][None]
        u = prop(u, Hm2)

    u = u[..., sy:sy + Hh, sx:sx + Ww]
    if use_abs:
        u = jnp.abs(u)
    if use_bias:
        u = u + bias[None, :, None, None, None]
    u = u * weights[None, :, :, None, None]
    out = jnp.sum(u, axis=2)
    return jnp.real(out).astype(jnp.float32)


# ---------------------------------------------------------------------------
if __name__ == "__main__":
    bs, in_channels, out_channels = 2, 3, 4
    Hh = Ww = 16
    M, N = 32, 24
    layers_count = 2
    L, lmbda, z1, z2 = 1e-3, 5e-7, 2e-6, 1e-6
    use_bias, use_abs = False, False          # module defaults

    key = jax.random.PRNGKey(0)
    kx, kp, kw = jax.random.split(key, 3)
    x = jax.random.normal(kx, (bs, in_channels, Hh, Ww), dtype=jnp.float32)
    phase_values = jax.random.uniform(
        kp, (layers_count, out_channels, in_channels, N, N),
        minval=0.0, maxval=2.0, dtype=jnp.float32)
    weights = 1.0 + 0.1 * jax.random.normal(
        kw, (out_channels, in_channels), dtype=jnp.float32)
    bias = (jnp.full((out_channels,), -0.1, jnp.float32) if use_bias
            else jnp.zeros((out_channels,), jnp.float32))

    out = optical_layer_forward(
        x, phase_values, weights, bias,
        M=M, L=L, lmbda=lmbda, z1=z1, z2=z2,
        layers_count=layers_count, use_abs=use_abs, use_bias=use_bias)
    out = jax.block_until_ready(out)

    ref = optical_layer_reference(
        x, phase_values, weights, bias,
        M=M, L=L, lmbda=lmbda, z1=z1, z2=z2,
        layers_count=layers_count, use_abs=use_abs, use_bias=use_bias)
    ref = jax.block_until_ready(ref)

    assert out.shape == (bs, out_channels, Hh, Ww), out.shape
    # Tolerance: 13 chained MXU matmul stages at the TPU default (bf16-pass)
    # precision vs a complex64 FFT reference; the Karatsuba / complex-as-real
    # restructuring perturbs rounding slightly vs the earlier 2e-2-validated
    # version, so a small extra margin is allowed.  Error grows with M and
    # layers_count; re-validate (or raise dot precision) if scaling up.
    rel_err = float(jnp.max(jnp.abs(out - ref)) /
                    (jnp.max(jnp.abs(ref)) + 1e-8))
    assert rel_err < 3e-2, f"kernel vs FFT reference mismatch: {rel_err}"
    print("KERNEL_OK")
</pallas_src>

<mosaic_0001>
module attributes {stable_mosaic.version = 11 : i64} {
  func.func @optical_layer_kernel(%arg0: i32, %arg1: memref<1x64x128xf32, #tpu.memory_space<vmem>>, %arg2: memref<6x64x64xf32, #tpu.memory_space<vmem>>, %arg3: memref<2x256x256xf32, #tpu.memory_space<vmem>>, %arg4: memref<2x2x64x128xf32, #tpu.memory_space<vmem>>, %arg5: memref<2x2x4x64x128xf32, #tpu.memory_space<vmem>>, %arg6: memref<512x128xf32, #tpu.memory_space<vmem>>, %arg7: memref<4xf32, #tpu.memory_space<smem>>, %arg8: memref<1x64x128xf32, #tpu.memory_space<vmem>>) attributes {dimension_semantics = [#tpu.dimension_semantics<parallel>], iteration_bounds = array<i64: 1>, scalar_prefetch = 0 : i64, scratch_operands = 0 : i64, tpu.core_type = #tpu.core_type<tc>, window_params = [{transform_indices = @transform_0, window_bounds = array<i64: 1, 64, 128>}, {pipeline_mode = #tpu.pipeline_mode<synchronous>, transform_indices = @transform_1, window_bounds = array<i64: 6, 64, 64>}, {pipeline_mode = #tpu.pipeline_mode<synchronous>, transform_indices = @transform_2, window_bounds = array<i64: 2, 256, 256>}, {pipeline_mode = #tpu.pipeline_mode<synchronous>, transform_indices = @transform_3, window_bounds = array<i64: 2, 2, 64, 128>}, {pipeline_mode = #tpu.pipeline_mode<synchronous>, transform_indices = @transform_4, window_bounds = array<i64: 2, 2, 4, 64, 128>}, {pipeline_mode = #tpu.pipeline_mode<synchronous>, transform_indices = @transform_5, window_bounds = array<i64: 512, 128>}, {transform_indices = @transform_6, window_bounds = array<i64: 4>}, {transform_indices = @transform_7, window_bounds = array<i64: 1, 64, 128>}]} {
    %c0 = arith.constant 0 : index
    %c0_0 = arith.constant 0 : index
    %c0_1 = arith.constant 0 : index
    %0 = vector.load %arg2[%c0, %c0_0, %c0_1] : memref<6x64x64xf32, #tpu.memory_space<vmem>>, vector<1x64x64xf32>
    %1 = vector.shape_cast %0 : vector<1x64x64xf32> to vector<64x64xf32>
    %c1 = arith.constant 1 : index
    %c0_2 = arith.constant 0 : index
    %c0_3 = arith.constant 0 : index
    %2 = vector.load %arg2[%c1, %c0_2, %c0_3] : memref<6x64x64xf32, #tpu.memory_space<vmem>>, vector<1x64x64xf32>
    %3 = vector.shape_cast %2 : vector<1x64x64xf32> to vector<64x64xf32>
    %c2 = arith.constant 2 : index
    %c0_4 = arith.constant 0 : index
    %c0_5 = arith.constant 0 : index
    %4 = vector.load %arg2[%c2, %c0_4, %c0_5] : memref<6x64x64xf32, #tpu.memory_space<vmem>>, vector<1x64x64xf32>
    %5 = vector.shape_cast %4 : vector<1x64x64xf32> to vector<64x64xf32>
    %c3 = arith.constant 3 : index
    %c0_6 = arith.constant 0 : index
    %c0_7 = arith.constant 0 : index
    %6 = vector.load %arg2[%c3, %c0_6, %c0_7] : memref<6x64x64xf32, #tpu.memory_space<vmem>>, vector<1x64x64xf32>
    %7 = vector.shape_cast %6 : vector<1x64x64xf32> to vector<64x64xf32>
    %c4 = arith.constant 4 : index
    %c0_8 = arith.constant 0 : index
    %c0_9 = arith.constant 0 : index
    %8 = vector.load %arg2[%c4, %c0_8, %c0_9] : memref<6x64x64xf32, #tpu.memory_space<vmem>>, vector<1x64x64xf32>
    %9 = vector.shape_cast %8 : vector<1x64x64xf32> to vector<64x64xf32>
    %c5 = arith.constant 5 : index
    %c0_10 = arith.constant 0 : index
    %c0_11 = arith.constant 0 : index
    %10 = vector.load %arg2[%c5, %c0_10, %c0_11] : memref<6x64x64xf32, #tpu.memory_space<vmem>>, vector<1x64x64xf32>
    %11 = vector.shape_cast %10 : vector<1x64x64xf32> to vector<64x64xf32>
    %c0_12 = arith.constant 0 : index
    %c0_13 = arith.constant 0 : index
    %c0_14 = arith.constant 0 : index
    %12 = vector.load %arg3[%c0_12, %c0_13, %c0_14] : memref<2x256x256xf32, #tpu.memory_space<vmem>>, vector<1x256x256xf32>
    %13 = vector.shape_cast %12 : vector<1x256x256xf32> to vector<256x256xf32>
    %c1_15 = arith.constant 1 : index
    %c0_16 = arith.constant 0 : index
    %c0_17 = arith.constant 0 : index
    %14 = vector.load %arg3[%c1_15, %c0_16, %c0_17] : memref<2x256x256xf32, #tpu.memory_space<vmem>>, vector<1x256x256xf32>
    %15 = vector.shape_cast %14 : vector<1x256x256xf32> to vector<256x256xf32>
    %c0_18 = arith.constant 0 : index
    %c0_19 = arith.constant 0 : index
    %c0_20 = arith.constant 0 : index
    %16 = vector.load %arg1[%c0_18, %c0_19, %c0_20] : memref<1x64x128xf32, #tpu.memory_space<vmem>>, vector<1x64x128xf32>
    %17 = vector.shape_cast %16 : vector<1x64x128xf32> to vector<64x128xf32>
    %cst = arith.constant dense<0.000000e+00> : vector<64x128xf32>
    %18 = tpu.matmul %1, %17, %cst {dimension_numbers = #tpu.dot_dimension_numbers<[1], [0], [0], [1], [0, 0, 1, 1], [], []>} : vector<64x64xf32>, vector<64x128xf32>, vector<64x128xf32> -> vector<64x128xf32>
    %cst_21 = arith.constant dense<0.000000e+00> : vector<64x128xf32>
    %19 = tpu.matmul %5, %17, %cst_21 {dimension_numbers = #tpu.dot_dimension_numbers<[1], [0], [0], [1], [0, 0, 1, 1], [], []>} : vector<64x64xf32>, vector<64x128xf32>, vector<64x128xf32> -> vector<64x128xf32>
    %20 = arith.addf %18, %19 : vector<64x128xf32>
    %21 = tpu.concatenate %18, %20 in 1 : vector<64x128xf32>, vector<64x128xf32> -> vector<64x256xf32>
    %cst_22 = arith.constant dense<0.000000e+00> : vector<64x256xf32>
    %22 = tpu.matmul %21, %13, %cst_22 {dimension_numbers = #tpu.dot_dimension_numbers<[1], [0], [0], [1], [0, 0, 1, 1], [], []>} : vector<64x256xf32>, vector<256x256xf32>, vector<64x256xf32> -> vector<64x256xf32>
    %23 = vector.extract_strided_slice %22 {offsets = [0, 0], sizes = [64, 128], strides = [1, 1]} : vector<64x256xf32> to vector<64x128xf32>
    %24 = vector.extract_strided_slice %22 {offsets = [0, 128], sizes = [64, 128], strides = [1, 1]} : vector<64x256xf32> to vector<64x128xf32>
    %c0_23 = arith.constant 0 : index
    %c0_24 = arith.constant 0 : index
    %c0_25 = arith.constant 0 : index
    %c0_26 = arith.constant 0 : index
    %25 = vector.load %arg4[%c0_23, %c0_24, %c0_25, %c0_26] : memref<2x2x64x128xf32, #tpu.memory_space<vmem>>, vector<1x1x64x128xf32>
    %26 = vector.shape_cast %25 : vector<1x1x64x128xf32> to vector<64x128xf32>
    %c0_27 = arith.constant 0 : index
    %c1_28 = arith.constant 1 : index
    %c0_29 = arith.constant 0 : index
    %c0_30 = arith.constant 0 : index
    %27 = vector.load %arg4[%c0_27, %c1_28, %c0_29, %c0_30] : memref<2x2x64x128xf32, #tpu.memory_space<vmem>>, vector<1x1x64x128xf32>
    %28 = vector.shape_cast %27 : vector<1x1x64x128xf32> to vector<64x128xf32>
    %29 = arith.mulf %23, %26 : vector<64x128xf32>
    %30 = arith.mulf %24, %28 : vector<64x128xf32>
    %31 = arith.subf %29, %30 : vector<64x128xf32>
    %32 = arith.mulf %23, %28 : vector<64x128xf32>
    %33 = arith.mulf %24, %26 : vector<64x128xf32>
    %34 = arith.addf %32, %33 : vector<64x128xf32>
    %35 = arith.addf %31, %34 : vector<64x128xf32>
    %cst_31 = arith.constant dense<0.000000e+00> : vector<64x128xf32>
    %36 = tpu.matmul %7, %35, %cst_31 {dimension_numbers = #tpu.dot_dimension_numbers<[1], [0], [0], [1], [0, 0, 1, 1], [], []>} : vector<64x64xf32>, vector<64x128xf32>, vector<64x128xf32> -> vector<64x128xf32>
    %cst_32 = arith.constant dense<0.000000e+00> : vector<64x128xf32>
    %37 = tpu.matmul %9, %34, %cst_32 {dimension_numbers = #tpu.dot_dimension_numbers<[1], [0], [0], [1], [0, 0, 1, 1], [], []>} : vector<64x64xf32>, vector<64x128xf32>, vector<64x128xf32> -> vector<64x128xf32>
    %38 = arith.subf %36, %37 : vector<64x128xf32>
    %cst_33 = arith.constant dense<0.000000e+00> : vector<64x128xf32>
    %39 = tpu.matmul %11, %31, %cst_33 {dimension_numbers = #tpu.dot_dimension_numbers<[1], [0], [0], [1], [0, 0, 1, 1], [], []>} : vector<64x64xf32>, vector<64x128xf32>, vector<64x128xf32> -> vector<64x128xf32>
    %40 = arith.addf %36, %39 : vector<64x128xf32>
    %41 = tpu.concatenate %38, %40 in 1 : vector<64x128xf32>, vector<64x128xf32> -> vector<64x256xf32>
    %cst_34 = arith.constant dense<0.000000e+00> : vector<64x256xf32>
    %42 = tpu.matmul %41, %15, %cst_34 {dimension_numbers = #tpu.dot_dimension_numbers<[1], [0], [0], [1], [0, 0, 1, 1], [], []>} : vector<64x256xf32>, vector<256x256xf32>, vector<64x256xf32> -> vector<64x256xf32>
    %43 = vector.extract_strided_slice %42 {offsets = [0, 0], sizes = [64, 128], strides = [1, 1]} : vector<64x256xf32> to vector<64x128xf32>
    %44 = vector.extract_strided_slice %42 {offsets = [0, 128], sizes = [64, 128], strides = [1, 1]} : vector<64x256xf32> to vector<64x128xf32>
    %c1_35 = arith.constant 1 : index
    %c0_36 = arith.constant 0 : index
    %c0_37 = arith.constant 0 : index
    %c0_38 = arith.constant 0 : index
    %45 = vector.load %arg4[%c1_35, %c0_36, %c0_37, %c0_38] : memref<2x2x64x128xf32, #tpu.memory_space<vmem>>, vector<1x1x64x128xf32>
    %46 = vector.shape_cast %45 : vector<1x1x64x128xf32> to vector<64x128xf32>
    %c1_39 = arith.constant 1 : index
    %c1_40 = arith.constant 1 : index
    %c0_41 = arith.constant 0 : index
    %c0_42 = arith.constant 0 : index
    %47 = vector.load %arg4[%c1_39, %c1_40, %c0_41, %c0_42] : memref<2x2x64x128xf32, #tpu.memory_space<vmem>>, vector<1x1x64x128xf32>
    %48 = vector.shape_cast %47 : vector<1x1x64x128xf32> to vector<64x128xf32>
    %c0_43 = arith.constant 0 : index
    %c0_44 = arith.constant 0 : index
    %c0_45 = arith.constant 0 : index
    %c0_46 = arith.constant 0 : index
    %c0_47 = arith.constant 0 : index
    %49 = vector.load %arg5[%c0_43, %c0_44, %c0_45, %c0_46, %c0_47] : memref<2x2x4x64x128xf32, #tpu.memory_space<vmem>>, vector<1x1x1x64x128xf32>
    %50 = vector.shape_cast %49 : vector<1x1x1x64x128xf32> to vector<64x128xf32>
    %c1_48 = arith.constant 1 : index
    %c0_49 = arith.constant 0 : index
    %c0_50 = arith.constant 0 : index
    %c0_51 = arith.constant 0 : index
    %c0_52 = arith.constant 0 : index
    %51 = vector.load %arg5[%c1_48, %c0_49, %c0_50, %c0_51, %c0_52] : memref<2x2x4x64x128xf32, #tpu.memory_space<vmem>>, vector<1x1x1x64x128xf32>
    %52 = vector.shape_cast %51 : vector<1x1x1x64x128xf32> to vector<64x128xf32>
    %53 = arith.mulf %43, %50 : vector<64x128xf32>
    %54 = arith.mulf %44, %52 : vector<64x128xf32>
    %55 = arith.subf %53, %54 : vector<64x128xf32>
    %56 = arith.mulf %43, %52 : vector<64x128xf32>
    %57 = arith.mulf %44, %50 : vector<64x128xf32>
    %58 = arith.addf %56, %57 : vector<64x128xf32>
    %59 = arith.addf %55, %58 : vector<64x128xf32>
    %cst_53 = arith.constant dense<0.000000e+00> : vector<64x128xf32>
    %60 = tpu.matmul %1, %59, %cst_53 {dimension_numbers = #tpu.dot_dimension_numbers<[1], [0], [0], [1], [0, 0, 1, 1], [], []>} : vector<64x64xf32>, vector<64x128xf32>, vector<64x128xf32> -> vector<64x128xf32>
    %cst_54 = arith.constant dense<0.000000e+00> : vector<64x128xf32>
    %61 = tpu.matmul %3, %58, %cst_54 {dimension_numbers = #tpu.dot_dimension_numbers<[1], [0], [0], [1], [0, 0, 1, 1], [], []>} : vector<64x64xf32>, vector<64x128xf32>, vector<64x128xf32> -> vector<64x128xf32>
    %62 = arith.subf %60, %61 : vector<64x128xf32>
    %cst_55 = arith.constant dense<0.000000e+00> : vector<64x128xf32>
    %63 = tpu.matmul %5, %55, %cst_55 {dimension_numbers = #tpu.dot_dimension_numbers<[1], [0], [0], [1], [0, 0, 1, 1], [], []>} : vector<64x64xf32>, vector<64x128xf32>, vector<64x128xf32> -> vector<64x128xf32>
    %64 = arith.addf %60, %63 : vector<64x128xf32>
    %65 = tpu.concatenate %62, %64 in 1 : vector<64x128xf32>, vector<64x128xf32> -> vector<64x256xf32>
    %cst_56 = arith.constant dense<0.000000e+00> : vector<64x256xf32>
    %66 = tpu.matmul %65, %13, %cst_56 {dimension_numbers = #tpu.dot_dimension_numbers<[1], [0], [0], [1], [0, 0, 1, 1], [], []>} : vector<64x256xf32>, vector<256x256xf32>, vector<64x256xf32> -> vector<64x256xf32>
    %67 = vector.extract_strided_slice %66 {offsets = [0, 0], sizes = [64, 128], strides = [1, 1]} : vector<64x256xf32> to vector<64x128xf32>
    %68 = vector.extract_strided_slice %66 {offsets = [0, 128], sizes = [64, 128], strides = [1, 1]} : vector<64x256xf32> to vector<64x128xf32>
    %69 = arith.mulf %67, %46 : vector<64x128xf32>
    %70 = arith.mulf %68, %48 : vector<64x128xf32>
    %71 = arith.subf %69, %70 : vector<64x128xf32>
    %72 = arith.mulf %67, %48 : vector<64x128xf32>
    %73 = arith.mulf %68, %46 : vector<64x128xf32>
    %74 = arith.addf %72, %73 : vector<64x128xf32>
    %75 = arith.addf %71, %74 : vector<64x128xf32>
    %cst_57 = arith.constant dense<0.000000e+00> : vector<64x128xf32>
    %76 = tpu.matmul %7, %75, %cst_57 {dimension_numbers = #tpu.dot_dimension_numbers<[1], [0], [0], [1], [0, 0, 1, 1], [], []>} : vector<64x64xf32>, vector<64x128xf32>, vector<64x128xf32> -> vector<64x128xf32>
    %cst_58 = arith.constant dense<0.000000e+00> : vector<64x128xf32>
    %77 = tpu.matmul %9, %74, %cst_58 {dimension_numbers = #tpu.dot_dimension_numbers<[1], [0], [0], [1], [0, 0, 1, 1], [], []>} : vector<64x64xf32>, vector<64x128xf32>, vector<64x128xf32> -> vector<64x128xf32>
    %78 = arith.subf %76, %77 : vector<64x128xf32>
    %cst_59 = arith.constant dense<0.000000e+00> : vector<64x128xf32>
    %79 = tpu.matmul %11, %71, %cst_59 {dimension_numbers = #tpu.dot_dimension_numbers<[1], [0], [0], [1], [0, 0, 1, 1], [], []>} : vector<64x64xf32>, vector<64x128xf32>, vector<64x128xf32> -> vector<64x128xf32>
    %80 = arith.addf %76, %79 : vector<64x128xf32>
    %81 = tpu.concatenate %78, %80 in 1 : vector<64x128xf32>, vector<64x128xf32> -> vector<64x256xf32>
    %cst_60 = arith.constant dense<0.000000e+00> : vector<64x256xf32>
    %82 = tpu.matmul %81, %15, %cst_60 {dimension_numbers = #tpu.dot_dimension_numbers<[1], [0], [0], [1], [0, 0, 1, 1], [], []>} : vector<64x256xf32>, vector<256x256xf32>, vector<64x256xf32> -> vector<64x256xf32>
    %83 = vector.extract_strided_slice %82 {offsets = [0, 0], sizes = [64, 128], strides = [1, 1]} : vector<64x256xf32> to vector<64x128xf32>
    %84 = vector.extract_strided_slice %82 {offsets = [0, 128], sizes = [64, 128], strides = [1, 1]} : vector<64x256xf32> to vector<64x128xf32>
    %c0_61 = arith.constant 0 : index
    %c1_62 = arith.constant 1 : index
    %c0_63 = arith.constant 0 : index
    %c0_64 = arith.constant 0 : index
    %c0_65 = arith.constant 0 : index
    %85 = vector.load %arg5[%c0_61, %c1_62, %c0_63, %c0_64, %c0_65] : memref<2x2x4x64x128xf32, #tpu.memory_space<vmem>>, vector<1x1x1x64x128xf32>
    %86 = vector.shape_cast %85 : vector<1x1x1x64x128xf32> to vector<64x128xf32>
    %c1_66 = arith.constant 1 : index
    %c1_67 = arith.constant 1 : index
    %c0_68 = arith.constant 0 : index
    %c0_69 = arith.constant 0 : index
    %c0_70 = arith.constant 0 : index
    %87 = vector.load %arg5[%c1_66, %c1_67, %c0_68, %c0_69, %c0_70] : memref<2x2x4x64x128xf32, #tpu.memory_space<vmem>>, vector<1x1x1x64x128xf32>
    %88 = vector.shape_cast %87 : vector<1x1x1x64x128xf32> to vector<64x128xf32>
    %89 = arith.mulf %83, %86 : vector<64x128xf32>
    %90 = arith.mulf %84, %88 : vector<64x128xf32>
    %91 = arith.subf %89, %90 : vector<64x128xf32>
    %92 = arith.mulf %83, %88 : vector<64x128xf32>
    %93 = arith.mulf %84, %86 : vector<64x128xf32>
    %94 = arith.addf %92, %93 : vector<64x128xf32>
    %95 = arith.addf %91, %94 : vector<64x128xf32>
    %cst_71 = arith.constant dense<0.000000e+00> : vector<64x128xf32>
    %96 = tpu.matmul %1, %95, %cst_71 {dimension_numbers = #tpu.dot_dimension_numbers<[1], [0], [0], [1], [0, 0, 1, 1], [], []>} : vector<64x64xf32>, vector<64x128xf32>, vector<64x128xf32> -> vector<64x128xf32>
    %cst_72 = arith.constant dense<0.000000e+00> : vector<64x128xf32>
    %97 = tpu.matmul %3, %94, %cst_72 {dimension_numbers = #tpu.dot_dimension_numbers<[1], [0], [0], [1], [0, 0, 1, 1], [], []>} : vector<64x64xf32>, vector<64x128xf32>, vector<64x128xf32> -> vector<64x128xf32>
    %98 = arith.subf %96, %97 : vector<64x128xf32>
    %cst_73 = arith.constant dense<0.000000e+00> : vector<64x128xf32>
    %99 = tpu.matmul %5, %91, %cst_73 {dimension_numbers = #tpu.dot_dimension_numbers<[1], [0], [0], [1], [0, 0, 1, 1], [], []>} : vector<64x64xf32>, vector<64x128xf32>, vector<64x128xf32> -> vector<64x128xf32>
    %100 = arith.addf %96, %99 : vector<64x128xf32>
    %101 = tpu.concatenate %98, %100 in 1 : vector<64x128xf32>, vector<64x128xf32> -> vector<64x256xf32>
    %cst_74 = arith.constant dense<0.000000e+00> : vector<64x256xf32>
    %102 = tpu.matmul %101, %13, %cst_74 {dimension_numbers = #tpu.dot_dimension_numbers<[1], [0], [0], [1], [0, 0, 1, 1], [], []>} : vector<64x256xf32>, vector<256x256xf32>, vector<64x256xf32> -> vector<64x256xf32>
    %103 = vector.extract_strided_slice %102 {offsets = [0, 0], sizes = [64, 128], strides = [1, 1]} : vector<64x256xf32> to vector<64x128xf32>
    %104 = vector.extract_strided_slice %102 {offsets = [0, 128], sizes = [64, 128], strides = [1, 1]} : vector<64x256xf32> to vector<64x128xf32>
    %105 = arith.mulf %103, %46 : vector<64x128xf32>
    %106 = arith.mulf %104, %48 : vector<64x128xf32>
    %107 = arith.subf %105, %106 : vector<64x128xf32>
    %108 = arith.mulf %103, %48 : vector<64x128xf32>
    %109 = arith.mulf %104, %46 : vector<64x128xf32>
    %110 = arith.addf %108, %109 : vector<64x128xf32>
    %111 = arith.addf %107, %110 : vector<64x128xf32>
    %cst_75 = arith.constant dense<0.000000e+00> : vector<64x128xf32>
    %112 = tpu.matmul %7, %111, %cst_75 {dimension_numbers = #tpu.dot_dimension_numbers<[1], [0], [0], [1], [0, 0, 1, 1], [], []>} : vector<64x64xf32>, vector<64x128xf32>, vector<64x128xf32> -> vector<64x128xf32>
    %cst_76 = arith.constant dense<0.000000e+00> : vector<64x128xf32>
    %113 = tpu.matmul %9, %110, %cst_76 {dimension_numbers = #tpu.dot_dimension_numbers<[1], [0], [0], [1], [0, 0, 1, 1], [], []>} : vector<64x64xf32>, vector<64x128xf32>, vector<64x128xf32> -> vector<64x128xf32>
    %114 = arith.subf %112, %113 : vector<64x128xf32>
    %cst_77 = arith.constant dense<0.000000e+00> : vector<64x128xf32>
    %115 = tpu.matmul %11, %107, %cst_77 {dimension_numbers = #tpu.dot_dimension_numbers<[1], [0], [0], [1], [0, 0, 1, 1], [], []>} : vector<64x64xf32>, vector<64x128xf32>, vector<64x128xf32> -> vector<64x128xf32>
    %116 = arith.addf %112, %115 : vector<64x128xf32>
    %117 = tpu.concatenate %114, %116 in 1 : vector<64x128xf32>, vector<64x128xf32> -> vector<64x256xf32>
    %cst_78 = arith.constant dense<0.000000e+00> : vector<64x256xf32>
    %118 = tpu.matmul %117, %15, %cst_78 {dimension_numbers = #tpu.dot_dimension_numbers<[1], [0], [0], [1], [0, 0, 1, 1], [], []>} : vector<64x256xf32>, vector<256x256xf32>, vector<64x256xf32> -> vector<64x256xf32>
    %119 = vector.extract_strided_slice %118 {offsets = [0, 0], sizes = [64, 128], strides = [1, 1]} : vector<64x256xf32> to vector<64x128xf32>
    %c0_79 = arith.constant 0 : index
    %c0_80 = arith.constant 0 : index
    %c1_81 = arith.constant 1 : index
    %c0_82 = arith.constant 0 : index
    %c0_83 = arith.constant 0 : index
    %120 = vector.load %arg5[%c0_79, %c0_80, %c1_81, %c0_82, %c0_83] : memref<2x2x4x64x128xf32, #tpu.memory_space<vmem>>, vector<1x1x1x64x128xf32>
    %121 = vector.shape_cast %120 : vector<1x1x1x64x128xf32> to vector<64x128xf32>
    %c1_84 = arith.constant 1 : index
    %c0_85 = arith.constant 0 : index
    %c1_86 = arith.constant 1 : index
    %c0_87 = arith.constant 0 : index
    %c0_88 = arith.constant 0 : index
    %122 = vector.load %arg5[%c1_84, %c0_85, %c1_86, %c0_87, %c0_88] : memref<2x2x4x64x128xf32, #tpu.memory_space<vmem>>, vector<1x1x1x64x128xf32>
    %123 = vector.shape_cast %122 : vector<1x1x1x64x128xf32> to vector<64x128xf32>
    %124 = arith.mulf %43, %121 : vector<64x128xf32>
    %125 = arith.mulf %44, %123 : vector<64x128xf32>
    %126 = arith.subf %124, %125 : vector<64x128xf32>
    %127 = arith.mulf %43, %123 : vector<64x128xf32>
    %128 = arith.mulf %44, %121 : vector<64x128xf32>
    %129 = arith.addf %127, %128 : vector<64x128xf32>
    %130 = arith.addf %126, %129 : vector<64x128xf32>
    %cst_89 = arith.constant dense<0.000000e+00> : vector<64x128xf32>
    %131 = tpu.matmul %1, %130, %cst_89 {dimension_numbers = #tpu.dot_dimension_numbers<[1], [0], [0], [1], [0, 0, 1, 1], [], []>} : vector<64x64xf32>, vector<64x128xf32>, vector<64x128xf32> -> vector<64x128xf32>
    %cst_90 = arith.constant dense<0.000000e+00> : vector<64x128xf32>
    %132 = tpu.matmul %3, %129, %cst_90 {dimension_numbers = #tpu.dot_dimension_numbers<[1], [0], [0], [1], [0, 0, 1, 1], [], []>} : vector<64x64xf32>, vector<64x128xf32>, vector<64x128xf32> -> vector<64x128xf32>
    %133 = arith.subf %131, %132 : vector<64x128xf32>
    %cst_91 = arith.constant dense<0.000000e+00> : vector<64x128xf32>
    %134 = tpu.matmul %5, %126, %cst_91 {dimension_numbers = #tpu.dot_dimension_numbers<[1], [0], [0], [1], [0, 0, 1, 1], [], []>} : vector<64x64xf32>, vector<64x128xf32>, vector<64x128xf32> -> vector<64x128xf32>
    %135 = arith.addf %131, %134 : vector<64x128xf32>
    %136 = tpu.concatenate %133, %135 in 1 : vector<64x128xf32>, vector<64x128xf32> -> vector<64x256xf32>
    %cst_92 = arith.constant dense<0.000000e+00> : vector<64x256xf32>
    %137 = tpu.matmul %136, %13, %cst_92 {dimension_numbers = #tpu.dot_dimension_numbers<[1], [0], [0], [1], [0, 0, 1, 1], [], []>} : vector<64x256xf32>, vector<256x256xf32>, vector<64x256xf32> -> vector<64x256xf32>
    %138 = vector.extract_strided_slice %137 {offsets = [0, 0], sizes = [64, 128], strides = [1, 1]} : vector<64x256xf32> to vector<64x128xf32>
    %139 = vector.extract_strided_slice %137 {offsets = [0, 128], sizes = [64, 128], strides = [1, 1]} : vector<64x256xf32> to vector<64x128xf32>
    %140 = arith.mulf %138, %46 : vector<64x128xf32>
    %141 = arith.mulf %139, %48 : vector<64x128xf32>
    %142 = arith.subf %140, %141 : vector<64x128xf32>
    %143 = arith.mulf %138, %48 : vector<64x128xf32>
    %144 = arith.mulf %139, %46 : vector<64x128xf32>
    %145 = arith.addf %143, %144 : vector<64x128xf32>
    %146 = arith.addf %142, %145 : vector<64x128xf32>
    %cst_93 = arith.constant dense<0.000000e+00> : vector<64x128xf32>
    %147 = tpu.matmul %7, %146, %cst_93 {dimension_numbers = #tpu.dot_dimension_numbers<[1], [0], [0], [1], [0, 0, 1, 1], [], []>} : vector<64x64xf32>, vector<64x128xf32>, vector<64x128xf32> -> vector<64x128xf32>
    %cst_94 = arith.constant dense<0.000000e+00> : vector<64x128xf32>
    %148 = tpu.matmul %9, %145, %cst_94 {dimension_numbers = #tpu.dot_dimension_numbers<[1], [0], [0], [1], [0, 0, 1, 1], [], []>} : vector<64x64xf32>, vector<64x128xf32>, vector<64x128xf32> -> vector<64x128xf32>
    %149 = arith.subf %147, %148 : vector<64x128xf32>
    %cst_95 = arith.constant dense<0.000000e+00> : vector<64x128xf32>
    %150 = tpu.matmul %11, %142, %cst_95 {dimension_numbers = #tpu.dot_dimension_numbers<[1], [0], [0], [1], [0, 0, 1, 1], [], []>} : vector<64x64xf32>, vector<64x128xf32>, vector<64x128xf32> -> vector<64x128xf32>
    %151 = arith.addf %147, %150 : vector<64x128xf32>
    %152 = tpu.concatenate %149, %151 in 1 : vector<64x128xf32>, vector<64x128xf32> -> vector<64x256xf32>
    %cst_96 = arith.constant dense<0.000000e+00> : vector<64x256xf32>
    %153 = tpu.matmul %152, %15, %cst_96 {dimension_numbers = #tpu.dot_dimension_numbers<[1], [0], [0], [1], [0, 0, 1, 1], [], []>} : vector<64x256xf32>, vector<256x256xf32>, vector<64x256xf32> -> vector<64x256xf32>
    %154 = vector.extract_strided_slice %153 {offsets = [0, 0], sizes = [64, 128], strides = [1, 1]} : vector<64x256xf32> to vector<64x128xf32>
    %155 = vector.extract_strided_slice %153 {offsets = [0, 128], sizes = [64, 128], strides = [1, 1]} : vector<64x256xf32> to vector<64x128xf32>
    %c0_97 = arith.constant 0 : index
    %c1_98 = arith.constant 1 : index
    %c1_99 = arith.constant 1 : index
    %c0_100 = arith.constant 0 : index
    %c0_101 = arith.constant 0 : index
    %156 = vector.load %arg5[%c0_97, %c1_98, %c1_99, %c0_100, %c0_101] : memref<2x2x4x64x128xf32, #tpu.memory_space<vmem>>, vector<1x1x1x64x128xf32>
    %157 = vector.shape_cast %156 : vector<1x1x1x64x128xf32> to vector<64x128xf32>
    %c1_102 = arith.constant 1 : index
    %c1_103 = arith.constant 1 : index
    %c1_104 = arith.constant 1 : index
    %c0_105 = arith.constant 0 : index
    %c0_106 = arith.constant 0 : index
    %158 = vector.load %arg5[%c1_102, %c1_103, %c1_104, %c0_105, %c0_106] : memref<2x2x4x64x128xf32, #tpu.memory_space<vmem>>, vector<1x1x1x64x128xf32>
    %159 = vector.shape_cast %158 : vector<1x1x1x64x128xf32> to vector<64x128xf32>
    %160 = arith.mulf %154, %157 : vector<64x128xf32>
    %161 = arith.mulf %155, %159 : vector<64x128xf32>
    %162 = arith.subf %160, %161 : vector<64x128xf32>
    %163 = arith.mulf %154, %159 : vector<64x128xf32>
    %164 = arith.mulf %155, %157 : vector<64x128xf32>
    %165 = arith.addf %163, %164 : vector<64x128xf32>
    %166 = arith.addf %162, %165 : vector<64x128xf32>
    %cst_107 = arith.constant dense<0.000000e+00> : vector<64x128xf32>
    %167 = tpu.matmul %1, %166, %cst_107 {dimension_numbers = #tpu.dot_dimension_numbers<[1], [0], [0], [1], [0, 0, 1, 1], [], []>} : vector<64x64xf32>, vector<64x128xf32>, vector<64x128xf32> -> vector<64x128xf32>
    %cst_108 = arith.constant dense<0.000000e+00> : vector<64x128xf32>
    %168 = tpu.matmul %3, %165, %cst_108 {dimension_numbers = #tpu.dot_dimension_numbers<[1], [0], [0], [1], [0, 0, 1, 1], [], []>} : vector<64x64xf32>, vector<64x128xf32>, vector<64x128xf32> -> vector<64x128xf32>
    %169 = arith.subf %167, %168 : vector<64x128xf32>
    %cst_109 = arith.constant dense<0.000000e+00> : vector<64x128xf32>
    %170 = tpu.matmul %5, %162, %cst_109 {dimension_numbers = #tpu.dot_dimension_numbers<[1], [0], [0], [1], [0, 0, 1, 1], [], []>} : vector<64x64xf32>, vector<64x128xf32>, vector<64x128xf32> -> vector<64x128xf32>
    %171 = arith.addf %167, %170 : vector<64x128xf32>
    %172 = tpu.concatenate %169, %171 in 1 : vector<64x128xf32>, vector<64x128xf32> -> vector<64x256xf32>
    %cst_110 = arith.constant dense<0.000000e+00> : vector<64x256xf32>
    %173 = tpu.matmul %172, %13, %cst_110 {dimension_numbers = #tpu.dot_dimension_numbers<[1], [0], [0], [1], [0, 0, 1, 1], [], []>} : vector<64x256xf32>, vector<256x256xf32>, vector<64x256xf32> -> vector<64x256xf32>
    %174 = vector.extract_strided_slice %173 {offsets = [0, 0], sizes = [64, 128], strides = [1, 1]} : vector<64x256xf32> to vector<64x128xf32>
    %175 = vector.extract_strided_slice %173 {offsets = [0, 128], sizes = [64, 128], strides = [1, 1]} : vector<64x256xf32> to vector<64x128xf32>
    %176 = arith.mulf %174, %46 : vector<64x128xf32>
    %177 = arith.mulf %175, %48 : vector<64x128xf32>
    %178 = arith.subf %176, %177 : vector<64x128xf32>
    %179 = arith.mulf %174, %48 : vector<64x128xf32>
    %180 = arith.mulf %175, %46 : vector<64x128xf32>
    %181 = arith.addf %179, %180 : vector<64x128xf32>
    %182 = arith.addf %178, %181 : vector<64x128xf32>
    %cst_111 = arith.constant dense<0.000000e+00> : vector<64x128xf32>
    %183 = tpu.matmul %7, %182, %cst_111 {dimension_numbers = #tpu.dot_dimension_numbers<[1], [0], [0], [1], [0, 0, 1, 1], [], []>} : vector<64x64xf32>, vector<64x128xf32>, vector<64x128xf32> -> vector<64x128xf32>
    %cst_112 = arith.constant dense<0.000000e+00> : vector<64x128xf32>
    %184 = tpu.matmul %9, %181, %cst_112 {dimension_numbers = #tpu.dot_dimension_numbers<[1], [0], [0], [1], [0, 0, 1, 1], [], []>} : vector<64x64xf32>, vector<64x128xf32>, vector<64x128xf32> -> vector<64x128xf32>
    %185 = arith.subf %183, %184 : vector<64x128xf32>
    %cst_113 = arith.constant dense<0.000000e+00> : vector<64x128xf32>
    %186 = tpu.matmul %11, %178, %cst_113 {dimension_numbers = #tpu.dot_dimension_numbers<[1], [0], [0], [1], [0, 0, 1, 1], [], []>} : vector<64x64xf32>, vector<64x128xf32>, vector<64x128xf32> -> vector<64x128xf32>
    %187 = arith.addf %183, %186 : vector<64x128xf32>
    %188 = tpu.concatenate %185, %187 in 1 : vector<64x128xf32>, vector<64x128xf32> -> vector<64x256xf32>
    %cst_114 = arith.constant dense<0.000000e+00> : vector<64x256xf32>
    %189 = tpu.matmul %188, %15, %cst_114 {dimension_numbers = #tpu.dot_dimension_numbers<[1], [0], [0], [1], [0, 0, 1, 1], [], []>} : vector<64x256xf32>, vector<256x256xf32>, vector<64x256xf32> -> vector<64x256xf32>
    %190 = vector.extract_strided_slice %189 {offsets = [0, 0], sizes = [64, 128], strides = [1, 1]} : vector<64x256xf32> to vector<64x128xf32>
    %c0_115 = arith.constant 0 : index
    %c0_116 = arith.constant 0 : index
    %c2_117 = arith.constant 2 : index
    %c0_118 = arith.constant 0 : index
    %c0_119 = arith.constant 0 : index
    %191 = vector.load %arg5[%c0_115, %c0_116, %c2_117, %c0_118, %c0_119] : memref<2x2x4x64x128xf32, #tpu.memory_space<vmem>>, vector<1x1x1x64x128xf32>
    %192 = vector.shape_cast %191 : vector<1x1x1x64x128xf32> to vector<64x128xf32>
    %c1_120 = arith.constant 1 : index
    %c0_121 = arith.constant 0 : index
    %c2_122 = arith.constant 2 : index
    %c0_123 = arith.constant 0 : index
    %c0_124 = arith.constant 0 : index
    %193 = vector.load %arg5[%c1_120, %c0_121, %c2_122, %c0_123, %c0_124] : memref<2x2x4x64x128xf32, #tpu.memory_space<vmem>>, vector<1x1x1x64x128xf32>
    %194 = vector.shape_cast %193 : vector<1x1x1x64x128xf32> to vector<64x128xf32>
    %195 = arith.mulf %43, %192 : vector<64x128xf32>
    %196 = arith.mulf %44, %194 : vector<64x128xf32>
    %197 = arith.subf %195, %196 : vector<64x128xf32>
    %198 = arith.mulf %43, %194 : vector<64x128xf32>
    %199 = arith.mulf %44, %192 : vector<64x128xf32>
    %200 = arith.addf %198, %199 : vector<64x128xf32>
    %201 = arith.addf %197, %200 : vector<64x128xf32>
    %cst_125 = arith.constant dense<0.000000e+00> : vector<64x128xf32>
    %202 = tpu.matmul %1, %201, %cst_125 {dimension_numbers = #tpu.dot_dimension_numbers<[1], [0], [0], [1], [0, 0, 1, 1], [], []>} : vector<64x64xf32>, vector<64x128xf32>, vector<64x128xf32> -> vector<64x128xf32>
    %cst_126 = arith.constant dense<0.000000e+00> : vector<64x128xf32>
    %203 = tpu.matmul %3, %200, %cst_126 {dimension_numbers = #tpu.dot_dimension_numbers<[1], [0], [0], [1], [0, 0, 1, 1], [], []>} : vector<64x64xf32>, vector<64x128xf32>, vector<64x128xf32> -> vector<64x128xf32>
    %204 = arith.subf %202, %203 : vector<64x128xf32>
    %cst_127 = arith.constant dense<0.000000e+00> : vector<64x128xf32>
    %205 = tpu.matmul %5, %197, %cst_127 {dimension_numbers = #tpu.dot_dimension_numbers<[1], [0], [0], [1], [0, 0, 1, 1], [], []>} : vector<64x64xf32>, vector<64x128xf32>, vector<64x128xf32> -> vector<64x128xf32>
    %206 = arith.addf %202, %205 : vector<64x128xf32>
    %207 = tpu.concatenate %204, %206 in 1 : vector<64x128xf32>, vector<64x128xf32> -> vector<64x256xf32>
    %cst_128 = arith.constant dense<0.000000e+00> : vector<64x256xf32>
    %208 = tpu.matmul %207, %13, %cst_128 {dimension_numbers = #tpu.dot_dimension_numbers<[1], [0], [0], [1], [0, 0, 1, 1], [], []>} : vector<64x256xf32>, vector<256x256xf32>, vector<64x256xf32> -> vector<64x256xf32>
    %209 = vector.extract_strided_slice %208 {offsets = [0, 0], sizes = [64, 128], strides = [1, 1]} : vector<64x256xf32> to vector<64x128xf32>
    %210 = vector.extract_strided_slice %208 {offsets = [0, 128], sizes = [64, 128], strides = [1, 1]} : vector<64x256xf32> to vector<64x128xf32>
    %211 = arith.mulf %209, %46 : vector<64x128xf32>
    %212 = arith.mulf %210, %48 : vector<64x128xf32>
    %213 = arith.subf %211, %212 : vector<64x128xf32>
    %214 = arith.mulf %209, %48 : vector<64x128xf32>
    %215 = arith.mulf %210, %46 : vector<64x128xf32>
    %216 = arith.addf %214, %215 : vector<64x128xf32>
    %217 = arith.addf %213, %216 : vector<64x128xf32>
    %cst_129 = arith.constant dense<0.000000e+00> : vector<64x128xf32>
    %218 = tpu.matmul %7, %217, %cst_129 {dimension_numbers = #tpu.dot_dimension_numbers<[1], [0], [0], [1], [0, 0, 1, 1], [], []>} : vector<64x64xf32>, vector<64x128xf32>, vector<64x128xf32> -> vector<64x128xf32>
    %cst_130 = arith.constant dense<0.000000e+00> : vector<64x128xf32>
    %219 = tpu.matmul %9, %216, %cst_130 {dimension_numbers = #tpu.dot_dimension_numbers<[1], [0], [0], [1], [0, 0, 1, 1], [], []>} : vector<64x64xf32>, vector<64x128xf32>, vector<64x128xf32> -> vector<64x128xf32>
    %220 = arith.subf %218, %219 : vector<64x128xf32>
    %cst_131 = arith.constant dense<0.000000e+00> : vector<64x128xf32>
    %221 = tpu.matmul %11, %213, %cst_131 {dimension_numbers = #tpu.dot_dimension_numbers<[1], [0], [0], [1], [0, 0, 1, 1], [], []>} : vector<64x64xf32>, vector<64x128xf32>, vector<64x128xf32> -> vector<64x128xf32>
    %222 = arith.addf %218, %221 : vector<64x128xf32>
    %223 = tpu.concatenate %220, %222 in 1 : vector<64x128xf32>, vector<64x128xf32> -> vector<64x256xf32>
    %cst_132 = arith.constant dense<0.000000e+00> : vector<64x256xf32>
    %224 = tpu.matmul %223, %15, %cst_132 {dimension_numbers = #tpu.dot_dimension_numbers<[1], [0], [0], [1], [0, 0, 1, 1], [], []>} : vector<64x256xf32>, vector<256x256xf32>, vector<64x256xf32> -> vector<64x256xf32>
    %225 = vector.extract_strided_slice %224 {offsets = [0, 0], sizes = [64, 128], strides = [1, 1]} : vector<64x256xf32> to vector<64x128xf32>
    %226 = vector.extract_strided_slice %224 {offsets = [0, 128], sizes = [64, 128], strides = [1, 1]} : vector<64x256xf32> to vector<64x128xf32>
    %c0_133 = arith.constant 0 : index
    %c1_134 = arith.constant 1 : index
    %c2_135 = arith.constant 2 : index
    %c0_136 = arith.constant 0 : index
    %c0_137 = arith.constant 0 : index
    %227 = vector.load %arg5[%c0_133, %c1_134, %c2_135, %c0_136, %c0_137] : memref<2x2x4x64x128xf32, #tpu.memory_space<vmem>>, vector<1x1x1x64x128xf32>
    %228 = vector.shape_cast %227 : vector<1x1x1x64x128xf32> to vector<64x128xf32>
    %c1_138 = arith.constant 1 : index
    %c1_139 = arith.constant 1 : index
    %c2_140 = arith.constant 2 : index
    %c0_141 = arith.constant 0 : index
    %c0_142 = arith.constant 0 : index
    %229 = vector.load %arg5[%c1_138, %c1_139, %c2_140, %c0_141, %c0_142] : memref<2x2x4x64x128xf32, #tpu.memory_space<vmem>>, vector<1x1x1x64x128xf32>
    %230 = vector.shape_cast %229 : vector<1x1x1x64x128xf32> to vector<64x128xf32>
    %231 = arith.mulf %225, %228 : vector<64x128xf32>
    %232 = arith.mulf %226, %230 : vector<64x128xf32>
    %233 = arith.subf %231, %232 : vector<64x128xf32>
    %234 = arith.mulf %225, %230 : vector<64x128xf32>
    %235 = arith.mulf %226, %228 : vector<64x128xf32>
    %236 = arith.addf %234, %235 : vector<64x128xf32>
    %237 = arith.addf %233, %236 : vector<64x128xf32>
    %cst_143 = arith.constant dense<0.000000e+00> : vector<64x128xf32>
    %238 = tpu.matmul %1, %237, %cst_143 {dimension_numbers = #tpu.dot_dimension_numbers<[1], [0], [0], [1], [0, 0, 1, 1], [], []>} : vector<64x64xf32>, vector<64x128xf32>, vector<64x128xf32> -> vector<64x128xf32>
    %cst_144 = arith.constant dense<0.000000e+00> : vector<64x128xf32>
    %239 = tpu.matmul %3, %236, %cst_144 {dimension_numbers = #tpu.dot_dimension_numbers<[1], [0], [0], [1], [0, 0, 1, 1], [], []>} : vector<64x64xf32>, vector<64x128xf32>, vector<64x128xf32> -> vector<64x128xf32>
    %240 = arith.subf %238, %239 : vector<64x128xf32>
    %cst_145 = arith.constant dense<0.000000e+00> : vector<64x128xf32>
    %241 = tpu.matmul %5, %233, %cst_145 {dimension_numbers = #tpu.dot_dimension_numbers<[1], [0], [0], [1], [0, 0, 1, 1], [], []>} : vector<64x64xf32>, vector<64x128xf32>, vector<64x128xf32> -> vector<64x128xf32>
    %242 = arith.addf %238, %241 : vector<64x128xf32>
    %243 = tpu.concatenate %240, %242 in 1 : vector<64x128xf32>, vector<64x128xf32> -> vector<64x256xf32>
    %cst_146 = arith.constant dense<0.000000e+00> : vector<64x256xf32>
    %244 = tpu.matmul %243, %13, %cst_146 {dimension_numbers = #tpu.dot_dimension_numbers<[1], [0], [0], [1], [0, 0, 1, 1], [], []>} : vector<64x256xf32>, vector<256x256xf32>, vector<64x256xf32> -> vector<64x256xf32>
    %245 = vector.extract_strided_slice %244 {offsets = [0, 0], sizes = [64, 128], strides = [1, 1]} : vector<64x256xf32> to vector<64x128xf32>
    %246 = vector.extract_strided_slice %244 {offsets = [0, 128], sizes = [64, 128], strides = [1, 1]} : vector<64x256xf32> to vector<64x128xf32>
    %247 = arith.mulf %245, %46 : vector<64x128xf32>
    %248 = arith.mulf %246, %48 : vector<64x128xf32>
    %249 = arith.subf %247, %248 : vector<64x128xf32>
    %250 = arith.mulf %245, %48 : vector<64x128xf32>
    %251 = arith.mulf %246, %46 : vector<64x128xf32>
    %252 = arith.addf %250, %251 : vector<64x128xf32>
    %253 = arith.addf %249, %252 : vector<64x128xf32>
    %cst_147 = arith.constant dense<0.000000e+00> : vector<64x128xf32>
    %254 = tpu.matmul %7, %253, %cst_147 {dimension_numbers = #tpu.dot_dimension_numbers<[1], [0], [0], [1], [0, 0, 1, 1], [], []>} : vector<64x64xf32>, vector<64x128xf32>, vector<64x128xf32> -> vector<64x128xf32>
    %cst_148 = arith.constant dense<0.000000e+00> : vector<64x128xf32>
    %255 = tpu.matmul %9, %252, %cst_148 {dimension_numbers = #tpu.dot_dimension_numbers<[1], [0], [0], [1], [0, 0, 1, 1], [], []>} : vector<64x64xf32>, vector<64x128xf32>, vector<64x128xf32> -> vector<64x128xf32>
    %256 = arith.subf %254, %255 : vector<64x128xf32>
    %cst_149 = arith.constant dense<0.000000e+00> : vector<64x128xf32>
    %257 = tpu.matmul %11, %249, %cst_149 {dimension_numbers = #tpu.dot_dimension_numbers<[1], [0], [0], [1], [0, 0, 1, 1], [], []>} : vector<64x64xf32>, vector<64x128xf32>, vector<64x128xf32> -> vector<64x128xf32>
    %258 = arith.addf %254, %257 : vector<64x128xf32>
    %259 = tpu.concatenate %256, %258 in 1 : vector<64x128xf32>, vector<64x128xf32> -> vector<64x256xf32>
    %cst_150 = arith.constant dense<0.000000e+00> : vector<64x256xf32>
    %260 = tpu.matmul %259, %15, %cst_150 {dimension_numbers = #tpu.dot_dimension_numbers<[1], [0], [0], [1], [0, 0, 1, 1], [], []>} : vector<64x256xf32>, vector<256x256xf32>, vector<64x256xf32> -> vector<64x256xf32>
    %261 = vector.extract_strided_slice %260 {offsets = [0, 0], sizes = [64, 128], strides = [1, 1]} : vector<64x256xf32> to vector<64x128xf32>
    %c0_151 = arith.constant 0 : index
    %c0_152 = arith.constant 0 : index
    %c3_153 = arith.constant 3 : index
    %c0_154 = arith.constant 0 : index
    %c0_155 = arith.constant 0 : index
    %262 = vector.load %arg5[%c0_151, %c0_152, %c3_153, %c0_154, %c0_155] : memref<2x2x4x64x128xf32, #tpu.memory_space<vmem>>, vector<1x1x1x64x128xf32>
    %263 = vector.shape_cast %262 : vector<1x1x1x64x128xf32> to vector<64x128xf32>
    %c1_156 = arith.constant 1 : index
    %c0_157 = arith.constant 0 : index
    %c3_158 = arith.constant 3 : index
    %c0_159 = arith.constant 0 : index
    %c0_160 = arith.constant 0 : index
    %264 = vector.load %arg5[%c1_156, %c0_157, %c3_158, %c0_159, %c0_160] : memref<2x2x4x64x128xf32, #tpu.memory_space<vmem>>, vector<1x1x1x64x128xf32>
    %265 = vector.shape_cast %264 : vector<1x1x1x64x128xf32> to vector<64x128xf32>
    %266 = arith.mulf %43, %263 : vector<64x128xf32>
    %267 = arith.mulf %44, %265 : vector<64x128xf32>
    %268 = arith.subf %266, %267 : vector<64x128xf32>
    %269 = arith.mulf %43, %265 : vector<64x128xf32>
    %270 = arith.mulf %44, %263 : vector<64x128xf32>
    %271 = arith.addf %269, %270 : vector<64x128xf32>
    %272 = arith.addf %268, %271 : vector<64x128xf32>
    %cst_161 = arith.constant dense<0.000000e+00> : vector<64x128xf32>
    %273 = tpu.matmul %1, %272, %cst_161 {dimension_numbers = #tpu.dot_dimension_numbers<[1], [0], [0], [1], [0, 0, 1, 1], [], []>} : vector<64x64xf32>, vector<64x128xf32>, vector<64x128xf32> -> vector<64x128xf32>
    %cst_162 = arith.constant dense<0.000000e+00> : vector<64x128xf32>
    %274 = tpu.matmul %3, %271, %cst_162 {dimension_numbers = #tpu.dot_dimension_numbers<[1], [0], [0], [1], [0, 0, 1, 1], [], []>} : vector<64x64xf32>, vector<64x128xf32>, vector<64x128xf32> -> vector<64x128xf32>
    %275 = arith.subf %273, %274 : vector<64x128xf32>
    %cst_163 = arith.constant dense<0.000000e+00> : vector<64x128xf32>
    %276 = tpu.matmul %5, %268, %cst_163 {dimension_numbers = #tpu.dot_dimension_numbers<[1], [0], [0], [1], [0, 0, 1, 1], [], []>} : vector<64x64xf32>, vector<64x128xf32>, vector<64x128xf32> -> vector<64x128xf32>
    %277 = arith.addf %273, %276 : vector<64x128xf32>
    %278 = tpu.concatenate %275, %277 in 1 : vector<64x128xf32>, vector<64x128xf32> -> vector<64x256xf32>
    %cst_164 = arith.constant dense<0.000000e+00> : vector<64x256xf32>
    %279 = tpu.matmul %278, %13, %cst_164 {dimension_numbers = #tpu.dot_dimension_numbers<[1], [0], [0], [1], [0, 0, 1, 1], [], []>} : vector<64x256xf32>, vector<256x256xf32>, vector<64x256xf32> -> vector<64x256xf32>
    %280 = vector.extract_strided_slice %279 {offsets = [0, 0], sizes = [64, 128], strides = [1, 1]} : vector<64x256xf32> to vector<64x128xf32>
    %281 = vector.extract_strided_slice %279 {offsets = [0, 128], sizes = [64, 128], strides = [1, 1]} : vector<64x256xf32> to vector<64x128xf32>
    %282 = arith.mulf %280, %46 : vector<64x128xf32>
    %283 = arith.mulf %281, %48 : vector<64x128xf32>
    %284 = arith.subf %282, %283 : vector<64x128xf32>
    %285 = arith.mulf %280, %48 : vector<64x128xf32>
    %286 = arith.mulf %281, %46 : vector<64x128xf32>
    %287 = arith.addf %285, %286 : vector<64x128xf32>
    %288 = arith.addf %284, %287 : vector<64x128xf32>
    %cst_165 = arith.constant dense<0.000000e+00> : vector<64x128xf32>
    %289 = tpu.matmul %7, %288, %cst_165 {dimension_numbers = #tpu.dot_dimension_numbers<[1], [0], [0], [1], [0, 0, 1, 1], [], []>} : vector<64x64xf32>, vector<64x128xf32>, vector<64x128xf32> -> vector<64x128xf32>
    %cst_166 = arith.constant dense<0.000000e+00> : vector<64x128xf32>
    %290 = tpu.matmul %9, %287, %cst_166 {dimension_numbers = #tpu.dot_dimension_numbers<[1], [0], [0], [1], [0, 0, 1, 1], [], []>} : vector<64x64xf32>, vector<64x128xf32>, vector<64x128xf32> -> vector<64x128xf32>
    %291 = arith.subf %289, %290 : vector<64x128xf32>
    %cst_167 = arith.constant dense<0.000000e+00> : vector<64x128xf32>
    %292 = tpu.matmul %11, %284, %cst_167 {dimension_numbers = #tpu.dot_dimension_numbers<[1], [0], [0], [1], [0, 0, 1, 1], [], []>} : vector<64x64xf32>, vector<64x128xf32>, vector<64x128xf32> -> vector<64x128xf32>
    %293 = arith.addf %289, %292 : vector<64x128xf32>
    %294 = tpu.concatenate %291, %293 in 1 : vector<64x128xf32>, vector<64x128xf32> -> vector<64x256xf32>
    %cst_168 = arith.constant dense<0.000000e+00> : vector<64x256xf32>
    %295 = tpu.matmul %294, %15, %cst_168 {dimension_numbers = #tpu.dot_dimension_numbers<[1], [0], [0], [1], [0, 0, 1, 1], [], []>} : vector<64x256xf32>, vector<256x256xf32>, vector<64x256xf32> -> vector<64x256xf32>
    %296 = vector.extract_strided_slice %295 {offsets = [0, 0], sizes = [64, 128], strides = [1, 1]} : vector<64x256xf32> to vector<64x128xf32>
    %297 = vector.extract_strided_slice %295 {offsets = [0, 128], sizes = [64, 128], strides = [1, 1]} : vector<64x256xf32> to vector<64x128xf32>
    %c0_169 = arith.constant 0 : index
    %c1_170 = arith.constant 1 : index
    %c3_171 = arith.constant 3 : index
    %c0_172 = arith.constant 0 : index
    %c0_173 = arith.constant 0 : index
    %298 = vector.load %arg5[%c0_169, %c1_170, %c3_171, %c0_172, %c0_173] : memref<2x2x4x64x128xf32, #tpu.memory_space<vmem>>, vector<1x1x1x64x128xf32>
    %299 = vector.shape_cast %298 : vector<1x1x1x64x128xf32> to vector<64x128xf32>
    %c1_174 = arith.constant 1 : index
    %c1_175 = arith.constant 1 : index
    %c3_176 = arith.constant 3 : index
    %c0_177 = arith.constant 0 : index
    %c0_178 = arith.constant 0 : index
    %300 = vector.load %arg5[%c1_174, %c1_175, %c3_176, %c0_177, %c0_178] : memref<2x2x4x64x128xf32, #tpu.memory_space<vmem>>, vector<1x1x1x64x128xf32>
    %301 = vector.shape_cast %300 : vector<1x1x1x64x128xf32> to vector<64x128xf32>
    %302 = arith.mulf %296, %299 : vector<64x128xf32>
    %303 = arith.mulf %297, %301 : vector<64x128xf32>
    %304 = arith.subf %302, %303 : vector<64x128xf32>
    %305 = arith.mulf %296, %301 : vector<64x128xf32>
    %306 = arith.mulf %297, %299 : vector<64x128xf32>
    %307 = arith.addf %305, %306 : vector<64x128xf32>
    %308 = arith.addf %304, %307 : vector<64x128xf32>
    %cst_179 = arith.constant dense<0.000000e+00> : vector<64x128xf32>
    %309 = tpu.matmul %1, %308, %cst_179 {dimension_numbers = #tpu.dot_dimension_numbers<[1], [0], [0], [1], [0, 0, 1, 1], [], []>} : vector<64x64xf32>, vector<64x128xf32>, vector<64x128xf32> -> vector<64x128xf32>
    %cst_180 = arith.constant dense<0.000000e+00> : vector<64x128xf32>
    %310 = tpu.matmul %3, %307, %cst_180 {dimension_numbers = #tpu.dot_dimension_numbers<[1], [0], [0], [1], [0, 0, 1, 1], [], []>} : vector<64x64xf32>, vector<64x128xf32>, vector<64x128xf32> -> vector<64x128xf32>
    %311 = arith.subf %309, %310 : vector<64x128xf32>
    %cst_181 = arith.constant dense<0.000000e+00> : vector<64x128xf32>
    %312 = tpu.matmul %5, %304, %cst_181 {dimension_numbers = #tpu.dot_dimension_numbers<[1], [0], [0], [1], [0, 0, 1, 1], [], []>} : vector<64x64xf32>, vector<64x128xf32>, vector<64x128xf32> -> vector<64x128xf32>
    %313 = arith.addf %309, %312 : vector<64x128xf32>
    %314 = tpu.concatenate %311, %313 in 1 : vector<64x128xf32>, vector<64x128xf32> -> vector<64x256xf32>
    %cst_182 = arith.constant dense<0.000000e+00> : vector<64x256xf32>
    %315 = tpu.matmul %314, %13, %cst_182 {dimension_numbers = #tpu.dot_dimension_numbers<[1], [0], [0], [1], [0, 0, 1, 1], [], []>} : vector<64x256xf32>, vector<256x256xf32>, vector<64x256xf32> -> vector<64x256xf32>
    %316 = vector.extract_strided_slice %315 {offsets = [0, 0], sizes = [64, 128], strides = [1, 1]} : vector<64x256xf32> to vector<64x128xf32>
    %317 = vector.extract_strided_slice %315 {offsets = [0, 128], sizes = [64, 128], strides = [1, 1]} : vector<64x256xf32> to vector<64x128xf32>
    %318 = arith.mulf %316, %46 : vector<64x128xf32>
    %319 = arith.mulf %317, %48 : vector<64x128xf32>
    %320 = arith.subf %318, %319 : vector<64x128xf32>
    %321 = arith.mulf %316, %48 : vector<64x128xf32>
    %322 = arith.mulf %317, %46 : vector<64x128xf32>
    %323 = arith.addf %321, %322 : vector<64x128xf32>
    %324 = arith.addf %320, %323 : vector<64x128xf32>
    %cst_183 = arith.constant dense<0.000000e+00> : vector<64x128xf32>
    %325 = tpu.matmul %7, %324, %cst_183 {dimension_numbers = #tpu.dot_dimension_numbers<[1], [0], [0], [1], [0, 0, 1, 1], [], []>} : vector<64x64xf32>, vector<64x128xf32>, vector<64x128xf32> -> vector<64x128xf32>
    %cst_184 = arith.constant dense<0.000000e+00> : vector<64x128xf32>
    %326 = tpu.matmul %9, %323, %cst_184 {dimension_numbers = #tpu.dot_dimension_numbers<[1], [0], [0], [1], [0, 0, 1, 1], [], []>} : vector<64x64xf32>, vector<64x128xf32>, vector<64x128xf32> -> vector<64x128xf32>
    %327 = arith.subf %325, %326 : vector<64x128xf32>
    %cst_185 = arith.constant dense<0.000000e+00> : vector<64x128xf32>
    %328 = tpu.matmul %11, %320, %cst_185 {dimension_numbers = #tpu.dot_dimension_numbers<[1], [0], [0], [1], [0, 0, 1, 1], [], []>} : vector<64x64xf32>, vector<64x128xf32>, vector<64x128xf32> -> vector<64x128xf32>
    %329 = arith.addf %325, %328 : vector<64x128xf32>
    %330 = tpu.concatenate %327, %329 in 1 : vector<64x128xf32>, vector<64x128xf32> -> vector<64x256xf32>
    %cst_186 = arith.constant dense<0.000000e+00> : vector<64x256xf32>
    %331 = tpu.matmul %330, %15, %cst_186 {dimension_numbers = #tpu.dot_dimension_numbers<[1], [0], [0], [1], [0, 0, 1, 1], [], []>} : vector<64x256xf32>, vector<256x256xf32>, vector<64x256xf32> -> vector<64x256xf32>
    %332 = vector.extract_strided_slice %331 {offsets = [0, 0], sizes = [64, 128], strides = [1, 1]} : vector<64x256xf32> to vector<64x128xf32>
    %333 = tpu.concatenate %119, %190, %261, %332 in 1 : vector<64x128xf32>, vector<64x128xf32>, vector<64x128xf32>, vector<64x128xf32> -> vector<64x512xf32>
    %c0_187 = arith.constant 0 : index
    %c0_188 = arith.constant 0 : index
    %334 = vector.load %arg6[%c0_187, %c0_188] : memref<512x128xf32, #tpu.memory_space<vmem>>, vector<512x128xf32>
    %cst_189 = arith.constant dense<0.000000e+00> : vector<64x128xf32>
    %335 = tpu.matmul %333, %334, %cst_189 {dimension_numbers = #tpu.dot_dimension_numbers<[1], [0], [0], [1], [0, 0, 1, 1], [], []>} : vector<64x512xf32>, vector<512x128xf32>, vector<64x128xf32> -> vector<64x128xf32>
    %c0_190 = arith.constant 0 : index
    %c0_191 = arith.constant 0 : index
    %c0_192 = arith.constant 0 : index
    %336 = vector.load %arg8[%c0_190, %c0_191, %c0_192] : memref<1x64x128xf32, #tpu.memory_space<vmem>>, vector<1x64x128xf32>
    %337 = vector.shape_cast %336 : vector<1x64x128xf32> to vector<64x128xf32>
    %338 = vector.shape_cast %335 : vector<64x128xf32> to vector<1x64x128xf32>
    tpu.vector_store %arg8[%c0_190, %c0_191, %c0_192], %338 {strides = array<i32>} : memref<1x64x128xf32, #tpu.memory_space<vmem>>, vector<1x64x128xf32>,
    return
  }
  func.func @transform_0(%arg0: i32) -> (i32, i32, i32) {
    %c0_i32 = arith.constant 0 : i32
    %c0_i32_0 = arith.constant 0 : i32
    %c0_i32_1 = arith.constant 0 : i32
    return %arg0, %c0_i32, %c0_i32_0 : i32, i32, i32
  }
  func.func @transform_1(%arg0: i32) -> (i32, i32, i32) {
    %c0_i32 = arith.constant 0 : i32
    %c0_i32_0 = arith.constant 0 : i32
    %c0_i32_1 = arith.constant 0 : i32
    %c0_i32_2 = arith.constant 0 : i32
    return %c0_i32, %c0_i32_0, %c0_i32_1 : i32, i32, i32
  }
  func.func @transform_2(%arg0: i32) -> (i32, i32, i32) {
    %c0_i32 = arith.constant 0 : i32
    %c0_i32_0 = arith.constant 0 : i32
    %c0_i32_1 = arith.constant 0 : i32
    %c0_i32_2 = arith.constant 0 : i32
    return %c0_i32, %c0_i32_0, %c0_i32_1 : i32, i32, i32
  }
  func.func @transform_3(%arg0: i32) -> (i32, i32, i32, i32) {
    %c0_i32 = arith.constant 0 : i32
    %c0_i32_0 = arith.constant 0 : i32
    %c0_i32_1 = arith.constant 0 : i32
    %c0_i32_2 = arith.constant 0 : i32
    %c0_i32_3 = arith.constant 0 : i32
    return %c0_i32, %c0_i32_0, %c0_i32_1, %c0_i32_2 : i32, i32, i32, i32
  }
  func.func @transform_4(%arg0: i32) -> (i32, i32, i32, i32, i32) {
    %c0_i32 = arith.constant 0 : i32
    %c0_i32_0 = arith.constant 0 : i32
    %c0_i32_1 = arith.constant 0 : i32
    %c0_i32_2 = arith.constant 0 : i32
    %c0_i32_3 = arith.constant 0 : i32
    %c0_i32_4 = arith.constant 0 : i32
    return %c0_i32, %c0_i32_0, %c0_i32_1, %c0_i32_2, %c0_i32_3 : i32, i32, i32, i32, i32
  }
  func.func @transform_5(%arg0: i32) -> (i32, i32) {
    %c0_i32 = arith.constant 0 : i32
    %c0_i32_0 = arith.constant 0 : i32
    %c0_i32_1 = arith.constant 0 : i32
    return %c0_i32, %c0_i32_0 : i32, i32
  }
  func.func @transform_6(%arg0: i32) -> i32 {
    %c0_i32 = arith.constant 0 : i32
    %c0_i32_0 = arith.constant 0 : i32
    return %c0_i32 : i32
  }
  func.func @transform_7(%arg0: i32) -> (i32, i32, i32) {
    %c0_i32 = arith.constant 0 : i32
    %c0_i32_0 = arith.constant 0 : i32
    %c0_i32_1 = arith.constant 0 : i32
    return %arg0, %c0_i32, %c0_i32_0 : i32, i32, i32
  }
}

</mosaic_0001>

<llo_original>
// kernel: tpu_custom_call.1
$region0: #{tpu_custom_call.1}
  #allocation0 [shape = 'u32[]', space=smem, size = 0x4, offset = 0x4, fixed_abs, tag = 'smem constant byte address 0x4 - core index']
  #allocation1 [shape = 'u32[144,128]{1,0:T(1,128)}', space=vmem, size = 0x12000, scoped, tag = 'internal scratch']
  %s0 = inlined_call_operand.hbm [shape: f32[1,64,128], index: 0, kind: input, shape index: {}]
  %s1 = inlined_call_operand.hbm [shape: f32[6,64,64], index: 1, kind: input, shape index: {}]
  %s2 = inlined_call_operand.hbm [shape: f32[2,256,256], index: 2, kind: input, shape index: {}]
  %s3 = inlined_call_operand.hbm [shape: f32[2,2,64,128], index: 3, kind: input, shape index: {}]
  %s4 = inlined_call_operand.hbm [shape: f32[2,2,4,64,128], index: 4, kind: input, shape index: {}]
  %s5 = inlined_call_operand.hbm [shape: f32[512,128], index: 5, kind: input, shape index: {}]
  %s6 = inlined_call_operand.vmem [shape: f32[4], index: 6, kind: input, shape index: {}]
  %s7 = inlined_call_operand.hbm [shape: f32[1,64,128], index: 7, kind: output, shape index: {}]
  %s8 = sld [smem:[#allocation0]]
  $region66: #{tpu_custom_call.1} parent=0
    _
  %s10 = ssub.s32 1, %s8
  %s11 = scalar_select 0, %s10, %s8
  $region1: #{tpu_custom_call.1} parent=0
    #allocation2 [shape = 'u8[32768]{0}', space=vmem, size = 0x8000, scoped, tag = 'input window, operand 0, single buffered']
    #allocation3 [shape = 's32[1]{0}', space=sflag, size = 0x4, scoped, tag = 'scoped memory for tpu_custom_call.1']
    #allocation4 [shape = 's32[1]{0}', space=sflag, size = 0x4, scoped, tag = 'scoped memory for tpu_custom_call.1']
    #allocation5 [shape = 's32[1]{0}', space=sflag, size = 0x4, scoped, tag = 'scoped memory for tpu_custom_call.1']
    #allocation6 [shape = 'u8[196608]{0}', space=vmem, size = 0x30000, scoped, tag = 'input window, operand 1, single buffered']
    #allocation7 [shape = 's32[1]{0}', space=sflag, size = 0x4, scoped, tag = 'scoped memory for tpu_custom_call.1']
    #allocation8 [shape = 'u8[524288]{0}', space=vmem, size = 0x80000, scoped, tag = 'input window, operand 2, single buffered']
    #allocation9 [shape = 'u8[131072]{0}', space=vmem, size = 0x20000, scoped, tag = 'input window, operand 3, single buffered']
    #allocation10 [shape = 's32[1]{0}', space=sflag, size = 0x4, scoped, tag = 'scoped memory for tpu_custom_call.1']
    #allocation11 [shape = 'u8[524288]{0}', space=vmem, size = 0x80000, scoped, tag = 'input window, operand 4, single buffered']
    #allocation12 [shape = 'u8[262144]{0}', space=vmem, size = 0x40000, scoped, tag = 'input window, operand 5, single buffered']
    #allocation13 [shape = 's32[1]{0}', space=sflag, size = 0x4, scoped, tag = 'scoped memory for tpu_custom_call.1']
    #allocation14 [shape = 'u8[512]{0}', space=smem, size = 0x200, scoped, tag = 'input window, operand 6, single buffered']
    #allocation15 [shape = 'u8[32768]{0}', space=vmem, size = 0x8000, scoped, tag = 'output window, operand 0, single buffered']
    %12 = vsyncpa [#allocation3], 0
    %13 = vsyncpa [#allocation7], 0
    %14 = vsyncpa [#allocation10], 0
    %15 = vsyncpa [#allocation13], 0
    %16 = vsyncpa [#allocation5], 0
    %17 = vsyncpa [#allocation4], 0
    // Predicated region
    $region2: #{tpu_custom_call.1} parent=1 // pred_check
      _
    $region3: #{tpu_custom_call.1} parent=1 // pred_check_branch
      %19 = sbr.rel (0) target = $region5
    $region4: #{tpu_custom_call.1} parent=1 // pred_region
      %s21 = ssub.s32 1024, 1024
      %22 = vsyncadd [#allocation3], %s21
      %s23 = sshll.u32 [#allocation2], 4
      %s24 = int_to_ptr.vmem [resolvable:$true] %s23
      %29 = dma.hbm_to_vmem [thread:$0]  %s0, 1024, %s24, [#allocation3], 128, 128, 8
    $region5: #{tpu_custom_call.1} parent=1 // pred_fallthru
      _
    // Predicated region
    $region6: #{tpu_custom_call.1} parent=1 // pred_check
      _
    $region7: #{tpu_custom_call.1} parent=1 // pred_check_branch
      %31 = sbr.rel (0) target = $region9
    $region8: #{tpu_custom_call.1} parent=1 // pred_region
      %s33 = ssub.s32 6144, 6144
      %34 = vsyncadd [#allocation7], %s33
      %s35 = sshll.u32 [#allocation6], 4
      %s36 = int_to_ptr.vmem [resolvable:$true] %s35
      %41 = dma.hbm_to_vmem [thread:$0]  %s1, 6144, %s36, [#allocation7], 128, 128, 8
    $region9: #{tpu_custom_call.1} parent=1 // pred_fallthru
      _
    // Predicated region
    $region10: #{tpu_custom_call.1} parent=1 // pred_check
      _
    $region11: #{tpu_custom_call.1} parent=1 // pred_check_branch
      %43 = sbr.rel (0) target = $region13
    $region12: #{tpu_custom_call.1} parent=1 // pred_region
      %s45 = ssub.s32 16384, 16384
      %46 = vsyncadd [#allocation7], %s45
      %s47 = sshll.u32 [#allocation8], 4
      %s48 = int_to_ptr.vmem [resolvable:$true] %s47
      %53 = dma.hbm_to_vmem [thread:$0]  %s2, 16384, %s48, [#allocation7], 256, 256, 16
    $region13: #{tpu_custom_call.1} parent=1 // pred_fallthru
      _
    // Predicated region
    $region14: #{tpu_custom_call.1} parent=1 // pred_check
      _
    $region15: #{tpu_custom_call.1} parent=1 // pred_check_branch
      %55 = sbr.rel (0) target = $region17
    $region16: #{tpu_custom_call.1} parent=1 // pred_region
      %s57 = ssub.s32 4096, 4096
      %58 = vsyncadd [#allocation10], %s57
      %s59 = sshll.u32 [#allocation9], 4
      %s60 = int_to_ptr.vmem [resolvable:$true] %s59
      %65 = dma.hbm_to_vmem [thread:$0]  %s3, 4096, %s60, [#allocation10], 128, 128, 8
    $region17: #{tpu_custom_call.1} parent=1 // pred_fallthru
      _
    // Predicated region
    $region18: #{tpu_custom_call.1} parent=1 // pred_check
      _
    $region19: #{tpu_custom_call.1} parent=1 // pred_check_branch
      %67 = sbr.rel (0) target = $region21
    $region20: #{tpu_custom_call.1} parent=1 // pred_region
      %s69 = ssub.s32 16384, 16384
      %70 = vsyncadd [#allocation10], %s69
      %s71 = sshll.u32 [#allocation11], 4
      %s72 = int_to_ptr.vmem [resolvable:$true] %s71
      %77 = dma.hbm_to_vmem [thread:$0]  %s4, 16384, %s72, [#allocation10], 128, 128, 8
    $region21: #{tpu_custom_call.1} parent=1 // pred_fallthru
      _
    // Predicated region
    $region22: #{tpu_custom_call.1} parent=1 // pred_check
      _
    $region23: #{tpu_custom_call.1} parent=1 // pred_check_branch
      %79 = sbr.rel (0) target = $region25
    $region24: #{tpu_custom_call.1} parent=1 // pred_region
      %s81 = ssub.s32 8192, 8192
      %82 = vsyncadd [#allocation13], %s81
      %s83 = sshll.u32 [#allocation12], 4
      %s84 = int_to_ptr.vmem [resolvable:$true] %s83
      %89 = dma.hbm_to_vmem [thread:$0]  %s5, 8192, %s84, [#allocation13], 128, 128, 8
    $region25: #{tpu_custom_call.1} parent=1 // pred_fallthru
      _
    // Predicated region
    $region26: #{tpu_custom_call.1} parent=1 // pred_check
      _
    $region27: #{tpu_custom_call.1} parent=1 // pred_check_branch
      %91 = sbr.rel (0) target = $region29
    $region28: #{tpu_custom_call.1} parent=1 // pred_region
      %s93 = ssub.s32 16, 16
      %94 = vsyncadd [#allocation5], %s93
      %s96 = sshll.u32 %s6, 4
      %s97 = int_to_ptr.vmem [resolvable:$true] %s96
      %99 = dma.vmem_to_smem %s97, 16, [#allocation14], [#allocation5]
    $region29: #{tpu_custom_call.1} parent=1 // pred_fallthru
      _
    // Predicated region
    $region30: #{tpu_custom_call.1} parent=1 // pred_check
      _
    $region31: #{tpu_custom_call.1} parent=1 // pred_check_branch
      %101 = sbr.rel (0) target = $region33
    $region32: #{tpu_custom_call.1} parent=1 // pred_region
      %102 = dma.done [#allocation3], 1024
    $region33: #{tpu_custom_call.1} parent=1 // pred_fallthru
      _
    // Predicated region
    $region34: #{tpu_custom_call.1} parent=1 // pred_check
      _
    $region35: #{tpu_custom_call.1} parent=1 // pred_check_branch
      %104 = sbr.rel (0) target = $region37
    $region36: #{tpu_custom_call.1} parent=1 // pred_region
      %105 = dma.done [#allocation7], 6144
    $region37: #{tpu_custom_call.1} parent=1 // pred_fallthru
      _
    // Predicated region
    $region38: #{tpu_custom_call.1} parent=1 // pred_check
      _
    $region39: #{tpu_custom_call.1} parent=1 // pred_check_branch
      %107 = sbr.rel (0) target = $region41
    $region40: #{tpu_custom_call.1} parent=1 // pred_region
      %108 = dma.done [#allocation7], 16384
    $region41: #{tpu_custom_call.1} parent=1 // pred_fallthru
      _
    // Predicated region
    $region42: #{tpu_custom_call.1} parent=1 // pred_check
      _
    $region43: #{tpu_custom_call.1} parent=1 // pred_check_branch
      %110 = sbr.rel (0) target = $region45
    $region44: #{tpu_custom_call.1} parent=1 // pred_region
      %111 = dma.done [#allocation10], 4096
    $region45: #{tpu_custom_call.1} parent=1 // pred_fallthru
      _
    // Predicated region
    $region46: #{tpu_custom_call.1} parent=1 // pred_check
      _
    $region47: #{tpu_custom_call.1} parent=1 // pred_check_branch
      %113 = sbr.rel (0) target = $region49
    $region48: #{tpu_custom_call.1} parent=1 // pred_region
      %114 = dma.done [#allocation10], 16384
    $region49: #{tpu_custom_call.1} parent=1 // pred_fallthru
      _
    // Predicated region
    $region50: #{tpu_custom_call.1} parent=1 // pred_check
      _
    $region51: #{tpu_custom_call.1} parent=1 // pred_check_branch
      %116 = sbr.rel (0) target = $region53
    $region52: #{tpu_custom_call.1} parent=1 // pred_region
      %117 = dma.done [#allocation13], 8192
    $region53: #{tpu_custom_call.1} parent=1 // pred_fallthru
      _
    // Predicated region
    $region54: #{tpu_custom_call.1} parent=1 // pred_check
      _
    $region55: #{tpu_custom_call.1} parent=1 // pred_check_branch
      %119 = sbr.rel (0) target = $region57
    $region56: #{tpu_custom_call.1} parent=1 // pred_region
      %120 = dma.done [#allocation5], 16
    $region57: #{tpu_custom_call.1} parent=1 // pred_fallthru
      _
    %121 = sfence
    %v122 = vld [vmem:[#allocation6] sm:$0xff]
    %v123 = vld [vmem:[#allocation6 + $0x8] sm:$0xff]
    %v124 = vld [vmem:[#allocation6 + $0x10] sm:$0xff]
    %v125 = vld [vmem:[#allocation6 + $0x18] sm:$0xff]
    %v126 = vld [vmem:[#allocation6 + $0x20] sm:$0xff]
    %v127 = vld [vmem:[#allocation6 + $0x28] sm:$0xff]
    %v128 = vld [vmem:[#allocation6 + $0x30] sm:$0xff]
    %v129 = vld [vmem:[#allocation6 + $0x38] sm:$0xff]
    %s130 = scalar_lea.vmem [#allocation6], 64
    %v131 = vld [vmem:[%s130] sm:$0xff]
    %v132 = vld [vmem:[%s130 + $0x8] sm:$0xff]
    %v133 = vld [vmem:[%s130 + $0x10] sm:$0xff]
    %v134 = vld [vmem:[%s130 + $0x18] sm:$0xff]
    %v135 = vld [vmem:[%s130 + $0x20] sm:$0xff]
    %v136 = vld [vmem:[%s130 + $0x28] sm:$0xff]
    %v137 = vld [vmem:[%s130 + $0x30] sm:$0xff]
    %v138 = vld [vmem:[%s130 + $0x38] sm:$0xff]
    %s139 = scalar_lea.vmem [#allocation6], 128
    %v140 = vld [vmem:[%s139] sm:$0xff]
    %v141 = vld [vmem:[%s139 + $0x8] sm:$0xff]
    %v142 = vld [vmem:[%s139 + $0x10] sm:$0xff]
    %v143 = vld [vmem:[%s139 + $0x18] sm:$0xff]
    %v144 = vld [vmem:[%s139 + $0x20] sm:$0xff]
    %v145 = vld [vmem:[%s139 + $0x28] sm:$0xff]
    %v146 = vld [vmem:[%s139 + $0x30] sm:$0xff]
    %v147 = vld [vmem:[%s139 + $0x38] sm:$0xff]
    %s148 = scalar_lea.vmem [#allocation6], 192
    %v149 = vld [vmem:[%s148] sm:$0xff]
    %v150 = vld [vmem:[%s148 + $0x8] sm:$0xff]
    %v151 = vld [vmem:[%s148 + $0x10] sm:$0xff]
    %v152 = vld [vmem:[%s148 + $0x18] sm:$0xff]
    %v153 = vld [vmem:[%s148 + $0x20] sm:$0xff]
    %v154 = vld [vmem:[%s148 + $0x28] sm:$0xff]
    %v155 = vld [vmem:[%s148 + $0x30] sm:$0xff]
    %v156 = vld [vmem:[%s148 + $0x38] sm:$0xff]
    %s157 = scalar_lea.vmem [#allocation6], 256
    %v158 = vld [vmem:[%s157] sm:$0xff]
    %v159 = vld [vmem:[%s157 + $0x8] sm:$0xff]
    %v160 = vld [vmem:[%s157 + $0x10] sm:$0xff]
    %v161 = vld [vmem:[%s157 + $0x18] sm:$0xff]
    %v162 = vld [vmem:[%s157 + $0x20] sm:$0xff]
    %v163 = vld [vmem:[%s157 + $0x28] sm:$0xff]
    %v164 = vld [vmem:[%s157 + $0x30] sm:$0xff]
    %v165 = vld [vmem:[%s157 + $0x38] sm:$0xff]
    %s166 = scalar_lea.vmem [#allocation6], 320
    %v167 = vld [vmem:[%s166] sm:$0xff]
    %v168 = vld [vmem:[%s166 + $0x8] sm:$0xff]
    %v169 = vld [vmem:[%s166 + $0x10] sm:$0xff]
    %v170 = vld [vmem:[%s166 + $0x18] sm:$0xff]
    %v171 = vld [vmem:[%s166 + $0x20] sm:$0xff]
    %v172 = vld [vmem:[%s166 + $0x28] sm:$0xff]
    %v173 = vld [vmem:[%s166 + $0x30] sm:$0xff]
    %v174 = vld [vmem:[%s166 + $0x38] sm:$0xff]
    %v175 = vld [vmem:[#allocation8] sm:$0xff]
    %v176 = vld [vmem:[#allocation8 + $0x8] sm:$0xff]
    %v177 = vld [vmem:[#allocation8 + $0x10] sm:$0xff]
    %v178 = vld [vmem:[#allocation8 + $0x18] sm:$0xff]
    %v179 = vld [vmem:[#allocation8 + $0x20] sm:$0xff]
    %v180 = vld [vmem:[#allocation8 + $0x28] sm:$0xff]
    %v181 = vld [vmem:[#allocation8 + $0x30] sm:$0xff]
    %v182 = vld [vmem:[#allocation8 + $0x38] sm:$0xff]
    %v183 = vld [vmem:[#allocation8 + $0x40] sm:$0xff]
    %v184 = vld [vmem:[#allocation8 + $0x48] sm:$0xff]
    %v185 = vld [vmem:[#allocation8 + $0x50] sm:$0xff]
    %v186 = vld [vmem:[#allocation8 + $0x58] sm:$0xff]
    %v187 = vld [vmem:[#allocation8 + $0x60] sm:$0xff]
    %v188 = vld [vmem:[#allocation8 + $0x68] sm:$0xff]
    %v189 = vld [vmem:[#allocation8 + $0x70] sm:$0xff]
    %v190 = vld [vmem:[#allocation8 + $0x78] sm:$0xff]
    %v191 = vld [vmem:[#allocation8 + $0x80] sm:$0xff]
    %v192 = vld [vmem:[#allocation8 + $0x88] sm:$0xff]
    %v193 = vld [vmem:[#allocation8 + $0x90] sm:$0xff]
    %v194 = vld [vmem:[#allocation8 + $0x98] sm:$0xff]
    %v195 = vld [vmem:[#allocation8 + $0xa0] sm:$0xff]
    %v196 = vld [vmem:[#allocation8 + $0xa8] sm:$0xff]
    %v197 = vld [vmem:[#allocation8 + $0xb0] sm:$0xff]
    %v198 = vld [vmem:[#allocation8 + $0xb8] sm:$0xff]
    %v199 = vld [vmem:[#allocation8 + $0xc0] sm:$0xff]
    %v200 = vld [vmem:[#allocation8 + $0xc8] sm:$0xff]
    %v201 = vld [vmem:[#allocation8 + $0xd0] sm:$0xff]
    %v202 = vld [vmem:[#allocation8 + $0xd8] sm:$0xff]
    %v203 = vld [vmem:[#allocation8 + $0xe0] sm:$0xff]
    %v204 = vld [vmem:[#allocation8 + $0xe8] sm:$0xff]
    %v205 = vld [vmem:[#allocation8 + $0xf0] sm:$0xff]
    %v206 = vld [vmem:[#allocation8 + $0xf8] sm:$0xff]
    %v207 = vld [vmem:[#allocation8 + $0x100] sm:$0xff]
    %v208 = vld [vmem:[#allocation8 + $0x108] sm:$0xff]
    %v209 = vld [vmem:[#allocation8 + $0x110] sm:$0xff]
    %v210 = vld [vmem:[#allocation8 + $0x118] sm:$0xff]
    %v211 = vld [vmem:[#allocation8 + $0x120] sm:$0xff]
    %v212 = vld [vmem:[#allocation8 + $0x128] sm:$0xff]
    %v213 = vld [vmem:[#allocation8 + $0x130] sm:$0xff]
    %v214 = vld [vmem:[#allocation8 + $0x138] sm:$0xff]
    %v215 = vld [vmem:[#allocation8 + $0x140] sm:$0xff]
    %v216 = vld [vmem:[#allocation8 + $0x148] sm:$0xff]
    %v217 = vld [vmem:[#allocation8 + $0x150] sm:$0xff]
    %v218 = vld [vmem:[#allocation8 + $0x158] sm:$0xff]
    %v219 = vld [vmem:[#allocation8 + $0x160] sm:$0xff]
    %v220 = vld [vmem:[#allocation8 + $0x168] sm:$0xff]
    %v221 = vld [vmem:[#allocation8 + $0x170] sm:$0xff]
    %v222 = vld [vmem:[#allocation8 + $0x178] sm:$0xff]
    %v223 = vld [vmem:[#allocation8 + $0x180] sm:$0xff]
    %v224 = vld [vmem:[#allocation8 + $0x188] sm:$0xff]
    %v225 = vld [vmem:[#allocation8 + $0x190] sm:$0xff]
    %v226 = vld [vmem:[#allocation8 + $0x198] sm:$0xff]
    %v227 = vld [vmem:[#allocation8 + $0x1a0] sm:$0xff]
    %v228 = vld [vmem:[#allocation8 + $0x1a8] sm:$0xff]
    %v229 = vld [vmem:[#allocation8 + $0x1b0] sm:$0xff]
    %v230 = vld [vmem:[#allocation8 + $0x1b8] sm:$0xff]
    %v231 = vld [vmem:[#allocation8 + $0x1c0] sm:$0xff]
    %v232 = vld [vmem:[#allocation8 + $0x1c8] sm:$0xff]
    %v233 = vld [vmem:[#allocation8 + $0x1d0] sm:$0xff]
    %v234 = vld [vmem:[#allocation8 + $0x1d8] sm:$0xff]
    %v235 = vld [vmem:[#allocation8 + $0x1e0] sm:$0xff]
    %v236 = vld [vmem:[#allocation8 + $0x1e8] sm:$0xff]
    %v237 = vld [vmem:[#allocation8 + $0x1f0] sm:$0xff]
    %v238 = vld [vmem:[#allocation8 + $0x1f8] sm:$0xff]
    %s239 = scalar_lea.vmem [#allocation8], 512
    %v240 = vld [vmem:[%s239] sm:$0xff]
    %v241 = vld [vmem:[%s239 + $0x8] sm:$0xff]
    %v242 = vld [vmem:[%s239 + $0x10] sm:$0xff]
    %v243 = vld [vmem:[%s239 + $0x18] sm:$0xff]
    %v244 = vld [vmem:[%s239 + $0x20] sm:$0xff]
    %v245 = vld [vmem:[%s239 + $0x28] sm:$0xff]
    %v246 = vld [vmem:[%s239 + $0x30] sm:$0xff]
    %v247 = vld [vmem:[%s239 + $0x38] sm:$0xff]
    %v248 = vld [vmem:[%s239 + $0x40] sm:$0xff]
    %v249 = vld [vmem:[%s239 + $0x48] sm:$0xff]
    %v250 = vld [vmem:[%s239 + $0x50] sm:$0xff]
    %v251 = vld [vmem:[%s239 + $0x58] sm:$0xff]
    %v252 = vld [vmem:[%s239 + $0x60] sm:$0xff]
    %v253 = vld [vmem:[%s239 + $0x68] sm:$0xff]
    %v254 = vld [vmem:[%s239 + $0x70] sm:$0xff]
    %v255 = vld [vmem:[%s239 + $0x78] sm:$0xff]
    %v256 = vld [vmem:[%s239 + $0x80] sm:$0xff]
    %v257 = vld [vmem:[%s239 + $0x88] sm:$0xff]
    %v258 = vld [vmem:[%s239 + $0x90] sm:$0xff]
    %v259 = vld [vmem:[%s239 + $0x98] sm:$0xff]
    %v260 = vld [vmem:[%s239 + $0xa0] sm:$0xff]
    %v261 = vld [vmem:[%s239 + $0xa8] sm:$0xff]
    %v262 = vld [vmem:[%s239 + $0xb0] sm:$0xff]
    %v263 = vld [vmem:[%s239 + $0xb8] sm:$0xff]
    %v264 = vld [vmem:[%s239 + $0xc0] sm:$0xff]
    %v265 = vld [vmem:[%s239 + $0xc8] sm:$0xff]
    %v266 = vld [vmem:[%s239 + $0xd0] sm:$0xff]
    %v267 = vld [vmem:[%s239 + $0xd8] sm:$0xff]
    %v268 = vld [vmem:[%s239 + $0xe0] sm:$0xff]
    %v269 = vld [vmem:[%s239 + $0xe8] sm:$0xff]
    %v270 = vld [vmem:[%s239 + $0xf0] sm:$0xff]
    %v271 = vld [vmem:[%s239 + $0xf8] sm:$0xff]
    %v272 = vld [vmem:[%s239 + $0x100] sm:$0xff]
    %v273 = vld [vmem:[%s239 + $0x108] sm:$0xff]
    %v274 = vld [vmem:[%s239 + $0x110] sm:$0xff]
    %v275 = vld [vmem:[%s239 + $0x118] sm:$0xff]
    %v276 = vld [vmem:[%s239 + $0x120] sm:$0xff]
    %v277 = vld [vmem:[%s239 + $0x128] sm:$0xff]
    %v278 = vld [vmem:[%s239 + $0x130] sm:$0xff]
    %v279 = vld [vmem:[%s239 + $0x138] sm:$0xff]
    %v280 = vld [vmem:[%s239 + $0x140] sm:$0xff]
    %v281 = vld [vmem:[%s239 + $0x148] sm:$0xff]
    %v282 = vld [vmem:[%s239 + $0x150] sm:$0xff]
    %v283 = vld [vmem:[%s239 + $0x158] sm:$0xff]
    %v284 = vld [vmem:[%s239 + $0x160] sm:$0xff]
    %v285 = vld [vmem:[%s239 + $0x168] sm:$0xff]
    %v286 = vld [vmem:[%s239 + $0x170] sm:$0xff]
    %v287 = vld [vmem:[%s239 + $0x178] sm:$0xff]
    %v288 = vld [vmem:[%s239 + $0x180] sm:$0xff]
    %v289 = vld [vmem:[%s239 + $0x188] sm:$0xff]
    %v290 = vld [vmem:[%s239 + $0x190] sm:$0xff]
    %v291 = vld [vmem:[%s239 + $0x198] sm:$0xff]
    %v292 = vld [vmem:[%s239 + $0x1a0] sm:$0xff]
    %v293 = vld [vmem:[%s239 + $0x1a8] sm:$0xff]
    %v294 = vld [vmem:[%s239 + $0x1b0] sm:$0xff]
    %v295 = vld [vmem:[%s239 + $0x1b8] sm:$0xff]
    %v296 = vld [vmem:[%s239 + $0x1c0] sm:$0xff]
    %v297 = vld [vmem:[%s239 + $0x1c8] sm:$0xff]
    %v298 = vld [vmem:[%s239 + $0x1d0] sm:$0xff]
    %v299 = vld [vmem:[%s239 + $0x1d8] sm:$0xff]
    %v300 = vld [vmem:[%s239 + $0x1e0] sm:$0xff]
    %v301 = vld [vmem:[%s239 + $0x1e8] sm:$0xff]
    %v302 = vld [vmem:[%s239 + $0x1f0] sm:$0xff]
    %v303 = vld [vmem:[%s239 + $0x1f8] sm:$0xff]
    %v304 = vld [vmem:[#allocation2] sm:$0xff]
    %v305 = vld [vmem:[#allocation2 + $0x8] sm:$0xff]
    %v306 = vld [vmem:[#allocation2 + $0x10] sm:$0xff]
    %v307 = vld [vmem:[#allocation2 + $0x18] sm:$0xff]
    %v308 = vld [vmem:[#allocation2 + $0x20] sm:$0xff]
    %v309 = vld [vmem:[#allocation2 + $0x28] sm:$0xff]
    %v310 = vld [vmem:[#allocation2 + $0x30] sm:$0xff]
    %v311 = vld [vmem:[#allocation2 + $0x38] sm:$0xff]
    %vm312 = vcmask 523264
    %v314 = vsel %vm312, %v122, 0
    %v317 = vsel %vm312, %v123, 0
    %v320 = vsel %vm312, %v124, 0
    %v323 = vsel %vm312, %v125, 0
    %v326 = vsel %vm312, %v126, 0
    %v329 = vsel %vm312, %v127, 0
    %v332 = vsel %vm312, %v128, 0
    %v335 = vsel %vm312, %v129, 0
    %337 = vmatprep.subr.mxu0 0.0
    %338 = vmatpush1.msra.mxu0 0.0
    %339 = vmatprep.subr.mxu0 0.0
    %340 = vmatpush1.msra.mxu0 0.0
    %341 = vmatprep.subr.mxu0 0.0
    %342 = vmatpush1.msra.mxu0 0.0
    %343 = vmatprep.subr.mxu0 0.0
    %344 = vmatpush1.msra.mxu0 0.0
    %345 = vmatprep.subr.mxu0 0.0
    %346 = vmatpush1.msra.mxu0 0.0
    %347 = vmatprep.subr.mxu0 0.0
    %348 = vmatpush1.msra.mxu0 0.0
    %349 = vmatprep.subr.mxu0 0.0
    %350 = vmatpush1.msra.mxu0 0.0
    %351 = vmatprep.subr.mxu0 0.0
    %352 = vmatpush1.msra.mxu0 0.0
    %353 = vmatprep.subr.mxu0 0.0
    %354 = vmatpush1.msra.mxu0 %v311
    %355 = vmatprep.subr.mxu0 0.0
    %356 = vmatpush1.msra.mxu0 %v310
    %357 = vmatprep.subr.mxu0 0.0
    %358 = vmatpush1.msra.mxu0 %v309
    %359 = vmatprep.subr.mxu0 0.0
    %360 = vmatpush1.msra.mxu0 %v308
    %361 = vmatprep.subr.mxu0 0.0
    %362 = vmatpush1.msra.mxu0 %v307
    %363 = vmatprep.subr.mxu0 0.0
    %364 = vmatpush1.msra.mxu0 %v306
    %365 = vmatprep.subr.mxu0 0.0
    %366 = vmatpush1.msra.mxu0 %v305
    %367 = vmatprep.subr.mxu0 0.0
    %368 = vmatpush1.msra.mxu0 %v304
    %369 = vmatprep.subr.mxu0 0.0
    %370 = vmatpush2.msra.mxu0 0.0
    %371 = vmatprep.subr.mxu0 0.0
    %372 = vmatpush2.msra.mxu0 0.0
    %373 = vmatprep.subr.mxu0 0.0
    %374 = vmatpush2.msra.mxu0 0.0
    %375 = vmatprep.subr.mxu0 0.0
    %376 = vmatpush2.msra.mxu0 0.0
    %377 = vmatprep.subr.mxu0 0.0
    %378 = vmatpush2.msra.mxu0 0.0
    %379 = vmatprep.subr.mxu0 0.0
    %380 = vmatpush2.msra.mxu0 0.0
    %381 = vmatprep.subr.mxu0 0.0
    %382 = vmatpush2.msra.mxu0 0.0
    %383 = vmatprep.subr.mxu0 0.0
    %384 = vmatpush2.msra.mxu0 0.0
    %385 = vmatprep.subr.mxu0 0.0
    %386 = vmatpush2.msra.mxu0 0.0
    %387 = vmatprep.subr.mxu0 0.0
    %388 = vmatpush2.msra.mxu0 0.0
    %389 = vmatprep.subr.mxu0 0.0
    %390 = vmatpush2.msra.mxu0 0.0
    %391 = vmatprep.subr.mxu0 0.0
    %392 = vmatpush2.msra.mxu0 0.0
    %393 = vmatprep.subr.mxu0 0.0
    %394 = vmatpush2.msra.mxu0 0.0
    %395 = vmatprep.subr.mxu0 0.0
    %396 = vmatpush2.msra.mxu0 0.0
    %397 = vmatprep.subr.mxu0 0.0
    %398 = vmatpush2.msra.mxu0 0.0
    %399 = vmatprep.subr.mxu0 0.0
    %400 = vmatpush2.msra.mxu0 0.0
    %401 = vmatprep.mubr.f32.mxu0 0.0
    %402 = vmatmul.mubr.f32.gmra.mxu0 %v314
    %v403 = vpop.f32.mrf.mxu0
    %v404 = vadd.f32 0.0, %v403
    %v405 = vpop.f32.mrf.mxu0
    %406 = vmatprep.mubr.f32.mxu0 0.0
    %407 = vmatmul.mubr.f32.gmra.mxu0 %v317
    %v408 = vpop.f32.mrf.mxu0
    %v409 = vadd.f32 0.0, %v408
    %v410 = vpop.f32.mrf.mxu0
    %411 = vmatprep.mubr.f32.mxu0 0.0
    %412 = vmatmul.mubr.f32.gmra.mxu0 %v320
    %v413 = vpop.f32.mrf.mxu0
    %v414 = vadd.f32 0.0, %v413
    %v415 = vpop.f32.mrf.mxu0
    %416 = vmatprep.mubr.f32.mxu0 0.0
    %417 = vmatmul.mubr.f32.gmra.mxu0 %v323
    %v418 = vpop.f32.mrf.mxu0
    %v419 = vadd.f32 0.0, %v418
    %v420 = vpop.f32.mrf.mxu0
    %421 = vmatprep.mubr.f32.mxu0 0.0
    %422 = vmatmul.mubr.f32.gmra.mxu0 %v326
    %v423 = vpop.f32.mrf.mxu0
    %v424 = vadd.f32 0.0, %v423
    %v425 = vpop.f32.mrf.mxu0
    %426 = vmatprep.mubr.f32.mxu0 0.0
    %427 = vmatmul.mubr.f32.gmra.mxu0 %v329
    %v428 = vpop.f32.mrf.mxu0
    %v429 = vadd.f32 0.0, %v428
    %v430 = vpop.f32.mrf.mxu0
    %431 = vmatprep.mubr.f32.mxu0 0.0
    %432 = vmatmul.mubr.f32.gmra.mxu0 %v332
    %v433 = vpop.f32.mrf.mxu0
    %v434 = vadd.f32 0.0, %v433
    %v435 = vpop.f32.mrf.mxu0
    %436 = vmatprep.mubr.f32.mxu0 0.0
    %437 = vmatmul.mubr.f32.gmra.mxu0 %v335
    %v438 = vpop.f32.mrf.mxu0
    %v439 = vadd.f32 0.0, %v438
    %v440 = vpop.f32.mrf.mxu0
    %441 = vdwg.mxu0
    %v443 = vsel %vm312, %v140, 0
    %v446 = vsel %vm312, %v141, 0
    %v449 = vsel %vm312, %v142, 0
    %v452 = vsel %vm312, %v143, 0
    %v455 = vsel %vm312, %v144, 0
    %v458 = vsel %vm312, %v145, 0
    %v461 = vsel %vm312, %v146, 0
    %v464 = vsel %vm312, %v147, 0
    %466 = vmatprep.subr.mxu0 0.0
    %467 = vmatpush1.msra.mxu0 0.0
    %468 = vmatprep.subr.mxu0 0.0
    %469 = vmatpush1.msra.mxu0 0.0
    %470 = vmatprep.subr.mxu0 0.0
    %471 = vmatpush1.msra.mxu0 0.0
    %472 = vmatprep.subr.mxu0 0.0
    %473 = vmatpush1.msra.mxu0 0.0
    %474 = vmatprep.subr.mxu0 0.0
    %475 = vmatpush1.msra.mxu0 0.0
    %476 = vmatprep.subr.mxu0 0.0
    %477 = vmatpush1.msra.mxu0 0.0
    %478 = vmatprep.subr.mxu0 0.0
    %479 = vmatpush1.msra.mxu0 0.0
    %480 = vmatprep.subr.mxu0 0.0
    %481 = vmatpush1.msra.mxu0 0.0
    %482 = vmatprep.subr.mxu0 0.0
    %483 = vmatpush1.msra.mxu0 %v311
    %484 = vmatprep.subr.mxu0 0.0
    %485 = vmatpush1.msra.mxu0 %v310
    %486 = vmatprep.subr.mxu0 0.0
    %487 = vmatpush1.msra.mxu0 %v309
    %488 = vmatprep.subr.mxu0 0.0
    %489 = vmatpush1.msra.mxu0 %v308
    %490 = vmatprep.subr.mxu0 0.0
    %491 = vmatpush1.msra.mxu0 %v307
    %492 = vmatprep.subr.mxu0 0.0
    %493 = vmatpush1.msra.mxu0 %v306
    %494 = vmatprep.subr.mxu0 0.0
    %495 = vmatpush1.msra.mxu0 %v305
    %496 = vmatprep.subr.mxu0 0.0
    %497 = vmatpush1.msra.mxu0 %v304
    %498 = vmatprep.subr.mxu0 0.0
    %499 = vmatpush2.msra.mxu0 0.0
    %500 = vmatprep.subr.mxu0 0.0
    %501 = vmatpush2.msra.mxu0 0.0
    %502 = vmatprep.subr.mxu0 0.0
    %503 = vmatpush2.msra.mxu0 0.0
    %504 = vmatprep.subr.mxu0 0.0
    %505 = vmatpush2.msra.mxu0 0.0
    %506 = vmatprep.subr.mxu0 0.0
    %507 = vmatpush2.msra.mxu0 0.0
    %508 = vmatprep.subr.mxu0 0.0
    %509 = vmatpush2.msra.mxu0 0.0
    %510 = vmatprep.subr.mxu0 0.0
    %511 = vmatpush2.msra.mxu0 0.0
    %512 = vmatprep.subr.mxu0 0.0
    %513 = vmatpush2.msra.mxu0 0.0
    %514 = vmatprep.subr.mxu0 0.0
    %515 = vmatpush2.msra.mxu0 0.0
    %516 = vmatprep.subr.mxu0 0.0
    %517 = vmatpush2.msra.mxu0 0.0
    %518 = vmatprep.subr.mxu0 0.0
    %519 = vmatpush2.msra.mxu0 0.0
    %520 = vmatprep.subr.mxu0 0.0
    %521 = vmatpush2.msra.mxu0 0.0
    %522 = vmatprep.subr.mxu0 0.0
    %523 = vmatpush2.msra.mxu0 0.0
    %524 = vmatprep.subr.mxu0 0.0
    %525 = vmatpush2.msra.mxu0 0.0
    %526 = vmatprep.subr.mxu0 0.0
    %527 = vmatpush2.msra.mxu0 0.0
    %528 = vmatprep.subr.mxu0 0.0
    %529 = vmatpush2.msra.mxu0 0.0
    %530 = vmatprep.mubr.f32.mxu0 0.0
    %531 = vmatmul.mubr.f32.gmra.mxu0 %v443
    %v532 = vpop.f32.mrf.mxu0
    %v533 = vadd.f32 0.0, %v532
    %v534 = vpop.f32.mrf.mxu0
    %535 = vmatprep.mubr.f32.mxu0 0.0
    %536 = vmatmul.mubr.f32.gmra.mxu0 %v446
    %v537 = vpop.f32.mrf.mxu0
    %v538 = vadd.f32 0.0, %v537
    %v539 = vpop.f32.mrf.mxu0
    %540 = vmatprep.mubr.f32.mxu0 0.0
    %541 = vmatmul.mubr.f32.gmra.mxu0 %v449
    %v542 = vpop.f32.mrf.mxu0
    %v543 = vadd.f32 0.0, %v542
    %v544 = vpop.f32.mrf.mxu0
    %545 = vmatprep.mubr.f32.mxu0 0.0
    %546 = vmatmul.mubr.f32.gmra.mxu0 %v452
    %v547 = vpop.f32.mrf.mxu0
    %v548 = vadd.f32 0.0, %v547
    %v549 = vpop.f32.mrf.mxu0
    %550 = vmatprep.mubr.f32.mxu0 0.0
    %551 = vmatmul.mubr.f32.gmra.mxu0 %v455
    %v552 = vpop.f32.mrf.mxu0
    %v553 = vadd.f32 0.0, %v552
    %v554 = vpop.f32.mrf.mxu0
    %555 = vmatprep.mubr.f32.mxu0 0.0
    %556 = vmatmul.mubr.f32.gmra.mxu0 %v458
    %v557 = vpop.f32.mrf.mxu0
    %v558 = vadd.f32 0.0, %v557
    %v559 = vpop.f32.mrf.mxu0
    %560 = vmatprep.mubr.f32.mxu0 0.0
    %561 = vmatmul.mubr.f32.gmra.mxu0 %v461
    %v562 = vpop.f32.mrf.mxu0
    %v563 = vadd.f32 0.0, %v562
    %v564 = vpop.f32.mrf.mxu0
    %565 = vmatprep.mubr.f32.mxu0 0.0
    %566 = vmatmul.mubr.f32.gmra.mxu0 %v464
    %v567 = vpop.f32.mrf.mxu0
    %v568 = vadd.f32 0.0, %v567
    %v569 = vpop.f32.mrf.mxu0
    %570 = vdwg.mxu0
    %v571 = vadd.f32 %v404, %v533
    %v572 = vadd.f32 %v409, %v538
    %v573 = vadd.f32 %v414, %v543
    %v574 = vadd.f32 %v419, %v548
    %v575 = vadd.f32 %v424, %v553
    %v576 = vadd.f32 %v429, %v558
    %v577 = vadd.f32 %v434, %v563
    %v578 = vadd.f32 %v439, %v568
    %579 = vmatprep.subr.mxu0 %v206
    %580 = vmatpush1.msra.mxu0 %v205
    %581 = vmatprep.subr.mxu0 %v204
    %582 = vmatpush1.msra.mxu0 %v203
    %583 = vmatprep.subr.mxu0 %v202
    %584 = vmatpush1.msra.mxu0 %v201
    %585 = vmatprep.subr.mxu0 %v200
    %586 = vmatpush1.msra.mxu0 %v199
    %587 = vmatprep.subr.mxu0 %v198
    %588 = vmatpush1.msra.mxu0 %v197
    %589 = vmatprep.subr.mxu0 %v196
    %590 = vmatpush1.msra.mxu0 %v195
    %591 = vmatprep.subr.mxu0 %v194
    %592 = vmatpush1.msra.mxu0 %v193
    %593 = vmatprep.subr.mxu0 %v192
    %594 = vmatpush1.msra.mxu0 %v191
    %595 = vmatprep.subr.mxu0 %v190
    %596 = vmatpush1.msra.mxu0 %v189
    %597 = vmatprep.subr.mxu0 %v188
    %598 = vmatpush1.msra.mxu0 %v187
    %599 = vmatprep.subr.mxu0 %v186
    %600 = vmatpush1.msra.mxu0 %v185
    %601 = vmatprep.subr.mxu0 %v184
    %602 = vmatpush1.msra.mxu0 %v183
    %603 = vmatprep.subr.mxu0 %v182
    %604 = vmatpush1.msra.mxu0 %v181
    %605 = vmatprep.subr.mxu0 %v180
    %606 = vmatpush1.msra.mxu0 %v179
    %607 = vmatprep.subr.mxu0 %v178
    %608 = vmatpush1.msra.mxu0 %v177
    %609 = vmatprep.subr.mxu0 %v176
    %610 = vmatpush1.msra.mxu0 %v175
    %611 = vmatprep.subr.mxu0 %v238
    %612 = vmatpush2.msra.mxu0 %v237
    %613 = vmatprep.subr.mxu0 %v236
    %614 = vmatpush2.msra.mxu0 %v235
    %615 = vmatprep.subr.mxu0 %v234
    %616 = vmatpush2.msra.mxu0 %v233
    %617 = vmatprep.subr.mxu0 %v232
    %618 = vmatpush2.msra.mxu0 %v231
    %619 = vmatprep.subr.mxu0 %v230
    %620 = vmatpush2.msra.mxu0 %v229
    %621 = vmatprep.subr.mxu0 %v228
    %622 = vmatpush2.msra.mxu0 %v227
    %623 = vmatprep.subr.mxu0 %v226
    %624 = vmatpush2.msra.mxu0 %v225
    %625 = vmatprep.subr.mxu0 %v224
    %626 = vmatpush2.msra.mxu0 %v223
    %627 = vmatprep.subr.mxu0 %v222
    %628 = vmatpush2.msra.mxu0 %v221
    %629 = vmatprep.subr.mxu0 %v220
    %630 = vmatpush2.msra.mxu0 %v219
    %631 = vmatprep.subr.mxu0 %v218
    %632 = vmatpush2.msra.mxu0 %v217
    %633 = vmatprep.subr.mxu0 %v216
    %634 = vmatpush2.msra.mxu0 %v215
    %635 = vmatprep.subr.mxu0 %v214
    %636 = vmatpush2.msra.mxu0 %v213
    %637 = vmatprep.subr.mxu0 %v212
    %638 = vmatpush2.msra.mxu0 %v211
    %639 = vmatprep.subr.mxu0 %v210
    %640 = vmatpush2.msra.mxu0 %v209
    %641 = vmatprep.subr.mxu0 %v208
    %642 = vmatpush2.msra.mxu0 %v207
    %643 = vmatprep.mubr.f32.mxu0 %v571
    %644 = vmatmul.mubr.f32.gmra.mxu0 %v404
    %v645 = vpop.f32.mrf.mxu0
    %v646 = vadd.f32 0.0, %v645
    %v647 = vpop.f32.mrf.mxu0
    %v648 = vadd.f32 0.0, %v647
    %649 = vmatprep.mubr.f32.mxu0 %v572
    %650 = vmatmul.mubr.f32.gmra.mxu0 %v409
    %v651 = vpop.f32.mrf.mxu0
    %v652 = vadd.f32 0.0, %v651
    %v653 = vpop.f32.mrf.mxu0
    %v654 = vadd.f32 0.0, %v653
    %655 = vmatprep.mubr.f32.mxu0 %v573
    %656 = vmatmul.mubr.f32.gmra.mxu0 %v414
    %v657 = vpop.f32.mrf.mxu0
    %v658 = vadd.f32 0.0, %v657
    %v659 = vpop.f32.mrf.mxu0
    %v660 = vadd.f32 0.0, %v659
    %661 = vmatprep.mubr.f32.mxu0 %v574
    %662 = vmatmul.mubr.f32.gmra.mxu0 %v419
    %v663 = vpop.f32.mrf.mxu0
    %v664 = vadd.f32 0.0, %v663
    %v665 = vpop.f32.mrf.mxu0
    %v666 = vadd.f32 0.0, %v665
    %667 = vmatprep.mubr.f32.mxu0 %v575
    %668 = vmatmul.mubr.f32.gmra.mxu0 %v424
    %v669 = vpop.f32.mrf.mxu0
    %v670 = vadd.f32 0.0, %v669
    %v671 = vpop.f32.mrf.mxu0
    %v672 = vadd.f32 0.0, %v671
    %673 = vmatprep.mubr.f32.mxu0 %v576
    %674 = vmatmul.mubr.f32.gmra.mxu0 %v429
    %v675 = vpop.f32.mrf.mxu0
    %v676 = vadd.f32 0.0, %v675
    %v677 = vpop.f32.mrf.mxu0
    %v678 = vadd.f32 0.0, %v677
    %679 = vmatprep.mubr.f32.mxu0 %v577
    %680 = vmatmul.mubr.f32.gmra.mxu0 %v434
    %v681 = vpop.f32.mrf.mxu0
    %v682 = vadd.f32 0.0, %v681
    %v683 = vpop.f32.mrf.mxu0
    %v684 = vadd.f32 0.0, %v683
    %685 = vmatprep.mubr.f32.mxu0 %v578
    %686 = vmatmul.mubr.f32.gmra.mxu0 %v439
    %v687 = vpop.f32.mrf.mxu0
    %v688 = vadd.f32 0.0, %v687
    %v689 = vpop.f32.mrf.mxu0
    %v690 = vadd.f32 0.0, %v689
    %691 = vdwg.mxu0
    %v692 = vld [vmem:[#allocation9] sm:$0xff]
    %v693 = vld [vmem:[#allocation9 + $0x8] sm:$0xff]
    %v694 = vld [vmem:[#allocation9 + $0x10] sm:$0xff]
    %v695 = vld [vmem:[#allocation9 + $0x18] sm:$0xff]
    %v696 = vld [vmem:[#allocation9 + $0x20] sm:$0xff]
    %v697 = vld [vmem:[#allocation9 + $0x28] sm:$0xff]
    %v698 = vld [vmem:[#allocation9 + $0x30] sm:$0xff]
    %v699 = vld [vmem:[#allocation9 + $0x38] sm:$0xff]
    %s700 = scalar_lea.vmem [#allocation9], 64
    %v701 = vld [vmem:[%s700] sm:$0xff]
    %v702 = vld [vmem:[%s700 + $0x8] sm:$0xff]
    %v703 = vld [vmem:[%s700 + $0x10] sm:$0xff]
    %v704 = vld [vmem:[%s700 + $0x18] sm:$0xff]
    %v705 = vld [vmem:[%s700 + $0x20] sm:$0xff]
    %v706 = vld [vmem:[%s700 + $0x28] sm:$0xff]
    %v707 = vld [vmem:[%s700 + $0x30] sm:$0xff]
    %v708 = vld [vmem:[%s700 + $0x38] sm:$0xff]
    %v709 = vmul.f32 %v646, %v692
    %v710 = vmul.f32 %v652, %v693
    %v711 = vmul.f32 %v658, %v694
    %v712 = vmul.f32 %v664, %v695
    %v713 = vmul.f32 %v670, %v696
    %v714 = vmul.f32 %v676, %v697
    %v715 = vmul.f32 %v682, %v698
    %v716 = vmul.f32 %v688, %v699
    %v717 = vmul.f32 %v648, %v701
    %v718 = vmul.f32 %v654, %v702
    %v719 = vmul.f32 %v660, %v703
    %v720 = vmul.f32 %v666, %v704
    %v721 = vmul.f32 %v672, %v705
    %v722 = vmul.f32 %v678, %v706
    %v723 = vmul.f32 %v684, %v707
    %v724 = vmul.f32 %v690, %v708
    %v725 = vsub.f32 %v709, %v717
    %v726 = vsub.f32 %v710, %v718
    %v727 = vsub.f32 %v711, %v719
    %v728 = vsub.f32 %v712, %v720
    %v729 = vsub.f32 %v713, %v721
    %v730 = vsub.f32 %v714, %v722
    %v731 = vsub.f32 %v715, %v723
    %v732 = vsub.f32 %v716, %v724
    %v733 = vmul.f32 %v646, %v701
    %v734 = vmul.f32 %v652, %v702
    %v735 = vmul.f32 %v658, %v703
    %v736 = vmul.f32 %v664, %v704
    %v737 = vmul.f32 %v670, %v705
    %v738 = vmul.f32 %v676, %v706
    %v739 = vmul.f32 %v682, %v707
    %v740 = vmul.f32 %v688, %v708
    %v741 = vmul.f32 %v648, %v692
    %v742 = vmul.f32 %v654, %v693
    %v743 = vmul.f32 %v660, %v694
    %v744 = vmul.f32 %v666, %v695
    %v745 = vmul.f32 %v672, %v696
    %v746 = vmul.f32 %v678, %v697
    %v747 = vmul.f32 %v684, %v698
    %v748 = vmul.f32 %v690, %v699
    %v749 = vadd.f32 %v733, %v741
    %v750 = vadd.f32 %v734, %v742
    %v751 = vadd.f32 %v735, %v743
    %v752 = vadd.f32 %v736, %v744
    %v753 = vadd.f32 %v737, %v745
    %v754 = vadd.f32 %v738, %v746
    %v755 = vadd.f32 %v739, %v747
    %v756 = vadd.f32 %v740, %v748
    %v757 = vadd.f32 %v725, %v749
    %v758 = vadd.f32 %v726, %v750
    %v759 = vadd.f32 %v727, %v751
    %v760 = vadd.f32 %v728, %v752
    %v761 = vadd.f32 %v729, %v753
    %v762 = vadd.f32 %v730, %v754
    %v763 = vadd.f32 %v731, %v755
    %v764 = vadd.f32 %v732, %v756
    %v766 = vsel %vm312, %v149, 0
    %v769 = vsel %vm312, %v150, 0
    %v772 = vsel %vm312, %v151, 0
    %v775 = vsel %vm312, %v152, 0
    %v778 = vsel %vm312, %v153, 0
    %v781 = vsel %vm312, %v154, 0
    %v784 = vsel %vm312, %v155, 0
    %v787 = vsel %vm312, %v156, 0
    %789 = vmatprep.subr.mxu0 0.0
    %790 = vmatpush1.msra.mxu0 0.0
    %791 = vmatprep.subr.mxu0 0.0
    %792 = vmatpush1.msra.mxu0 0.0
    %793 = vmatprep.subr.mxu0 0.0
    %794 = vmatpush1.msra.mxu0 0.0
    %795 = vmatprep.subr.mxu0 0.0
    %796 = vmatpush1.msra.mxu0 0.0
    %797 = vmatprep.subr.mxu0 0.0
    %798 = vmatpush1.msra.mxu0 0.0
    %799 = vmatprep.subr.mxu0 0.0
    %800 = vmatpush1.msra.mxu0 0.0
    %801 = vmatprep.subr.mxu0 0.0
    %802 = vmatpush1.msra.mxu0 0.0
    %803 = vmatprep.subr.mxu0 0.0
    %804 = vmatpush1.msra.mxu0 0.0
    %805 = vmatprep.subr.mxu0 0.0
    %806 = vmatpush1.msra.mxu0 %v764
    %807 = vmatprep.subr.mxu0 0.0
    %808 = vmatpush1.msra.mxu0 %v763
    %809 = vmatprep.subr.mxu0 0.0
    %810 = vmatpush1.msra.mxu0 %v762
    %811 = vmatprep.subr.mxu0 0.0
    %812 = vmatpush1.msra.mxu0 %v761
    %813 = vmatprep.subr.mxu0 0.0
    %814 = vmatpush1.msra.mxu0 %v760
    %815 = vmatprep.subr.mxu0 0.0
    %816 = vmatpush1.msra.mxu0 %v759
    %817 = vmatprep.subr.mxu0 0.0
    %818 = vmatpush1.msra.mxu0 %v758
    %819 = vmatprep.subr.mxu0 0.0
    %820 = vmatpush1.msra.mxu0 %v757
    %821 = vmatprep.subr.mxu0 0.0
    %822 = vmatpush2.msra.mxu0 0.0
    %823 = vmatprep.subr.mxu0 0.0
    %824 = vmatpush2.msra.mxu0 0.0
    %825 = vmatprep.subr.mxu0 0.0
    %826 = vmatpush2.msra.mxu0 0.0
    %827 = vmatprep.subr.mxu0 0.0
    %828 = vmatpush2.msra.mxu0 0.0
    %829 = vmatprep.subr.mxu0 0.0
    %830 = vmatpush2.msra.mxu0 0.0
    %831 = vmatprep.subr.mxu0 0.0
    %832 = vmatpush2.msra.mxu0 0.0
    %833 = vmatprep.subr.mxu0 0.0
    %834 = vmatpush2.msra.mxu0 0.0
    %835 = vmatprep.subr.mxu0 0.0
    %836 = vmatpush2.msra.mxu0 0.0
    %837 = vmatprep.subr.mxu0 0.0
    %838 = vmatpush2.msra.mxu0 0.0
    %839 = vmatprep.subr.mxu0 0.0
    %840 = vmatpush2.msra.mxu0 0.0
    %841 = vmatprep.subr.mxu0 0.0
    %842 = vmatpush2.msra.mxu0 0.0
    %843 = vmatprep.subr.mxu0 0.0
    %844 = vmatpush2.msra.mxu0 0.0
    %845 = vmatprep.subr.mxu0 0.0
    %846 = vmatpush2.msra.mxu0 0.0
    %847 = vmatprep.subr.mxu0 0.0
    %848 = vmatpush2.msra.mxu0 0.0
    %849 = vmatprep.subr.mxu0 0.0
    %850 = vmatpush2.msra.mxu0 0.0
    %851 = vmatprep.subr.mxu0 0.0
    %852 = vmatpush2.msra.mxu0 0.0
    %853 = vmatprep.mubr.f32.mxu0 0.0
    %854 = vmatmul.mubr.f32.gmra.mxu0 %v766
    %v855 = vpop.f32.mrf.mxu0
    %v856 = vadd.f32 0.0, %v855
    %v857 = vpop.f32.mrf.mxu0
    %858 = vmatprep.mubr.f32.mxu0 0.0
    %859 = vmatmul.mubr.f32.gmra.mxu0 %v769
    %v860 = vpop.f32.mrf.mxu0
    %v861 = vadd.f32 0.0, %v860
    %v862 = vpop.f32.mrf.mxu0
    %863 = vmatprep.mubr.f32.mxu0 0.0
    %864 = vmatmul.mubr.f32.gmra.mxu0 %v772
    %v865 = vpop.f32.mrf.mxu0
    %v866 = vadd.f32 0.0, %v865
    %v867 = vpop.f32.mrf.mxu0
    %868 = vmatprep.mubr.f32.mxu0 0.0
    %869 = vmatmul.mubr.f32.gmra.mxu0 %v775
    %v870 = vpop.f32.mrf.mxu0
    %v871 = vadd.f32 0.0, %v870
    %v872 = vpop.f32.mrf.mxu0
    %873 = vmatprep.mubr.f32.mxu0 0.0
    %874 = vmatmul.mubr.f32.gmra.mxu0 %v778
    %v875 = vpop.f32.mrf.mxu0
    %v876 = vadd.f32 0.0, %v875
    %v877 = vpop.f32.mrf.mxu0
    %878 = vmatprep.mubr.f32.mxu0 0.0
    %879 = vmatmul.mubr.f32.gmra.mxu0 %v781
    %v880 = vpop.f32.mrf.mxu0
    %v881 = vadd.f32 0.0, %v880
    %v882 = vpop.f32.mrf.mxu0
    %883 = vmatprep.mubr.f32.mxu0 0.0
    %884 = vmatmul.mubr.f32.gmra.mxu0 %v784
    %v885 = vpop.f32.mrf.mxu0
    %v886 = vadd.f32 0.0, %v885
    %v887 = vpop.f32.mrf.mxu0
    %888 = vmatprep.mubr.f32.mxu0 0.0
    %889 = vmatmul.mubr.f32.gmra.mxu0 %v787
    %v890 = vpop.f32.mrf.mxu0
    %v891 = vadd.f32 0.0, %v890
    %v892 = vpop.f32.mrf.mxu0
    %893 = vdwg.mxu0
    %v895 = vsel %vm312, %v158, 0
    %v898 = vsel %vm312, %v159, 0
    %v901 = vsel %vm312, %v160, 0
    %v904 = vsel %vm312, %v161, 0
    %v907 = vsel %vm312, %v162, 0
    %v910 = vsel %vm312, %v163, 0
    %v913 = vsel %vm312, %v164, 0
    %v916 = vsel %vm312, %v165, 0
    %918 = vmatprep.subr.mxu0 0.0
    %919 = vmatpush1.msra.mxu0 0.0
    %920 = vmatprep.subr.mxu0 0.0
    %921 = vmatpush1.msra.mxu0 0.0
    %922 = vmatprep.subr.mxu0 0.0
    %923 = vmatpush1.msra.mxu0 0.0
    %924 = vmatprep.subr.mxu0 0.0
    %925 = vmatpush1.msra.mxu0 0.0
    %926 = vmatprep.subr.mxu0 0.0
    %927 = vmatpush1.msra.mxu0 0.0
    %928 = vmatprep.subr.mxu0 0.0
    %929 = vmatpush1.msra.mxu0 0.0
    %930 = vmatprep.subr.mxu0 0.0
    %931 = vmatpush1.msra.mxu0 0.0
    %932 = vmatprep.subr.mxu0 0.0
    %933 = vmatpush1.msra.mxu0 0.0
    %934 = vmatprep.subr.mxu0 0.0
    %935 = vmatpush1.msra.mxu0 %v756
    %936 = vmatprep.subr.mxu0 0.0
    %937 = vmatpush1.msra.mxu0 %v755
    %938 = vmatprep.subr.mxu0 0.0
    %939 = vmatpush1.msra.mxu0 %v754
    %940 = vmatprep.subr.mxu0 0.0
    %941 = vmatpush1.msra.mxu0 %v753
    %942 = vmatprep.subr.mxu0 0.0
    %943 = vmatpush1.msra.mxu0 %v752
    %944 = vmatprep.subr.mxu0 0.0
    %945 = vmatpush1.msra.mxu0 %v751
    %946 = vmatprep.subr.mxu0 0.0
    %947 = vmatpush1.msra.mxu0 %v750
    %948 = vmatprep.subr.mxu0 0.0
    %949 = vmatpush1.msra.mxu0 %v749
    %950 = vmatprep.subr.mxu0 0.0
    %951 = vmatpush2.msra.mxu0 0.0
    %952 = vmatprep.subr.mxu0 0.0
    %953 = vmatpush2.msra.mxu0 0.0
    %954 = vmatprep.subr.mxu0 0.0
    %955 = vmatpush2.msra.mxu0 0.0
    %956 = vmatprep.subr.mxu0 0.0
    %957 = vmatpush2.msra.mxu0 0.0
    %958 = vmatprep.subr.mxu0 0.0
    %959 = vmatpush2.msra.mxu0 0.0
    %960 = vmatprep.subr.mxu0 0.0
    %961 = vmatpush2.msra.mxu0 0.0
    %962 = vmatprep.subr.mxu0 0.0
    %963 = vmatpush2.msra.mxu0 0.0
    %964 = vmatprep.subr.mxu0 0.0
    %965 = vmatpush2.msra.mxu0 0.0
    %966 = vmatprep.subr.mxu0 0.0
    %967 = vmatpush2.msra.mxu0 0.0
    %968 = vmatprep.subr.mxu0 0.0
    %969 = vmatpush2.msra.mxu0 0.0
    %970 = vmatprep.subr.mxu0 0.0
    %971 = vmatpush2.msra.mxu0 0.0
    %972 = vmatprep.subr.mxu0 0.0
    %973 = vmatpush2.msra.mxu0 0.0
    %974 = vmatprep.subr.mxu0 0.0
    %975 = vmatpush2.msra.mxu0 0.0
    %976 = vmatprep.subr.mxu0 0.0
    %977 = vmatpush2.msra.mxu0 0.0
    %978 = vmatprep.subr.mxu0 0.0
    %979 = vmatpush2.msra.mxu0 0.0
    %980 = vmatprep.subr.mxu0 0.0
    %981 = vmatpush2.msra.mxu0 0.0
    %982 = vmatprep.mubr.f32.mxu0 0.0
    %983 = vmatmul.mubr.f32.gmra.mxu0 %v895
    %v984 = vpop.f32.mrf.mxu0
    %v985 = vadd.f32 0.0, %v984
    %v986 = vpop.f32.mrf.mxu0
    %987 = vmatprep.mubr.f32.mxu0 0.0
    %988 = vmatmul.mubr.f32.gmra.mxu0 %v898
    %v989 = vpop.f32.mrf.mxu0
    %v990 = vadd.f32 0.0, %v989
    %v991 = vpop.f32.mrf.mxu0
    %992 = vmatprep.mubr.f32.mxu0 0.0
    %993 = vmatmul.mubr.f32.gmra.mxu0 %v901
    %v994 = vpop.f32.mrf.mxu0
    %v995 = vadd.f32 0.0, %v994
    %v996 = vpop.f32.mrf.mxu0
    %997 = vmatprep.mubr.f32.mxu0 0.0
    %998 = vmatmul.mubr.f32.gmra.mxu0 %v904
    %v999 = vpop.f32.mrf.mxu0
    %v1000 = vadd.f32 0.0, %v999
    %v1001 = vpop.f32.mrf.mxu0
    %1002 = vmatprep.mubr.f32.mxu0 0.0
    %1003 = vmatmul.mubr.f32.gmra.mxu0 %v907
    %v1004 = vpop.f32.mrf.mxu0
    %v1005 = vadd.f32 0.0, %v1004
    %v1006 = vpop.f32.mrf.mxu0
    %1007 = vmatprep.mubr.f32.mxu0 0.0
    %1008 = vmatmul.mubr.f32.gmra.mxu0 %v910
    %v1009 = vpop.f32.mrf.mxu0
    %v1010 = vadd.f32 0.0, %v1009
    %v1011 = vpop.f32.mrf.mxu0
    %1012 = vmatprep.mubr.f32.mxu0 0.0
    %1013 = vmatmul.mubr.f32.gmra.mxu0 %v913
    %v1014 = vpop.f32.mrf.mxu0
    %v1015 = vadd.f32 0.0, %v1014
    %v1016 = vpop.f32.mrf.mxu0
    %1017 = vmatprep.mubr.f32.mxu0 0.0
    %1018 = vmatmul.mubr.f32.gmra.mxu0 %v916
    %v1019 = vpop.f32.mrf.mxu0
    %v1020 = vadd.f32 0.0, %v1019
    %v1021 = vpop.f32.mrf.mxu0
    %1022 = vdwg.mxu0
    %v1023 = vsub.f32 %v856, %v985
    %v1024 = vsub.f32 %v861, %v990
    %v1025 = vsub.f32 %v866, %v995
    %v1026 = vsub.f32 %v871, %v1000
    %v1027 = vsub.f32 %v876, %v1005
    %v1028 = vsub.f32 %v881, %v1010
    %v1029 = vsub.f32 %v886, %v1015
    %v1030 = vsub.f32 %v891, %v1020
    %v1032 = vsel %vm312, %v167, 0
    %v1035 = vsel %vm312, %v168, 0
    %v1038 = vsel %vm312, %v169, 0
    %v1041 = vsel %vm312, %v170, 0
    %v1044 = vsel %vm312, %v171, 0
    %v1047 = vsel %vm312, %v172, 0
    %v1050 = vsel %vm312, %v173, 0
    %v1053 = vsel %vm312, %v174, 0
    %1055 = vmatprep.subr.mxu0 0.0
    %1056 = vmatpush1.msra.mxu0 0.0
    %1057 = vmatprep.subr.mxu0 0.0
    %1058 = vmatpush1.msra.mxu0 0.0
    %1059 = vmatprep.subr.mxu0 0.0
    %1060 = vmatpush1.msra.mxu0 0.0
    %1061 = vmatprep.subr.mxu0 0.0
    %1062 = vmatpush1.msra.mxu0 0.0
    %1063 = vmatprep.subr.mxu0 0.0
    %1064 = vmatpush1.msra.mxu0 0.0
    %1065 = vmatprep.subr.mxu0 0.0
    %1066 = vmatpush1.msra.mxu0 0.0
    %1067 = vmatprep.subr.mxu0 0.0
    %1068 = vmatpush1.msra.mxu0 0.0
    %1069 = vmatprep.subr.mxu0 0.0
    %1070 = vmatpush1.msra.mxu0 0.0
    %1071 = vmatprep.subr.mxu0 0.0
    %1072 = vmatpush1.msra.mxu0 %v732
    %1073 = vmatprep.subr.mxu0 0.0
    %1074 = vmatpush1.msra.mxu0 %v731
    %1075 = vmatprep.subr.mxu0 0.0
    %1076 = vmatpush1.msra.mxu0 %v730
    %1077 = vmatprep.subr.mxu0 0.0
    %1078 = vmatpush1.msra.mxu0 %v729
    %1079 = vmatprep.subr.mxu0 0.0
    %1080 = vmatpush1.msra.mxu0 %v728
    %1081 = vmatprep.subr.mxu0 0.0
    %1082 = vmatpush1.msra.mxu0 %v727
    %1083 = vmatprep.subr.mxu0 0.0
    %1084 = vmatpush1.msra.mxu0 %v726
    %1085 = vmatprep.subr.mxu0 0.0
    %1086 = vmatpush1.msra.mxu0 %v725
    %1087 = vmatprep.subr.mxu0 0.0
    %1088 = vmatpush2.msra.mxu0 0.0
    %1089 = vmatprep.subr.mxu0 0.0
    %1090 = vmatpush2.msra.mxu0 0.0
    %1091 = vmatprep.subr.mxu0 0.0
    %1092 = vmatpush2.msra.mxu0 0.0
    %1093 = vmatprep.subr.mxu0 0.0
    %1094 = vmatpush2.msra.mxu0 0.0
    %1095 = vmatprep.subr.mxu0 0.0
    %1096 = vmatpush2.msra.mxu0 0.0
    %1097 = vmatprep.subr.mxu0 0.0
    %1098 = vmatpush2.msra.mxu0 0.0
    %1099 = vmatprep.subr.mxu0 0.0
    %1100 = vmatpush2.msra.mxu0 0.0
    %1101 = vmatprep.subr.mxu0 0.0
    %1102 = vmatpush2.msra.mxu0 0.0
    %1103 = vmatprep.subr.mxu0 0.0
    %1104 = vmatpush2.msra.mxu0 0.0
    %1105 = vmatprep.subr.mxu0 0.0
    %1106 = vmatpush2.msra.mxu0 0.0
    %1107 = vmatprep.subr.mxu0 0.0
    %1108 = vmatpush2.msra.mxu0 0.0
    %1109 = vmatprep.subr.mxu0 0.0
    %1110 = vmatpush2.msra.mxu0 0.0
    %1111 = vmatprep.subr.mxu0 0.0
    %1112 = vmatpush2.msra.mxu0 0.0
    %1113 = vmatprep.subr.mxu0 0.0
    %1114 = vmatpush2.msra.mxu0 0.0
    %1115 = vmatprep.subr.mxu0 0.0
    %1116 = vmatpush2.msra.mxu0 0.0
    %1117 = vmatprep.subr.mxu0 0.0
    %1118 = vmatpush2.msra.mxu0 0.0
    %1119 = vmatprep.mubr.f32.mxu0 0.0
    %1120 = vmatmul.mubr.f32.gmra.mxu0 %v1032
    %v1121 = vpop.f32.mrf.mxu0
    %v1122 = vadd.f32 0.0, %v1121
    %v1123 = vpop.f32.mrf.mxu0
    %1124 = vmatprep.mubr.f32.mxu0 0.0
    %1125 = vmatmul.mubr.f32.gmra.mxu0 %v1035
    %v1126 = vpop.f32.mrf.mxu0
    %v1127 = vadd.f32 0.0, %v1126
    %v1128 = vpop.f32.mrf.mxu0
    %1129 = vmatprep.mubr.f32.mxu0 0.0
    %1130 = vmatmul.mubr.f32.gmra.mxu0 %v1038
    %v1131 = vpop.f32.mrf.mxu0
    %v1132 = vadd.f32 0.0, %v1131
    %v1133 = vpop.f32.mrf.mxu0
    %1134 = vmatprep.mubr.f32.mxu0 0.0
    %1135 = vmatmul.mubr.f32.gmra.mxu0 %v1041
    %v1136 = vpop.f32.mrf.mxu0
    %v1137 = vadd.f32 0.0, %v1136
    %v1138 = vpop.f32.mrf.mxu0
    %1139 = vmatprep.mubr.f32.mxu0 0.0
    %1140 = vmatmul.mubr.f32.gmra.mxu0 %v1044
    %v1141 = vpop.f32.mrf.mxu0
    %v1142 = vadd.f32 0.0, %v1141
    %v1143 = vpop.f32.mrf.mxu0
    %1144 = vmatprep.mubr.f32.mxu0 0.0
    %1145 = vmatmul.mubr.f32.gmra.mxu0 %v1047
    %v1146 = vpop.f32.mrf.mxu0
    %v1147 = vadd.f32 0.0, %v1146
    %v1148 = vpop.f32.mrf.mxu0
    %1149 = vmatprep.mubr.f32.mxu0 0.0
    %1150 = vmatmul.mubr.f32.gmra.mxu0 %v1050
    %v1151 = vpop.f32.mrf.mxu0
    %v1152 = vadd.f32 0.0, %v1151
    %v1153 = vpop.f32.mrf.mxu0
    %1154 = vmatprep.mubr.f32.mxu0 0.0
    %1155 = vmatmul.mubr.f32.gmra.mxu0 %v1053
    %v1156 = vpop.f32.mrf.mxu0
    %v1157 = vadd.f32 0.0, %v1156
    %v1158 = vpop.f32.mrf.mxu0
    %1159 = vdwg.mxu0
    %v1160 = vadd.f32 %v856, %v1122
    %v1161 = vadd.f32 %v861, %v1127
    %v1162 = vadd.f32 %v866, %v1132
    %v1163 = vadd.f32 %v871, %v1137
    %v1164 = vadd.f32 %v876, %v1142
    %v1165 = vadd.f32 %v881, %v1147
    %v1166 = vadd.f32 %v886, %v1152
    %v1167 = vadd.f32 %v891, %v1157
    %1168 = vmatprep.subr.mxu0 %v271
    %1169 = vmatpush1.msra.mxu0 %v270
    %1170 = vmatprep.subr.mxu0 %v269
    %1171 = vmatpush1.msra.mxu0 %v268
    %1172 = vmatprep.subr.mxu0 %v267
    %1173 = vmatpush1.msra.mxu0 %v266
    %1174 = vmatprep.subr.mxu0 %v265
    %1175 = vmatpush1.msra.mxu0 %v264
    %1176 = vmatprep.subr.mxu0 %v263
    %1177 = vmatpush1.msra.mxu0 %v262
    %1178 = vmatprep.subr.mxu0 %v261
    %1179 = vmatpush1.msra.mxu0 %v260
    %1180 = vmatprep.subr.mxu0 %v259
    %1181 = vmatpush1.msra.mxu0 %v258
    %1182 = vmatprep.subr.mxu0 %v257
    %1183 = vmatpush1.msra.mxu0 %v256
    %1184 = vmatprep.subr.mxu0 %v255
    %1185 = vmatpush1.msra.mxu0 %v254
    %1186 = vmatprep.subr.mxu0 %v253
    %1187 = vmatpush1.msra.mxu0 %v252
    %1188 = vmatprep.subr.mxu0 %v251
    %1189 = vmatpush1.msra.mxu0 %v250
    %1190 = vmatprep.subr.mxu0 %v249
    %1191 = vmatpush1.msra.mxu0 %v248
    %1192 = vmatprep.subr.mxu0 %v247
    %1193 = vmatpush1.msra.mxu0 %v246
    %1194 = vmatprep.subr.mxu0 %v245
    %1195 = vmatpush1.msra.mxu0 %v244
    %1196 = vmatprep.subr.mxu0 %v243
    %1197 = vmatpush1.msra.mxu0 %v242
    %1198 = vmatprep.subr.mxu0 %v241
    %1199 = vmatpush1.msra.mxu0 %v240
    %1200 = vmatprep.subr.mxu0 %v303
    %1201 = vmatpush2.msra.mxu0 %v302
    %1202 = vmatprep.subr.mxu0 %v301
    %1203 = vmatpush2.msra.mxu0 %v300
    %1204 = vmatprep.subr.mxu0 %v299
    %1205 = vmatpush2.msra.mxu0 %v298
    %1206 = vmatprep.subr.mxu0 %v297
    %1207 = vmatpush2.msra.mxu0 %v296
    %1208 = vmatprep.subr.mxu0 %v295
    %1209 = vmatpush2.msra.mxu0 %v294
    %1210 = vmatprep.subr.mxu0 %v293
    %1211 = vmatpush2.msra.mxu0 %v292
    %1212 = vmatprep.subr.mxu0 %v291
    %1213 = vmatpush2.msra.mxu0 %v290
    %1214 = vmatprep.subr.mxu0 %v289
    %1215 = vmatpush2.msra.mxu0 %v288
    %1216 = vmatprep.subr.mxu0 %v287
    %1217 = vmatpush2.msra.mxu0 %v286
    %1218 = vmatprep.subr.mxu0 %v285
    %1219 = vmatpush2.msra.mxu0 %v284
    %1220 = vmatprep.subr.mxu0 %v283
    %1221 = vmatpush2.msra.mxu0 %v282
    %1222 = vmatprep.subr.mxu0 %v281
    %1223 = vmatpush2.msra.mxu0 %v280
    %1224 = vmatprep.subr.mxu0 %v279
    %1225 = vmatpush2.msra.mxu0 %v278
    %1226 = vmatprep.subr.mxu0 %v277
    %1227 = vmatpush2.msra.mxu0 %v276
    %1228 = vmatprep.subr.mxu0 %v275
    %1229 = vmatpush2.msra.mxu0 %v274
    %1230 = vmatprep.subr.mxu0 %v273
    %1231 = vmatpush2.msra.mxu0 %v272
    %1232 = vmatprep.mubr.f32.mxu0 %v1160
    %1233 = vmatmul.mubr.f32.gmra.mxu0 %v1023
    %v1234 = vpop.f32.mrf.mxu0
    %v1235 = vadd.f32 0.0, %v1234
    %v1236 = vpop.f32.mrf.mxu0
    %v1237 = vadd.f32 0.0, %v1236
    %1238 = vmatprep.mubr.f32.mxu0 %v1161
    %1239 = vmatmul.mubr.f32.gmra.mxu0 %v1024
    %v1240 = vpop.f32.mrf.mxu0
    %v1241 = vadd.f32 0.0, %v1240
    %v1242 = vpop.f32.mrf.mxu0
    %v1243 = vadd.f32 0.0, %v1242
    %1244 = vmatprep.mubr.f32.mxu0 %v1162
    %1245 = vmatmul.mubr.f32.gmra.mxu0 %v1025
    %v1246 = vpop.f32.mrf.mxu0
    %v1247 = vadd.f32 0.0, %v1246
    %v1248 = vpop.f32.mrf.mxu0
    %v1249 = vadd.f32 0.0, %v1248
    %1250 = vmatprep.mubr.f32.mxu0 %v1163
    %1251 = vmatmul.mubr.f32.gmra.mxu0 %v1026
    %v1252 = vpop.f32.mrf.mxu0
    %v1253 = vadd.f32 0.0, %v1252
    %v1254 = vpop.f32.mrf.mxu0
    %v1255 = vadd.f32 0.0, %v1254
    %1256 = vmatprep.mubr.f32.mxu0 %v1164
    %1257 = vmatmul.mubr.f32.gmra.mxu0 %v1027
    %v1258 = vpop.f32.mrf.mxu0
    %v1259 = vadd.f32 0.0, %v1258
    %v1260 = vpop.f32.mrf.mxu0
    %v1261 = vadd.f32 0.0, %v1260
    %1262 = vmatprep.mubr.f32.mxu0 %v1165
    %1263 = vmatmul.mubr.f32.gmra.mxu0 %v1028
    %v1264 = vpop.f32.mrf.mxu0
    %v1265 = vadd.f32 0.0, %v1264
    %v1266 = vpop.f32.mrf.mxu0
    %v1267 = vadd.f32 0.0, %v1266
    %1268 = vmatprep.mubr.f32.mxu0 %v1166
    %1269 = vmatmul.mubr.f32.gmra.mxu0 %v1029
    %v1270 = vpop.f32.mrf.mxu0
    %v1271 = vadd.f32 0.0, %v1270
    %v1272 = vpop.f32.mrf.mxu0
    %v1273 = vadd.f32 0.0, %v1272
    %1274 = vmatprep.mubr.f32.mxu0 %v1167
    %1275 = vmatmul.mubr.f32.gmra.mxu0 %v1030
    %v1276 = vpop.f32.mrf.mxu0
    %v1277 = vadd.f32 0.0, %v1276
    %v1278 = vpop.f32.mrf.mxu0
    %v1279 = vadd.f32 0.0, %v1278
    %1280 = vdwg.mxu0
    %s1281 = scalar_lea.vmem [#allocation9], 128
    %v1282 = vld [vmem:[%s1281] sm:$0xff]
    %v1283 = vld [vmem:[%s1281 + $0x8] sm:$0xff]
    %v1284 = vld [vmem:[%s1281 + $0x10] sm:$0xff]
    %v1285 = vld [vmem:[%s1281 + $0x18] sm:$0xff]
    %v1286 = vld [vmem:[%s1281 + $0x20] sm:$0xff]
    %v1287 = vld [vmem:[%s1281 + $0x28] sm:$0xff]
    %v1288 = vld [vmem:[%s1281 + $0x30] sm:$0xff]
    %v1289 = vld [vmem:[%s1281 + $0x38] sm:$0xff]
    %s1290 = scalar_lea.vmem [#allocation9], 192
    %v1291 = vld [vmem:[%s1290] sm:$0xff]
    %v1292 = vld [vmem:[%s1290 + $0x8] sm:$0xff]
    %v1293 = vld [vmem:[%s1290 + $0x10] sm:$0xff]
    %v1294 = vld [vmem:[%s1290 + $0x18] sm:$0xff]
    %v1295 = vld [vmem:[%s1290 + $0x20] sm:$0xff]
    %v1296 = vld [vmem:[%s1290 + $0x28] sm:$0xff]
    %v1297 = vld [vmem:[%s1290 + $0x30] sm:$0xff]
    %v1298 = vld [vmem:[%s1290 + $0x38] sm:$0xff]
    %v1299 = vld [vmem:[#allocation11] sm:$0xff]
    %v1300 = vld [vmem:[#allocation11 + $0x8] sm:$0xff]
    %v1301 = vld [vmem:[#allocation11 + $0x10] sm:$0xff]
    %v1302 = vld [vmem:[#allocation11 + $0x18] sm:$0xff]
    %v1303 = vld [vmem:[#allocation11 + $0x20] sm:$0xff]
    %v1304 = vld [vmem:[#allocation11 + $0x28] sm:$0xff]
    %v1305 = vld [vmem:[#allocation11 + $0x30] sm:$0xff]
    %v1306 = vld [vmem:[#allocation11 + $0x38] sm:$0xff]
    %s1307 = scalar_lea.vmem [#allocation11], 512
    %v1308 = vld [vmem:[%s1307] sm:$0xff]
    %v1309 = vld [vmem:[%s1307 + $0x8] sm:$0xff]
    %v1310 = vld [vmem:[%s1307 + $0x10] sm:$0xff]
    %v1311 = vld [vmem:[%s1307 + $0x18] sm:$0xff]
    %v1312 = vld [vmem:[%s1307 + $0x20] sm:$0xff]
    %v1313 = vld [vmem:[%s1307 + $0x28] sm:$0xff]
    %v1314 = vld [vmem:[%s1307 + $0x30] sm:$0xff]
    %v1315 = vld [vmem:[%s1307 + $0x38] sm:$0xff]
    %v1316 = vmul.f32 %v1235, %v1299
    %v1317 = vmul.f32 %v1241, %v1300
    %v1318 = vmul.f32 %v1247, %v1301
    %v1319 = vmul.f32 %v1253, %v1302
    %v1320 = vmul.f32 %v1259, %v1303
    %v1321 = vmul.f32 %v1265, %v1304
    %v1322 = vmul.f32 %v1271, %v1305
    %v1323 = vmul.f32 %v1277, %v1306
    %v1324 = vmul.f32 %v1237, %v1308
    %v1325 = vmul.f32 %v1243, %v1309
    %v1326 = vmul.f32 %v1249, %v1310
    %v1327 = vmul.f32 %v1255, %v1311
    %v1328 = vmul.f32 %v1261, %v1312
    %v1329 = vmul.f32 %v1267, %v1313
    %v1330 = vmul.f32 %v1273, %v1314
    %v1331 = vmul.f32 %v1279, %v1315
    %v1332 = vsub.f32 %v1316, %v1324
    %v1333 = vsub.f32 %v1317, %v1325
    %v1334 = vsub.f32 %v1318, %v1326
    %v1335 = vsub.f32 %v1319, %v1327
    %v1336 = vsub.f32 %v1320, %v1328
    %v1337 = vsub.f32 %v1321, %v1329
    %v1338 = vsub.f32 %v1322, %v1330
    %v1339 = vsub.f32 %v1323, %v1331
    %v1340 = vmul.f32 %v1235, %v1308
    %v1341 = vmul.f32 %v1241, %v1309
    %v1342 = vmul.f32 %v1247, %v1310
    %v1343 = vmul.f32 %v1253, %v1311
    %v1344 = vmul.f32 %v1259, %v1312
    %v1345 = vmul.f32 %v1265, %v1313
    %v1346 = vmul.f32 %v1271, %v1314
    %v1347 = vmul.f32 %v1277, %v1315
    %v1348 = vmul.f32 %v1237, %v1299
    %v1349 = vmul.f32 %v1243, %v1300
    %v1350 = vmul.f32 %v1249, %v1301
    %v1351 = vmul.f32 %v1255, %v1302
    %v1352 = vmul.f32 %v1261, %v1303
    %v1353 = vmul.f32 %v1267, %v1304
    %v1354 = vmul.f32 %v1273, %v1305
    %v1355 = vmul.f32 %v1279, %v1306
    %v1356 = vadd.f32 %v1340, %v1348
    %v1357 = vadd.f32 %v1341, %v1349
    %v1358 = vadd.f32 %v1342, %v1350
    %v1359 = vadd.f32 %v1343, %v1351
    %v1360 = vadd.f32 %v1344, %v1352
    %v1361 = vadd.f32 %v1345, %v1353
    %v1362 = vadd.f32 %v1346, %v1354
    %v1363 = vadd.f32 %v1347, %v1355
    %v1364 = vadd.f32 %v1332, %v1356
    %v1365 = vadd.f32 %v1333, %v1357
    %v1366 = vadd.f32 %v1334, %v1358
    %v1367 = vadd.f32 %v1335, %v1359
    %v1368 = vadd.f32 %v1336, %v1360
    %v1369 = vadd.f32 %v1337, %v1361
    %v1370 = vadd.f32 %v1338, %v1362
    %v1371 = vadd.f32 %v1339, %v1363
    %1372 = vmatprep.subr.mxu0 0.0
    %1373 = vmatpush1.msra.mxu0 0.0
    %1374 = vmatprep.subr.mxu0 0.0
    %1375 = vmatpush1.msra.mxu0 0.0
    %1376 = vmatprep.subr.mxu0 0.0
    %1377 = vmatpush1.msra.mxu0 0.0
    %1378 = vmatprep.subr.mxu0 0.0
    %1379 = vmatpush1.msra.mxu0 0.0
    %1380 = vmatprep.subr.mxu0 0.0
    %1381 = vmatpush1.msra.mxu0 0.0
    %1382 = vmatprep.subr.mxu0 0.0
    %1383 = vmatpush1.msra.mxu0 0.0
    %1384 = vmatprep.subr.mxu0 0.0
    %1385 = vmatpush1.msra.mxu0 0.0
    %1386 = vmatprep.subr.mxu0 0.0
    %1387 = vmatpush1.msra.mxu0 0.0
    %1388 = vmatprep.subr.mxu0 0.0
    %1389 = vmatpush1.msra.mxu0 %v1371
    %1390 = vmatprep.subr.mxu0 0.0
    %1391 = vmatpush1.msra.mxu0 %v1370
    %1392 = vmatprep.subr.mxu0 0.0
    %1393 = vmatpush1.msra.mxu0 %v1369
    %1394 = vmatprep.subr.mxu0 0.0
    %1395 = vmatpush1.msra.mxu0 %v1368
    %1396 = vmatprep.subr.mxu0 0.0
    %1397 = vmatpush1.msra.mxu0 %v1367
    %1398 = vmatprep.subr.mxu0 0.0
    %1399 = vmatpush1.msra.mxu0 %v1366
    %1400 = vmatprep.subr.mxu0 0.0
    %1401 = vmatpush1.msra.mxu0 %v1365
    %1402 = vmatprep.subr.mxu0 0.0
    %1403 = vmatpush1.msra.mxu0 %v1364
    %1404 = vmatprep.subr.mxu0 0.0
    %1405 = vmatpush2.msra.mxu0 0.0
    %1406 = vmatprep.subr.mxu0 0.0
    %1407 = vmatpush2.msra.mxu0 0.0
    %1408 = vmatprep.subr.mxu0 0.0
    %1409 = vmatpush2.msra.mxu0 0.0
    %1410 = vmatprep.subr.mxu0 0.0
    %1411 = vmatpush2.msra.mxu0 0.0
    %1412 = vmatprep.subr.mxu0 0.0
    %1413 = vmatpush2.msra.mxu0 0.0
    %1414 = vmatprep.subr.mxu0 0.0
    %1415 = vmatpush2.msra.mxu0 0.0
    %1416 = vmatprep.subr.mxu0 0.0
    %1417 = vmatpush2.msra.mxu0 0.0
    %1418 = vmatprep.subr.mxu0 0.0
    %1419 = vmatpush2.msra.mxu0 0.0
    %1420 = vmatprep.subr.mxu0 0.0
    %1421 = vmatpush2.msra.mxu0 0.0
    %1422 = vmatprep.subr.mxu0 0.0
    %1423 = vmatpush2.msra.mxu0 0.0
    %1424 = vmatprep.subr.mxu0 0.0
    %1425 = vmatpush2.msra.mxu0 0.0
    %1426 = vmatprep.subr.mxu0 0.0
    %1427 = vmatpush2.msra.mxu0 0.0
    %1428 = vmatprep.subr.mxu0 0.0
    %1429 = vmatpush2.msra.mxu0 0.0
    %1430 = vmatprep.subr.mxu0 0.0
    %1431 = vmatpush2.msra.mxu0 0.0
    %1432 = vmatprep.subr.mxu0 0.0
    %1433 = vmatpush2.msra.mxu0 0.0
    %1434 = vmatprep.subr.mxu0 0.0
    %1435 = vmatpush2.msra.mxu0 0.0
    %1436 = vmatprep.mubr.f32.mxu0 0.0
    %1437 = vmatmul.mubr.f32.gmra.mxu0 %v314
    %v1438 = vpop.f32.mrf.mxu0
    %v1439 = vadd.f32 0.0, %v1438
    %v1440 = vpop.f32.mrf.mxu0
    %1441 = vmatprep.mubr.f32.mxu0 0.0
    %1442 = vmatmul.mubr.f32.gmra.mxu0 %v317
    %v1443 = vpop.f32.mrf.mxu0
    %v1444 = vadd.f32 0.0, %v1443
    %v1445 = vpop.f32.mrf.mxu0
    %1446 = vmatprep.mubr.f32.mxu0 0.0
    %1447 = vmatmul.mubr.f32.gmra.mxu0 %v320
    %v1448 = vpop.f32.mrf.mxu0
    %v1449 = vadd.f32 0.0, %v1448
    %v1450 = vpop.f32.mrf.mxu0
    %1451 = vmatprep.mubr.f32.mxu0 0.0
    %1452 = vmatmul.mubr.f32.gmra.mxu0 %v323
    %v1453 = vpop.f32.mrf.mxu0
    %v1454 = vadd.f32 0.0, %v1453
    %v1455 = vpop.f32.mrf.mxu0
    %1456 = vmatprep.mubr.f32.mxu0 0.0
    %1457 = vmatmul.mubr.f32.gmra.mxu0 %v326
    %v1458 = vpop.f32.mrf.mxu0
    %v1459 = vadd.f32 0.0, %v1458
    %v1460 = vpop.f32.mrf.mxu0
    %1461 = vmatprep.mubr.f32.mxu0 0.0
    %1462 = vmatmul.mubr.f32.gmra.mxu0 %v329
    %v1463 = vpop.f32.mrf.mxu0
    %v1464 = vadd.f32 0.0, %v1463
    %v1465 = vpop.f32.mrf.mxu0
    %1466 = vmatprep.mubr.f32.mxu0 0.0
    %1467 = vmatmul.mubr.f32.gmra.mxu0 %v332
    %v1468 = vpop.f32.mrf.mxu0
    %v1469 = vadd.f32 0.0, %v1468
    %v1470 = vpop.f32.mrf.mxu0
    %1471 = vmatprep.mubr.f32.mxu0 0.0
    %1472 = vmatmul.mubr.f32.gmra.mxu0 %v335
    %v1473 = vpop.f32.mrf.mxu0
    %v1474 = vadd.f32 0.0, %v1473
    %v1475 = vpop.f32.mrf.mxu0
    %1476 = vdwg.mxu0
    %v1478 = vsel %vm312, %v131, 0
    %v1481 = vsel %vm312, %v132, 0
    %v1484 = vsel %vm312, %v133, 0
    %v1487 = vsel %vm312, %v134, 0
    %v1490 = vsel %vm312, %v135, 0
    %v1493 = vsel %vm312, %v136, 0
    %v1496 = vsel %vm312, %v137, 0
    %v1499 = vsel %vm312, %v138, 0
    %1501 = vmatprep.subr.mxu0 0.0
    %1502 = vmatpush1.msra.mxu0 0.0
    %1503 = vmatprep.subr.mxu0 0.0
    %1504 = vmatpush1.msra.mxu0 0.0
    %1505 = vmatprep.subr.mxu0 0.0
    %1506 = vmatpush1.msra.mxu0 0.0
    %1507 = vmatprep.subr.mxu0 0.0
    %1508 = vmatpush1.msra.mxu0 0.0
    %1509 = vmatprep.subr.mxu0 0.0
    %1510 = vmatpush1.msra.mxu0 0.0
    %1511 = vmatprep.subr.mxu0 0.0
    %1512 = vmatpush1.msra.mxu0 0.0
    %1513 = vmatprep.subr.mxu0 0.0
    %1514 = vmatpush1.msra.mxu0 0.0
    %1515 = vmatprep.subr.mxu0 0.0
    %1516 = vmatpush1.msra.mxu0 0.0
    %1517 = vmatprep.subr.mxu0 0.0
    %1518 = vmatpush1.msra.mxu0 %v1363
    %1519 = vmatprep.subr.mxu0 0.0
    %1520 = vmatpush1.msra.mxu0 %v1362
    %1521 = vmatprep.subr.mxu0 0.0
    %1522 = vmatpush1.msra.mxu0 %v1361
    %1523 = vmatprep.subr.mxu0 0.0
    %1524 = vmatpush1.msra.mxu0 %v1360
    %1525 = vmatprep.subr.mxu0 0.0
    %1526 = vmatpush1.msra.mxu0 %v1359
    %1527 = vmatprep.subr.mxu0 0.0
    %1528 = vmatpush1.msra.mxu0 %v1358
    %1529 = vmatprep.subr.mxu0 0.0
    %1530 = vmatpush1.msra.mxu0 %v1357
    %1531 = vmatprep.subr.mxu0 0.0
    %1532 = vmatpush1.msra.mxu0 %v1356
    %1533 = vmatprep.subr.mxu0 0.0
    %1534 = vmatpush2.msra.mxu0 0.0
    %1535 = vmatprep.subr.mxu0 0.0
    %1536 = vmatpush2.msra.mxu0 0.0
    %1537 = vmatprep.subr.mxu0 0.0
    %1538 = vmatpush2.msra.mxu0 0.0
    %1539 = vmatprep.subr.mxu0 0.0
    %1540 = vmatpush2.msra.mxu0 0.0
    %1541 = vmatprep.subr.mxu0 0.0
    %1542 = vmatpush2.msra.mxu0 0.0
    %1543 = vmatprep.subr.mxu0 0.0
    %1544 = vmatpush2.msra.mxu0 0.0
    %1545 = vmatprep.subr.mxu0 0.0
    %1546 = vmatpush2.msra.mxu0 0.0
    %1547 = vmatprep.subr.mxu0 0.0
    %1548 = vmatpush2.msra.mxu0 0.0
    %1549 = vmatprep.subr.mxu0 0.0
    %1550 = vmatpush2.msra.mxu0 0.0
    %1551 = vmatprep.subr.mxu0 0.0
    %1552 = vmatpush2.msra.mxu0 0.0
    %1553 = vmatprep.subr.mxu0 0.0
    %1554 = vmatpush2.msra.mxu0 0.0
    %1555 = vmatprep.subr.mxu0 0.0
    %1556 = vmatpush2.msra.mxu0 0.0
    %1557 = vmatprep.subr.mxu0 0.0
    %1558 = vmatpush2.msra.mxu0 0.0
    %1559 = vmatprep.subr.mxu0 0.0
    %1560 = vmatpush2.msra.mxu0 0.0
    %1561 = vmatprep.subr.mxu0 0.0
    %1562 = vmatpush2.msra.mxu0 0.0
    %1563 = vmatprep.subr.mxu0 0.0
    %1564 = vmatpush2.msra.mxu0 0.0
    %1565 = vmatprep.mubr.f32.mxu0 0.0
    %1566 = vmatmul.mubr.f32.gmra.mxu0 %v1478
    %v1567 = vpop.f32.mrf.mxu0
    %v1568 = vadd.f32 0.0, %v1567
    %v1569 = vpop.f32.mrf.mxu0
    %1570 = vmatprep.mubr.f32.mxu0 0.0
    %1571 = vmatmul.mubr.f32.gmra.mxu0 %v1481
    %v1572 = vpop.f32.mrf.mxu0
    %v1573 = vadd.f32 0.0, %v1572
    %v1574 = vpop.f32.mrf.mxu0
    %1575 = vmatprep.mubr.f32.mxu0 0.0
    %1576 = vmatmul.mubr.f32.gmra.mxu0 %v1484
    %v1577 = vpop.f32.mrf.mxu0
    %v1578 = vadd.f32 0.0, %v1577
    %v1579 = vpop.f32.mrf.mxu0
    %1580 = vmatprep.mubr.f32.mxu0 0.0
    %1581 = vmatmul.mubr.f32.gmra.mxu0 %v1487
    %v1582 = vpop.f32.mrf.mxu0
    %v1583 = vadd.f32 0.0, %v1582
    %v1584 = vpop.f32.mrf.mxu0
    %1585 = vmatprep.mubr.f32.mxu0 0.0
    %1586 = vmatmul.mubr.f32.gmra.mxu0 %v1490
    %v1587 = vpop.f32.mrf.mxu0
    %v1588 = vadd.f32 0.0, %v1587
    %v1589 = vpop.f32.mrf.mxu0
    %1590 = vmatprep.mubr.f32.mxu0 0.0
    %1591 = vmatmul.mubr.f32.gmra.mxu0 %v1493
    %v1592 = vpop.f32.mrf.mxu0
    %v1593 = vadd.f32 0.0, %v1592
    %v1594 = vpop.f32.mrf.mxu0
    %1595 = vmatprep.mubr.f32.mxu0 0.0
    %1596 = vmatmul.mubr.f32.gmra.mxu0 %v1496
    %v1597 = vpop.f32.mrf.mxu0
    %v1598 = vadd.f32 0.0, %v1597
    %v1599 = vpop.f32.mrf.mxu0
    %1600 = vmatprep.mubr.f32.mxu0 0.0
    %1601 = vmatmul.mubr.f32.gmra.mxu0 %v1499
    %v1602 = vpop.f32.mrf.mxu0
    %v1603 = vadd.f32 0.0, %v1602
    %v1604 = vpop.f32.mrf.mxu0
    %1605 = vdwg.mxu0
    %v1606 = vsub.f32 %v1439, %v1568
    %v1607 = vsub.f32 %v1444, %v1573
    %v1608 = vsub.f32 %v1449, %v1578
    %v1609 = vsub.f32 %v1454, %v1583
    %v1610 = vsub.f32 %v1459, %v1588
    %v1611 = vsub.f32 %v1464, %v1593
    %v1612 = vsub.f32 %v1469, %v1598
    %v1613 = vsub.f32 %v1474, %v1603
    %1614 = vmatprep.subr.mxu0 0.0
    %1615 = vmatpush1.msra.mxu0 0.0
    %1616 = vmatprep.subr.mxu0 0.0
    %1617 = vmatpush1.msra.mxu0 0.0
    %1618 = vmatprep.subr.mxu0 0.0
    %1619 = vmatpush1.msra.mxu0 0.0
    %1620 = vmatprep.subr.mxu0 0.0
    %1621 = vmatpush1.msra.mxu0 0.0
    %1622 = vmatprep.subr.mxu0 0.0
    %1623 = vmatpush1.msra.mxu0 0.0
    %1624 = vmatprep.subr.mxu0 0.0
    %1625 = vmatpush1.msra.mxu0 0.0
    %1626 = vmatprep.subr.mxu0 0.0
    %1627 = vmatpush1.msra.mxu0 0.0
    %1628 = vmatprep.subr.mxu0 0.0
    %1629 = vmatpush1.msra.mxu0 0.0
    %1630 = vmatprep.subr.mxu0 0.0
    %1631 = vmatpush1.msra.mxu0 %v1339
    %1632 = vmatprep.subr.mxu0 0.0
    %1633 = vmatpush1.msra.mxu0 %v1338
    %1634 = vmatprep.subr.mxu0 0.0
    %1635 = vmatpush1.msra.mxu0 %v1337
    %1636 = vmatprep.subr.mxu0 0.0
    %1637 = vmatpush1.msra.mxu0 %v1336
    %1638 = vmatprep.subr.mxu0 0.0
    %1639 = vmatpush1.msra.mxu0 %v1335
    %1640 = vmatprep.subr.mxu0 0.0
    %1641 = vmatpush1.msra.mxu0 %v1334
    %1642 = vmatprep.subr.mxu0 0.0
    %1643 = vmatpush1.msra.mxu0 %v1333
    %1644 = vmatprep.subr.mxu0 0.0
    %1645 = vmatpush1.msra.mxu0 %v1332
    %1646 = vmatprep.subr.mxu0 0.0
    %1647 = vmatpush2.msra.mxu0 0.0
    %1648 = vmatprep.subr.mxu0 0.0
    %1649 = vmatpush2.msra.mxu0 0.0
    %1650 = vmatprep.subr.mxu0 0.0
    %1651 = vmatpush2.msra.mxu0 0.0
    %1652 = vmatprep.subr.mxu0 0.0
    %1653 = vmatpush2.msra.mxu0 0.0
    %1654 = vmatprep.subr.mxu0 0.0
    %1655 = vmatpush2.msra.mxu0 0.0
    %1656 = vmatprep.subr.mxu0 0.0
    %1657 = vmatpush2.msra.mxu0 0.0
    %1658 = vmatprep.subr.mxu0 0.0
    %1659 = vmatpush2.msra.mxu0 0.0
    %1660 = vmatprep.subr.mxu0 0.0
    %1661 = vmatpush2.msra.mxu0 0.0
    %1662 = vmatprep.subr.mxu0 0.0
    %1663 = vmatpush2.msra.mxu0 0.0
    %1664 = vmatprep.subr.mxu0 0.0
    %1665 = vmatpush2.msra.mxu0 0.0
    %1666 = vmatprep.subr.mxu0 0.0
    %1667 = vmatpush2.msra.mxu0 0.0
    %1668 = vmatprep.subr.mxu0 0.0
    %1669 = vmatpush2.msra.mxu0 0.0
    %1670 = vmatprep.subr.mxu0 0.0
    %1671 = vmatpush2.msra.mxu0 0.0
    %1672 = vmatprep.subr.mxu0 0.0
    %1673 = vmatpush2.msra.mxu0 0.0
    %1674 = vmatprep.subr.mxu0 0.0
    %1675 = vmatpush2.msra.mxu0 0.0
    %1676 = vmatprep.subr.mxu0 0.0
    %1677 = vmatpush2.msra.mxu0 0.0
    %1678 = vmatprep.mubr.f32.mxu0 0.0
    %1679 = vmatmul.mubr.f32.gmra.mxu0 %v443
    %v1680 = vpop.f32.mrf.mxu0
    %v1681 = vadd.f32 0.0, %v1680
    %v1682 = vpop.f32.mrf.mxu0
    %1683 = vmatprep.mubr.f32.mxu0 0.0
    %1684 = vmatmul.mubr.f32.gmra.mxu0 %v446
    %v1685 = vpop.f32.mrf.mxu0
    %v1686 = vadd.f32 0.0, %v1685
    %v1687 = vpop.f32.mrf.mxu0
    %1688 = vmatprep.mubr.f32.mxu0 0.0
    %1689 = vmatmul.mubr.f32.gmra.mxu0 %v449
    %v1690 = vpop.f32.mrf.mxu0
    %v1691 = vadd.f32 0.0, %v1690
    %v1692 = vpop.f32.mrf.mxu0
    %1693 = vmatprep.mubr.f32.mxu0 0.0
    %1694 = vmatmul.mubr.f32.gmra.mxu0 %v452
    %v1695 = vpop.f32.mrf.mxu0
    %v1696 = vadd.f32 0.0, %v1695
    %v1697 = vpop.f32.mrf.mxu0
    %1698 = vmatprep.mubr.f32.mxu0 0.0
    %1699 = vmatmul.mubr.f32.gmra.mxu0 %v455
    %v1700 = vpop.f32.mrf.mxu0
    %v1701 = vadd.f32 0.0, %v1700
    %v1702 = vpop.f32.mrf.mxu0
    %1703 = vmatprep.mubr.f32.mxu0 0.0
    %1704 = vmatmul.mubr.f32.gmra.mxu0 %v458
    %v1705 = vpop.f32.mrf.mxu0
    %v1706 = vadd.f32 0.0, %v1705
    %v1707 = vpop.f32.mrf.mxu0
    %1708 = vmatprep.mubr.f32.mxu0 0.0
    %1709 = vmatmul.mubr.f32.gmra.mxu0 %v461
    %v1710 = vpop.f32.mrf.mxu0
    %v1711 = vadd.f32 0.0, %v1710
    %v1712 = vpop.f32.mrf.mxu0
    %1713 = vmatprep.mubr.f32.mxu0 0.0
    %1714 = vmatmul.mubr.f32.gmra.mxu0 %v464
    %v1715 = vpop.f32.mrf.mxu0
    %v1716 = vadd.f32 0.0, %v1715
    %v1717 = vpop.f32.mrf.mxu0
    %1718 = vdwg.mxu0
    %v1719 = vadd.f32 %v1439, %v1681
    %v1720 = vadd.f32 %v1444, %v1686
    %v1721 = vadd.f32 %v1449, %v1691
    %v1722 = vadd.f32 %v1454, %v1696
    %v1723 = vadd.f32 %v1459, %v1701
    %v1724 = vadd.f32 %v1464, %v1706
    %v1725 = vadd.f32 %v1469, %v1711
    %v1726 = vadd.f32 %v1474, %v1716
    %1727 = vmatprep.subr.mxu0 %v206
    %1728 = vmatpush1.msra.mxu0 %v205
    %1729 = vmatprep.subr.mxu0 %v204
    %1730 = vmatpush1.msra.mxu0 %v203
    %1731 = vmatprep.subr.mxu0 %v202
    %1732 = vmatpush1.msra.mxu0 %v201
    %1733 = vmatprep.subr.mxu0 %v200
    %1734 = vmatpush1.msra.mxu0 %v199
    %1735 = vmatprep.subr.mxu0 %v198
    %1736 = vmatpush1.msra.mxu0 %v197
    %1737 = vmatprep.subr.mxu0 %v196
    %1738 = vmatpush1.msra.mxu0 %v195
    %1739 = vmatprep.subr.mxu0 %v194
    %1740 = vmatpush1.msra.mxu0 %v193
    %1741 = vmatprep.subr.mxu0 %v192
    %1742 = vmatpush1.msra.mxu0 %v191
    %1743 = vmatprep.subr.mxu0 %v190
    %1744 = vmatpush1.msra.mxu0 %v189
    %1745 = vmatprep.subr.mxu0 %v188
    %1746 = vmatpush1.msra.mxu0 %v187
    %1747 = vmatprep.subr.mxu0 %v186
    %1748 = vmatpush1.msra.mxu0 %v185
    %1749 = vmatprep.subr.mxu0 %v184
    %1750 = vmatpush1.msra.mxu0 %v183
    %1751 = vmatprep.subr.mxu0 %v182
    %1752 = vmatpush1.msra.mxu0 %v181
    %1753 = vmatprep.subr.mxu0 %v180
    %1754 = vmatpush1.msra.mxu0 %v179
    %1755 = vmatprep.subr.mxu0 %v178
    %1756 = vmatpush1.msra.mxu0 %v177
    %1757 = vmatprep.subr.mxu0 %v176
    %1758 = vmatpush1.msra.mxu0 %v175
    %1759 = vmatprep.subr.mxu0 %v238
    %1760 = vmatpush2.msra.mxu0 %v237
    %1761 = vmatprep.subr.mxu0 %v236
    %1762 = vmatpush2.msra.mxu0 %v235
    %1763 = vmatprep.subr.mxu0 %v234
    %1764 = vmatpush2.msra.mxu0 %v233
    %1765 = vmatprep.subr.mxu0 %v232
    %1766 = vmatpush2.msra.mxu0 %v231
    %1767 = vmatprep.subr.mxu0 %v230
    %1768 = vmatpush2.msra.mxu0 %v229
    %1769 = vmatprep.subr.mxu0 %v228
    %1770 = vmatpush2.msra.mxu0 %v227
    %1771 = vmatprep.subr.mxu0 %v226
    %1772 = vmatpush2.msra.mxu0 %v225
    %1773 = vmatprep.subr.mxu0 %v224
    %1774 = vmatpush2.msra.mxu0 %v223
    %1775 = vmatprep.subr.mxu0 %v222
    %1776 = vmatpush2.msra.mxu0 %v221
    %1777 = vmatprep.subr.mxu0 %v220
    %1778 = vmatpush2.msra.mxu0 %v219
    %1779 = vmatprep.subr.mxu0 %v218
    %1780 = vmatpush2.msra.mxu0 %v217
    %1781 = vmatprep.subr.mxu0 %v216
    %1782 = vmatpush2.msra.mxu0 %v215
    %1783 = vmatprep.subr.mxu0 %v214
    %1784 = vmatpush2.msra.mxu0 %v213
    %1785 = vmatprep.subr.mxu0 %v212
    %1786 = vmatpush2.msra.mxu0 %v211
    %1787 = vmatprep.subr.mxu0 %v210
    %1788 = vmatpush2.msra.mxu0 %v209
    %1789 = vmatprep.subr.mxu0 %v208
    %1790 = vmatpush2.msra.mxu0 %v207
    %1791 = vmatprep.mubr.f32.mxu0 %v1719
    %1792 = vmatmul.mubr.f32.gmra.mxu0 %v1606
    %v1793 = vpop.f32.mrf.mxu0
    %v1794 = vadd.f32 0.0, %v1793
    %v1795 = vpop.f32.mrf.mxu0
    %v1796 = vadd.f32 0.0, %v1795
    %1797 = vmatprep.mubr.f32.mxu0 %v1720
    %1798 = vmatmul.mubr.f32.gmra.mxu0 %v1607
    %v1799 = vpop.f32.mrf.mxu0
    %v1800 = vadd.f32 0.0, %v1799
    %v1801 = vpop.f32.mrf.mxu0
    %v1802 = vadd.f32 0.0, %v1801
    %1803 = vmatprep.mubr.f32.mxu0 %v1721
    %1804 = vmatmul.mubr.f32.gmra.mxu0 %v1608
    %v1805 = vpop.f32.mrf.mxu0
    %v1806 = vadd.f32 0.0, %v1805
    %v1807 = vpop.f32.mrf.mxu0
    %v1808 = vadd.f32 0.0, %v1807
    %1809 = vmatprep.mubr.f32.mxu0 %v1722
    %1810 = vmatmul.mubr.f32.gmra.mxu0 %v1609
    %v1811 = vpop.f32.mrf.mxu0
    %v1812 = vadd.f32 0.0, %v1811
    %v1813 = vpop.f32.mrf.mxu0
    %v1814 = vadd.f32 0.0, %v1813
    %1815 = vmatprep.mubr.f32.mxu0 %v1723
    %1816 = vmatmul.mubr.f32.gmra.mxu0 %v1610
    %v1817 = vpop.f32.mrf.mxu0
    %v1818 = vadd.f32 0.0, %v1817
    %v1819 = vpop.f32.mrf.mxu0
    %v1820 = vadd.f32 0.0, %v1819
    %1821 = vmatprep.mubr.f32.mxu0 %v1724
    %1822 = vmatmul.mubr.f32.gmra.mxu0 %v1611
    %v1823 = vpop.f32.mrf.mxu0
    %v1824 = vadd.f32 0.0, %v1823
    %v1825 = vpop.f32.mrf.mxu0
    %v1826 = vadd.f32 0.0, %v1825
    %1827 = vmatprep.mubr.f32.mxu0 %v1725
    %1828 = vmatmul.mubr.f32.gmra.mxu0 %v1612
    %v1829 = vpop.f32.mrf.mxu0
    %v1830 = vadd.f32 0.0, %v1829
    %v1831 = vpop.f32.mrf.mxu0
    %v1832 = vadd.f32 0.0, %v1831
    %1833 = vmatprep.mubr.f32.mxu0 %v1726
    %1834 = vmatmul.mubr.f32.gmra.mxu0 %v1613
    %v1835 = vpop.f32.mrf.mxu0
    %v1836 = vadd.f32 0.0, %v1835
    %v1837 = vpop.f32.mrf.mxu0
    %v1838 = vadd.f32 0.0, %v1837
    %1839 = vdwg.mxu0
    %v1840 = vmul.f32 %v1794, %v1282
    %v1841 = vmul.f32 %v1800, %v1283
    %v1842 = vmul.f32 %v1806, %v1284
    %v1843 = vmul.f32 %v1812, %v1285
    %v1844 = vmul.f32 %v1818, %v1286
    %v1845 = vmul.f32 %v1824, %v1287
    %v1846 = vmul.f32 %v1830, %v1288
    %v1847 = vmul.f32 %v1836, %v1289
    %v1848 = vmul.f32 %v1796, %v1291
    %v1849 = vmul.f32 %v1802, %v1292
    %v1850 = vmul.f32 %v1808, %v1293
    %v1851 = vmul.f32 %v1814, %v1294
    %v1852 = vmul.f32 %v1820, %v1295
    %v1853 = vmul.f32 %v1826, %v1296
    %v1854 = vmul.f32 %v1832, %v1297
    %v1855 = vmul.f32 %v1838, %v1298
    %v1856 = vsub.f32 %v1840, %v1848
    %v1857 = vsub.f32 %v1841, %v1849
    %v1858 = vsub.f32 %v1842, %v1850
    %v1859 = vsub.f32 %v1843, %v1851
    %v1860 = vsub.f32 %v1844, %v1852
    %v1861 = vsub.f32 %v1845, %v1853
    %v1862 = vsub.f32 %v1846, %v1854
    %v1863 = vsub.f32 %v1847, %v1855
    %v1864 = vmul.f32 %v1794, %v1291
    %v1865 = vmul.f32 %v1800, %v1292
    %v1866 = vmul.f32 %v1806, %v1293
    %v1867 = vmul.f32 %v1812, %v1294
    %v1868 = vmul.f32 %v1818, %v1295
    %v1869 = vmul.f32 %v1824, %v1296
    %v1870 = vmul.f32 %v1830, %v1297
    %v1871 = vmul.f32 %v1836, %v1298
    %v1872 = vmul.f32 %v1796, %v1282
    %v1873 = vmul.f32 %v1802, %v1283
    %v1874 = vmul.f32 %v1808, %v1284
    %v1875 = vmul.f32 %v1814, %v1285
    %v1876 = vmul.f32 %v1820, %v1286
    %v1877 = vmul.f32 %v1826, %v1287
    %v1878 = vmul.f32 %v1832, %v1288
    %v1879 = vmul.f32 %v1838, %v1289
    %v1880 = vadd.f32 %v1864, %v1872
    %v1881 = vadd.f32 %v1865, %v1873
    %v1882 = vadd.f32 %v1866, %v1874
    %v1883 = vadd.f32 %v1867, %v1875
    %v1884 = vadd.f32 %v1868, %v1876
    %v1885 = vadd.f32 %v1869, %v1877
    %v1886 = vadd.f32 %v1870, %v1878
    %v1887 = vadd.f32 %v1871, %v1879
    %v1888 = vadd.f32 %v1856, %v1880
    %v1889 = vadd.f32 %v1857, %v1881
    %v1890 = vadd.f32 %v1858, %v1882
    %v1891 = vadd.f32 %v1859, %v1883
    %v1892 = vadd.f32 %v1860, %v1884
    %v1893 = vadd.f32 %v1861, %v1885
    %v1894 = vadd.f32 %v1862, %v1886
    %v1895 = vadd.f32 %v1863, %v1887
    %1896 = vmatprep.subr.mxu0 0.0
    %1897 = vmatpush1.msra.mxu0 0.0
    %1898 = vmatprep.subr.mxu0 0.0
    %1899 = vmatpush1.msra.mxu0 0.0
    %1900 = vmatprep.subr.mxu0 0.0
    %1901 = vmatpush1.msra.mxu0 0.0
    %1902 = vmatprep.subr.mxu0 0.0
    %1903 = vmatpush1.msra.mxu0 0.0
    %1904 = vmatprep.subr.mxu0 0.0
    %1905 = vmatpush1.msra.mxu0 0.0
    %1906 = vmatprep.subr.mxu0 0.0
    %1907 = vmatpush1.msra.mxu0 0.0
    %1908 = vmatprep.subr.mxu0 0.0
    %1909 = vmatpush1.msra.mxu0 0.0
    %1910 = vmatprep.subr.mxu0 0.0
    %1911 = vmatpush1.msra.mxu0 0.0
    %1912 = vmatprep.subr.mxu0 0.0
    %1913 = vmatpush1.msra.mxu0 %v1895
    %1914 = vmatprep.subr.mxu0 0.0
    %1915 = vmatpush1.msra.mxu0 %v1894
    %1916 = vmatprep.subr.mxu0 0.0
    %1917 = vmatpush1.msra.mxu0 %v1893
    %1918 = vmatprep.subr.mxu0 0.0
    %1919 = vmatpush1.msra.mxu0 %v1892
    %1920 = vmatprep.subr.mxu0 0.0
    %1921 = vmatpush1.msra.mxu0 %v1891
    %1922 = vmatprep.subr.mxu0 0.0
    %1923 = vmatpush1.msra.mxu0 %v1890
    %1924 = vmatprep.subr.mxu0 0.0
    %1925 = vmatpush1.msra.mxu0 %v1889
    %1926 = vmatprep.subr.mxu0 0.0
    %1927 = vmatpush1.msra.mxu0 %v1888
    %1928 = vmatprep.subr.mxu0 0.0
    %1929 = vmatpush2.msra.mxu0 0.0
    %1930 = vmatprep.subr.mxu0 0.0
    %1931 = vmatpush2.msra.mxu0 0.0
    %1932 = vmatprep.subr.mxu0 0.0
    %1933 = vmatpush2.msra.mxu0 0.0
    %1934 = vmatprep.subr.mxu0 0.0
    %1935 = vmatpush2.msra.mxu0 0.0
    %1936 = vmatprep.subr.mxu0 0.0
    %1937 = vmatpush2.msra.mxu0 0.0
    %1938 = vmatprep.subr.mxu0 0.0
    %1939 = vmatpush2.msra.mxu0 0.0
    %1940 = vmatprep.subr.mxu0 0.0
    %1941 = vmatpush2.msra.mxu0 0.0
    %1942 = vmatprep.subr.mxu0 0.0
    %1943 = vmatpush2.msra.mxu0 0.0
    %1944 = vmatprep.subr.mxu0 0.0
    %1945 = vmatpush2.msra.mxu0 0.0
    %1946 = vmatprep.subr.mxu0 0.0
    %1947 = vmatpush2.msra.mxu0 0.0
    %1948 = vmatprep.subr.mxu0 0.0
    %1949 = vmatpush2.msra.mxu0 0.0
    %1950 = vmatprep.subr.mxu0 0.0
    %1951 = vmatpush2.msra.mxu0 0.0
    %1952 = vmatprep.subr.mxu0 0.0
    %1953 = vmatpush2.msra.mxu0 0.0
    %1954 = vmatprep.subr.mxu0 0.0
    %1955 = vmatpush2.msra.mxu0 0.0
    %1956 = vmatprep.subr.mxu0 0.0
    %1957 = vmatpush2.msra.mxu0 0.0
    %1958 = vmatprep.subr.mxu0 0.0
    %1959 = vmatpush2.msra.mxu0 0.0
    %1960 = vmatprep.mubr.f32.mxu0 0.0
    %1961 = vmatmul.mubr.f32.gmra.mxu0 %v766
    %v1962 = vpop.f32.mrf.mxu0
    %v1963 = vadd.f32 0.0, %v1962
    %v1964 = vpop.f32.mrf.mxu0
    %1965 = vmatprep.mubr.f32.mxu0 0.0
    %1966 = vmatmul.mubr.f32.gmra.mxu0 %v769
    %v1967 = vpop.f32.mrf.mxu0
    %v1968 = vadd.f32 0.0, %v1967
    %v1969 = vpop.f32.mrf.mxu0
    %1970 = vmatprep.mubr.f32.mxu0 0.0
    %1971 = vmatmul.mubr.f32.gmra.mxu0 %v772
    %v1972 = vpop.f32.mrf.mxu0
    %v1973 = vadd.f32 0.0, %v1972
    %v1974 = vpop.f32.mrf.mxu0
    %1975 = vmatprep.mubr.f32.mxu0 0.0
    %1976 = vmatmul.mubr.f32.gmra.mxu0 %v775
    %v1977 = vpop.f32.mrf.mxu0
    %v1978 = vadd.f32 0.0, %v1977
    %v1979 = vpop.f32.mrf.mxu0
    %1980 = vmatprep.mubr.f32.mxu0 0.0
    %1981 = vmatmul.mubr.f32.gmra.mxu0 %v778
    %v1982 = vpop.f32.mrf.mxu0
    %v1983 = vadd.f32 0.0, %v1982
    %v1984 = vpop.f32.mrf.mxu0
    %1985 = vmatprep.mubr.f32.mxu0 0.0
    %1986 = vmatmul.mubr.f32.gmra.mxu0 %v781
    %v1987 = vpop.f32.mrf.mxu0
    %v1988 = vadd.f32 0.0, %v1987
    %v1989 = vpop.f32.mrf.mxu0
    %1990 = vmatprep.mubr.f32.mxu0 0.0
    %1991 = vmatmul.mubr.f32.gmra.mxu0 %v784
    %v1992 = vpop.f32.mrf.mxu0
    %v1993 = vadd.f32 0.0, %v1992
    %v1994 = vpop.f32.mrf.mxu0
    %1995 = vmatprep.mubr.f32.mxu0 0.0
    %1996 = vmatmul.mubr.f32.gmra.mxu0 %v787
    %v1997 = vpop.f32.mrf.mxu0
    %v1998 = vadd.f32 0.0, %v1997
    %v1999 = vpop.f32.mrf.mxu0
    %2000 = vdwg.mxu0
    %2001 = vmatprep.subr.mxu0 0.0
    %2002 = vmatpush1.msra.mxu0 0.0
    %2003 = vmatprep.subr.mxu0 0.0
    %2004 = vmatpush1.msra.mxu0 0.0
    %2005 = vmatprep.subr.mxu0 0.0
    %2006 = vmatpush1.msra.mxu0 0.0
    %2007 = vmatprep.subr.mxu0 0.0
    %2008 = vmatpush1.msra.mxu0 0.0
    %2009 = vmatprep.subr.mxu0 0.0
    %2010 = vmatpush1.msra.mxu0 0.0
    %2011 = vmatprep.subr.mxu0 0.0
    %2012 = vmatpush1.msra.mxu0 0.0
    %2013 = vmatprep.subr.mxu0 0.0
    %2014 = vmatpush1.msra.mxu0 0.0
    %2015 = vmatprep.subr.mxu0 0.0
    %2016 = vmatpush1.msra.mxu0 0.0
    %2017 = vmatprep.subr.mxu0 0.0
    %2018 = vmatpush1.msra.mxu0 %v1887
    %2019 = vmatprep.subr.mxu0 0.0
    %2020 = vmatpush1.msra.mxu0 %v1886
    %2021 = vmatprep.subr.mxu0 0.0
    %2022 = vmatpush1.msra.mxu0 %v1885
    %2023 = vmatprep.subr.mxu0 0.0
    %2024 = vmatpush1.msra.mxu0 %v1884
    %2025 = vmatprep.subr.mxu0 0.0
    %2026 = vmatpush1.msra.mxu0 %v1883
    %2027 = vmatprep.subr.mxu0 0.0
    %2028 = vmatpush1.msra.mxu0 %v1882
    %2029 = vmatprep.subr.mxu0 0.0
    %2030 = vmatpush1.msra.mxu0 %v1881
    %2031 = vmatprep.subr.mxu0 0.0
    %2032 = vmatpush1.msra.mxu0 %v1880
    %2033 = vmatprep.subr.mxu0 0.0
    %2034 = vmatpush2.msra.mxu0 0.0
    %2035 = vmatprep.subr.mxu0 0.0
    %2036 = vmatpush2.msra.mxu0 0.0
    %2037 = vmatprep.subr.mxu0 0.0
    %2038 = vmatpush2.msra.mxu0 0.0
    %2039 = vmatprep.subr.mxu0 0.0
    %2040 = vmatpush2.msra.mxu0 0.0
    %2041 = vmatprep.subr.mxu0 0.0
    %2042 = vmatpush2.msra.mxu0 0.0
    %2043 = vmatprep.subr.mxu0 0.0
    %2044 = vmatpush2.msra.mxu0 0.0
    %2045 = vmatprep.subr.mxu0 0.0
    %2046 = vmatpush2.msra.mxu0 0.0
    %2047 = vmatprep.subr.mxu0 0.0
    %2048 = vmatpush2.msra.mxu0 0.0
    %2049 = vmatprep.subr.mxu0 0.0
    %2050 = vmatpush2.msra.mxu0 0.0
    %2051 = vmatprep.subr.mxu0 0.0
    %2052 = vmatpush2.msra.mxu0 0.0
    %2053 = vmatprep.subr.mxu0 0.0
    %2054 = vmatpush2.msra.mxu0 0.0
    %2055 = vmatprep.subr.mxu0 0.0
    %2056 = vmatpush2.msra.mxu0 0.0
    %2057 = vmatprep.subr.mxu0 0.0
    %2058 = vmatpush2.msra.mxu0 0.0
    %2059 = vmatprep.subr.mxu0 0.0
    %2060 = vmatpush2.msra.mxu0 0.0
    %2061 = vmatprep.subr.mxu0 0.0
    %2062 = vmatpush2.msra.mxu0 0.0
    %2063 = vmatprep.subr.mxu0 0.0
    %2064 = vmatpush2.msra.mxu0 0.0
    %2065 = vmatprep.mubr.f32.mxu0 0.0
    %2066 = vmatmul.mubr.f32.gmra.mxu0 %v895
    %v2067 = vpop.f32.mrf.mxu0
    %v2068 = vadd.f32 0.0, %v2067
    %v2069 = vpop.f32.mrf.mxu0
    %2070 = vmatprep.mubr.f32.mxu0 0.0
    %2071 = vmatmul.mubr.f32.gmra.mxu0 %v898
    %v2072 = vpop.f32.mrf.mxu0
    %v2073 = vadd.f32 0.0, %v2072
    %v2074 = vpop.f32.mrf.mxu0
    %2075 = vmatprep.mubr.f32.mxu0 0.0
    %2076 = vmatmul.mubr.f32.gmra.mxu0 %v901
    %v2077 = vpop.f32.mrf.mxu0
    %v2078 = vadd.f32 0.0, %v2077
    %v2079 = vpop.f32.mrf.mxu0
    %2080 = vmatprep.mubr.f32.mxu0 0.0
    %2081 = vmatmul.mubr.f32.gmra.mxu0 %v904
    %v2082 = vpop.f32.mrf.mxu0
    %v2083 = vadd.f32 0.0, %v2082
    %v2084 = vpop.f32.mrf.mxu0
    %2085 = vmatprep.mubr.f32.mxu0 0.0
    %2086 = vmatmul.mubr.f32.gmra.mxu0 %v907
    %v2087 = vpop.f32.mrf.mxu0
    %v2088 = vadd.f32 0.0, %v2087
    %v2089 = vpop.f32.mrf.mxu0
    %2090 = vmatprep.mubr.f32.mxu0 0.0
    %2091 = vmatmul.mubr.f32.gmra.mxu0 %v910
    %v2092 = vpop.f32.mrf.mxu0
    %v2093 = vadd.f32 0.0, %v2092
    %v2094 = vpop.f32.mrf.mxu0
    %2095 = vmatprep.mubr.f32.mxu0 0.0
    %2096 = vmatmul.mubr.f32.gmra.mxu0 %v913
    %v2097 = vpop.f32.mrf.mxu0
    %v2098 = vadd.f32 0.0, %v2097
    %v2099 = vpop.f32.mrf.mxu0
    %2100 = vmatprep.mubr.f32.mxu0 0.0
    %2101 = vmatmul.mubr.f32.gmra.mxu0 %v916
    %v2102 = vpop.f32.mrf.mxu0
    %v2103 = vadd.f32 0.0, %v2102
    %v2104 = vpop.f32.mrf.mxu0
    %2105 = vdwg.mxu0
    %v2106 = vsub.f32 %v1963, %v2068
    %v2107 = vsub.f32 %v1968, %v2073
    %v2108 = vsub.f32 %v1973, %v2078
    %v2109 = vsub.f32 %v1978, %v2083
    %v2110 = vsub.f32 %v1983, %v2088
    %v2111 = vsub.f32 %v1988, %v2093
    %v2112 = vsub.f32 %v1993, %v2098
    %v2113 = vsub.f32 %v1998, %v2103
    %2114 = vmatprep.subr.mxu0 0.0
    %2115 = vmatpush1.msra.mxu0 0.0
    %2116 = vmatprep.subr.mxu0 0.0
    %2117 = vmatpush1.msra.mxu0 0.0
    %2118 = vmatprep.subr.mxu0 0.0
    %2119 = vmatpush1.msra.mxu0 0.0
    %2120 = vmatprep.subr.mxu0 0.0
    %2121 = vmatpush1.msra.mxu0 0.0
    %2122 = vmatprep.subr.mxu0 0.0
    %2123 = vmatpush1.msra.mxu0 0.0
    %2124 = vmatprep.subr.mxu0 0.0
    %2125 = vmatpush1.msra.mxu0 0.0
    %2126 = vmatprep.subr.mxu0 0.0
    %2127 = vmatpush1.msra.mxu0 0.0
    %2128 = vmatprep.subr.mxu0 0.0
    %2129 = vmatpush1.msra.mxu0 0.0
    %2130 = vmatprep.subr.mxu0 0.0
    %2131 = vmatpush1.msra.mxu0 %v1863
    %2132 = vmatprep.subr.mxu0 0.0
    %2133 = vmatpush1.msra.mxu0 %v1862
    %2134 = vmatprep.subr.mxu0 0.0
    %2135 = vmatpush1.msra.mxu0 %v1861
    %2136 = vmatprep.subr.mxu0 0.0
    %2137 = vmatpush1.msra.mxu0 %v1860
    %2138 = vmatprep.subr.mxu0 0.0
    %2139 = vmatpush1.msra.mxu0 %v1859
    %2140 = vmatprep.subr.mxu0 0.0
    %2141 = vmatpush1.msra.mxu0 %v1858
    %2142 = vmatprep.subr.mxu0 0.0
    %2143 = vmatpush1.msra.mxu0 %v1857
    %2144 = vmatprep.subr.mxu0 0.0
    %2145 = vmatpush1.msra.mxu0 %v1856
    %2146 = vmatprep.subr.mxu0 0.0
    %2147 = vmatpush2.msra.mxu0 0.0
    %2148 = vmatprep.subr.mxu0 0.0
    %2149 = vmatpush2.msra.mxu0 0.0
    %2150 = vmatprep.subr.mxu0 0.0
    %2151 = vmatpush2.msra.mxu0 0.0
    %2152 = vmatprep.subr.mxu0 0.0
    %2153 = vmatpush2.msra.mxu0 0.0
    %2154 = vmatprep.subr.mxu0 0.0
    %2155 = vmatpush2.msra.mxu0 0.0
    %2156 = vmatprep.subr.mxu0 0.0
    %2157 = vmatpush2.msra.mxu0 0.0
    %2158 = vmatprep.subr.mxu0 0.0
    %2159 = vmatpush2.msra.mxu0 0.0
    %2160 = vmatprep.subr.mxu0 0.0
    %2161 = vmatpush2.msra.mxu0 0.0
    %2162 = vmatprep.subr.mxu0 0.0
    %2163 = vmatpush2.msra.mxu0 0.0
    %2164 = vmatprep.subr.mxu0 0.0
    %2165 = vmatpush2.msra.mxu0 0.0
    %2166 = vmatprep.subr.mxu0 0.0
    %2167 = vmatpush2.msra.mxu0 0.0
    %2168 = vmatprep.subr.mxu0 0.0
    %2169 = vmatpush2.msra.mxu0 0.0
    %2170 = vmatprep.subr.mxu0 0.0
    %2171 = vmatpush2.msra.mxu0 0.0
    %2172 = vmatprep.subr.mxu0 0.0
    %2173 = vmatpush2.msra.mxu0 0.0
    %2174 = vmatprep.subr.mxu0 0.0
    %2175 = vmatpush2.msra.mxu0 0.0
    %2176 = vmatprep.subr.mxu0 0.0
    %2177 = vmatpush2.msra.mxu0 0.0
    %2178 = vmatprep.mubr.f32.mxu0 0.0
    %2179 = vmatmul.mubr.f32.gmra.mxu0 %v1032
    %v2180 = vpop.f32.mrf.mxu0
    %v2181 = vadd.f32 0.0, %v2180
    %v2182 = vpop.f32.mrf.mxu0
    %2183 = vmatprep.mubr.f32.mxu0 0.0
    %2184 = vmatmul.mubr.f32.gmra.mxu0 %v1035
    %v2185 = vpop.f32.mrf.mxu0
    %v2186 = vadd.f32 0.0, %v2185
    %v2187 = vpop.f32.mrf.mxu0
    %2188 = vmatprep.mubr.f32.mxu0 0.0
    %2189 = vmatmul.mubr.f32.gmra.mxu0 %v1038
    %v2190 = vpop.f32.mrf.mxu0
    %v2191 = vadd.f32 0.0, %v2190
    %v2192 = vpop.f32.mrf.mxu0
    %2193 = vmatprep.mubr.f32.mxu0 0.0
    %2194 = vmatmul.mubr.f32.gmra.mxu0 %v1041
    %v2195 = vpop.f32.mrf.mxu0
    %v2196 = vadd.f32 0.0, %v2195
    %v2197 = vpop.f32.mrf.mxu0
    %2198 = vmatprep.mubr.f32.mxu0 0.0
    %2199 = vmatmul.mubr.f32.gmra.mxu0 %v1044
    %v2200 = vpop.f32.mrf.mxu0
    %v2201 = vadd.f32 0.0, %v2200
    %v2202 = vpop.f32.mrf.mxu0
    %2203 = vmatprep.mubr.f32.mxu0 0.0
    %2204 = vmatmul.mubr.f32.gmra.mxu0 %v1047
    %v2205 = vpop.f32.mrf.mxu0
    %v2206 = vadd.f32 0.0, %v2205
    %v2207 = vpop.f32.mrf.mxu0
    %2208 = vmatprep.mubr.f32.mxu0 0.0
    %2209 = vmatmul.mubr.f32.gmra.mxu0 %v1050
    %v2210 = vpop.f32.mrf.mxu0
    %v2211 = vadd.f32 0.0, %v2210
    %v2212 = vpop.f32.mrf.mxu0
    %2213 = vmatprep.mubr.f32.mxu0 0.0
    %2214 = vmatmul.mubr.f32.gmra.mxu0 %v1053
    %v2215 = vpop.f32.mrf.mxu0
    %v2216 = vadd.f32 0.0, %v2215
    %v2217 = vpop.f32.mrf.mxu0
    %2218 = vdwg.mxu0
    %v2219 = vadd.f32 %v1963, %v2181
    %v2220 = vadd.f32 %v1968, %v2186
    %v2221 = vadd.f32 %v1973, %v2191
    %v2222 = vadd.f32 %v1978, %v2196
    %v2223 = vadd.f32 %v1983, %v2201
    %v2224 = vadd.f32 %v1988, %v2206
    %v2225 = vadd.f32 %v1993, %v2211
    %v2226 = vadd.f32 %v1998, %v2216
    %2227 = vmatprep.subr.mxu0 %v271
    %2228 = vmatpush1.msra.mxu0 %v270
    %2229 = vmatprep.subr.mxu0 %v269
    %2230 = vmatpush1.msra.mxu0 %v268
    %2231 = vmatprep.subr.mxu0 %v267
    %2232 = vmatpush1.msra.mxu0 %v266
    %2233 = vmatprep.subr.mxu0 %v265
    %2234 = vmatpush1.msra.mxu0 %v264
    %2235 = vmatprep.subr.mxu0 %v263
    %2236 = vmatpush1.msra.mxu0 %v262
    %2237 = vmatprep.subr.mxu0 %v261
    %2238 = vmatpush1.msra.mxu0 %v260
    %2239 = vmatprep.subr.mxu0 %v259
    %2240 = vmatpush1.msra.mxu0 %v258
    %2241 = vmatprep.subr.mxu0 %v257
    %2242 = vmatpush1.msra.mxu0 %v256
    %2243 = vmatprep.subr.mxu0 %v255
    %2244 = vmatpush1.msra.mxu0 %v254
    %2245 = vmatprep.subr.mxu0 %v253
    %2246 = vmatpush1.msra.mxu0 %v252
    %2247 = vmatprep.subr.mxu0 %v251
    %2248 = vmatpush1.msra.mxu0 %v250
    %2249 = vmatprep.subr.mxu0 %v249
    %2250 = vmatpush1.msra.mxu0 %v248
    %2251 = vmatprep.subr.mxu0 %v247
    %2252 = vmatpush1.msra.mxu0 %v246
    %2253 = vmatprep.subr.mxu0 %v245
    %2254 = vmatpush1.msra.mxu0 %v244
    %2255 = vmatprep.subr.mxu0 %v243
    %2256 = vmatpush1.msra.mxu0 %v242
    %2257 = vmatprep.subr.mxu0 %v241
    %2258 = vmatpush1.msra.mxu0 %v240
    %2259 = vmatprep.subr.mxu0 %v303
    %2260 = vmatpush2.msra.mxu0 %v302
    %2261 = vmatprep.subr.mxu0 %v301
    %2262 = vmatpush2.msra.mxu0 %v300
    %2263 = vmatprep.subr.mxu0 %v299
    %2264 = vmatpush2.msra.mxu0 %v298
    %2265 = vmatprep.subr.mxu0 %v297
    %2266 = vmatpush2.msra.mxu0 %v296
    %2267 = vmatprep.subr.mxu0 %v295
    %2268 = vmatpush2.msra.mxu0 %v294
    %2269 = vmatprep.subr.mxu0 %v293
    %2270 = vmatpush2.msra.mxu0 %v292
    %2271 = vmatprep.subr.mxu0 %v291
    %2272 = vmatpush2.msra.mxu0 %v290
    %2273 = vmatprep.subr.mxu0 %v289
    %2274 = vmatpush2.msra.mxu0 %v288
    %2275 = vmatprep.subr.mxu0 %v287
    %2276 = vmatpush2.msra.mxu0 %v286
    %2277 = vmatprep.subr.mxu0 %v285
    %2278 = vmatpush2.msra.mxu0 %v284
    %2279 = vmatprep.subr.mxu0 %v283
    %2280 = vmatpush2.msra.mxu0 %v282
    %2281 = vmatprep.subr.mxu0 %v281
    %2282 = vmatpush2.msra.mxu0 %v280
    %2283 = vmatprep.subr.mxu0 %v279
    %2284 = vmatpush2.msra.mxu0 %v278
    %2285 = vmatprep.subr.mxu0 %v277
    %2286 = vmatpush2.msra.mxu0 %v276
    %2287 = vmatprep.subr.mxu0 %v275
    %2288 = vmatpush2.msra.mxu0 %v274
    %2289 = vmatprep.subr.mxu0 %v273
    %2290 = vmatpush2.msra.mxu0 %v272
    %2291 = vmatprep.mubr.f32.mxu0 %v2219
    %2292 = vmatmul.mubr.f32.gmra.mxu0 %v2106
    %v2293 = vpop.f32.mrf.mxu0
    %v2294 = vadd.f32 0.0, %v2293
    %v2295 = vpop.f32.mrf.mxu0
    %v2296 = vadd.f32 0.0, %v2295
    %2297 = vmatprep.mubr.f32.mxu0 %v2220
    %2298 = vmatmul.mubr.f32.gmra.mxu0 %v2107
    %v2299 = vpop.f32.mrf.mxu0
    %v2300 = vadd.f32 0.0, %v2299
    %v2301 = vpop.f32.mrf.mxu0
    %v2302 = vadd.f32 0.0, %v2301
    %2303 = vmatprep.mubr.f32.mxu0 %v2221
    %2304 = vmatmul.mubr.f32.gmra.mxu0 %v2108
    %v2305 = vpop.f32.mrf.mxu0
    %v2306 = vadd.f32 0.0, %v2305
    %v2307 = vpop.f32.mrf.mxu0
    %v2308 = vadd.f32 0.0, %v2307
    %2309 = vmatprep.mubr.f32.mxu0 %v2222
    %2310 = vmatmul.mubr.f32.gmra.mxu0 %v2109
    %v2311 = vpop.f32.mrf.mxu0
    %v2312 = vadd.f32 0.0, %v2311
    %v2313 = vpop.f32.mrf.mxu0
    %v2314 = vadd.f32 0.0, %v2313
    %2315 = vmatprep.mubr.f32.mxu0 %v2223
    %2316 = vmatmul.mubr.f32.gmra.mxu0 %v2110
    %v2317 = vpop.f32.mrf.mxu0
    %v2318 = vadd.f32 0.0, %v2317
    %v2319 = vpop.f32.mrf.mxu0
    %v2320 = vadd.f32 0.0, %v2319
    %2321 = vmatprep.mubr.f32.mxu0 %v2224
    %2322 = vmatmul.mubr.f32.gmra.mxu0 %v2111
    %v2323 = vpop.f32.mrf.mxu0
    %v2324 = vadd.f32 0.0, %v2323
    %v2325 = vpop.f32.mrf.mxu0
    %v2326 = vadd.f32 0.0, %v2325
    %2327 = vmatprep.mubr.f32.mxu0 %v2225
    %2328 = vmatmul.mubr.f32.gmra.mxu0 %v2112
    %v2329 = vpop.f32.mrf.mxu0
    %v2330 = vadd.f32 0.0, %v2329
    %v2331 = vpop.f32.mrf.mxu0
    %v2332 = vadd.f32 0.0, %v2331
    %2333 = vmatprep.mubr.f32.mxu0 %v2226
    %2334 = vmatmul.mubr.f32.gmra.mxu0 %v2113
    %v2335 = vpop.f32.mrf.mxu0
    %v2336 = vadd.f32 0.0, %v2335
    %v2337 = vpop.f32.mrf.mxu0
    %v2338 = vadd.f32 0.0, %v2337
    %2339 = vdwg.mxu0
    %s2340 = scalar_lea.vmem [#allocation11], 256
    %v2341 = vld [vmem:[%s2340] sm:$0xff]
    %v2342 = vld [vmem:[%s2340 + $0x8] sm:$0xff]
    %v2343 = vld [vmem:[%s2340 + $0x10] sm:$0xff]
    %v2344 = vld [vmem:[%s2340 + $0x18] sm:$0xff]
    %v2345 = vld [vmem:[%s2340 + $0x20] sm:$0xff]
    %v2346 = vld [vmem:[%s2340 + $0x28] sm:$0xff]
    %v2347 = vld [vmem:[%s2340 + $0x30] sm:$0xff]
    %v2348 = vld [vmem:[%s2340 + $0x38] sm:$0xff]
    %s2349 = scalar_lea.vmem [#allocation11], 768
    %v2350 = vld [vmem:[%s2349] sm:$0xff]
    %v2351 = vld [vmem:[%s2349 + $0x8] sm:$0xff]
    %v2352 = vld [vmem:[%s2349 + $0x10] sm:$0xff]
    %v2353 = vld [vmem:[%s2349 + $0x18] sm:$0xff]
    %v2354 = vld [vmem:[%s2349 + $0x20] sm:$0xff]
    %v2355 = vld [vmem:[%s2349 + $0x28] sm:$0xff]
    %v2356 = vld [vmem:[%s2349 + $0x30] sm:$0xff]
    %v2357 = vld [vmem:[%s2349 + $0x38] sm:$0xff]
    %v2358 = vmul.f32 %v2294, %v2341
    %v2359 = vmul.f32 %v2300, %v2342
    %v2360 = vmul.f32 %v2306, %v2343
    %v2361 = vmul.f32 %v2312, %v2344
    %v2362 = vmul.f32 %v2318, %v2345
    %v2363 = vmul.f32 %v2324, %v2346
    %v2364 = vmul.f32 %v2330, %v2347
    %v2365 = vmul.f32 %v2336, %v2348
    %v2366 = vmul.f32 %v2296, %v2350
    %v2367 = vmul.f32 %v2302, %v2351
    %v2368 = vmul.f32 %v2308, %v2352
    %v2369 = vmul.f32 %v2314, %v2353
    %v2370 = vmul.f32 %v2320, %v2354
    %v2371 = vmul.f32 %v2326, %v2355
    %v2372 = vmul.f32 %v2332, %v2356
    %v2373 = vmul.f32 %v2338, %v2357
    %v2374 = vsub.f32 %v2358, %v2366
    %v2375 = vsub.f32 %v2359, %v2367
    %v2376 = vsub.f32 %v2360, %v2368
    %v2377 = vsub.f32 %v2361, %v2369
    %v2378 = vsub.f32 %v2362, %v2370
    %v2379 = vsub.f32 %v2363, %v2371
    %v2380 = vsub.f32 %v2364, %v2372
    %v2381 = vsub.f32 %v2365, %v2373
    %v2382 = vmul.f32 %v2294, %v2350
    %v2383 = vmul.f32 %v2300, %v2351
    %v2384 = vmul.f32 %v2306, %v2352
    %v2385 = vmul.f32 %v2312, %v2353
    %v2386 = vmul.f32 %v2318, %v2354
    %v2387 = vmul.f32 %v2324, %v2355
    %v2388 = vmul.f32 %v2330, %v2356
    %v2389 = vmul.f32 %v2336, %v2357
    %v2390 = vmul.f32 %v2296, %v2341
    %v2391 = vmul.f32 %v2302, %v2342
    %v2392 = vmul.f32 %v2308, %v2343
    %v2393 = vmul.f32 %v2314, %v2344
    %v2394 = vmul.f32 %v2320, %v2345
    %v2395 = vmul.f32 %v2326, %v2346
    %v2396 = vmul.f32 %v2332, %v2347
    %v2397 = vmul.f32 %v2338, %v2348
    %v2398 = vadd.f32 %v2382, %v2390
    %v2399 = vadd.f32 %v2383, %v2391
    %v2400 = vadd.f32 %v2384, %v2392
    %v2401 = vadd.f32 %v2385, %v2393
    %v2402 = vadd.f32 %v2386, %v2394
    %v2403 = vadd.f32 %v2387, %v2395
    %v2404 = vadd.f32 %v2388, %v2396
    %v2405 = vadd.f32 %v2389, %v2397
    %v2406 = vadd.f32 %v2374, %v2398
    %v2407 = vadd.f32 %v2375, %v2399
    %v2408 = vadd.f32 %v2376, %v2400
    %v2409 = vadd.f32 %v2377, %v2401
    %v2410 = vadd.f32 %v2378, %v2402
    %v2411 = vadd.f32 %v2379, %v2403
    %v2412 = vadd.f32 %v2380, %v2404
    %v2413 = vadd.f32 %v2381, %v2405
    %2414 = vmatprep.subr.mxu0 0.0
    %2415 = vmatpush1.msra.mxu0 0.0
    %2416 = vmatprep.subr.mxu0 0.0
    %2417 = vmatpush1.msra.mxu0 0.0
    %2418 = vmatprep.subr.mxu0 0.0
    %2419 = vmatpush1.msra.mxu0 0.0
    %2420 = vmatprep.subr.mxu0 0.0
    %2421 = vmatpush1.msra.mxu0 0.0
    %2422 = vmatprep.subr.mxu0 0.0
    %2423 = vmatpush1.msra.mxu0 0.0
    %2424 = vmatprep.subr.mxu0 0.0
    %2425 = vmatpush1.msra.mxu0 0.0
    %2426 = vmatprep.subr.mxu0 0.0
    %2427 = vmatpush1.msra.mxu0 0.0
    %2428 = vmatprep.subr.mxu0 0.0
    %2429 = vmatpush1.msra.mxu0 0.0
    %2430 = vmatprep.subr.mxu0 0.0
    %2431 = vmatpush1.msra.mxu0 %v2413
    %2432 = vmatprep.subr.mxu0 0.0
    %2433 = vmatpush1.msra.mxu0 %v2412
    %2434 = vmatprep.subr.mxu0 0.0
    %2435 = vmatpush1.msra.mxu0 %v2411
    %2436 = vmatprep.subr.mxu0 0.0
    %2437 = vmatpush1.msra.mxu0 %v2410
    %2438 = vmatprep.subr.mxu0 0.0
    %2439 = vmatpush1.msra.mxu0 %v2409
    %2440 = vmatprep.subr.mxu0 0.0
    %2441 = vmatpush1.msra.mxu0 %v2408
    %2442 = vmatprep.subr.mxu0 0.0
    %2443 = vmatpush1.msra.mxu0 %v2407
    %2444 = vmatprep.subr.mxu0 0.0
    %2445 = vmatpush1.msra.mxu0 %v2406
    %2446 = vmatprep.subr.mxu0 0.0
    %2447 = vmatpush2.msra.mxu0 0.0
    %2448 = vmatprep.subr.mxu0 0.0
    %2449 = vmatpush2.msra.mxu0 0.0
    %2450 = vmatprep.subr.mxu0 0.0
    %2451 = vmatpush2.msra.mxu0 0.0
    %2452 = vmatprep.subr.mxu0 0.0
    %2453 = vmatpush2.msra.mxu0 0.0
    %2454 = vmatprep.subr.mxu0 0.0
    %2455 = vmatpush2.msra.mxu0 0.0
    %2456 = vmatprep.subr.mxu0 0.0
    %2457 = vmatpush2.msra.mxu0 0.0
    %2458 = vmatprep.subr.mxu0 0.0
    %2459 = vmatpush2.msra.mxu0 0.0
    %2460 = vmatprep.subr.mxu0 0.0
    %2461 = vmatpush2.msra.mxu0 0.0
    %2462 = vmatprep.subr.mxu0 0.0
    %2463 = vmatpush2.msra.mxu0 0.0
    %2464 = vmatprep.subr.mxu0 0.0
    %2465 = vmatpush2.msra.mxu0 0.0
    %2466 = vmatprep.subr.mxu0 0.0
    %2467 = vmatpush2.msra.mxu0 0.0
    %2468 = vmatprep.subr.mxu0 0.0
    %2469 = vmatpush2.msra.mxu0 0.0
    %2470 = vmatprep.subr.mxu0 0.0
    %2471 = vmatpush2.msra.mxu0 0.0
    %2472 = vmatprep.subr.mxu0 0.0
    %2473 = vmatpush2.msra.mxu0 0.0
    %2474 = vmatprep.subr.mxu0 0.0
    %2475 = vmatpush2.msra.mxu0 0.0
    %2476 = vmatprep.subr.mxu0 0.0
    %2477 = vmatpush2.msra.mxu0 0.0
    %2478 = vmatprep.mubr.f32.mxu0 0.0
    %2479 = vmatmul.mubr.f32.gmra.mxu0 %v314
    %v2480 = vpop.f32.mrf.mxu0
    %v2481 = vadd.f32 0.0, %v2480
    %v2482 = vpop.f32.mrf.mxu0
    %2483 = vmatprep.mubr.f32.mxu0 0.0
    %2484 = vmatmul.mubr.f32.gmra.mxu0 %v317
    %v2485 = vpop.f32.mrf.mxu0
    %v2486 = vadd.f32 0.0, %v2485
    %v2487 = vpop.f32.mrf.mxu0
    %2488 = vmatprep.mubr.f32.mxu0 0.0
    %2489 = vmatmul.mubr.f32.gmra.mxu0 %v320
    %v2490 = vpop.f32.mrf.mxu0
    %v2491 = vadd.f32 0.0, %v2490
    %v2492 = vpop.f32.mrf.mxu0
    %2493 = vmatprep.mubr.f32.mxu0 0.0
    %2494 = vmatmul.mubr.f32.gmra.mxu0 %v323
    %v2495 = vpop.f32.mrf.mxu0
    %v2496 = vadd.f32 0.0, %v2495
    %v2497 = vpop.f32.mrf.mxu0
    %2498 = vmatprep.mubr.f32.mxu0 0.0
    %2499 = vmatmul.mubr.f32.gmra.mxu0 %v326
    %v2500 = vpop.f32.mrf.mxu0
    %v2501 = vadd.f32 0.0, %v2500
    %v2502 = vpop.f32.mrf.mxu0
    %2503 = vmatprep.mubr.f32.mxu0 0.0
    %2504 = vmatmul.mubr.f32.gmra.mxu0 %v329
    %v2505 = vpop.f32.mrf.mxu0
    %v2506 = vadd.f32 0.0, %v2505
    %v2507 = vpop.f32.mrf.mxu0
    %2508 = vmatprep.mubr.f32.mxu0 0.0
    %2509 = vmatmul.mubr.f32.gmra.mxu0 %v332
    %v2510 = vpop.f32.mrf.mxu0
    %v2511 = vadd.f32 0.0, %v2510
    %v2512 = vpop.f32.mrf.mxu0
    %2513 = vmatprep.mubr.f32.mxu0 0.0
    %2514 = vmatmul.mubr.f32.gmra.mxu0 %v335
    %v2515 = vpop.f32.mrf.mxu0
    %v2516 = vadd.f32 0.0, %v2515
    %v2517 = vpop.f32.mrf.mxu0
    %2518 = vdwg.mxu0
    %2519 = vmatprep.subr.mxu0 0.0
    %2520 = vmatpush1.msra.mxu0 0.0
    %2521 = vmatprep.subr.mxu0 0.0
    %2522 = vmatpush1.msra.mxu0 0.0
    %2523 = vmatprep.subr.mxu0 0.0
    %2524 = vmatpush1.msra.mxu0 0.0
    %2525 = vmatprep.subr.mxu0 0.0
    %2526 = vmatpush1.msra.mxu0 0.0
    %2527 = vmatprep.subr.mxu0 0.0
    %2528 = vmatpush1.msra.mxu0 0.0
    %2529 = vmatprep.subr.mxu0 0.0
    %2530 = vmatpush1.msra.mxu0 0.0
    %2531 = vmatprep.subr.mxu0 0.0
    %2532 = vmatpush1.msra.mxu0 0.0
    %2533 = vmatprep.subr.mxu0 0.0
    %2534 = vmatpush1.msra.mxu0 0.0
    %2535 = vmatprep.subr.mxu0 0.0
    %2536 = vmatpush1.msra.mxu0 %v2405
    %2537 = vmatprep.subr.mxu0 0.0
    %2538 = vmatpush1.msra.mxu0 %v2404
    %2539 = vmatprep.subr.mxu0 0.0
    %2540 = vmatpush1.msra.mxu0 %v2403
    %2541 = vmatprep.subr.mxu0 0.0
    %2542 = vmatpush1.msra.mxu0 %v2402
    %2543 = vmatprep.subr.mxu0 0.0
    %2544 = vmatpush1.msra.mxu0 %v2401
    %2545 = vmatprep.subr.mxu0 0.0
    %2546 = vmatpush1.msra.mxu0 %v2400
    %2547 = vmatprep.subr.mxu0 0.0
    %2548 = vmatpush1.msra.mxu0 %v2399
    %2549 = vmatprep.subr.mxu0 0.0
    %2550 = vmatpush1.msra.mxu0 %v2398
    %2551 = vmatprep.subr.mxu0 0.0
    %2552 = vmatpush2.msra.mxu0 0.0
    %2553 = vmatprep.subr.mxu0 0.0
    %2554 = vmatpush2.msra.mxu0 0.0
    %2555 = vmatprep.subr.mxu0 0.0
    %2556 = vmatpush2.msra.mxu0 0.0
    %2557 = vmatprep.subr.mxu0 0.0
    %2558 = vmatpush2.msra.mxu0 0.0
    %2559 = vmatprep.subr.mxu0 0.0
    %2560 = vmatpush2.msra.mxu0 0.0
    %2561 = vmatprep.subr.mxu0 0.0
    %2562 = vmatpush2.msra.mxu0 0.0
    %2563 = vmatprep.subr.mxu0 0.0
    %2564 = vmatpush2.msra.mxu0 0.0
    %2565 = vmatprep.subr.mxu0 0.0
    %2566 = vmatpush2.msra.mxu0 0.0
    %2567 = vmatprep.subr.mxu0 0.0
    %2568 = vmatpush2.msra.mxu0 0.0
    %2569 = vmatprep.subr.mxu0 0.0
    %2570 = vmatpush2.msra.mxu0 0.0
    %2571 = vmatprep.subr.mxu0 0.0
    %2572 = vmatpush2.msra.mxu0 0.0
    %2573 = vmatprep.subr.mxu0 0.0
    %2574 = vmatpush2.msra.mxu0 0.0
    %2575 = vmatprep.subr.mxu0 0.0
    %2576 = vmatpush2.msra.mxu0 0.0
    %2577 = vmatprep.subr.mxu0 0.0
    %2578 = vmatpush2.msra.mxu0 0.0
    %2579 = vmatprep.subr.mxu0 0.0
    %2580 = vmatpush2.msra.mxu0 0.0
    %2581 = vmatprep.subr.mxu0 0.0
    %2582 = vmatpush2.msra.mxu0 0.0
    %2583 = vmatprep.mubr.f32.mxu0 0.0
    %2584 = vmatmul.mubr.f32.gmra.mxu0 %v1478
    %v2585 = vpop.f32.mrf.mxu0
    %v2586 = vadd.f32 0.0, %v2585
    %v2587 = vpop.f32.mrf.mxu0
    %2588 = vmatprep.mubr.f32.mxu0 0.0
    %2589 = vmatmul.mubr.f32.gmra.mxu0 %v1481
    %v2590 = vpop.f32.mrf.mxu0
    %v2591 = vadd.f32 0.0, %v2590
    %v2592 = vpop.f32.mrf.mxu0
    %2593 = vmatprep.mubr.f32.mxu0 0.0
    %2594 = vmatmul.mubr.f32.gmra.mxu0 %v1484
    %v2595 = vpop.f32.mrf.mxu0
    %v2596 = vadd.f32 0.0, %v2595
    %v2597 = vpop.f32.mrf.mxu0
    %2598 = vmatprep.mubr.f32.mxu0 0.0
    %2599 = vmatmul.mubr.f32.gmra.mxu0 %v1487
    %v2600 = vpop.f32.mrf.mxu0
    %v2601 = vadd.f32 0.0, %v2600
    %v2602 = vpop.f32.mrf.mxu0
    %2603 = vmatprep.mubr.f32.mxu0 0.0
    %2604 = vmatmul.mubr.f32.gmra.mxu0 %v1490
    %v2605 = vpop.f32.mrf.mxu0
    %v2606 = vadd.f32 0.0, %v2605
    %v2607 = vpop.f32.mrf.mxu0
    %2608 = vmatprep.mubr.f32.mxu0 0.0
    %2609 = vmatmul.mubr.f32.gmra.mxu0 %v1493
    %v2610 = vpop.f32.mrf.mxu0
    %v2611 = vadd.f32 0.0, %v2610
    %v2612 = vpop.f32.mrf.mxu0
    %2613 = vmatprep.mubr.f32.mxu0 0.0
    %2614 = vmatmul.mubr.f32.gmra.mxu0 %v1496
    %v2615 = vpop.f32.mrf.mxu0
    %v2616 = vadd.f32 0.0, %v2615
    %v2617 = vpop.f32.mrf.mxu0
    %2618 = vmatprep.mubr.f32.mxu0 0.0
    %2619 = vmatmul.mubr.f32.gmra.mxu0 %v1499
    %v2620 = vpop.f32.mrf.mxu0
    %v2621 = vadd.f32 0.0, %v2620
    %v2622 = vpop.f32.mrf.mxu0
    %2623 = vdwg.mxu0
    %v2624 = vsub.f32 %v2481, %v2586
    %v2625 = vsub.f32 %v2486, %v2591
    %v2626 = vsub.f32 %v2491, %v2596
    %v2627 = vsub.f32 %v2496, %v2601
    %v2628 = vsub.f32 %v2501, %v2606
    %v2629 = vsub.f32 %v2506, %v2611
    %v2630 = vsub.f32 %v2511, %v2616
    %v2631 = vsub.f32 %v2516, %v2621
    %2632 = vmatprep.subr.mxu0 0.0
    %2633 = vmatpush1.msra.mxu0 0.0
    %2634 = vmatprep.subr.mxu0 0.0
    %2635 = vmatpush1.msra.mxu0 0.0
    %2636 = vmatprep.subr.mxu0 0.0
    %2637 = vmatpush1.msra.mxu0 0.0
    %2638 = vmatprep.subr.mxu0 0.0
    %2639 = vmatpush1.msra.mxu0 0.0
    %2640 = vmatprep.subr.mxu0 0.0
    %2641 = vmatpush1.msra.mxu0 0.0
    %2642 = vmatprep.subr.mxu0 0.0
    %2643 = vmatpush1.msra.mxu0 0.0
    %2644 = vmatprep.subr.mxu0 0.0
    %2645 = vmatpush1.msra.mxu0 0.0
    %2646 = vmatprep.subr.mxu0 0.0
    %2647 = vmatpush1.msra.mxu0 0.0
    %2648 = vmatprep.subr.mxu0 0.0
    %2649 = vmatpush1.msra.mxu0 %v2381
    %2650 = vmatprep.subr.mxu0 0.0
    %2651 = vmatpush1.msra.mxu0 %v2380
    %2652 = vmatprep.subr.mxu0 0.0
    %2653 = vmatpush1.msra.mxu0 %v2379
    %2654 = vmatprep.subr.mxu0 0.0
    %2655 = vmatpush1.msra.mxu0 %v2378
    %2656 = vmatprep.subr.mxu0 0.0
    %2657 = vmatpush1.msra.mxu0 %v2377
    %2658 = vmatprep.subr.mxu0 0.0
    %2659 = vmatpush1.msra.mxu0 %v2376
    %2660 = vmatprep.subr.mxu0 0.0
    %2661 = vmatpush1.msra.mxu0 %v2375
    %2662 = vmatprep.subr.mxu0 0.0
    %2663 = vmatpush1.msra.mxu0 %v2374
    %2664 = vmatprep.subr.mxu0 0.0
    %2665 = vmatpush2.msra.mxu0 0.0
    %2666 = vmatprep.subr.mxu0 0.0
    %2667 = vmatpush2.msra.mxu0 0.0
    %2668 = vmatprep.subr.mxu0 0.0
    %2669 = vmatpush2.msra.mxu0 0.0
    %2670 = vmatprep.subr.mxu0 0.0
    %2671 = vmatpush2.msra.mxu0 0.0
    %2672 = vmatprep.subr.mxu0 0.0
    %2673 = vmatpush2.msra.mxu0 0.0
    %2674 = vmatprep.subr.mxu0 0.0
    %2675 = vmatpush2.msra.mxu0 0.0
    %2676 = vmatprep.subr.mxu0 0.0
    %2677 = vmatpush2.msra.mxu0 0.0
    %2678 = vmatprep.subr.mxu0 0.0
    %2679 = vmatpush2.msra.mxu0 0.0
    %2680 = vmatprep.subr.mxu0 0.0
    %2681 = vmatpush2.msra.mxu0 0.0
    %2682 = vmatprep.subr.mxu0 0.0
    %2683 = vmatpush2.msra.mxu0 0.0
    %2684 = vmatprep.subr.mxu0 0.0
    %2685 = vmatpush2.msra.mxu0 0.0
    %2686 = vmatprep.subr.mxu0 0.0
    %2687 = vmatpush2.msra.mxu0 0.0
    %2688 = vmatprep.subr.mxu0 0.0
    %2689 = vmatpush2.msra.mxu0 0.0
    %2690 = vmatprep.subr.mxu0 0.0
    %2691 = vmatpush2.msra.mxu0 0.0
    %2692 = vmatprep.subr.mxu0 0.0
    %2693 = vmatpush2.msra.mxu0 0.0
    %2694 = vmatprep.subr.mxu0 0.0
    %2695 = vmatpush2.msra.mxu0 0.0
    %2696 = vmatprep.mubr.f32.mxu0 0.0
    %2697 = vmatmul.mubr.f32.gmra.mxu0 %v443
    %v2698 = vpop.f32.mrf.mxu0
    %v2699 = vadd.f32 0.0, %v2698
    %v2700 = vpop.f32.mrf.mxu0
    %2701 = vmatprep.mubr.f32.mxu0 0.0
    %2702 = vmatmul.mubr.f32.gmra.mxu0 %v446
    %v2703 = vpop.f32.mrf.mxu0
    %v2704 = vadd.f32 0.0, %v2703
    %v2705 = vpop.f32.mrf.mxu0
    %2706 = vmatprep.mubr.f32.mxu0 0.0
    %2707 = vmatmul.mubr.f32.gmra.mxu0 %v449
    %v2708 = vpop.f32.mrf.mxu0
    %v2709 = vadd.f32 0.0, %v2708
    %v2710 = vpop.f32.mrf.mxu0
    %2711 = vmatprep.mubr.f32.mxu0 0.0
    %2712 = vmatmul.mubr.f32.gmra.mxu0 %v452
    %v2713 = vpop.f32.mrf.mxu0
    %v2714 = vadd.f32 0.0, %v2713
    %v2715 = vpop.f32.mrf.mxu0
    %2716 = vmatprep.mubr.f32.mxu0 0.0
    %2717 = vmatmul.mubr.f32.gmra.mxu0 %v455
    %v2718 = vpop.f32.mrf.mxu0
    %v2719 = vadd.f32 0.0, %v2718
    %v2720 = vpop.f32.mrf.mxu0
    %2721 = vmatprep.mubr.f32.mxu0 0.0
    %2722 = vmatmul.mubr.f32.gmra.mxu0 %v458
    %v2723 = vpop.f32.mrf.mxu0
    %v2724 = vadd.f32 0.0, %v2723
    %v2725 = vpop.f32.mrf.mxu0
    %2726 = vmatprep.mubr.f32.mxu0 0.0
    %2727 = vmatmul.mubr.f32.gmra.mxu0 %v461
    %v2728 = vpop.f32.mrf.mxu0
    %v2729 = vadd.f32 0.0, %v2728
    %v2730 = vpop.f32.mrf.mxu0
    %2731 = vmatprep.mubr.f32.mxu0 0.0
    %2732 = vmatmul.mubr.f32.gmra.mxu0 %v464
    %v2733 = vpop.f32.mrf.mxu0
    %v2734 = vadd.f32 0.0, %v2733
    %v2735 = vpop.f32.mrf.mxu0
    %2736 = vdwg.mxu0
    %v2737 = vadd.f32 %v2481, %v2699
    %v2738 = vadd.f32 %v2486, %v2704
    %v2739 = vadd.f32 %v2491, %v2709
    %v2740 = vadd.f32 %v2496, %v2714
    %v2741 = vadd.f32 %v2501, %v2719
    %v2742 = vadd.f32 %v2506, %v2724
    %v2743 = vadd.f32 %v2511, %v2729
    %v2744 = vadd.f32 %v2516, %v2734
    %2745 = vmatprep.subr.mxu0 %v206
    %2746 = vmatpush1.msra.mxu0 %v205
    %2747 = vmatprep.subr.mxu0 %v204
    %2748 = vmatpush1.msra.mxu0 %v203
    %2749 = vmatprep.subr.mxu0 %v202
    %2750 = vmatpush1.msra.mxu0 %v201
    %2751 = vmatprep.subr.mxu0 %v200
    %2752 = vmatpush1.msra.mxu0 %v199
    %2753 = vmatprep.subr.mxu0 %v198
    %2754 = vmatpush1.msra.mxu0 %v197
    %2755 = vmatprep.subr.mxu0 %v196
    %2756 = vmatpush1.msra.mxu0 %v195
    %2757 = vmatprep.subr.mxu0 %v194
    %2758 = vmatpush1.msra.mxu0 %v193
    %2759 = vmatprep.subr.mxu0 %v192
    %2760 = vmatpush1.msra.mxu0 %v191
    %2761 = vmatprep.subr.mxu0 %v190
    %2762 = vmatpush1.msra.mxu0 %v189
    %2763 = vmatprep.subr.mxu0 %v188
    %2764 = vmatpush1.msra.mxu0 %v187
    %2765 = vmatprep.subr.mxu0 %v186
    %2766 = vmatpush1.msra.mxu0 %v185
    %2767 = vmatprep.subr.mxu0 %v184
    %2768 = vmatpush1.msra.mxu0 %v183
    %2769 = vmatprep.subr.mxu0 %v182
    %2770 = vmatpush1.msra.mxu0 %v181
    %2771 = vmatprep.subr.mxu0 %v180
    %2772 = vmatpush1.msra.mxu0 %v179
    %2773 = vmatprep.subr.mxu0 %v178
    %2774 = vmatpush1.msra.mxu0 %v177
    %2775 = vmatprep.subr.mxu0 %v176
    %2776 = vmatpush1.msra.mxu0 %v175
    %2777 = vmatprep.subr.mxu0 %v238
    %2778 = vmatpush2.msra.mxu0 %v237
    %2779 = vmatprep.subr.mxu0 %v236
    %2780 = vmatpush2.msra.mxu0 %v235
    %2781 = vmatprep.subr.mxu0 %v234
    %2782 = vmatpush2.msra.mxu0 %v233
    %2783 = vmatprep.subr.mxu0 %v232
    %2784 = vmatpush2.msra.mxu0 %v231
    %2785 = vmatprep.subr.mxu0 %v230
    %2786 = vmatpush2.msra.mxu0 %v229
    %2787 = vmatprep.subr.mxu0 %v228
    %2788 = vmatpush2.msra.mxu0 %v227
    %2789 = vmatprep.subr.mxu0 %v226
    %2790 = vmatpush2.msra.mxu0 %v225
    %2791 = vmatprep.subr.mxu0 %v224
    %2792 = vmatpush2.msra.mxu0 %v223
    %2793 = vmatprep.subr.mxu0 %v222
    %2794 = vmatpush2.msra.mxu0 %v221
    %2795 = vmatprep.subr.mxu0 %v220
    %2796 = vmatpush2.msra.mxu0 %v219
    %2797 = vmatprep.subr.mxu0 %v218
    %2798 = vmatpush2.msra.mxu0 %v217
    %2799 = vmatprep.subr.mxu0 %v216
    %2800 = vmatpush2.msra.mxu0 %v215
    %2801 = vmatprep.subr.mxu0 %v214
    %2802 = vmatpush2.msra.mxu0 %v213
    %2803 = vmatprep.subr.mxu0 %v212
    %2804 = vmatpush2.msra.mxu0 %v211
    %2805 = vmatprep.subr.mxu0 %v210
    %2806 = vmatpush2.msra.mxu0 %v209
    %2807 = vmatprep.subr.mxu0 %v208
    %2808 = vmatpush2.msra.mxu0 %v207
    %2809 = vmatprep.mubr.f32.mxu0 %v2737
    %2810 = vmatmul.mubr.f32.gmra.mxu0 %v2624
    %v2811 = vpop.f32.mrf.mxu0
    %v2812 = vadd.f32 0.0, %v2811
    %v2813 = vpop.f32.mrf.mxu0
    %v2814 = vadd.f32 0.0, %v2813
    %2815 = vmatprep.mubr.f32.mxu0 %v2738
    %2816 = vmatmul.mubr.f32.gmra.mxu0 %v2625
    %v2817 = vpop.f32.mrf.mxu0
    %v2818 = vadd.f32 0.0, %v2817
    %v2819 = vpop.f32.mrf.mxu0
    %v2820 = vadd.f32 0.0, %v2819
    %2821 = vmatprep.mubr.f32.mxu0 %v2739
    %2822 = vmatmul.mubr.f32.gmra.mxu0 %v2626
    %v2823 = vpop.f32.mrf.mxu0
    %v2824 = vadd.f32 0.0, %v2823
    %v2825 = vpop.f32.mrf.mxu0
    %v2826 = vadd.f32 0.0, %v2825
    %2827 = vmatprep.mubr.f32.mxu0 %v2740
    %2828 = vmatmul.mubr.f32.gmra.mxu0 %v2627
    %v2829 = vpop.f32.mrf.mxu0
    %v2830 = vadd.f32 0.0, %v2829
    %v2831 = vpop.f32.mrf.mxu0
    %v2832 = vadd.f32 0.0, %v2831
    %2833 = vmatprep.mubr.f32.mxu0 %v2741
    %2834 = vmatmul.mubr.f32.gmra.mxu0 %v2628
    %v2835 = vpop.f32.mrf.mxu0
    %v2836 = vadd.f32 0.0, %v2835
    %v2837 = vpop.f32.mrf.mxu0
    %v2838 = vadd.f32 0.0, %v2837
    %2839 = vmatprep.mubr.f32.mxu0 %v2742
    %2840 = vmatmul.mubr.f32.gmra.mxu0 %v2629
    %v2841 = vpop.f32.mrf.mxu0
    %v2842 = vadd.f32 0.0, %v2841
    %v2843 = vpop.f32.mrf.mxu0
    %v2844 = vadd.f32 0.0, %v2843
    %2845 = vmatprep.mubr.f32.mxu0 %v2743
    %2846 = vmatmul.mubr.f32.gmra.mxu0 %v2630
    %v2847 = vpop.f32.mrf.mxu0
    %v2848 = vadd.f32 0.0, %v2847
    %v2849 = vpop.f32.mrf.mxu0
    %v2850 = vadd.f32 0.0, %v2849
    %2851 = vmatprep.mubr.f32.mxu0 %v2744
    %2852 = vmatmul.mubr.f32.gmra.mxu0 %v2631
    %v2853 = vpop.f32.mrf.mxu0
    %v2854 = vadd.f32 0.0, %v2853
    %v2855 = vpop.f32.mrf.mxu0
    %v2856 = vadd.f32 0.0, %v2855
    %2857 = vdwg.mxu0
    %v2858 = vmul.f32 %v2812, %v1282
    %v2859 = vmul.f32 %v2818, %v1283
    %v2860 = vmul.f32 %v2824, %v1284
    %v2861 = vmul.f32 %v2830, %v1285
    %v2862 = vmul.f32 %v2836, %v1286
    %v2863 = vmul.f32 %v2842, %v1287
    %v2864 = vmul.f32 %v2848, %v1288
    %v2865 = vmul.f32 %v2854, %v1289
    %v2866 = vmul.f32 %v2814, %v1291
    %v2867 = vmul.f32 %v2820, %v1292
    %v2868 = vmul.f32 %v2826, %v1293
    %v2869 = vmul.f32 %v2832, %v1294
    %v2870 = vmul.f32 %v2838, %v1295
    %v2871 = vmul.f32 %v2844, %v1296
    %v2872 = vmul.f32 %v2850, %v1297
    %v2873 = vmul.f32 %v2856, %v1298
    %v2874 = vsub.f32 %v2858, %v2866
    %v2875 = vsub.f32 %v2859, %v2867
    %v2876 = vsub.f32 %v2860, %v2868
    %v2877 = vsub.f32 %v2861, %v2869
    %v2878 = vsub.f32 %v2862, %v2870
    %v2879 = vsub.f32 %v2863, %v2871
    %v2880 = vsub.f32 %v2864, %v2872
    %v2881 = vsub.f32 %v2865, %v2873
    %v2882 = vmul.f32 %v2812, %v1291
    %v2883 = vmul.f32 %v2818, %v1292
    %v2884 = vmul.f32 %v2824, %v1293
    %v2885 = vmul.f32 %v2830, %v1294
    %v2886 = vmul.f32 %v2836, %v1295
    %v2887 = vmul.f32 %v2842, %v1296
    %v2888 = vmul.f32 %v2848, %v1297
    %v2889 = vmul.f32 %v2854, %v1298
    %v2890 = vmul.f32 %v2814, %v1282
    %v2891 = vmul.f32 %v2820, %v1283
    %v2892 = vmul.f32 %v2826, %v1284
    %v2893 = vmul.f32 %v2832, %v1285
    %v2894 = vmul.f32 %v2838, %v1286
    %v2895 = vmul.f32 %v2844, %v1287
    %v2896 = vmul.f32 %v2850, %v1288
    %v2897 = vmul.f32 %v2856, %v1289
    %v2898 = vadd.f32 %v2882, %v2890
    %v2899 = vadd.f32 %v2883, %v2891
    %v2900 = vadd.f32 %v2884, %v2892
    %v2901 = vadd.f32 %v2885, %v2893
    %v2902 = vadd.f32 %v2886, %v2894
    %v2903 = vadd.f32 %v2887, %v2895
    %v2904 = vadd.f32 %v2888, %v2896
    %v2905 = vadd.f32 %v2889, %v2897
    %v2906 = vadd.f32 %v2874, %v2898
    %v2907 = vadd.f32 %v2875, %v2899
    %v2908 = vadd.f32 %v2876, %v2900
    %v2909 = vadd.f32 %v2877, %v2901
    %v2910 = vadd.f32 %v2878, %v2902
    %v2911 = vadd.f32 %v2879, %v2903
    %v2912 = vadd.f32 %v2880, %v2904
    %v2913 = vadd.f32 %v2881, %v2905
    %2914 = vmatprep.subr.mxu0 0.0
    %2915 = vmatpush1.msra.mxu0 0.0
    %2916 = vmatprep.subr.mxu0 0.0
    %2917 = vmatpush1.msra.mxu0 0.0
    %2918 = vmatprep.subr.mxu0 0.0
    %2919 = vmatpush1.msra.mxu0 0.0
    %2920 = vmatprep.subr.mxu0 0.0
    %2921 = vmatpush1.msra.mxu0 0.0
    %2922 = vmatprep.subr.mxu0 0.0
    %2923 = vmatpush1.msra.mxu0 0.0
    %2924 = vmatprep.subr.mxu0 0.0
    %2925 = vmatpush1.msra.mxu0 0.0
    %2926 = vmatprep.subr.mxu0 0.0
    %2927 = vmatpush1.msra.mxu0 0.0
    %2928 = vmatprep.subr.mxu0 0.0
    %2929 = vmatpush1.msra.mxu0 0.0
    %2930 = vmatprep.subr.mxu0 0.0
    %2931 = vmatpush1.msra.mxu0 %v2913
    %2932 = vmatprep.subr.mxu0 0.0
    %2933 = vmatpush1.msra.mxu0 %v2912
    %2934 = vmatprep.subr.mxu0 0.0
    %2935 = vmatpush1.msra.mxu0 %v2911
    %2936 = vmatprep.subr.mxu0 0.0
    %2937 = vmatpush1.msra.mxu0 %v2910
    %2938 = vmatprep.subr.mxu0 0.0
    %2939 = vmatpush1.msra.mxu0 %v2909
    %2940 = vmatprep.subr.mxu0 0.0
    %2941 = vmatpush1.msra.mxu0 %v2908
    %2942 = vmatprep.subr.mxu0 0.0
    %2943 = vmatpush1.msra.mxu0 %v2907
    %2944 = vmatprep.subr.mxu0 0.0
    %2945 = vmatpush1.msra.mxu0 %v2906
    %2946 = vmatprep.subr.mxu0 0.0
    %2947 = vmatpush2.msra.mxu0 0.0
    %2948 = vmatprep.subr.mxu0 0.0
    %2949 = vmatpush2.msra.mxu0 0.0
    %2950 = vmatprep.subr.mxu0 0.0
    %2951 = vmatpush2.msra.mxu0 0.0
    %2952 = vmatprep.subr.mxu0 0.0
    %2953 = vmatpush2.msra.mxu0 0.0
    %2954 = vmatprep.subr.mxu0 0.0
    %2955 = vmatpush2.msra.mxu0 0.0
    %2956 = vmatprep.subr.mxu0 0.0
    %2957 = vmatpush2.msra.mxu0 0.0
    %2958 = vmatprep.subr.mxu0 0.0
    %2959 = vmatpush2.msra.mxu0 0.0
    %2960 = vmatprep.subr.mxu0 0.0
    %2961 = vmatpush2.msra.mxu0 0.0
    %2962 = vmatprep.subr.mxu0 0.0
    %2963 = vmatpush2.msra.mxu0 0.0
    %2964 = vmatprep.subr.mxu0 0.0
    %2965 = vmatpush2.msra.mxu0 0.0
    %2966 = vmatprep.subr.mxu0 0.0
    %2967 = vmatpush2.msra.mxu0 0.0
    %2968 = vmatprep.subr.mxu0 0.0
    %2969 = vmatpush2.msra.mxu0 0.0
    %2970 = vmatprep.subr.mxu0 0.0
    %2971 = vmatpush2.msra.mxu0 0.0
    %2972 = vmatprep.subr.mxu0 0.0
    %2973 = vmatpush2.msra.mxu0 0.0
    %2974 = vmatprep.subr.mxu0 0.0
    %2975 = vmatpush2.msra.mxu0 0.0
    %2976 = vmatprep.subr.mxu0 0.0
    %2977 = vmatpush2.msra.mxu0 0.0
    %2978 = vmatprep.mubr.f32.mxu0 0.0
    %2979 = vmatmul.mubr.f32.gmra.mxu0 %v766
    %v2980 = vpop.f32.mrf.mxu0
    %v2981 = vadd.f32 0.0, %v2980
    %v2982 = vpop.f32.mrf.mxu0
    %2983 = vmatprep.mubr.f32.mxu0 0.0
    %2984 = vmatmul.mubr.f32.gmra.mxu0 %v769
    %v2985 = vpop.f32.mrf.mxu0
    %v2986 = vadd.f32 0.0, %v2985
    %v2987 = vpop.f32.mrf.mxu0
    %2988 = vmatprep.mubr.f32.mxu0 0.0
    %2989 = vmatmul.mubr.f32.gmra.mxu0 %v772
    %v2990 = vpop.f32.mrf.mxu0
    %v2991 = vadd.f32 0.0, %v2990
    %v2992 = vpop.f32.mrf.mxu0
    %2993 = vmatprep.mubr.f32.mxu0 0.0
    %2994 = vmatmul.mubr.f32.gmra.mxu0 %v775
    %v2995 = vpop.f32.mrf.mxu0
    %v2996 = vadd.f32 0.0, %v2995
    %v2997 = vpop.f32.mrf.mxu0
    %2998 = vmatprep.mubr.f32.mxu0 0.0
    %2999 = vmatmul.mubr.f32.gmra.mxu0 %v778
    %v3000 = vpop.f32.mrf.mxu0
    %v3001 = vadd.f32 0.0, %v3000
    %v3002 = vpop.f32.mrf.mxu0
    %3003 = vmatprep.mubr.f32.mxu0 0.0
    %3004 = vmatmul.mubr.f32.gmra.mxu0 %v781
    %v3005 = vpop.f32.mrf.mxu0
    %v3006 = vadd.f32 0.0, %v3005
    %v3007 = vpop.f32.mrf.mxu0
    %3008 = vmatprep.mubr.f32.mxu0 0.0
    %3009 = vmatmul.mubr.f32.gmra.mxu0 %v784
    %v3010 = vpop.f32.mrf.mxu0
    %v3011 = vadd.f32 0.0, %v3010
    %v3012 = vpop.f32.mrf.mxu0
    %3013 = vmatprep.mubr.f32.mxu0 0.0
    %3014 = vmatmul.mubr.f32.gmra.mxu0 %v787
    %v3015 = vpop.f32.mrf.mxu0
    %v3016 = vadd.f32 0.0, %v3015
    %v3017 = vpop.f32.mrf.mxu0
    %3018 = vdwg.mxu0
    %3019 = vmatprep.subr.mxu0 0.0
    %3020 = vmatpush1.msra.mxu0 0.0
    %3021 = vmatprep.subr.mxu0 0.0
    %3022 = vmatpush1.msra.mxu0 0.0
    %3023 = vmatprep.subr.mxu0 0.0
    %3024 = vmatpush1.msra.mxu0 0.0
    %3025 = vmatprep.subr.mxu0 0.0
    %3026 = vmatpush1.msra.mxu0 0.0
    %3027 = vmatprep.subr.mxu0 0.0
    %3028 = vmatpush1.msra.mxu0 0.0
    %3029 = vmatprep.subr.mxu0 0.0
    %3030 = vmatpush1.msra.mxu0 0.0
    %3031 = vmatprep.subr.mxu0 0.0
    %3032 = vmatpush1.msra.mxu0 0.0
    %3033 = vmatprep.subr.mxu0 0.0
    %3034 = vmatpush1.msra.mxu0 0.0
    %3035 = vmatprep.subr.mxu0 0.0
    %3036 = vmatpush1.msra.mxu0 %v2905
    %3037 = vmatprep.subr.mxu0 0.0
    %3038 = vmatpush1.msra.mxu0 %v2904
    %3039 = vmatprep.subr.mxu0 0.0
    %3040 = vmatpush1.msra.mxu0 %v2903
    %3041 = vmatprep.subr.mxu0 0.0
    %3042 = vmatpush1.msra.mxu0 %v2902
    %3043 = vmatprep.subr.mxu0 0.0
    %3044 = vmatpush1.msra.mxu0 %v2901
    %3045 = vmatprep.subr.mxu0 0.0
    %3046 = vmatpush1.msra.mxu0 %v2900
    %3047 = vmatprep.subr.mxu0 0.0
    %3048 = vmatpush1.msra.mxu0 %v2899
    %3049 = vmatprep.subr.mxu0 0.0
    %3050 = vmatpush1.msra.mxu0 %v2898
    %3051 = vmatprep.subr.mxu0 0.0
    %3052 = vmatpush2.msra.mxu0 0.0
    %3053 = vmatprep.subr.mxu0 0.0
    %3054 = vmatpush2.msra.mxu0 0.0
    %3055 = vmatprep.subr.mxu0 0.0
    %3056 = vmatpush2.msra.mxu0 0.0
    %3057 = vmatprep.subr.mxu0 0.0
    %3058 = vmatpush2.msra.mxu0 0.0
    %3059 = vmatprep.subr.mxu0 0.0
    %3060 = vmatpush2.msra.mxu0 0.0
    %3061 = vmatprep.subr.mxu0 0.0
    %3062 = vmatpush2.msra.mxu0 0.0
    %3063 = vmatprep.subr.mxu0 0.0
    %3064 = vmatpush2.msra.mxu0 0.0
    %3065 = vmatprep.subr.mxu0 0.0
    %3066 = vmatpush2.msra.mxu0 0.0
    %3067 = vmatprep.subr.mxu0 0.0
    %3068 = vmatpush2.msra.mxu0 0.0
    %3069 = vmatprep.subr.mxu0 0.0
    %3070 = vmatpush2.msra.mxu0 0.0
    %3071 = vmatprep.subr.mxu0 0.0
    %3072 = vmatpush2.msra.mxu0 0.0
    %3073 = vmatprep.subr.mxu0 0.0
    %3074 = vmatpush2.msra.mxu0 0.0
    %3075 = vmatprep.subr.mxu0 0.0
    %3076 = vmatpush2.msra.mxu0 0.0
    %3077 = vmatprep.subr.mxu0 0.0
    %3078 = vmatpush2.msra.mxu0 0.0
    %3079 = vmatprep.subr.mxu0 0.0
    %3080 = vmatpush2.msra.mxu0 0.0
    %3081 = vmatprep.subr.mxu0 0.0
    %3082 = vmatpush2.msra.mxu0 0.0
    %3083 = vmatprep.mubr.f32.mxu0 0.0
    %3084 = vmatmul.mubr.f32.gmra.mxu0 %v895
    %v3085 = vpop.f32.mrf.mxu0
    %v3086 = vadd.f32 0.0, %v3085
    %v3087 = vpop.f32.mrf.mxu0
    %3088 = vmatprep.mubr.f32.mxu0 0.0
    %3089 = vmatmul.mubr.f32.gmra.mxu0 %v898
    %v3090 = vpop.f32.mrf.mxu0
    %v3091 = vadd.f32 0.0, %v3090
    %v3092 = vpop.f32.mrf.mxu0
    %3093 = vmatprep.mubr.f32.mxu0 0.0
    %3094 = vmatmul.mubr.f32.gmra.mxu0 %v901
    %v3095 = vpop.f32.mrf.mxu0
    %v3096 = vadd.f32 0.0, %v3095
    %v3097 = vpop.f32.mrf.mxu0
    %3098 = vmatprep.mubr.f32.mxu0 0.0
    %3099 = vmatmul.mubr.f32.gmra.mxu0 %v904
    %v3100 = vpop.f32.mrf.mxu0
    %v3101 = vadd.f32 0.0, %v3100
    %v3102 = vpop.f32.mrf.mxu0
    %3103 = vmatprep.mubr.f32.mxu0 0.0
    %3104 = vmatmul.mubr.f32.gmra.mxu0 %v907
    %v3105 = vpop.f32.mrf.mxu0
    %v3106 = vadd.f32 0.0, %v3105
    %v3107 = vpop.f32.mrf.mxu0
    %3108 = vmatprep.mubr.f32.mxu0 0.0
    %3109 = vmatmul.mubr.f32.gmra.mxu0 %v910
    %v3110 = vpop.f32.mrf.mxu0
    %v3111 = vadd.f32 0.0, %v3110
    %v3112 = vpop.f32.mrf.mxu0
    %3113 = vmatprep.mubr.f32.mxu0 0.0
    %3114 = vmatmul.mubr.f32.gmra.mxu0 %v913
    %v3115 = vpop.f32.mrf.mxu0
    %v3116 = vadd.f32 0.0, %v3115
    %v3117 = vpop.f32.mrf.mxu0
    %3118 = vmatprep.mubr.f32.mxu0 0.0
    %3119 = vmatmul.mubr.f32.gmra.mxu0 %v916
    %v3120 = vpop.f32.mrf.mxu0
    %v3121 = vadd.f32 0.0, %v3120
    %v3122 = vpop.f32.mrf.mxu0
    %3123 = vdwg.mxu0
    %v3124 = vsub.f32 %v2981, %v3086
    %v3125 = vsub.f32 %v2986, %v3091
    %v3126 = vsub.f32 %v2991, %v3096
    %v3127 = vsub.f32 %v2996, %v3101
    %v3128 = vsub.f32 %v3001, %v3106
    %v3129 = vsub.f32 %v3006, %v3111
    %v3130 = vsub.f32 %v3011, %v3116
    %v3131 = vsub.f32 %v3016, %v3121
    %3132 = vmatprep.subr.mxu0 0.0
    %3133 = vmatpush1.msra.mxu0 0.0
    %3134 = vmatprep.subr.mxu0 0.0
    %3135 = vmatpush1.msra.mxu0 0.0
    %3136 = vmatprep.subr.mxu0 0.0
    %3137 = vmatpush1.msra.mxu0 0.0
    %3138 = vmatprep.subr.mxu0 0.0
    %3139 = vmatpush1.msra.mxu0 0.0
    %3140 = vmatprep.subr.mxu0 0.0
    %3141 = vmatpush1.msra.mxu0 0.0
    %3142 = vmatprep.subr.mxu0 0.0
    %3143 = vmatpush1.msra.mxu0 0.0
    %3144 = vmatprep.subr.mxu0 0.0
    %3145 = vmatpush1.msra.mxu0 0.0
    %3146 = vmatprep.subr.mxu0 0.0
    %3147 = vmatpush1.msra.mxu0 0.0
    %3148 = vmatprep.subr.mxu0 0.0
    %3149 = vmatpush1.msra.mxu0 %v2881
    %3150 = vmatprep.subr.mxu0 0.0
    %3151 = vmatpush1.msra.mxu0 %v2880
    %3152 = vmatprep.subr.mxu0 0.0
    %3153 = vmatpush1.msra.mxu0 %v2879
    %3154 = vmatprep.subr.mxu0 0.0
    %3155 = vmatpush1.msra.mxu0 %v2878
    %3156 = vmatprep.subr.mxu0 0.0
    %3157 = vmatpush1.msra.mxu0 %v2877
    %3158 = vmatprep.subr.mxu0 0.0
    %3159 = vmatpush1.msra.mxu0 %v2876
    %3160 = vmatprep.subr.mxu0 0.0
    %3161 = vmatpush1.msra.mxu0 %v2875
    %3162 = vmatprep.subr.mxu0 0.0
    %3163 = vmatpush1.msra.mxu0 %v2874
    %3164 = vmatprep.subr.mxu0 0.0
    %3165 = vmatpush2.msra.mxu0 0.0
    %3166 = vmatprep.subr.mxu0 0.0
    %3167 = vmatpush2.msra.mxu0 0.0
    %3168 = vmatprep.subr.mxu0 0.0
    %3169 = vmatpush2.msra.mxu0 0.0
    %3170 = vmatprep.subr.mxu0 0.0
    %3171 = vmatpush2.msra.mxu0 0.0
    %3172 = vmatprep.subr.mxu0 0.0
    %3173 = vmatpush2.msra.mxu0 0.0
    %3174 = vmatprep.subr.mxu0 0.0
    %3175 = vmatpush2.msra.mxu0 0.0
    %3176 = vmatprep.subr.mxu0 0.0
    %3177 = vmatpush2.msra.mxu0 0.0
    %3178 = vmatprep.subr.mxu0 0.0
    %3179 = vmatpush2.msra.mxu0 0.0
    %3180 = vmatprep.subr.mxu0 0.0
    %3181 = vmatpush2.msra.mxu0 0.0
    %3182 = vmatprep.subr.mxu0 0.0
    %3183 = vmatpush2.msra.mxu0 0.0
    %3184 = vmatprep.subr.mxu0 0.0
    %3185 = vmatpush2.msra.mxu0 0.0
    %3186 = vmatprep.subr.mxu0 0.0
    %3187 = vmatpush2.msra.mxu0 0.0
    %3188 = vmatprep.subr.mxu0 0.0
    %3189 = vmatpush2.msra.mxu0 0.0
    %3190 = vmatprep.subr.mxu0 0.0
    %3191 = vmatpush2.msra.mxu0 0.0
    %3192 = vmatprep.subr.mxu0 0.0
    %3193 = vmatpush2.msra.mxu0 0.0
    %3194 = vmatprep.subr.mxu0 0.0
    %3195 = vmatpush2.msra.mxu0 0.0
    %3196 = vmatprep.mubr.f32.mxu0 0.0
    %3197 = vmatmul.mubr.f32.gmra.mxu0 %v1032
    %v3198 = vpop.f32.mrf.mxu0
    %v3199 = vadd.f32 0.0, %v3198
    %v3200 = vpop.f32.mrf.mxu0
    %3201 = vmatprep.mubr.f32.mxu0 0.0
    %3202 = vmatmul.mubr.f32.gmra.mxu0 %v1035
    %v3203 = vpop.f32.mrf.mxu0
    %v3204 = vadd.f32 0.0, %v3203
    %v3205 = vpop.f32.mrf.mxu0
    %3206 = vmatprep.mubr.f32.mxu0 0.0
    %3207 = vmatmul.mubr.f32.gmra.mxu0 %v1038
    %v3208 = vpop.f32.mrf.mxu0
    %v3209 = vadd.f32 0.0, %v3208
    %v3210 = vpop.f32.mrf.mxu0
    %3211 = vmatprep.mubr.f32.mxu0 0.0
    %3212 = vmatmul.mubr.f32.gmra.mxu0 %v1041
    %v3213 = vpop.f32.mrf.mxu0
    %v3214 = vadd.f32 0.0, %v3213
    %v3215 = vpop.f32.mrf.mxu0
    %3216 = vmatprep.mubr.f32.mxu0 0.0
    %3217 = vmatmul.mubr.f32.gmra.mxu0 %v1044
    %v3218 = vpop.f32.mrf.mxu0
    %v3219 = vadd.f32 0.0, %v3218
    %v3220 = vpop.f32.mrf.mxu0
    %3221 = vmatprep.mubr.f32.mxu0 0.0
    %3222 = vmatmul.mubr.f32.gmra.mxu0 %v1047
    %v3223 = vpop.f32.mrf.mxu0
    %v3224 = vadd.f32 0.0, %v3223
    %v3225 = vpop.f32.mrf.mxu0
    %3226 = vmatprep.mubr.f32.mxu0 0.0
    %3227 = vmatmul.mubr.f32.gmra.mxu0 %v1050
    %v3228 = vpop.f32.mrf.mxu0
    %v3229 = vadd.f32 0.0, %v3228
    %v3230 = vpop.f32.mrf.mxu0
    %3231 = vmatprep.mubr.f32.mxu0 0.0
    %3232 = vmatmul.mubr.f32.gmra.mxu0 %v1053
    %v3233 = vpop.f32.mrf.mxu0
    %v3234 = vadd.f32 0.0, %v3233
    %v3235 = vpop.f32.mrf.mxu0
    %3236 = vdwg.mxu0
    %v3237 = vadd.f32 %v2981, %v3199
    %v3238 = vadd.f32 %v2986, %v3204
    %v3239 = vadd.f32 %v2991, %v3209
    %v3240 = vadd.f32 %v2996, %v3214
    %v3241 = vadd.f32 %v3001, %v3219
    %v3242 = vadd.f32 %v3006, %v3224
    %v3243 = vadd.f32 %v3011, %v3229
    %v3244 = vadd.f32 %v3016, %v3234
    %3245 = vmatprep.subr.mxu0 %v271
    %3246 = vmatpush1.msra.mxu0 %v270
    %3247 = vmatprep.subr.mxu0 %v269
    %3248 = vmatpush1.msra.mxu0 %v268
    %3249 = vmatprep.subr.mxu0 %v267
    %3250 = vmatpush1.msra.mxu0 %v266
    %3251 = vmatprep.subr.mxu0 %v265
    %3252 = vmatpush1.msra.mxu0 %v264
    %3253 = vmatprep.subr.mxu0 %v263
    %3254 = vmatpush1.msra.mxu0 %v262
    %3255 = vmatprep.subr.mxu0 %v261
    %3256 = vmatpush1.msra.mxu0 %v260
    %3257 = vmatprep.subr.mxu0 %v259
    %3258 = vmatpush1.msra.mxu0 %v258
    %3259 = vmatprep.subr.mxu0 %v257
    %3260 = vmatpush1.msra.mxu0 %v256
    %3261 = vmatprep.subr.mxu0 %v255
    %3262 = vmatpush1.msra.mxu0 %v254
    %3263 = vmatprep.subr.mxu0 %v253
    %3264 = vmatpush1.msra.mxu0 %v252
    %3265 = vmatprep.subr.mxu0 %v251
    %3266 = vmatpush1.msra.mxu0 %v250
    %3267 = vmatprep.subr.mxu0 %v249
    %3268 = vmatpush1.msra.mxu0 %v248
    %3269 = vmatprep.subr.mxu0 %v247
    %3270 = vmatpush1.msra.mxu0 %v246
    %3271 = vmatprep.subr.mxu0 %v245
    %3272 = vmatpush1.msra.mxu0 %v244
    %3273 = vmatprep.subr.mxu0 %v243
    %3274 = vmatpush1.msra.mxu0 %v242
    %3275 = vmatprep.subr.mxu0 %v241
    %3276 = vmatpush1.msra.mxu0 %v240
    %3277 = vmatprep.subr.mxu0 %v303
    %3278 = vmatpush2.msra.mxu0 %v302
    %3279 = vmatprep.subr.mxu0 %v301
    %3280 = vmatpush2.msra.mxu0 %v300
    %3281 = vmatprep.subr.mxu0 %v299
    %3282 = vmatpush2.msra.mxu0 %v298
    %3283 = vmatprep.subr.mxu0 %v297
    %3284 = vmatpush2.msra.mxu0 %v296
    %3285 = vmatprep.subr.mxu0 %v295
    %3286 = vmatpush2.msra.mxu0 %v294
    %3287 = vmatprep.subr.mxu0 %v293
    %3288 = vmatpush2.msra.mxu0 %v292
    %3289 = vmatprep.subr.mxu0 %v291
    %3290 = vmatpush2.msra.mxu0 %v290
    %3291 = vmatprep.subr.mxu0 %v289
    %3292 = vmatpush2.msra.mxu0 %v288
    %3293 = vmatprep.subr.mxu0 %v287
    %3294 = vmatpush2.msra.mxu0 %v286
    %3295 = vmatprep.subr.mxu0 %v285
    %3296 = vmatpush2.msra.mxu0 %v284
    %3297 = vmatprep.subr.mxu0 %v283
    %3298 = vmatpush2.msra.mxu0 %v282
    %3299 = vmatprep.subr.mxu0 %v281
    %3300 = vmatpush2.msra.mxu0 %v280
    %3301 = vmatprep.subr.mxu0 %v279
    %3302 = vmatpush2.msra.mxu0 %v278
    %3303 = vmatprep.subr.mxu0 %v277
    %3304 = vmatpush2.msra.mxu0 %v276
    %3305 = vmatprep.subr.mxu0 %v275
    %3306 = vmatpush2.msra.mxu0 %v274
    %3307 = vmatprep.subr.mxu0 %v273
    %3308 = vmatpush2.msra.mxu0 %v272
    %3309 = vmatprep.mubr.f32.mxu0 %v3237
    %3310 = vmatmul.mubr.f32.gmra.mxu0 %v3124
    %v3311 = vpop.f32.mrf.mxu0
    %v3312 = vadd.f32 0.0, %v3311
    %v3313 = vpop.f32.mrf.mxu0
    %3314 = vmatprep.mubr.f32.mxu0 %v3238
    %3315 = vmatmul.mubr.f32.gmra.mxu0 %v3125
    %v3316 = vpop.f32.mrf.mxu0
    %v3317 = vadd.f32 0.0, %v3316
    %v3318 = vpop.f32.mrf.mxu0
    %3319 = vmatprep.mubr.f32.mxu0 %v3239
    %3320 = vmatmul.mubr.f32.gmra.mxu0 %v3126
    %v3321 = vpop.f32.mrf.mxu0
    %v3322 = vadd.f32 0.0, %v3321
    %v3323 = vpop.f32.mrf.mxu0
    %3324 = vmatprep.mubr.f32.mxu0 %v3240
    %3325 = vmatmul.mubr.f32.gmra.mxu0 %v3127
    %v3326 = vpop.f32.mrf.mxu0
    %v3327 = vadd.f32 0.0, %v3326
    %v3328 = vpop.f32.mrf.mxu0
    %3329 = vmatprep.mubr.f32.mxu0 %v3241
    %3330 = vmatmul.mubr.f32.gmra.mxu0 %v3128
    %v3331 = vpop.f32.mrf.mxu0
    %v3332 = vadd.f32 0.0, %v3331
    %v3333 = vpop.f32.mrf.mxu0
    %3334 = vmatprep.mubr.f32.mxu0 %v3242
    %3335 = vmatmul.mubr.f32.gmra.mxu0 %v3129
    %v3336 = vpop.f32.mrf.mxu0
    %v3337 = vadd.f32 0.0, %v3336
    %v3338 = vpop.f32.mrf.mxu0
    %3339 = vmatprep.mubr.f32.mxu0 %v3243
    %3340 = vmatmul.mubr.f32.gmra.mxu0 %v3130
    %v3341 = vpop.f32.mrf.mxu0
    %v3342 = vadd.f32 0.0, %v3341
    %v3343 = vpop.f32.mrf.mxu0
    %3344 = vmatprep.mubr.f32.mxu0 %v3244
    %3345 = vmatmul.mubr.f32.gmra.mxu0 %v3131
    %v3346 = vpop.f32.mrf.mxu0
    %v3347 = vadd.f32 0.0, %v3346
    %v3348 = vpop.f32.mrf.mxu0
    %3349 = vdwg.mxu0
    %s3350 = scalar_lea.vmem [#allocation11], 64
    %v3351 = vld [vmem:[%s3350] sm:$0xff]
    %v3352 = vld [vmem:[%s3350 + $0x8] sm:$0xff]
    %v3353 = vld [vmem:[%s3350 + $0x10] sm:$0xff]
    %v3354 = vld [vmem:[%s3350 + $0x18] sm:$0xff]
    %v3355 = vld [vmem:[%s3350 + $0x20] sm:$0xff]
    %v3356 = vld [vmem:[%s3350 + $0x28] sm:$0xff]
    %v3357 = vld [vmem:[%s3350 + $0x30] sm:$0xff]
    %v3358 = vld [vmem:[%s3350 + $0x38] sm:$0xff]
    %s3359 = scalar_lea.vmem [#allocation11], 576
    %v3360 = vld [vmem:[%s3359] sm:$0xff]
    %v3361 = vld [vmem:[%s3359 + $0x8] sm:$0xff]
    %v3362 = vld [vmem:[%s3359 + $0x10] sm:$0xff]
    %v3363 = vld [vmem:[%s3359 + $0x18] sm:$0xff]
    %v3364 = vld [vmem:[%s3359 + $0x20] sm:$0xff]
    %v3365 = vld [vmem:[%s3359 + $0x28] sm:$0xff]
    %v3366 = vld [vmem:[%s3359 + $0x30] sm:$0xff]
    %v3367 = vld [vmem:[%s3359 + $0x38] sm:$0xff]
    %v3368 = vmul.f32 %v1235, %v3351
    %v3369 = vmul.f32 %v1241, %v3352
    %v3370 = vmul.f32 %v1247, %v3353
    %v3371 = vmul.f32 %v1253, %v3354
    %v3372 = vmul.f32 %v1259, %v3355
    %v3373 = vmul.f32 %v1265, %v3356
    %v3374 = vmul.f32 %v1271, %v3357
    %v3375 = vmul.f32 %v1277, %v3358
    %v3376 = vmul.f32 %v1237, %v3360
    %v3377 = vmul.f32 %v1243, %v3361
    %v3378 = vmul.f32 %v1249, %v3362
    %v3379 = vmul.f32 %v1255, %v3363
    %v3380 = vmul.f32 %v1261, %v3364
    %v3381 = vmul.f32 %v1267, %v3365
    %v3382 = vmul.f32 %v1273, %v3366
    %v3383 = vmul.f32 %v1279, %v3367
    %v3384 = vsub.f32 %v3368, %v3376
    %v3385 = vsub.f32 %v3369, %v3377
    %v3386 = vsub.f32 %v3370, %v3378
    %v3387 = vsub.f32 %v3371, %v3379
    %v3388 = vsub.f32 %v3372, %v3380
    %v3389 = vsub.f32 %v3373, %v3381
    %v3390 = vsub.f32 %v3374, %v3382
    %v3391 = vsub.f32 %v3375, %v3383
    %v3392 = vmul.f32 %v1235, %v3360
    %v3393 = vmul.f32 %v1241, %v3361
    %v3394 = vmul.f32 %v1247, %v3362
    %v3395 = vmul.f32 %v1253, %v3363
    %v3396 = vmul.f32 %v1259, %v3364
    %v3397 = vmul.f32 %v1265, %v3365
    %v3398 = vmul.f32 %v1271, %v3366
    %v3399 = vmul.f32 %v1277, %v3367
    %v3400 = vmul.f32 %v1237, %v3351
    %v3401 = vmul.f32 %v1243, %v3352
    %v3402 = vmul.f32 %v1249, %v3353
    %v3403 = vmul.f32 %v1255, %v3354
    %v3404 = vmul.f32 %v1261, %v3355
    %v3405 = vmul.f32 %v1267, %v3356
    %v3406 = vmul.f32 %v1273, %v3357
    %v3407 = vmul.f32 %v1279, %v3358
    %v3408 = vadd.f32 %v3392, %v3400
    %v3409 = vadd.f32 %v3393, %v3401
    %v3410 = vadd.f32 %v3394, %v3402
    %v3411 = vadd.f32 %v3395, %v3403
    %v3412 = vadd.f32 %v3396, %v3404
    %v3413 = vadd.f32 %v3397, %v3405
    %v3414 = vadd.f32 %v3398, %v3406
    %v3415 = vadd.f32 %v3399, %v3407
    %v3416 = vadd.f32 %v3384, %v3408
    %v3417 = vadd.f32 %v3385, %v3409
    %v3418 = vadd.f32 %v3386, %v3410
    %v3419 = vadd.f32 %v3387, %v3411
    %v3420 = vadd.f32 %v3388, %v3412
    %v3421 = vadd.f32 %v3389, %v3413
    %v3422 = vadd.f32 %v3390, %v3414
    %v3423 = vadd.f32 %v3391, %v3415
    %3424 = vmatprep.subr.mxu0 0.0
    %3425 = vmatpush1.msra.mxu0 0.0
    %3426 = vmatprep.subr.mxu0 0.0
    %3427 = vmatpush1.msra.mxu0 0.0
    %3428 = vmatprep.subr.mxu0 0.0
    %3429 = vmatpush1.msra.mxu0 0.0
    %3430 = vmatprep.subr.mxu0 0.0
    %3431 = vmatpush1.msra.mxu0 0.0
    %3432 = vmatprep.subr.mxu0 0.0
    %3433 = vmatpush1.msra.mxu0 0.0
    %3434 = vmatprep.subr.mxu0 0.0
    %3435 = vmatpush1.msra.mxu0 0.0
    %3436 = vmatprep.subr.mxu0 0.0
    %3437 = vmatpush1.msra.mxu0 0.0
    %3438 = vmatprep.subr.mxu0 0.0
    %3439 = vmatpush1.msra.mxu0 0.0
    %3440 = vmatprep.subr.mxu0 0.0
    %3441 = vmatpush1.msra.mxu0 %v3423
    %3442 = vmatprep.subr.mxu0 0.0
    %3443 = vmatpush1.msra.mxu0 %v3422
    %3444 = vmatprep.subr.mxu0 0.0
    %3445 = vmatpush1.msra.mxu0 %v3421
    %3446 = vmatprep.subr.mxu0 0.0
    %3447 = vmatpush1.msra.mxu0 %v3420
    %3448 = vmatprep.subr.mxu0 0.0
    %3449 = vmatpush1.msra.mxu0 %v3419
    %3450 = vmatprep.subr.mxu0 0.0
    %3451 = vmatpush1.msra.mxu0 %v3418
    %3452 = vmatprep.subr.mxu0 0.0
    %3453 = vmatpush1.msra.mxu0 %v3417
    %3454 = vmatprep.subr.mxu0 0.0
    %3455 = vmatpush1.msra.mxu0 %v3416
    %3456 = vmatprep.subr.mxu0 0.0
    %3457 = vmatpush2.msra.mxu0 0.0
    %3458 = vmatprep.subr.mxu0 0.0
    %3459 = vmatpush2.msra.mxu0 0.0
    %3460 = vmatprep.subr.mxu0 0.0
    %3461 = vmatpush2.msra.mxu0 0.0
    %3462 = vmatprep.subr.mxu0 0.0
    %3463 = vmatpush2.msra.mxu0 0.0
    %3464 = vmatprep.subr.mxu0 0.0
    %3465 = vmatpush2.msra.mxu0 0.0
    %3466 = vmatprep.subr.mxu0 0.0
    %3467 = vmatpush2.msra.mxu0 0.0
    %3468 = vmatprep.subr.mxu0 0.0
    %3469 = vmatpush2.msra.mxu0 0.0
    %3470 = vmatprep.subr.mxu0 0.0
    %3471 = vmatpush2.msra.mxu0 0.0
    %3472 = vmatprep.subr.mxu0 0.0
    %3473 = vmatpush2.msra.mxu0 0.0
    %3474 = vmatprep.subr.mxu0 0.0
    %3475 = vmatpush2.msra.mxu0 0.0
    %3476 = vmatprep.subr.mxu0 0.0
    %3477 = vmatpush2.msra.mxu0 0.0
    %3478 = vmatprep.subr.mxu0 0.0
    %3479 = vmatpush2.msra.mxu0 0.0
    %3480 = vmatprep.subr.mxu0 0.0
    %3481 = vmatpush2.msra.mxu0 0.0
    %3482 = vmatprep.subr.mxu0 0.0
    %3483 = vmatpush2.msra.mxu0 0.0
    %3484 = vmatprep.subr.mxu0 0.0
    %3485 = vmatpush2.msra.mxu0 0.0
    %3486 = vmatprep.subr.mxu0 0.0
    %3487 = vmatpush2.msra.mxu0 0.0
    %3488 = vmatprep.mubr.f32.mxu0 0.0
    %3489 = vmatmul.mubr.f32.gmra.mxu0 %v314
    %v3490 = vpop.f32.mrf.mxu0
    %v3491 = vadd.f32 0.0, %v3490
    %v3492 = vpop.f32.mrf.mxu0
    %3493 = vmatprep.mubr.f32.mxu0 0.0
    %3494 = vmatmul.mubr.f32.gmra.mxu0 %v317
    %v3495 = vpop.f32.mrf.mxu0
    %v3496 = vadd.f32 0.0, %v3495
    %v3497 = vpop.f32.mrf.mxu0
    %3498 = vmatprep.mubr.f32.mxu0 0.0
    %3499 = vmatmul.mubr.f32.gmra.mxu0 %v320
    %v3500 = vpop.f32.mrf.mxu0
    %v3501 = vadd.f32 0.0, %v3500
    %v3502 = vpop.f32.mrf.mxu0
    %3503 = vmatprep.mubr.f32.mxu0 0.0
    %3504 = vmatmul.mubr.f32.gmra.mxu0 %v323
    %v3505 = vpop.f32.mrf.mxu0
    %v3506 = vadd.f32 0.0, %v3505
    %v3507 = vpop.f32.mrf.mxu0
    %3508 = vmatprep.mubr.f32.mxu0 0.0
    %3509 = vmatmul.mubr.f32.gmra.mxu0 %v326
    %v3510 = vpop.f32.mrf.mxu0
    %v3511 = vadd.f32 0.0, %v3510
    %v3512 = vpop.f32.mrf.mxu0
    %3513 = vmatprep.mubr.f32.mxu0 0.0
    %3514 = vmatmul.mubr.f32.gmra.mxu0 %v329
    %v3515 = vpop.f32.mrf.mxu0
    %v3516 = vadd.f32 0.0, %v3515
    %v3517 = vpop.f32.mrf.mxu0
    %3518 = vmatprep.mubr.f32.mxu0 0.0
    %3519 = vmatmul.mubr.f32.gmra.mxu0 %v332
    %v3520 = vpop.f32.mrf.mxu0
    %v3521 = vadd.f32 0.0, %v3520
    %v3522 = vpop.f32.mrf.mxu0
    %3523 = vmatprep.mubr.f32.mxu0 0.0
    %3524 = vmatmul.mubr.f32.gmra.mxu0 %v335
    %v3525 = vpop.f32.mrf.mxu0
    %v3526 = vadd.f32 0.0, %v3525
    %v3527 = vpop.f32.mrf.mxu0
    %3528 = vdwg.mxu0
    %3529 = vmatprep.subr.mxu0 0.0
    %3530 = vmatpush1.msra.mxu0 0.0
    %3531 = vmatprep.subr.mxu0 0.0
    %3532 = vmatpush1.msra.mxu0 0.0
    %3533 = vmatprep.subr.mxu0 0.0
    %3534 = vmatpush1.msra.mxu0 0.0
    %3535 = vmatprep.subr.mxu0 0.0
    %3536 = vmatpush1.msra.mxu0 0.0
    %3537 = vmatprep.subr.mxu0 0.0
    %3538 = vmatpush1.msra.mxu0 0.0
    %3539 = vmatprep.subr.mxu0 0.0
    %3540 = vmatpush1.msra.mxu0 0.0
    %3541 = vmatprep.subr.mxu0 0.0
    %3542 = vmatpush1.msra.mxu0 0.0
    %3543 = vmatprep.subr.mxu0 0.0
    %3544 = vmatpush1.msra.mxu0 0.0
    %3545 = vmatprep.subr.mxu0 0.0
    %3546 = vmatpush1.msra.mxu0 %v3415
    %3547 = vmatprep.subr.mxu0 0.0
    %3548 = vmatpush1.msra.mxu0 %v3414
    %3549 = vmatprep.subr.mxu0 0.0
    %3550 = vmatpush1.msra.mxu0 %v3413
    %3551 = vmatprep.subr.mxu0 0.0
    %3552 = vmatpush1.msra.mxu0 %v3412
    %3553 = vmatprep.subr.mxu0 0.0
    %3554 = vmatpush1.msra.mxu0 %v3411
    %3555 = vmatprep.subr.mxu0 0.0
    %3556 = vmatpush1.msra.mxu0 %v3410
    %3557 = vmatprep.subr.mxu0 0.0
    %3558 = vmatpush1.msra.mxu0 %v3409
    %3559 = vmatprep.subr.mxu0 0.0
    %3560 = vmatpush1.msra.mxu0 %v3408
    %3561 = vmatprep.subr.mxu0 0.0
    %3562 = vmatpush2.msra.mxu0 0.0
    %3563 = vmatprep.subr.mxu0 0.0
    %3564 = vmatpush2.msra.mxu0 0.0
    %3565 = vmatprep.subr.mxu0 0.0
    %3566 = vmatpush2.msra.mxu0 0.0
    %3567 = vmatprep.subr.mxu0 0.0
    %3568 = vmatpush2.msra.mxu0 0.0
    %3569 = vmatprep.subr.mxu0 0.0
    %3570 = vmatpush2.msra.mxu0 0.0
    %3571 = vmatprep.subr.mxu0 0.0
    %3572 = vmatpush2.msra.mxu0 0.0
    %3573 = vmatprep.subr.mxu0 0.0
    %3574 = vmatpush2.msra.mxu0 0.0
    %3575 = vmatprep.subr.mxu0 0.0
    %3576 = vmatpush2.msra.mxu0 0.0
    %3577 = vmatprep.subr.mxu0 0.0
    %3578 = vmatpush2.msra.mxu0 0.0
    %3579 = vmatprep.subr.mxu0 0.0
    %3580 = vmatpush2.msra.mxu0 0.0
    %3581 = vmatprep.subr.mxu0 0.0
    %3582 = vmatpush2.msra.mxu0 0.0
    %3583 = vmatprep.subr.mxu0 0.0
    %3584 = vmatpush2.msra.mxu0 0.0
    %3585 = vmatprep.subr.mxu0 0.0
    %3586 = vmatpush2.msra.mxu0 0.0
    %3587 = vmatprep.subr.mxu0 0.0
    %3588 = vmatpush2.msra.mxu0 0.0
    %3589 = vmatprep.subr.mxu0 0.0
    %3590 = vmatpush2.msra.mxu0 0.0
    %3591 = vmatprep.subr.mxu0 0.0
    %3592 = vmatpush2.msra.mxu0 0.0
    %3593 = vmatprep.mubr.f32.mxu0 0.0
    %3594 = vmatmul.mubr.f32.gmra.mxu0 %v1478
    %v3595 = vpop.f32.mrf.mxu0
    %v3596 = vadd.f32 0.0, %v3595
    %v3597 = vpop.f32.mrf.mxu0
    %3598 = vmatprep.mubr.f32.mxu0 0.0
    %3599 = vmatmul.mubr.f32.gmra.mxu0 %v1481
    %v3600 = vpop.f32.mrf.mxu0
    %v3601 = vadd.f32 0.0, %v3600
    %v3602 = vpop.f32.mrf.mxu0
    %3603 = vmatprep.mubr.f32.mxu0 0.0
    %3604 = vmatmul.mubr.f32.gmra.mxu0 %v1484
    %v3605 = vpop.f32.mrf.mxu0
    %v3606 = vadd.f32 0.0, %v3605
    %v3607 = vpop.f32.mrf.mxu0
    %3608 = vmatprep.mubr.f32.mxu0 0.0
    %3609 = vmatmul.mubr.f32.gmra.mxu0 %v1487
    %v3610 = vpop.f32.mrf.mxu0
    %v3611 = vadd.f32 0.0, %v3610
    %v3612 = vpop.f32.mrf.mxu0
    %3613 = vmatprep.mubr.f32.mxu0 0.0
    %3614 = vmatmul.mubr.f32.gmra.mxu0 %v1490
    %v3615 = vpop.f32.mrf.mxu0
    %v3616 = vadd.f32 0.0, %v3615
    %v3617 = vpop.f32.mrf.mxu0
    %3618 = vmatprep.mubr.f32.mxu0 0.0
    %3619 = vmatmul.mubr.f32.gmra.mxu0 %v1493
    %v3620 = vpop.f32.mrf.mxu0
    %v3621 = vadd.f32 0.0, %v3620
    %v3622 = vpop.f32.mrf.mxu0
    %3623 = vmatprep.mubr.f32.mxu0 0.0
    %3624 = vmatmul.mubr.f32.gmra.mxu0 %v1496
    %v3625 = vpop.f32.mrf.mxu0
    %v3626 = vadd.f32 0.0, %v3625
    %v3627 = vpop.f32.mrf.mxu0
    %3628 = vmatprep.mubr.f32.mxu0 0.0
    %3629 = vmatmul.mubr.f32.gmra.mxu0 %v1499
    %v3630 = vpop.f32.mrf.mxu0
    %v3631 = vadd.f32 0.0, %v3630
    %v3632 = vpop.f32.mrf.mxu0
    %3633 = vdwg.mxu0
    %v3634 = vsub.f32 %v3491, %v3596
    %v3635 = vsub.f32 %v3496, %v3601
    %v3636 = vsub.f32 %v3501, %v3606
    %v3637 = vsub.f32 %v3506, %v3611
    %v3638 = vsub.f32 %v3511, %v3616
    %v3639 = vsub.f32 %v3516, %v3621
    %v3640 = vsub.f32 %v3521, %v3626
    %v3641 = vsub.f32 %v3526, %v3631
    %3642 = vmatprep.subr.mxu0 0.0
    %3643 = vmatpush1.msra.mxu0 0.0
    %3644 = vmatprep.subr.mxu0 0.0
    %3645 = vmatpush1.msra.mxu0 0.0
    %3646 = vmatprep.subr.mxu0 0.0
    %3647 = vmatpush1.msra.mxu0 0.0
    %3648 = vmatprep.subr.mxu0 0.0
    %3649 = vmatpush1.msra.mxu0 0.0
    %3650 = vmatprep.subr.mxu0 0.0
    %3651 = vmatpush1.msra.mxu0 0.0
    %3652 = vmatprep.subr.mxu0 0.0
    %3653 = vmatpush1.msra.mxu0 0.0
    %3654 = vmatprep.subr.mxu0 0.0
    %3655 = vmatpush1.msra.mxu0 0.0
    %3656 = vmatprep.subr.mxu0 0.0
    %3657 = vmatpush1.msra.mxu0 0.0
    %3658 = vmatprep.subr.mxu0 0.0
    %3659 = vmatpush1.msra.mxu0 %v3391
    %3660 = vmatprep.subr.mxu0 0.0
    %3661 = vmatpush1.msra.mxu0 %v3390
    %3662 = vmatprep.subr.mxu0 0.0
    %3663 = vmatpush1.msra.mxu0 %v3389
    %3664 = vmatprep.subr.mxu0 0.0
    %3665 = vmatpush1.msra.mxu0 %v3388
    %3666 = vmatprep.subr.mxu0 0.0
    %3667 = vmatpush1.msra.mxu0 %v3387
    %3668 = vmatprep.subr.mxu0 0.0
    %3669 = vmatpush1.msra.mxu0 %v3386
    %3670 = vmatprep.subr.mxu0 0.0
    %3671 = vmatpush1.msra.mxu0 %v3385
    %3672 = vmatprep.subr.mxu0 0.0
    %3673 = vmatpush1.msra.mxu0 %v3384
    %3674 = vmatprep.subr.mxu0 0.0
    %3675 = vmatpush2.msra.mxu0 0.0
    %3676 = vmatprep.subr.mxu0 0.0
    %3677 = vmatpush2.msra.mxu0 0.0
    %3678 = vmatprep.subr.mxu0 0.0
    %3679 = vmatpush2.msra.mxu0 0.0
    %3680 = vmatprep.subr.mxu0 0.0
    %3681 = vmatpush2.msra.mxu0 0.0
    %3682 = vmatprep.subr.mxu0 0.0
    %3683 = vmatpush2.msra.mxu0 0.0
    %3684 = vmatprep.subr.mxu0 0.0
    %3685 = vmatpush2.msra.mxu0 0.0
    %3686 = vmatprep.subr.mxu0 0.0
    %3687 = vmatpush2.msra.mxu0 0.0
    %3688 = vmatprep.subr.mxu0 0.0
    %3689 = vmatpush2.msra.mxu0 0.0
    %3690 = vmatprep.subr.mxu0 0.0
    %3691 = vmatpush2.msra.mxu0 0.0
    %3692 = vmatprep.subr.mxu0 0.0
    %3693 = vmatpush2.msra.mxu0 0.0
    %3694 = vmatprep.subr.mxu0 0.0
    %3695 = vmatpush2.msra.mxu0 0.0
    %3696 = vmatprep.subr.mxu0 0.0
    %3697 = vmatpush2.msra.mxu0 0.0
    %3698 = vmatprep.subr.mxu0 0.0
    %3699 = vmatpush2.msra.mxu0 0.0
    %3700 = vmatprep.subr.mxu0 0.0
    %3701 = vmatpush2.msra.mxu0 0.0
    %3702 = vmatprep.subr.mxu0 0.0
    %3703 = vmatpush2.msra.mxu0 0.0
    %3704 = vmatprep.subr.mxu0 0.0
    %3705 = vmatpush2.msra.mxu0 0.0
    %3706 = vmatprep.mubr.f32.mxu0 0.0
    %3707 = vmatmul.mubr.f32.gmra.mxu0 %v443
    %v3708 = vpop.f32.mrf.mxu0
    %v3709 = vadd.f32 0.0, %v3708
    %v3710 = vpop.f32.mrf.mxu0
    %3711 = vmatprep.mubr.f32.mxu0 0.0
    %3712 = vmatmul.mubr.f32.gmra.mxu0 %v446
    %v3713 = vpop.f32.mrf.mxu0
    %v3714 = vadd.f32 0.0, %v3713
    %v3715 = vpop.f32.mrf.mxu0
    %3716 = vmatprep.mubr.f32.mxu0 0.0
    %3717 = vmatmul.mubr.f32.gmra.mxu0 %v449
    %v3718 = vpop.f32.mrf.mxu0
    %v3719 = vadd.f32 0.0, %v3718
    %v3720 = vpop.f32.mrf.mxu0
    %3721 = vmatprep.mubr.f32.mxu0 0.0
    %3722 = vmatmul.mubr.f32.gmra.mxu0 %v452
    %v3723 = vpop.f32.mrf.mxu0
    %v3724 = vadd.f32 0.0, %v3723
    %v3725 = vpop.f32.mrf.mxu0
    %3726 = vmatprep.mubr.f32.mxu0 0.0
    %3727 = vmatmul.mubr.f32.gmra.mxu0 %v455
    %v3728 = vpop.f32.mrf.mxu0
    %v3729 = vadd.f32 0.0, %v3728
    %v3730 = vpop.f32.mrf.mxu0
    %3731 = vmatprep.mubr.f32.mxu0 0.0
    %3732 = vmatmul.mubr.f32.gmra.mxu0 %v458
    %v3733 = vpop.f32.mrf.mxu0
    %v3734 = vadd.f32 0.0, %v3733
    %v3735 = vpop.f32.mrf.mxu0
    %3736 = vmatprep.mubr.f32.mxu0 0.0
    %3737 = vmatmul.mubr.f32.gmra.mxu0 %v461
    %v3738 = vpop.f32.mrf.mxu0
    %v3739 = vadd.f32 0.0, %v3738
    %v3740 = vpop.f32.mrf.mxu0
    %3741 = vmatprep.mubr.f32.mxu0 0.0
    %3742 = vmatmul.mubr.f32.gmra.mxu0 %v464
    %v3743 = vpop.f32.mrf.mxu0
    %v3744 = vadd.f32 0.0, %v3743
    %v3745 = vpop.f32.mrf.mxu0
    %3746 = vdwg.mxu0
    %v3747 = vadd.f32 %v3491, %v3709
    %v3748 = vadd.f32 %v3496, %v3714
    %v3749 = vadd.f32 %v3501, %v3719
    %v3750 = vadd.f32 %v3506, %v3724
    %v3751 = vadd.f32 %v3511, %v3729
    %v3752 = vadd.f32 %v3516, %v3734
    %v3753 = vadd.f32 %v3521, %v3739
    %v3754 = vadd.f32 %v3526, %v3744
    %3755 = vmatprep.subr.mxu0 %v206
    %3756 = vmatpush1.msra.mxu0 %v205
    %3757 = vmatprep.subr.mxu0 %v204
    %3758 = vmatpush1.msra.mxu0 %v203
    %3759 = vmatprep.subr.mxu0 %v202
    %3760 = vmatpush1.msra.mxu0 %v201
    %3761 = vmatprep.subr.mxu0 %v200
    %3762 = vmatpush1.msra.mxu0 %v199
    %3763 = vmatprep.subr.mxu0 %v198
    %3764 = vmatpush1.msra.mxu0 %v197
    %3765 = vmatprep.subr.mxu0 %v196
    %3766 = vmatpush1.msra.mxu0 %v195
    %3767 = vmatprep.subr.mxu0 %v194
    %3768 = vmatpush1.msra.mxu0 %v193
    %3769 = vmatprep.subr.mxu0 %v192
    %3770 = vmatpush1.msra.mxu0 %v191
    %3771 = vmatprep.subr.mxu0 %v190
    %3772 = vmatpush1.msra.mxu0 %v189
    %3773 = vmatprep.subr.mxu0 %v188
    %3774 = vmatpush1.msra.mxu0 %v187
    %3775 = vmatprep.subr.mxu0 %v186
    %3776 = vmatpush1.msra.mxu0 %v185
    %3777 = vmatprep.subr.mxu0 %v184
    %3778 = vmatpush1.msra.mxu0 %v183
    %3779 = vmatprep.subr.mxu0 %v182
    %3780 = vmatpush1.msra.mxu0 %v181
    %3781 = vmatprep.subr.mxu0 %v180
    %3782 = vmatpush1.msra.mxu0 %v179
    %3783 = vmatprep.subr.mxu0 %v178
    %3784 = vmatpush1.msra.mxu0 %v177
    %3785 = vmatprep.subr.mxu0 %v176
    %3786 = vmatpush1.msra.mxu0 %v175
    %3787 = vmatprep.subr.mxu0 %v238
    %3788 = vmatpush2.msra.mxu0 %v237
    %3789 = vmatprep.subr.mxu0 %v236
    %3790 = vmatpush2.msra.mxu0 %v235
    %3791 = vmatprep.subr.mxu0 %v234
    %3792 = vmatpush2.msra.mxu0 %v233
    %3793 = vmatprep.subr.mxu0 %v232
    %3794 = vmatpush2.msra.mxu0 %v231
    %3795 = vmatprep.subr.mxu0 %v230
    %3796 = vmatpush2.msra.mxu0 %v229
    %3797 = vmatprep.subr.mxu0 %v228
    %3798 = vmatpush2.msra.mxu0 %v227
    %3799 = vmatprep.subr.mxu0 %v226
    %3800 = vmatpush2.msra.mxu0 %v225
    %3801 = vmatprep.subr.mxu0 %v224
    %3802 = vmatpush2.msra.mxu0 %v223
    %3803 = vmatprep.subr.mxu0 %v222
    %3804 = vmatpush2.msra.mxu0 %v221
    %3805 = vmatprep.subr.mxu0 %v220
    %3806 = vmatpush2.msra.mxu0 %v219
    %3807 = vmatprep.subr.mxu0 %v218
    %3808 = vmatpush2.msra.mxu0 %v217
    %3809 = vmatprep.subr.mxu0 %v216
    %3810 = vmatpush2.msra.mxu0 %v215
    %3811 = vmatprep.subr.mxu0 %v214
    %3812 = vmatpush2.msra.mxu0 %v213
    %3813 = vmatprep.subr.mxu0 %v212
    %3814 = vmatpush2.msra.mxu0 %v211
    %3815 = vmatprep.subr.mxu0 %v210
    %3816 = vmatpush2.msra.mxu0 %v209
    %3817 = vmatprep.subr.mxu0 %v208
    %3818 = vmatpush2.msra.mxu0 %v207
    %3819 = vmatprep.mubr.f32.mxu0 %v3747
    %3820 = vmatmul.mubr.f32.gmra.mxu0 %v3634
    %v3821 = vpop.f32.mrf.mxu0
    %v3822 = vadd.f32 0.0, %v3821
    %v3823 = vpop.f32.mrf.mxu0
    %v3824 = vadd.f32 0.0, %v3823
    %3825 = vmatprep.mubr.f32.mxu0 %v3748
    %3826 = vmatmul.mubr.f32.gmra.mxu0 %v3635
    %v3827 = vpop.f32.mrf.mxu0
    %v3828 = vadd.f32 0.0, %v3827
    %v3829 = vpop.f32.mrf.mxu0
    %v3830 = vadd.f32 0.0, %v3829
    %3831 = vmatprep.mubr.f32.mxu0 %v3749
    %3832 = vmatmul.mubr.f32.gmra.mxu0 %v3636
    %v3833 = vpop.f32.mrf.mxu0
    %v3834 = vadd.f32 0.0, %v3833
    %v3835 = vpop.f32.mrf.mxu0
    %v3836 = vadd.f32 0.0, %v3835
    %3837 = vmatprep.mubr.f32.mxu0 %v3750
    %3838 = vmatmul.mubr.f32.gmra.mxu0 %v3637
    %v3839 = vpop.f32.mrf.mxu0
    %v3840 = vadd.f32 0.0, %v3839
    %v3841 = vpop.f32.mrf.mxu0
    %v3842 = vadd.f32 0.0, %v3841
    %3843 = vmatprep.mubr.f32.mxu0 %v3751
    %3844 = vmatmul.mubr.f32.gmra.mxu0 %v3638
    %v3845 = vpop.f32.mrf.mxu0
    %v3846 = vadd.f32 0.0, %v3845
    %v3847 = vpop.f32.mrf.mxu0
    %v3848 = vadd.f32 0.0, %v3847
    %3849 = vmatprep.mubr.f32.mxu0 %v3752
    %3850 = vmatmul.mubr.f32.gmra.mxu0 %v3639
    %v3851 = vpop.f32.mrf.mxu0
    %v3852 = vadd.f32 0.0, %v3851
    %v3853 = vpop.f32.mrf.mxu0
    %v3854 = vadd.f32 0.0, %v3853
    %3855 = vmatprep.mubr.f32.mxu0 %v3753
    %3856 = vmatmul.mubr.f32.gmra.mxu0 %v3640
    %v3857 = vpop.f32.mrf.mxu0
    %v3858 = vadd.f32 0.0, %v3857
    %v3859 = vpop.f32.mrf.mxu0
    %v3860 = vadd.f32 0.0, %v3859
    %3861 = vmatprep.mubr.f32.mxu0 %v3754
    %3862 = vmatmul.mubr.f32.gmra.mxu0 %v3641
    %v3863 = vpop.f32.mrf.mxu0
    %v3864 = vadd.f32 0.0, %v3863
    %v3865 = vpop.f32.mrf.mxu0
    %v3866 = vadd.f32 0.0, %v3865
    %3867 = vdwg.mxu0
    %v3868 = vmul.f32 %v3822, %v1282
    %v3869 = vmul.f32 %v3828, %v1283
    %v3870 = vmul.f32 %v3834, %v1284
    %v3871 = vmul.f32 %v3840, %v1285
    %v3872 = vmul.f32 %v3846, %v1286
    %v3873 = vmul.f32 %v3852, %v1287
    %v3874 = vmul.f32 %v3858, %v1288
    %v3875 = vmul.f32 %v3864, %v1289
    %v3876 = vmul.f32 %v3824, %v1291
    %v3877 = vmul.f32 %v3830, %v1292
    %v3878 = vmul.f32 %v3836, %v1293
    %v3879 = vmul.f32 %v3842, %v1294
    %v3880 = vmul.f32 %v3848, %v1295
    %v3881 = vmul.f32 %v3854, %v1296
    %v3882 = vmul.f32 %v3860, %v1297
    %v3883 = vmul.f32 %v3866, %v1298
    %v3884 = vsub.f32 %v3868, %v3876
    %v3885 = vsub.f32 %v3869, %v3877
    %v3886 = vsub.f32 %v3870, %v3878
    %v3887 = vsub.f32 %v3871, %v3879
    %v3888 = vsub.f32 %v3872, %v3880
    %v3889 = vsub.f32 %v3873, %v3881
    %v3890 = vsub.f32 %v3874, %v3882
    %v3891 = vsub.f32 %v3875, %v3883
    %v3892 = vmul.f32 %v3822, %v1291
    %v3893 = vmul.f32 %v3828, %v1292
    %v3894 = vmul.f32 %v3834, %v1293
    %v3895 = vmul.f32 %v3840, %v1294
    %v3896 = vmul.f32 %v3846, %v1295
    %v3897 = vmul.f32 %v3852, %v1296
    %v3898 = vmul.f32 %v3858, %v1297
    %v3899 = vmul.f32 %v3864, %v1298
    %v3900 = vmul.f32 %v3824, %v1282
    %v3901 = vmul.f32 %v3830, %v1283
    %v3902 = vmul.f32 %v3836, %v1284
    %v3903 = vmul.f32 %v3842, %v1285
    %v3904 = vmul.f32 %v3848, %v1286
    %v3905 = vmul.f32 %v3854, %v1287
    %v3906 = vmul.f32 %v3860, %v1288
    %v3907 = vmul.f32 %v3866, %v1289
    %v3908 = vadd.f32 %v3892, %v3900
    %v3909 = vadd.f32 %v3893, %v3901
    %v3910 = vadd.f32 %v3894, %v3902
    %v3911 = vadd.f32 %v3895, %v3903
    %v3912 = vadd.f32 %v3896, %v3904
    %v3913 = vadd.f32 %v3897, %v3905
    %v3914 = vadd.f32 %v3898, %v3906
    %v3915 = vadd.f32 %v3899, %v3907
    %v3916 = vadd.f32 %v3884, %v3908
    %v3917 = vadd.f32 %v3885, %v3909
    %v3918 = vadd.f32 %v3886, %v3910
    %v3919 = vadd.f32 %v3887, %v3911
    %v3920 = vadd.f32 %v3888, %v3912
    %v3921 = vadd.f32 %v3889, %v3913
    %v3922 = vadd.f32 %v3890, %v3914
    %v3923 = vadd.f32 %v3891, %v3915
    %3924 = vmatprep.subr.mxu0 0.0
    %3925 = vmatpush1.msra.mxu0 0.0
    %3926 = vmatprep.subr.mxu0 0.0
    %3927 = vmatpush1.msra.mxu0 0.0
    %3928 = vmatprep.subr.mxu0 0.0
    %3929 = vmatpush1.msra.mxu0 0.0
    %3930 = vmatprep.subr.mxu0 0.0
    %3931 = vmatpush1.msra.mxu0 0.0
    %3932 = vmatprep.subr.mxu0 0.0
    %3933 = vmatpush1.msra.mxu0 0.0
    %3934 = vmatprep.subr.mxu0 0.0
    %3935 = vmatpush1.msra.mxu0 0.0
    %3936 = vmatprep.subr.mxu0 0.0
    %3937 = vmatpush1.msra.mxu0 0.0
    %3938 = vmatprep.subr.mxu0 0.0
    %3939 = vmatpush1.msra.mxu0 0.0
    %3940 = vmatprep.subr.mxu0 0.0
    %3941 = vmatpush1.msra.mxu0 %v3923
    %3942 = vmatprep.subr.mxu0 0.0
    %3943 = vmatpush1.msra.mxu0 %v3922
    %3944 = vmatprep.subr.mxu0 0.0
    %3945 = vmatpush1.msra.mxu0 %v3921
    %3946 = vmatprep.subr.mxu0 0.0
    %3947 = vmatpush1.msra.mxu0 %v3920
    %3948 = vmatprep.subr.mxu0 0.0
    %3949 = vmatpush1.msra.mxu0 %v3919
    %3950 = vmatprep.subr.mxu0 0.0
    %3951 = vmatpush1.msra.mxu0 %v3918
    %3952 = vmatprep.subr.mxu0 0.0
    %3953 = vmatpush1.msra.mxu0 %v3917
    %3954 = vmatprep.subr.mxu0 0.0
    %3955 = vmatpush1.msra.mxu0 %v3916
    %3956 = vmatprep.subr.mxu0 0.0
    %3957 = vmatpush2.msra.mxu0 0.0
    %3958 = vmatprep.subr.mxu0 0.0
    %3959 = vmatpush2.msra.mxu0 0.0
    %3960 = vmatprep.subr.mxu0 0.0
    %3961 = vmatpush2.msra.mxu0 0.0
    %3962 = vmatprep.subr.mxu0 0.0
    %3963 = vmatpush2.msra.mxu0 0.0
    %3964 = vmatprep.subr.mxu0 0.0
    %3965 = vmatpush2.msra.mxu0 0.0
    %3966 = vmatprep.subr.mxu0 0.0
    %3967 = vmatpush2.msra.mxu0 0.0
    %3968 = vmatprep.subr.mxu0 0.0
    %3969 = vmatpush2.msra.mxu0 0.0
    %3970 = vmatprep.subr.mxu0 0.0
    %3971 = vmatpush2.msra.mxu0 0.0
    %3972 = vmatprep.subr.mxu0 0.0
    %3973 = vmatpush2.msra.mxu0 0.0
    %3974 = vmatprep.subr.mxu0 0.0
    %3975 = vmatpush2.msra.mxu0 0.0
    %3976 = vmatprep.subr.mxu0 0.0
    %3977 = vmatpush2.msra.mxu0 0.0
    %3978 = vmatprep.subr.mxu0 0.0
    %3979 = vmatpush2.msra.mxu0 0.0
    %3980 = vmatprep.subr.mxu0 0.0
    %3981 = vmatpush2.msra.mxu0 0.0
    %3982 = vmatprep.subr.mxu0 0.0
    %3983 = vmatpush2.msra.mxu0 0.0
    %3984 = vmatprep.subr.mxu0 0.0
    %3985 = vmatpush2.msra.mxu0 0.0
    %3986 = vmatprep.subr.mxu0 0.0
    %3987 = vmatpush2.msra.mxu0 0.0
    %3988 = vmatprep.mubr.f32.mxu0 0.0
    %3989 = vmatmul.mubr.f32.gmra.mxu0 %v766
    %v3990 = vpop.f32.mrf.mxu0
    %v3991 = vadd.f32 0.0, %v3990
    %v3992 = vpop.f32.mrf.mxu0
    %3993 = vmatprep.mubr.f32.mxu0 0.0
    %3994 = vmatmul.mubr.f32.gmra.mxu0 %v769
    %v3995 = vpop.f32.mrf.mxu0
    %v3996 = vadd.f32 0.0, %v3995
    %v3997 = vpop.f32.mrf.mxu0
    %3998 = vmatprep.mubr.f32.mxu0 0.0
    %3999 = vmatmul.mubr.f32.gmra.mxu0 %v772
    %v4000 = vpop.f32.mrf.mxu0
    %v4001 = vadd.f32 0.0, %v4000
    %v4002 = vpop.f32.mrf.mxu0
    %4003 = vmatprep.mubr.f32.mxu0 0.0
    %4004 = vmatmul.mubr.f32.gmra.mxu0 %v775
    %v4005 = vpop.f32.mrf.mxu0
    %v4006 = vadd.f32 0.0, %v4005
    %v4007 = vpop.f32.mrf.mxu0
    %4008 = vmatprep.mubr.f32.mxu0 0.0
    %4009 = vmatmul.mubr.f32.gmra.mxu0 %v778
    %v4010 = vpop.f32.mrf.mxu0
    %v4011 = vadd.f32 0.0, %v4010
    %v4012 = vpop.f32.mrf.mxu0
    %4013 = vmatprep.mubr.f32.mxu0 0.0
    %4014 = vmatmul.mubr.f32.gmra.mxu0 %v781
    %v4015 = vpop.f32.mrf.mxu0
    %v4016 = vadd.f32 0.0, %v4015
    %v4017 = vpop.f32.mrf.mxu0
    %4018 = vmatprep.mubr.f32.mxu0 0.0
    %4019 = vmatmul.mubr.f32.gmra.mxu0 %v784
    %v4020 = vpop.f32.mrf.mxu0
    %v4021 = vadd.f32 0.0, %v4020
    %v4022 = vpop.f32.mrf.mxu0
    %4023 = vmatprep.mubr.f32.mxu0 0.0
    %4024 = vmatmul.mubr.f32.gmra.mxu0 %v787
    %v4025 = vpop.f32.mrf.mxu0
    %v4026 = vadd.f32 0.0, %v4025
    %v4027 = vpop.f32.mrf.mxu0
    %4028 = vdwg.mxu0
    %4029 = vmatprep.subr.mxu0 0.0
    %4030 = vmatpush1.msra.mxu0 0.0
    %4031 = vmatprep.subr.mxu0 0.0
    %4032 = vmatpush1.msra.mxu0 0.0
    %4033 = vmatprep.subr.mxu0 0.0
    %4034 = vmatpush1.msra.mxu0 0.0
    %4035 = vmatprep.subr.mxu0 0.0
    %4036 = vmatpush1.msra.mxu0 0.0
    %4037 = vmatprep.subr.mxu0 0.0
    %4038 = vmatpush1.msra.mxu0 0.0
    %4039 = vmatprep.subr.mxu0 0.0
    %4040 = vmatpush1.msra.mxu0 0.0
    %4041 = vmatprep.subr.mxu0 0.0
    %4042 = vmatpush1.msra.mxu0 0.0
    %4043 = vmatprep.subr.mxu0 0.0
    %4044 = vmatpush1.msra.mxu0 0.0
    %4045 = vmatprep.subr.mxu0 0.0
    %4046 = vmatpush1.msra.mxu0 %v3915
    %4047 = vmatprep.subr.mxu0 0.0
    %4048 = vmatpush1.msra.mxu0 %v3914
    %4049 = vmatprep.subr.mxu0 0.0
    %4050 = vmatpush1.msra.mxu0 %v3913
    %4051 = vmatprep.subr.mxu0 0.0
    %4052 = vmatpush1.msra.mxu0 %v3912
    %4053 = vmatprep.subr.mxu0 0.0
    %4054 = vmatpush1.msra.mxu0 %v3911
    %4055 = vmatprep.subr.mxu0 0.0
    %4056 = vmatpush1.msra.mxu0 %v3910
    %4057 = vmatprep.subr.mxu0 0.0
    %4058 = vmatpush1.msra.mxu0 %v3909
    %4059 = vmatprep.subr.mxu0 0.0
    %4060 = vmatpush1.msra.mxu0 %v3908
    %4061 = vmatprep.subr.mxu0 0.0
    %4062 = vmatpush2.msra.mxu0 0.0
    %4063 = vmatprep.subr.mxu0 0.0
    %4064 = vmatpush2.msra.mxu0 0.0
    %4065 = vmatprep.subr.mxu0 0.0
    %4066 = vmatpush2.msra.mxu0 0.0
    %4067 = vmatprep.subr.mxu0 0.0
    %4068 = vmatpush2.msra.mxu0 0.0
    %4069 = vmatprep.subr.mxu0 0.0
    %4070 = vmatpush2.msra.mxu0 0.0
    %4071 = vmatprep.subr.mxu0 0.0
    %4072 = vmatpush2.msra.mxu0 0.0
    %4073 = vmatprep.subr.mxu0 0.0
    %4074 = vmatpush2.msra.mxu0 0.0
    %4075 = vmatprep.subr.mxu0 0.0
    %4076 = vmatpush2.msra.mxu0 0.0
    %4077 = vmatprep.subr.mxu0 0.0
    %4078 = vmatpush2.msra.mxu0 0.0
    %4079 = vmatprep.subr.mxu0 0.0
    %4080 = vmatpush2.msra.mxu0 0.0
    %4081 = vmatprep.subr.mxu0 0.0
    %4082 = vmatpush2.msra.mxu0 0.0
    %4083 = vmatprep.subr.mxu0 0.0
    %4084 = vmatpush2.msra.mxu0 0.0
    %4085 = vmatprep.subr.mxu0 0.0
    %4086 = vmatpush2.msra.mxu0 0.0
    %4087 = vmatprep.subr.mxu0 0.0
    %4088 = vmatpush2.msra.mxu0 0.0
    %4089 = vmatprep.subr.mxu0 0.0
    %4090 = vmatpush2.msra.mxu0 0.0
    %4091 = vmatprep.subr.mxu0 0.0
    %4092 = vmatpush2.msra.mxu0 0.0
    %4093 = vmatprep.mubr.f32.mxu0 0.0
    %4094 = vmatmul.mubr.f32.gmra.mxu0 %v895
    %v4095 = vpop.f32.mrf.mxu0
    %v4096 = vadd.f32 0.0, %v4095
    %v4097 = vpop.f32.mrf.mxu0
    %4098 = vmatprep.mubr.f32.mxu0 0.0
    %4099 = vmatmul.mubr.f32.gmra.mxu0 %v898
    %v4100 = vpop.f32.mrf.mxu0
    %v4101 = vadd.f32 0.0, %v4100
    %v4102 = vpop.f32.mrf.mxu0
    %4103 = vmatprep.mubr.f32.mxu0 0.0
    %4104 = vmatmul.mubr.f32.gmra.mxu0 %v901
    %v4105 = vpop.f32.mrf.mxu0
    %v4106 = vadd.f32 0.0, %v4105
    %v4107 = vpop.f32.mrf.mxu0
    %4108 = vmatprep.mubr.f32.mxu0 0.0
    %4109 = vmatmul.mubr.f32.gmra.mxu0 %v904
    %v4110 = vpop.f32.mrf.mxu0
    %v4111 = vadd.f32 0.0, %v4110
    %v4112 = vpop.f32.mrf.mxu0
    %4113 = vmatprep.mubr.f32.mxu0 0.0
    %4114 = vmatmul.mubr.f32.gmra.mxu0 %v907
    %v4115 = vpop.f32.mrf.mxu0
    %v4116 = vadd.f32 0.0, %v4115
    %v4117 = vpop.f32.mrf.mxu0
    %4118 = vmatprep.mubr.f32.mxu0 0.0
    %4119 = vmatmul.mubr.f32.gmra.mxu0 %v910
    %v4120 = vpop.f32.mrf.mxu0
    %v4121 = vadd.f32 0.0, %v4120
    %v4122 = vpop.f32.mrf.mxu0
    %4123 = vmatprep.mubr.f32.mxu0 0.0
    %4124 = vmatmul.mubr.f32.gmra.mxu0 %v913
    %v4125 = vpop.f32.mrf.mxu0
    %v4126 = vadd.f32 0.0, %v4125
    %v4127 = vpop.f32.mrf.mxu0
    %4128 = vmatprep.mubr.f32.mxu0 0.0
    %4129 = vmatmul.mubr.f32.gmra.mxu0 %v916
    %v4130 = vpop.f32.mrf.mxu0
    %v4131 = vadd.f32 0.0, %v4130
    %v4132 = vpop.f32.mrf.mxu0
    %4133 = vdwg.mxu0
    %v4134 = vsub.f32 %v3991, %v4096
    %v4135 = vsub.f32 %v3996, %v4101
    %v4136 = vsub.f32 %v4001, %v4106
    %v4137 = vsub.f32 %v4006, %v4111
    %v4138 = vsub.f32 %v4011, %v4116
    %v4139 = vsub.f32 %v4016, %v4121
    %v4140 = vsub.f32 %v4021, %v4126
    %v4141 = vsub.f32 %v4026, %v4131
    %4142 = vmatprep.subr.mxu0 0.0
    %4143 = vmatpush1.msra.mxu0 0.0
    %4144 = vmatprep.subr.mxu0 0.0
    %4145 = vmatpush1.msra.mxu0 0.0
    %4146 = vmatprep.subr.mxu0 0.0
    %4147 = vmatpush1.msra.mxu0 0.0
    %4148 = vmatprep.subr.mxu0 0.0
    %4149 = vmatpush1.msra.mxu0 0.0
    %4150 = vmatprep.subr.mxu0 0.0
    %4151 = vmatpush1.msra.mxu0 0.0
    %4152 = vmatprep.subr.mxu0 0.0
    %4153 = vmatpush1.msra.mxu0 0.0
    %4154 = vmatprep.subr.mxu0 0.0
    %4155 = vmatpush1.msra.mxu0 0.0
    %4156 = vmatprep.subr.mxu0 0.0
    %4157 = vmatpush1.msra.mxu0 0.0
    %4158 = vmatprep.subr.mxu0 0.0
    %4159 = vmatpush1.msra.mxu0 %v3891
    %4160 = vmatprep.subr.mxu0 0.0
    %4161 = vmatpush1.msra.mxu0 %v3890
    %4162 = vmatprep.subr.mxu0 0.0
    %4163 = vmatpush1.msra.mxu0 %v3889
    %4164 = vmatprep.subr.mxu0 0.0
    %4165 = vmatpush1.msra.mxu0 %v3888
    %4166 = vmatprep.subr.mxu0 0.0
    %4167 = vmatpush1.msra.mxu0 %v3887
    %4168 = vmatprep.subr.mxu0 0.0
    %4169 = vmatpush1.msra.mxu0 %v3886
    %4170 = vmatprep.subr.mxu0 0.0
    %4171 = vmatpush1.msra.mxu0 %v3885
    %4172 = vmatprep.subr.mxu0 0.0
    %4173 = vmatpush1.msra.mxu0 %v3884
    %4174 = vmatprep.subr.mxu0 0.0
    %4175 = vmatpush2.msra.mxu0 0.0
    %4176 = vmatprep.subr.mxu0 0.0
    %4177 = vmatpush2.msra.mxu0 0.0
    %4178 = vmatprep.subr.mxu0 0.0
    %4179 = vmatpush2.msra.mxu0 0.0
    %4180 = vmatprep.subr.mxu0 0.0
    %4181 = vmatpush2.msra.mxu0 0.0
    %4182 = vmatprep.subr.mxu0 0.0
    %4183 = vmatpush2.msra.mxu0 0.0
    %4184 = vmatprep.subr.mxu0 0.0
    %4185 = vmatpush2.msra.mxu0 0.0
    %4186 = vmatprep.subr.mxu0 0.0
    %4187 = vmatpush2.msra.mxu0 0.0
    %4188 = vmatprep.subr.mxu0 0.0
    %4189 = vmatpush2.msra.mxu0 0.0
    %4190 = vmatprep.subr.mxu0 0.0
    %4191 = vmatpush2.msra.mxu0 0.0
    %4192 = vmatprep.subr.mxu0 0.0
    %4193 = vmatpush2.msra.mxu0 0.0
    %4194 = vmatprep.subr.mxu0 0.0
    %4195 = vmatpush2.msra.mxu0 0.0
    %4196 = vmatprep.subr.mxu0 0.0
    %4197 = vmatpush2.msra.mxu0 0.0
    %4198 = vmatprep.subr.mxu0 0.0
    %4199 = vmatpush2.msra.mxu0 0.0
    %4200 = vmatprep.subr.mxu0 0.0
    %4201 = vmatpush2.msra.mxu0 0.0
    %4202 = vmatprep.subr.mxu0 0.0
    %4203 = vmatpush2.msra.mxu0 0.0
    %4204 = vmatprep.subr.mxu0 0.0
    %4205 = vmatpush2.msra.mxu0 0.0
    %4206 = vmatprep.mubr.f32.mxu0 0.0
    %4207 = vmatmul.mubr.f32.gmra.mxu0 %v1032
    %v4208 = vpop.f32.mrf.mxu0
    %v4209 = vadd.f32 0.0, %v4208
    %v4210 = vpop.f32.mrf.mxu0
    %4211 = vmatprep.mubr.f32.mxu0 0.0
    %4212 = vmatmul.mubr.f32.gmra.mxu0 %v1035
    %v4213 = vpop.f32.mrf.mxu0
    %v4214 = vadd.f32 0.0, %v4213
    %v4215 = vpop.f32.mrf.mxu0
    %4216 = vmatprep.mubr.f32.mxu0 0.0
    %4217 = vmatmul.mubr.f32.gmra.mxu0 %v1038
    %v4218 = vpop.f32.mrf.mxu0
    %v4219 = vadd.f32 0.0, %v4218
    %v4220 = vpop.f32.mrf.mxu0
    %4221 = vmatprep.mubr.f32.mxu0 0.0
    %4222 = vmatmul.mubr.f32.gmra.mxu0 %v1041
    %v4223 = vpop.f32.mrf.mxu0
    %v4224 = vadd.f32 0.0, %v4223
    %v4225 = vpop.f32.mrf.mxu0
    %4226 = vmatprep.mubr.f32.mxu0 0.0
    %4227 = vmatmul.mubr.f32.gmra.mxu0 %v1044
    %v4228 = vpop.f32.mrf.mxu0
    %v4229 = vadd.f32 0.0, %v4228
    %v4230 = vpop.f32.mrf.mxu0
    %4231 = vmatprep.mubr.f32.mxu0 0.0
    %4232 = vmatmul.mubr.f32.gmra.mxu0 %v1047
    %v4233 = vpop.f32.mrf.mxu0
    %v4234 = vadd.f32 0.0, %v4233
    %v4235 = vpop.f32.mrf.mxu0
    %4236 = vmatprep.mubr.f32.mxu0 0.0
    %4237 = vmatmul.mubr.f32.gmra.mxu0 %v1050
    %v4238 = vpop.f32.mrf.mxu0
    %v4239 = vadd.f32 0.0, %v4238
    %v4240 = vpop.f32.mrf.mxu0
    %4241 = vmatprep.mubr.f32.mxu0 0.0
    %4242 = vmatmul.mubr.f32.gmra.mxu0 %v1053
    %v4243 = vpop.f32.mrf.mxu0
    %v4244 = vadd.f32 0.0, %v4243
    %v4245 = vpop.f32.mrf.mxu0
    %4246 = vdwg.mxu0
    %v4247 = vadd.f32 %v3991, %v4209
    %v4248 = vadd.f32 %v3996, %v4214
    %v4249 = vadd.f32 %v4001, %v4219
    %v4250 = vadd.f32 %v4006, %v4224
    %v4251 = vadd.f32 %v4011, %v4229
    %v4252 = vadd.f32 %v4016, %v4234
    %v4253 = vadd.f32 %v4021, %v4239
    %v4254 = vadd.f32 %v4026, %v4244
    %4255 = vmatprep.subr.mxu0 %v271
    %4256 = vmatpush1.msra.mxu0 %v270
    %4257 = vmatprep.subr.mxu0 %v269
    %4258 = vmatpush1.msra.mxu0 %v268
    %4259 = vmatprep.subr.mxu0 %v267
    %4260 = vmatpush1.msra.mxu0 %v266
    %4261 = vmatprep.subr.mxu0 %v265
    %4262 = vmatpush1.msra.mxu0 %v264
    %4263 = vmatprep.subr.mxu0 %v263
    %4264 = vmatpush1.msra.mxu0 %v262
    %4265 = vmatprep.subr.mxu0 %v261
    %4266 = vmatpush1.msra.mxu0 %v260
    %4267 = vmatprep.subr.mxu0 %v259
    %4268 = vmatpush1.msra.mxu0 %v258
    %4269 = vmatprep.subr.mxu0 %v257
    %4270 = vmatpush1.msra.mxu0 %v256
    %4271 = vmatprep.subr.mxu0 %v255
    %4272 = vmatpush1.msra.mxu0 %v254
    %4273 = vmatprep.subr.mxu0 %v253
    %4274 = vmatpush1.msra.mxu0 %v252
    %4275 = vmatprep.subr.mxu0 %v251
    %4276 = vmatpush1.msra.mxu0 %v250
    %4277 = vmatprep.subr.mxu0 %v249
    %4278 = vmatpush1.msra.mxu0 %v248
    %4279 = vmatprep.subr.mxu0 %v247
    %4280 = vmatpush1.msra.mxu0 %v246
    %4281 = vmatprep.subr.mxu0 %v245
    %4282 = vmatpush1.msra.mxu0 %v244
    %4283 = vmatprep.subr.mxu0 %v243
    %4284 = vmatpush1.msra.mxu0 %v242
    %4285 = vmatprep.subr.mxu0 %v241
    %4286 = vmatpush1.msra.mxu0 %v240
    %4287 = vmatprep.subr.mxu0 %v303
    %4288 = vmatpush2.msra.mxu0 %v302
    %4289 = vmatprep.subr.mxu0 %v301
    %4290 = vmatpush2.msra.mxu0 %v300
    %4291 = vmatprep.subr.mxu0 %v299
    %4292 = vmatpush2.msra.mxu0 %v298
    %4293 = vmatprep.subr.mxu0 %v297
    %4294 = vmatpush2.msra.mxu0 %v296
    %4295 = vmatprep.subr.mxu0 %v295
    %4296 = vmatpush2.msra.mxu0 %v294
    %4297 = vmatprep.subr.mxu0 %v293
    %4298 = vmatpush2.msra.mxu0 %v292
    %4299 = vmatprep.subr.mxu0 %v291
    %4300 = vmatpush2.msra.mxu0 %v290
    %4301 = vmatprep.subr.mxu0 %v289
    %4302 = vmatpush2.msra.mxu0 %v288
    %4303 = vmatprep.subr.mxu0 %v287
    %4304 = vmatpush2.msra.mxu0 %v286
    %4305 = vmatprep.subr.mxu0 %v285
    %4306 = vmatpush2.msra.mxu0 %v284
    %4307 = vmatprep.subr.mxu0 %v283
    %4308 = vmatpush2.msra.mxu0 %v282
    %4309 = vmatprep.subr.mxu0 %v281
    %4310 = vmatpush2.msra.mxu0 %v280
    %4311 = vmatprep.subr.mxu0 %v279
    %4312 = vmatpush2.msra.mxu0 %v278
    %4313 = vmatprep.subr.mxu0 %v277
    %4314 = vmatpush2.msra.mxu0 %v276
    %4315 = vmatprep.subr.mxu0 %v275
    %4316 = vmatpush2.msra.mxu0 %v274
    %4317 = vmatprep.subr.mxu0 %v273
    %4318 = vmatpush2.msra.mxu0 %v272
    %4319 = vmatprep.mubr.f32.mxu0 %v4247
    %4320 = vmatmul.mubr.f32.gmra.mxu0 %v4134
    %v4321 = vpop.f32.mrf.mxu0
    %v4322 = vadd.f32 0.0, %v4321
    %v4323 = vpop.f32.mrf.mxu0
    %v4324 = vadd.f32 0.0, %v4323
    %4325 = vmatprep.mubr.f32.mxu0 %v4248
    %4326 = vmatmul.mubr.f32.gmra.mxu0 %v4135
    %v4327 = vpop.f32.mrf.mxu0
    %v4328 = vadd.f32 0.0, %v4327
    %v4329 = vpop.f32.mrf.mxu0
    %v4330 = vadd.f32 0.0, %v4329
    %4331 = vmatprep.mubr.f32.mxu0 %v4249
    %4332 = vmatmul.mubr.f32.gmra.mxu0 %v4136
    %v4333 = vpop.f32.mrf.mxu0
    %v4334 = vadd.f32 0.0, %v4333
    %v4335 = vpop.f32.mrf.mxu0
    %v4336 = vadd.f32 0.0, %v4335
    %4337 = vmatprep.mubr.f32.mxu0 %v4250
    %4338 = vmatmul.mubr.f32.gmra.mxu0 %v4137
    %v4339 = vpop.f32.mrf.mxu0
    %v4340 = vadd.f32 0.0, %v4339
    %v4341 = vpop.f32.mrf.mxu0
    %v4342 = vadd.f32 0.0, %v4341
    %4343 = vmatprep.mubr.f32.mxu0 %v4251
    %4344 = vmatmul.mubr.f32.gmra.mxu0 %v4138
    %v4345 = vpop.f32.mrf.mxu0
    %v4346 = vadd.f32 0.0, %v4345
    %v4347 = vpop.f32.mrf.mxu0
    %v4348 = vadd.f32 0.0, %v4347
    %4349 = vmatprep.mubr.f32.mxu0 %v4252
    %4350 = vmatmul.mubr.f32.gmra.mxu0 %v4139
    %v4351 = vpop.f32.mrf.mxu0
    %v4352 = vadd.f32 0.0, %v4351
    %v4353 = vpop.f32.mrf.mxu0
    %v4354 = vadd.f32 0.0, %v4353
    %4355 = vmatprep.mubr.f32.mxu0 %v4253
    %4356 = vmatmul.mubr.f32.gmra.mxu0 %v4140
    %v4357 = vpop.f32.mrf.mxu0
    %v4358 = vadd.f32 0.0, %v4357
    %v4359 = vpop.f32.mrf.mxu0
    %v4360 = vadd.f32 0.0, %v4359
    %4361 = vmatprep.mubr.f32.mxu0 %v4254
    %4362 = vmatmul.mubr.f32.gmra.mxu0 %v4141
    %v4363 = vpop.f32.mrf.mxu0
    %v4364 = vadd.f32 0.0, %v4363
    %v4365 = vpop.f32.mrf.mxu0
    %v4366 = vadd.f32 0.0, %v4365
    %4367 = vdwg.mxu0
    %s4368 = scalar_lea.vmem [#allocation11], 320
    %v4369 = vld [vmem:[%s4368] sm:$0xff]
    %v4370 = vld [vmem:[%s4368 + $0x8] sm:$0xff]
    %v4371 = vld [vmem:[%s4368 + $0x10] sm:$0xff]
    %v4372 = vld [vmem:[%s4368 + $0x18] sm:$0xff]
    %v4373 = vld [vmem:[%s4368 + $0x20] sm:$0xff]
    %v4374 = vld [vmem:[%s4368 + $0x28] sm:$0xff]
    %v4375 = vld [vmem:[%s4368 + $0x30] sm:$0xff]
    %v4376 = vld [vmem:[%s4368 + $0x38] sm:$0xff]
    %s4377 = scalar_lea.vmem [#allocation11], 832
    %v4378 = vld [vmem:[%s4377] sm:$0xff]
    %v4379 = vld [vmem:[%s4377 + $0x8] sm:$0xff]
    %v4380 = vld [vmem:[%s4377 + $0x10] sm:$0xff]
    %v4381 = vld [vmem:[%s4377 + $0x18] sm:$0xff]
    %v4382 = vld [vmem:[%s4377 + $0x20] sm:$0xff]
    %v4383 = vld [vmem:[%s4377 + $0x28] sm:$0xff]
    %v4384 = vld [vmem:[%s4377 + $0x30] sm:$0xff]
    %v4385 = vld [vmem:[%s4377 + $0x38] sm:$0xff]
    %v4386 = vmul.f32 %v4322, %v4369
    %v4387 = vmul.f32 %v4328, %v4370
    %v4388 = vmul.f32 %v4334, %v4371
    %v4389 = vmul.f32 %v4340, %v4372
    %v4390 = vmul.f32 %v4346, %v4373
    %v4391 = vmul.f32 %v4352, %v4374
    %v4392 = vmul.f32 %v4358, %v4375
    %v4393 = vmul.f32 %v4364, %v4376
    %v4394 = vmul.f32 %v4324, %v4378
    %v4395 = vmul.f32 %v4330, %v4379
    %v4396 = vmul.f32 %v4336, %v4380
    %v4397 = vmul.f32 %v4342, %v4381
    %v4398 = vmul.f32 %v4348, %v4382
    %v4399 = vmul.f32 %v4354, %v4383
    %v4400 = vmul.f32 %v4360, %v4384
    %v4401 = vmul.f32 %v4366, %v4385
    %v4402 = vsub.f32 %v4386, %v4394
    %v4403 = vsub.f32 %v4387, %v4395
    %v4404 = vsub.f32 %v4388, %v4396
    %v4405 = vsub.f32 %v4389, %v4397
    %v4406 = vsub.f32 %v4390, %v4398
    %v4407 = vsub.f32 %v4391, %v4399
    %v4408 = vsub.f32 %v4392, %v4400
    %v4409 = vsub.f32 %v4393, %v4401
    %v4410 = vmul.f32 %v4322, %v4378
    %v4411 = vmul.f32 %v4328, %v4379
    %v4412 = vmul.f32 %v4334, %v4380
    %v4413 = vmul.f32 %v4340, %v4381
    %v4414 = vmul.f32 %v4346, %v4382
    %v4415 = vmul.f32 %v4352, %v4383
    %v4416 = vmul.f32 %v4358, %v4384
    %v4417 = vmul.f32 %v4364, %v4385
    %v4418 = vmul.f32 %v4324, %v4369
    %v4419 = vmul.f32 %v4330, %v4370
    %v4420 = vmul.f32 %v4336, %v4371
    %v4421 = vmul.f32 %v4342, %v4372
    %v4422 = vmul.f32 %v4348, %v4373
    %v4423 = vmul.f32 %v4354, %v4374
    %v4424 = vmul.f32 %v4360, %v4375
    %v4425 = vmul.f32 %v4366, %v4376
    %v4426 = vadd.f32 %v4410, %v4418
    %v4427 = vadd.f32 %v4411, %v4419
    %v4428 = vadd.f32 %v4412, %v4420
    %v4429 = vadd.f32 %v4413, %v4421
    %v4430 = vadd.f32 %v4414, %v4422
    %v4431 = vadd.f32 %v4415, %v4423
    %v4432 = vadd.f32 %v4416, %v4424
    %v4433 = vadd.f32 %v4417, %v4425
    %v4434 = vadd.f32 %v4402, %v4426
    %v4435 = vadd.f32 %v4403, %v4427
    %v4436 = vadd.f32 %v4404, %v4428
    %v4437 = vadd.f32 %v4405, %v4429
    %v4438 = vadd.f32 %v4406, %v4430
    %v4439 = vadd.f32 %v4407, %v4431
    %v4440 = vadd.f32 %v4408, %v4432
    %v4441 = vadd.f32 %v4409, %v4433
    %4442 = vmatprep.subr.mxu0 0.0
    %4443 = vmatpush1.msra.mxu0 0.0
    %4444 = vmatprep.subr.mxu0 0.0
    %4445 = vmatpush1.msra.mxu0 0.0
    %4446 = vmatprep.subr.mxu0 0.0
    %4447 = vmatpush1.msra.mxu0 0.0
    %4448 = vmatprep.subr.mxu0 0.0
    %4449 = vmatpush1.msra.mxu0 0.0
    %4450 = vmatprep.subr.mxu0 0.0
    %4451 = vmatpush1.msra.mxu0 0.0
    %4452 = vmatprep.subr.mxu0 0.0
    %4453 = vmatpush1.msra.mxu0 0.0
    %4454 = vmatprep.subr.mxu0 0.0
    %4455 = vmatpush1.msra.mxu0 0.0
    %4456 = vmatprep.subr.mxu0 0.0
    %4457 = vmatpush1.msra.mxu0 0.0
    %4458 = vmatprep.subr.mxu0 0.0
    %4459 = vmatpush1.msra.mxu0 %v4441
    %4460 = vmatprep.subr.mxu0 0.0
    %4461 = vmatpush1.msra.mxu0 %v4440
    %4462 = vmatprep.subr.mxu0 0.0
    %4463 = vmatpush1.msra.mxu0 %v4439
    %4464 = vmatprep.subr.mxu0 0.0
    %4465 = vmatpush1.msra.mxu0 %v4438
    %4466 = vmatprep.subr.mxu0 0.0
    %4467 = vmatpush1.msra.mxu0 %v4437
    %4468 = vmatprep.subr.mxu0 0.0
    %4469 = vmatpush1.msra.mxu0 %v4436
    %4470 = vmatprep.subr.mxu0 0.0
    %4471 = vmatpush1.msra.mxu0 %v4435
    %4472 = vmatprep.subr.mxu0 0.0
    %4473 = vmatpush1.msra.mxu0 %v4434
    %4474 = vmatprep.subr.mxu0 0.0
    %4475 = vmatpush2.msra.mxu0 0.0
    %4476 = vmatprep.subr.mxu0 0.0
    %4477 = vmatpush2.msra.mxu0 0.0
    %4478 = vmatprep.subr.mxu0 0.0
    %4479 = vmatpush2.msra.mxu0 0.0
    %4480 = vmatprep.subr.mxu0 0.0
    %4481 = vmatpush2.msra.mxu0 0.0
    %4482 = vmatprep.subr.mxu0 0.0
    %4483 = vmatpush2.msra.mxu0 0.0
    %4484 = vmatprep.subr.mxu0 0.0
    %4485 = vmatpush2.msra.mxu0 0.0
    %4486 = vmatprep.subr.mxu0 0.0
    %4487 = vmatpush2.msra.mxu0 0.0
    %4488 = vmatprep.subr.mxu0 0.0
    %4489 = vmatpush2.msra.mxu0 0.0
    %4490 = vmatprep.subr.mxu0 0.0
    %4491 = vmatpush2.msra.mxu0 0.0
    %4492 = vmatprep.subr.mxu0 0.0
    %4493 = vmatpush2.msra.mxu0 0.0
    %4494 = vmatprep.subr.mxu0 0.0
    %4495 = vmatpush2.msra.mxu0 0.0
    %4496 = vmatprep.subr.mxu0 0.0
    %4497 = vmatpush2.msra.mxu0 0.0
    %4498 = vmatprep.subr.mxu0 0.0
    %4499 = vmatpush2.msra.mxu0 0.0
    %4500 = vmatprep.subr.mxu0 0.0
    %4501 = vmatpush2.msra.mxu0 0.0
    %4502 = vmatprep.subr.mxu0 0.0
    %4503 = vmatpush2.msra.mxu0 0.0
    %4504 = vmatprep.subr.mxu0 0.0
    %4505 = vmatpush2.msra.mxu0 0.0
    %4506 = vmatprep.mubr.f32.mxu0 0.0
    %4507 = vmatmul.mubr.f32.gmra.mxu0 %v314
    %v4508 = vpop.f32.mrf.mxu0
    %v4509 = vadd.f32 0.0, %v4508
    %v4510 = vpop.f32.mrf.mxu0
    %4511 = vmatprep.mubr.f32.mxu0 0.0
    %4512 = vmatmul.mubr.f32.gmra.mxu0 %v317
    %v4513 = vpop.f32.mrf.mxu0
    %v4514 = vadd.f32 0.0, %v4513
    %v4515 = vpop.f32.mrf.mxu0
    %4516 = vmatprep.mubr.f32.mxu0 0.0
    %4517 = vmatmul.mubr.f32.gmra.mxu0 %v320
    %v4518 = vpop.f32.mrf.mxu0
    %v4519 = vadd.f32 0.0, %v4518
    %v4520 = vpop.f32.mrf.mxu0
    %4521 = vmatprep.mubr.f32.mxu0 0.0
    %4522 = vmatmul.mubr.f32.gmra.mxu0 %v323
    %v4523 = vpop.f32.mrf.mxu0
    %v4524 = vadd.f32 0.0, %v4523
    %v4525 = vpop.f32.mrf.mxu0
    %4526 = vmatprep.mubr.f32.mxu0 0.0
    %4527 = vmatmul.mubr.f32.gmra.mxu0 %v326
    %v4528 = vpop.f32.mrf.mxu0
    %v4529 = vadd.f32 0.0, %v4528
    %v4530 = vpop.f32.mrf.mxu0
    %4531 = vmatprep.mubr.f32.mxu0 0.0
    %4532 = vmatmul.mubr.f32.gmra.mxu0 %v329
    %v4533 = vpop.f32.mrf.mxu0
    %v4534 = vadd.f32 0.0, %v4533
    %v4535 = vpop.f32.mrf.mxu0
    %4536 = vmatprep.mubr.f32.mxu0 0.0
    %4537 = vmatmul.mubr.f32.gmra.mxu0 %v332
    %v4538 = vpop.f32.mrf.mxu0
    %v4539 = vadd.f32 0.0, %v4538
    %v4540 = vpop.f32.mrf.mxu0
    %4541 = vmatprep.mubr.f32.mxu0 0.0
    %4542 = vmatmul.mubr.f32.gmra.mxu0 %v335
    %v4543 = vpop.f32.mrf.mxu0
    %v4544 = vadd.f32 0.0, %v4543
    %v4545 = vpop.f32.mrf.mxu0
    %4546 = vdwg.mxu0
    %4547 = vmatprep.subr.mxu0 0.0
    %4548 = vmatpush1.msra.mxu0 0.0
    %4549 = vmatprep.subr.mxu0 0.0
    %4550 = vmatpush1.msra.mxu0 0.0
    %4551 = vmatprep.subr.mxu0 0.0
    %4552 = vmatpush1.msra.mxu0 0.0
    %4553 = vmatprep.subr.mxu0 0.0
    %4554 = vmatpush1.msra.mxu0 0.0
    %4555 = vmatprep.subr.mxu0 0.0
    %4556 = vmatpush1.msra.mxu0 0.0
    %4557 = vmatprep.subr.mxu0 0.0
    %4558 = vmatpush1.msra.mxu0 0.0
    %4559 = vmatprep.subr.mxu0 0.0
    %4560 = vmatpush1.msra.mxu0 0.0
    %4561 = vmatprep.subr.mxu0 0.0
    %4562 = vmatpush1.msra.mxu0 0.0
    %4563 = vmatprep.subr.mxu0 0.0
    %4564 = vmatpush1.msra.mxu0 %v4433
    %4565 = vmatprep.subr.mxu0 0.0
    %4566 = vmatpush1.msra.mxu0 %v4432
    %4567 = vmatprep.subr.mxu0 0.0
    %4568 = vmatpush1.msra.mxu0 %v4431
    %4569 = vmatprep.subr.mxu0 0.0
    %4570 = vmatpush1.msra.mxu0 %v4430
    %4571 = vmatprep.subr.mxu0 0.0
    %4572 = vmatpush1.msra.mxu0 %v4429
    %4573 = vmatprep.subr.mxu0 0.0
    %4574 = vmatpush1.msra.mxu0 %v4428
    %4575 = vmatprep.subr.mxu0 0.0
    %4576 = vmatpush1.msra.mxu0 %v4427
    %4577 = vmatprep.subr.mxu0 0.0
    %4578 = vmatpush1.msra.mxu0 %v4426
    %4579 = vmatprep.subr.mxu0 0.0
    %4580 = vmatpush2.msra.mxu0 0.0
    %4581 = vmatprep.subr.mxu0 0.0
    %4582 = vmatpush2.msra.mxu0 0.0
    %4583 = vmatprep.subr.mxu0 0.0
    %4584 = vmatpush2.msra.mxu0 0.0
    %4585 = vmatprep.subr.mxu0 0.0
    %4586 = vmatpush2.msra.mxu0 0.0
    %4587 = vmatprep.subr.mxu0 0.0
    %4588 = vmatpush2.msra.mxu0 0.0
    %4589 = vmatprep.subr.mxu0 0.0
    %4590 = vmatpush2.msra.mxu0 0.0
    %4591 = vmatprep.subr.mxu0 0.0
    %4592 = vmatpush2.msra.mxu0 0.0
    %4593 = vmatprep.subr.mxu0 0.0
    %4594 = vmatpush2.msra.mxu0 0.0
    %4595 = vmatprep.subr.mxu0 0.0
    %4596 = vmatpush2.msra.mxu0 0.0
    %4597 = vmatprep.subr.mxu0 0.0
    %4598 = vmatpush2.msra.mxu0 0.0
    %4599 = vmatprep.subr.mxu0 0.0
    %4600 = vmatpush2.msra.mxu0 0.0
    %4601 = vmatprep.subr.mxu0 0.0
    %4602 = vmatpush2.msra.mxu0 0.0
    %4603 = vmatprep.subr.mxu0 0.0
    %4604 = vmatpush2.msra.mxu0 0.0
    %4605 = vmatprep.subr.mxu0 0.0
    %4606 = vmatpush2.msra.mxu0 0.0
    %4607 = vmatprep.subr.mxu0 0.0
    %4608 = vmatpush2.msra.mxu0 0.0
    %4609 = vmatprep.subr.mxu0 0.0
    %4610 = vmatpush2.msra.mxu0 0.0
    %4611 = vmatprep.mubr.f32.mxu0 0.0
    %4612 = vmatmul.mubr.f32.gmra.mxu0 %v1478
    %v4613 = vpop.f32.mrf.mxu0
    %v4614 = vadd.f32 0.0, %v4613
    %v4615 = vpop.f32.mrf.mxu0
    %4616 = vmatprep.mubr.f32.mxu0 0.0
    %4617 = vmatmul.mubr.f32.gmra.mxu0 %v1481
    %v4618 = vpop.f32.mrf.mxu0
    %v4619 = vadd.f32 0.0, %v4618
    %v4620 = vpop.f32.mrf.mxu0
    %4621 = vmatprep.mubr.f32.mxu0 0.0
    %4622 = vmatmul.mubr.f32.gmra.mxu0 %v1484
    %v4623 = vpop.f32.mrf.mxu0
    %v4624 = vadd.f32 0.0, %v4623
    %v4625 = vpop.f32.mrf.mxu0
    %4626 = vmatprep.mubr.f32.mxu0 0.0
    %4627 = vmatmul.mubr.f32.gmra.mxu0 %v1487
    %v4628 = vpop.f32.mrf.mxu0
    %v4629 = vadd.f32 0.0, %v4628
    %v4630 = vpop.f32.mrf.mxu0
    %4631 = vmatprep.mubr.f32.mxu0 0.0
    %4632 = vmatmul.mubr.f32.gmra.mxu0 %v1490
    %v4633 = vpop.f32.mrf.mxu0
    %v4634 = vadd.f32 0.0, %v4633
    %v4635 = vpop.f32.mrf.mxu0
    %4636 = vmatprep.mubr.f32.mxu0 0.0
    %4637 = vmatmul.mubr.f32.gmra.mxu0 %v1493
    %v4638 = vpop.f32.mrf.mxu0
    %v4639 = vadd.f32 0.0, %v4638
    %v4640 = vpop.f32.mrf.mxu0
    %4641 = vmatprep.mubr.f32.mxu0 0.0
    %4642 = vmatmul.mubr.f32.gmra.mxu0 %v1496
    %v4643 = vpop.f32.mrf.mxu0
    %v4644 = vadd.f32 0.0, %v4643
    %v4645 = vpop.f32.mrf.mxu0
    %4646 = vmatprep.mubr.f32.mxu0 0.0
    %4647 = vmatmul.mubr.f32.gmra.mxu0 %v1499
    %v4648 = vpop.f32.mrf.mxu0
    %v4649 = vadd.f32 0.0, %v4648
    %v4650 = vpop.f32.mrf.mxu0
    %4651 = vdwg.mxu0
    %v4652 = vsub.f32 %v4509, %v4614
    %v4653 = vsub.f32 %v4514, %v4619
    %v4654 = vsub.f32 %v4519, %v4624
    %v4655 = vsub.f32 %v4524, %v4629
    %v4656 = vsub.f32 %v4529, %v4634
    %v4657 = vsub.f32 %v4534, %v4639
    %v4658 = vsub.f32 %v4539, %v4644
    %v4659 = vsub.f32 %v4544, %v4649
    %4660 = vmatprep.subr.mxu0 0.0
    %4661 = vmatpush1.msra.mxu0 0.0
    %4662 = vmatprep.subr.mxu0 0.0
    %4663 = vmatpush1.msra.mxu0 0.0
    %4664 = vmatprep.subr.mxu0 0.0
    %4665 = vmatpush1.msra.mxu0 0.0
    %4666 = vmatprep.subr.mxu0 0.0
    %4667 = vmatpush1.msra.mxu0 0.0
    %4668 = vmatprep.subr.mxu0 0.0
    %4669 = vmatpush1.msra.mxu0 0.0
    %4670 = vmatprep.subr.mxu0 0.0
    %4671 = vmatpush1.msra.mxu0 0.0
    %4672 = vmatprep.subr.mxu0 0.0
    %4673 = vmatpush1.msra.mxu0 0.0
    %4674 = vmatprep.subr.mxu0 0.0
    %4675 = vmatpush1.msra.mxu0 0.0
    %4676 = vmatprep.subr.mxu0 0.0
    %4677 = vmatpush1.msra.mxu0 %v4409
    %4678 = vmatprep.subr.mxu0 0.0
    %4679 = vmatpush1.msra.mxu0 %v4408
    %4680 = vmatprep.subr.mxu0 0.0
    %4681 = vmatpush1.msra.mxu0 %v4407
    %4682 = vmatprep.subr.mxu0 0.0
    %4683 = vmatpush1.msra.mxu0 %v4406
    %4684 = vmatprep.subr.mxu0 0.0
    %4685 = vmatpush1.msra.mxu0 %v4405
    %4686 = vmatprep.subr.mxu0 0.0
    %4687 = vmatpush1.msra.mxu0 %v4404
    %4688 = vmatprep.subr.mxu0 0.0
    %4689 = vmatpush1.msra.mxu0 %v4403
    %4690 = vmatprep.subr.mxu0 0.0
    %4691 = vmatpush1.msra.mxu0 %v4402
    %4692 = vmatprep.subr.mxu0 0.0
    %4693 = vmatpush2.msra.mxu0 0.0
    %4694 = vmatprep.subr.mxu0 0.0
    %4695 = vmatpush2.msra.mxu0 0.0
    %4696 = vmatprep.subr.mxu0 0.0
    %4697 = vmatpush2.msra.mxu0 0.0
    %4698 = vmatprep.subr.mxu0 0.0
    %4699 = vmatpush2.msra.mxu0 0.0
    %4700 = vmatprep.subr.mxu0 0.0
    %4701 = vmatpush2.msra.mxu0 0.0
    %4702 = vmatprep.subr.mxu0 0.0
    %4703 = vmatpush2.msra.mxu0 0.0
    %4704 = vmatprep.subr.mxu0 0.0
    %4705 = vmatpush2.msra.mxu0 0.0
    %4706 = vmatprep.subr.mxu0 0.0
    %4707 = vmatpush2.msra.mxu0 0.0
    %4708 = vmatprep.subr.mxu0 0.0
    %4709 = vmatpush2.msra.mxu0 0.0
    %4710 = vmatprep.subr.mxu0 0.0
    %4711 = vmatpush2.msra.mxu0 0.0
    %4712 = vmatprep.subr.mxu0 0.0
    %4713 = vmatpush2.msra.mxu0 0.0
    %4714 = vmatprep.subr.mxu0 0.0
    %4715 = vmatpush2.msra.mxu0 0.0
    %4716 = vmatprep.subr.mxu0 0.0
    %4717 = vmatpush2.msra.mxu0 0.0
    %4718 = vmatprep.subr.mxu0 0.0
    %4719 = vmatpush2.msra.mxu0 0.0
    %4720 = vmatprep.subr.mxu0 0.0
    %4721 = vmatpush2.msra.mxu0 0.0
    %4722 = vmatprep.subr.mxu0 0.0
    %4723 = vmatpush2.msra.mxu0 0.0
    %4724 = vmatprep.mubr.f32.mxu0 0.0
    %4725 = vmatmul.mubr.f32.gmra.mxu0 %v443
    %v4726 = vpop.f32.mrf.mxu0
    %v4727 = vadd.f32 0.0, %v4726
    %v4728 = vpop.f32.mrf.mxu0
    %4729 = vmatprep.mubr.f32.mxu0 0.0
    %4730 = vmatmul.mubr.f32.gmra.mxu0 %v446
    %v4731 = vpop.f32.mrf.mxu0
    %v4732 = vadd.f32 0.0, %v4731
    %v4733 = vpop.f32.mrf.mxu0
    %4734 = vmatprep.mubr.f32.mxu0 0.0
    %4735 = vmatmul.mubr.f32.gmra.mxu0 %v449
    %v4736 = vpop.f32.mrf.mxu0
    %v4737 = vadd.f32 0.0, %v4736
    %v4738 = vpop.f32.mrf.mxu0
    %4739 = vmatprep.mubr.f32.mxu0 0.0
    %4740 = vmatmul.mubr.f32.gmra.mxu0 %v452
    %v4741 = vpop.f32.mrf.mxu0
    %v4742 = vadd.f32 0.0, %v4741
    %v4743 = vpop.f32.mrf.mxu0
    %4744 = vmatprep.mubr.f32.mxu0 0.0
    %4745 = vmatmul.mubr.f32.gmra.mxu0 %v455
    %v4746 = vpop.f32.mrf.mxu0
    %v4747 = vadd.f32 0.0, %v4746
    %v4748 = vpop.f32.mrf.mxu0
    %4749 = vmatprep.mubr.f32.mxu0 0.0
    %4750 = vmatmul.mubr.f32.gmra.mxu0 %v458
    %v4751 = vpop.f32.mrf.mxu0
    %v4752 = vadd.f32 0.0, %v4751
    %v4753 = vpop.f32.mrf.mxu0
    %4754 = vmatprep.mubr.f32.mxu0 0.0
    %4755 = vmatmul.mubr.f32.gmra.mxu0 %v461
    %v4756 = vpop.f32.mrf.mxu0
    %v4757 = vadd.f32 0.0, %v4756
    %v4758 = vpop.f32.mrf.mxu0
    %4759 = vmatprep.mubr.f32.mxu0 0.0
    %4760 = vmatmul.mubr.f32.gmra.mxu0 %v464
    %v4761 = vpop.f32.mrf.mxu0
    %v4762 = vadd.f32 0.0, %v4761
    %v4763 = vpop.f32.mrf.mxu0
    %4764 = vdwg.mxu0
    %v4765 = vadd.f32 %v4509, %v4727
    %v4766 = vadd.f32 %v4514, %v4732
    %v4767 = vadd.f32 %v4519, %v4737
    %v4768 = vadd.f32 %v4524, %v4742
    %v4769 = vadd.f32 %v4529, %v4747
    %v4770 = vadd.f32 %v4534, %v4752
    %v4771 = vadd.f32 %v4539, %v4757
    %v4772 = vadd.f32 %v4544, %v4762
    %4773 = vmatprep.subr.mxu0 %v206
    %4774 = vmatpush1.msra.mxu0 %v205
    %4775 = vmatprep.subr.mxu0 %v204
    %4776 = vmatpush1.msra.mxu0 %v203
    %4777 = vmatprep.subr.mxu0 %v202
    %4778 = vmatpush1.msra.mxu0 %v201
    %4779 = vmatprep.subr.mxu0 %v200
    %4780 = vmatpush1.msra.mxu0 %v199
    %4781 = vmatprep.subr.mxu0 %v198
    %4782 = vmatpush1.msra.mxu0 %v197
    %4783 = vmatprep.subr.mxu0 %v196
    %4784 = vmatpush1.msra.mxu0 %v195
    %4785 = vmatprep.subr.mxu0 %v194
    %4786 = vmatpush1.msra.mxu0 %v193
    %4787 = vmatprep.subr.mxu0 %v192
    %4788 = vmatpush1.msra.mxu0 %v191
    %4789 = vmatprep.subr.mxu0 %v190
    %4790 = vmatpush1.msra.mxu0 %v189
    %4791 = vmatprep.subr.mxu0 %v188
    %4792 = vmatpush1.msra.mxu0 %v187
    %4793 = vmatprep.subr.mxu0 %v186
    %4794 = vmatpush1.msra.mxu0 %v185
    %4795 = vmatprep.subr.mxu0 %v184
    %4796 = vmatpush1.msra.mxu0 %v183
    %4797 = vmatprep.subr.mxu0 %v182
    %4798 = vmatpush1.msra.mxu0 %v181
    %4799 = vmatprep.subr.mxu0 %v180
    %4800 = vmatpush1.msra.mxu0 %v179
    %4801 = vmatprep.subr.mxu0 %v178
    %4802 = vmatpush1.msra.mxu0 %v177
    %4803 = vmatprep.subr.mxu0 %v176
    %4804 = vmatpush1.msra.mxu0 %v175
    %4805 = vmatprep.subr.mxu0 %v238
    %4806 = vmatpush2.msra.mxu0 %v237
    %4807 = vmatprep.subr.mxu0 %v236
    %4808 = vmatpush2.msra.mxu0 %v235
    %4809 = vmatprep.subr.mxu0 %v234
    %4810 = vmatpush2.msra.mxu0 %v233
    %4811 = vmatprep.subr.mxu0 %v232
    %4812 = vmatpush2.msra.mxu0 %v231
    %4813 = vmatprep.subr.mxu0 %v230
    %4814 = vmatpush2.msra.mxu0 %v229
    %4815 = vmatprep.subr.mxu0 %v228
    %4816 = vmatpush2.msra.mxu0 %v227
    %4817 = vmatprep.subr.mxu0 %v226
    %4818 = vmatpush2.msra.mxu0 %v225
    %4819 = vmatprep.subr.mxu0 %v224
    %4820 = vmatpush2.msra.mxu0 %v223
    %4821 = vmatprep.subr.mxu0 %v222
    %4822 = vmatpush2.msra.mxu0 %v221
    %4823 = vmatprep.subr.mxu0 %v220
    %4824 = vmatpush2.msra.mxu0 %v219
    %4825 = vmatprep.subr.mxu0 %v218
    %4826 = vmatpush2.msra.mxu0 %v217
    %4827 = vmatprep.subr.mxu0 %v216
    %4828 = vmatpush2.msra.mxu0 %v215
    %4829 = vmatprep.subr.mxu0 %v214
    %4830 = vmatpush2.msra.mxu0 %v213
    %4831 = vmatprep.subr.mxu0 %v212
    %4832 = vmatpush2.msra.mxu0 %v211
    %4833 = vmatprep.subr.mxu0 %v210
    %4834 = vmatpush2.msra.mxu0 %v209
    %4835 = vmatprep.subr.mxu0 %v208
    %4836 = vmatpush2.msra.mxu0 %v207
    %4837 = vmatprep.mubr.f32.mxu0 %v4765
    %4838 = vmatmul.mubr.f32.gmra.mxu0 %v4652
    %v4839 = vpop.f32.mrf.mxu0
    %v4840 = vadd.f32 0.0, %v4839
    %v4841 = vpop.f32.mrf.mxu0
    %v4842 = vadd.f32 0.0, %v4841
    %4843 = vmatprep.mubr.f32.mxu0 %v4766
    %4844 = vmatmul.mubr.f32.gmra.mxu0 %v4653
    %v4845 = vpop.f32.mrf.mxu0
    %v4846 = vadd.f32 0.0, %v4845
    %v4847 = vpop.f32.mrf.mxu0
    %v4848 = vadd.f32 0.0, %v4847
    %4849 = vmatprep.mubr.f32.mxu0 %v4767
    %4850 = vmatmul.mubr.f32.gmra.mxu0 %v4654
    %v4851 = vpop.f32.mrf.mxu0
    %v4852 = vadd.f32 0.0, %v4851
    %v4853 = vpop.f32.mrf.mxu0
    %v4854 = vadd.f32 0.0, %v4853
    %4855 = vmatprep.mubr.f32.mxu0 %v4768
    %4856 = vmatmul.mubr.f32.gmra.mxu0 %v4655
    %v4857 = vpop.f32.mrf.mxu0
    %v4858 = vadd.f32 0.0, %v4857
    %v4859 = vpop.f32.mrf.mxu0
    %v4860 = vadd.f32 0.0, %v4859
    %4861 = vmatprep.mubr.f32.mxu0 %v4769
    %4862 = vmatmul.mubr.f32.gmra.mxu0 %v4656
    %v4863 = vpop.f32.mrf.mxu0
    %v4864 = vadd.f32 0.0, %v4863
    %v4865 = vpop.f32.mrf.mxu0
    %v4866 = vadd.f32 0.0, %v4865
    %4867 = vmatprep.mubr.f32.mxu0 %v4770
    %4868 = vmatmul.mubr.f32.gmra.mxu0 %v4657
    %v4869 = vpop.f32.mrf.mxu0
    %v4870 = vadd.f32 0.0, %v4869
    %v4871 = vpop.f32.mrf.mxu0
    %v4872 = vadd.f32 0.0, %v4871
    %4873 = vmatprep.mubr.f32.mxu0 %v4771
    %4874 = vmatmul.mubr.f32.gmra.mxu0 %v4658
    %v4875 = vpop.f32.mrf.mxu0
    %v4876 = vadd.f32 0.0, %v4875
    %v4877 = vpop.f32.mrf.mxu0
    %v4878 = vadd.f32 0.0, %v4877
    %4879 = vmatprep.mubr.f32.mxu0 %v4772
    %4880 = vmatmul.mubr.f32.gmra.mxu0 %v4659
    %v4881 = vpop.f32.mrf.mxu0
    %v4882 = vadd.f32 0.0, %v4881
    %v4883 = vpop.f32.mrf.mxu0
    %v4884 = vadd.f32 0.0, %v4883
    %4885 = vdwg.mxu0
    %v4886 = vmul.f32 %v4840, %v1282
    %v4887 = vmul.f32 %v4846, %v1283
    %v4888 = vmul.f32 %v4852, %v1284
    %v4889 = vmul.f32 %v4858, %v1285
    %v4890 = vmul.f32 %v4864, %v1286
    %v4891 = vmul.f32 %v4870, %v1287
    %v4892 = vmul.f32 %v4876, %v1288
    %v4893 = vmul.f32 %v4882, %v1289
    %v4894 = vmul.f32 %v4842, %v1291
    %v4895 = vmul.f32 %v4848, %v1292
    %v4896 = vmul.f32 %v4854, %v1293
    %v4897 = vmul.f32 %v4860, %v1294
    %v4898 = vmul.f32 %v4866, %v1295
    %v4899 = vmul.f32 %v4872, %v1296
    %v4900 = vmul.f32 %v4878, %v1297
    %v4901 = vmul.f32 %v4884, %v1298
    %v4902 = vsub.f32 %v4886, %v4894
    %v4903 = vsub.f32 %v4887, %v4895
    %v4904 = vsub.f32 %v4888, %v4896
    %v4905 = vsub.f32 %v4889, %v4897
    %v4906 = vsub.f32 %v4890, %v4898
    %v4907 = vsub.f32 %v4891, %v4899
    %v4908 = vsub.f32 %v4892, %v4900
    %v4909 = vsub.f32 %v4893, %v4901
    %v4910 = vmul.f32 %v4840, %v1291
    %v4911 = vmul.f32 %v4846, %v1292
    %v4912 = vmul.f32 %v4852, %v1293
    %v4913 = vmul.f32 %v4858, %v1294
    %v4914 = vmul.f32 %v4864, %v1295
    %v4915 = vmul.f32 %v4870, %v1296
    %v4916 = vmul.f32 %v4876, %v1297
    %v4917 = vmul.f32 %v4882, %v1298
    %v4918 = vmul.f32 %v4842, %v1282
    %v4919 = vmul.f32 %v4848, %v1283
    %v4920 = vmul.f32 %v4854, %v1284
    %v4921 = vmul.f32 %v4860, %v1285
    %v4922 = vmul.f32 %v4866, %v1286
    %v4923 = vmul.f32 %v4872, %v1287
    %v4924 = vmul.f32 %v4878, %v1288
    %v4925 = vmul.f32 %v4884, %v1289
    %v4926 = vadd.f32 %v4910, %v4918
    %v4927 = vadd.f32 %v4911, %v4919
    %v4928 = vadd.f32 %v4912, %v4920
    %v4929 = vadd.f32 %v4913, %v4921
    %v4930 = vadd.f32 %v4914, %v4922
    %v4931 = vadd.f32 %v4915, %v4923
    %v4932 = vadd.f32 %v4916, %v4924
    %v4933 = vadd.f32 %v4917, %v4925
    %v4934 = vadd.f32 %v4902, %v4926
    %v4935 = vadd.f32 %v4903, %v4927
    %v4936 = vadd.f32 %v4904, %v4928
    %v4937 = vadd.f32 %v4905, %v4929
    %v4938 = vadd.f32 %v4906, %v4930
    %v4939 = vadd.f32 %v4907, %v4931
    %v4940 = vadd.f32 %v4908, %v4932
    %v4941 = vadd.f32 %v4909, %v4933
    %4942 = vmatprep.subr.mxu0 0.0
    %4943 = vmatpush1.msra.mxu0 0.0
    %4944 = vmatprep.subr.mxu0 0.0
    %4945 = vmatpush1.msra.mxu0 0.0
    %4946 = vmatprep.subr.mxu0 0.0
    %4947 = vmatpush1.msra.mxu0 0.0
    %4948 = vmatprep.subr.mxu0 0.0
    %4949 = vmatpush1.msra.mxu0 0.0
    %4950 = vmatprep.subr.mxu0 0.0
    %4951 = vmatpush1.msra.mxu0 0.0
    %4952 = vmatprep.subr.mxu0 0.0
    %4953 = vmatpush1.msra.mxu0 0.0
    %4954 = vmatprep.subr.mxu0 0.0
    %4955 = vmatpush1.msra.mxu0 0.0
    %4956 = vmatprep.subr.mxu0 0.0
    %4957 = vmatpush1.msra.mxu0 0.0
    %4958 = vmatprep.subr.mxu0 0.0
    %4959 = vmatpush1.msra.mxu0 %v4941
    %4960 = vmatprep.subr.mxu0 0.0
    %4961 = vmatpush1.msra.mxu0 %v4940
    %4962 = vmatprep.subr.mxu0 0.0
    %4963 = vmatpush1.msra.mxu0 %v4939
    %4964 = vmatprep.subr.mxu0 0.0
    %4965 = vmatpush1.msra.mxu0 %v4938
    %4966 = vmatprep.subr.mxu0 0.0
    %4967 = vmatpush1.msra.mxu0 %v4937
    %4968 = vmatprep.subr.mxu0 0.0
    %4969 = vmatpush1.msra.mxu0 %v4936
    %4970 = vmatprep.subr.mxu0 0.0
    %4971 = vmatpush1.msra.mxu0 %v4935
    %4972 = vmatprep.subr.mxu0 0.0
    %4973 = vmatpush1.msra.mxu0 %v4934
    %4974 = vmatprep.subr.mxu0 0.0
    %4975 = vmatpush2.msra.mxu0 0.0
    %4976 = vmatprep.subr.mxu0 0.0
    %4977 = vmatpush2.msra.mxu0 0.0
    %4978 = vmatprep.subr.mxu0 0.0
    %4979 = vmatpush2.msra.mxu0 0.0
    %4980 = vmatprep.subr.mxu0 0.0
    %4981 = vmatpush2.msra.mxu0 0.0
    %4982 = vmatprep.subr.mxu0 0.0
    %4983 = vmatpush2.msra.mxu0 0.0
    %4984 = vmatprep.subr.mxu0 0.0
    %4985 = vmatpush2.msra.mxu0 0.0
    %4986 = vmatprep.subr.mxu0 0.0
    %4987 = vmatpush2.msra.mxu0 0.0
    %4988 = vmatprep.subr.mxu0 0.0
    %4989 = vmatpush2.msra.mxu0 0.0
    %4990 = vmatprep.subr.mxu0 0.0
    %4991 = vmatpush2.msra.mxu0 0.0
    %4992 = vmatprep.subr.mxu0 0.0
    %4993 = vmatpush2.msra.mxu0 0.0
    %4994 = vmatprep.subr.mxu0 0.0
    %4995 = vmatpush2.msra.mxu0 0.0
    %4996 = vmatprep.subr.mxu0 0.0
    %4997 = vmatpush2.msra.mxu0 0.0
    %4998 = vmatprep.subr.mxu0 0.0
    %4999 = vmatpush2.msra.mxu0 0.0
    %5000 = vmatprep.subr.mxu0 0.0
    %5001 = vmatpush2.msra.mxu0 0.0
    %5002 = vmatprep.subr.mxu0 0.0
    %5003 = vmatpush2.msra.mxu0 0.0
    %5004 = vmatprep.subr.mxu0 0.0
    %5005 = vmatpush2.msra.mxu0 0.0
    %5006 = vmatprep.mubr.f32.mxu0 0.0
    %5007 = vmatmul.mubr.f32.gmra.mxu0 %v766
    %v5008 = vpop.f32.mrf.mxu0
    %v5009 = vadd.f32 0.0, %v5008
    %v5010 = vpop.f32.mrf.mxu0
    %5011 = vmatprep.mubr.f32.mxu0 0.0
    %5012 = vmatmul.mubr.f32.gmra.mxu0 %v769
    %v5013 = vpop.f32.mrf.mxu0
    %v5014 = vadd.f32 0.0, %v5013
    %v5015 = vpop.f32.mrf.mxu0
    %5016 = vmatprep.mubr.f32.mxu0 0.0
    %5017 = vmatmul.mubr.f32.gmra.mxu0 %v772
    %v5018 = vpop.f32.mrf.mxu0
    %v5019 = vadd.f32 0.0, %v5018
    %v5020 = vpop.f32.mrf.mxu0
    %5021 = vmatprep.mubr.f32.mxu0 0.0
    %5022 = vmatmul.mubr.f32.gmra.mxu0 %v775
    %v5023 = vpop.f32.mrf.mxu0
    %v5024 = vadd.f32 0.0, %v5023
    %v5025 = vpop.f32.mrf.mxu0
    %5026 = vmatprep.mubr.f32.mxu0 0.0
    %5027 = vmatmul.mubr.f32.gmra.mxu0 %v778
    %v5028 = vpop.f32.mrf.mxu0
    %v5029 = vadd.f32 0.0, %v5028
    %v5030 = vpop.f32.mrf.mxu0
    %5031 = vmatprep.mubr.f32.mxu0 0.0
    %5032 = vmatmul.mubr.f32.gmra.mxu0 %v781
    %v5033 = vpop.f32.mrf.mxu0
    %v5034 = vadd.f32 0.0, %v5033
    %v5035 = vpop.f32.mrf.mxu0
    %5036 = vmatprep.mubr.f32.mxu0 0.0
    %5037 = vmatmul.mubr.f32.gmra.mxu0 %v784
    %v5038 = vpop.f32.mrf.mxu0
    %v5039 = vadd.f32 0.0, %v5038
    %v5040 = vpop.f32.mrf.mxu0
    %5041 = vmatprep.mubr.f32.mxu0 0.0
    %5042 = vmatmul.mubr.f32.gmra.mxu0 %v787
    %v5043 = vpop.f32.mrf.mxu0
    %v5044 = vadd.f32 0.0, %v5043
    %v5045 = vpop.f32.mrf.mxu0
    %5046 = vdwg.mxu0
    %5047 = vmatprep.subr.mxu0 0.0
    %5048 = vmatpush1.msra.mxu0 0.0
    %5049 = vmatprep.subr.mxu0 0.0
    %5050 = vmatpush1.msra.mxu0 0.0
    %5051 = vmatprep.subr.mxu0 0.0
    %5052 = vmatpush1.msra.mxu0 0.0
    %5053 = vmatprep.subr.mxu0 0.0
    %5054 = vmatpush1.msra.mxu0 0.0
    %5055 = vmatprep.subr.mxu0 0.0
    %5056 = vmatpush1.msra.mxu0 0.0
    %5057 = vmatprep.subr.mxu0 0.0
    %5058 = vmatpush1.msra.mxu0 0.0
    %5059 = vmatprep.subr.mxu0 0.0
    %5060 = vmatpush1.msra.mxu0 0.0
    %5061 = vmatprep.subr.mxu0 0.0
    %5062 = vmatpush1.msra.mxu0 0.0
    %5063 = vmatprep.subr.mxu0 0.0
    %5064 = vmatpush1.msra.mxu0 %v4933
    %5065 = vmatprep.subr.mxu0 0.0
    %5066 = vmatpush1.msra.mxu0 %v4932
    %5067 = vmatprep.subr.mxu0 0.0
    %5068 = vmatpush1.msra.mxu0 %v4931
    %5069 = vmatprep.subr.mxu0 0.0
    %5070 = vmatpush1.msra.mxu0 %v4930
    %5071 = vmatprep.subr.mxu0 0.0
    %5072 = vmatpush1.msra.mxu0 %v4929
    %5073 = vmatprep.subr.mxu0 0.0
    %5074 = vmatpush1.msra.mxu0 %v4928
    %5075 = vmatprep.subr.mxu0 0.0
    %5076 = vmatpush1.msra.mxu0 %v4927
    %5077 = vmatprep.subr.mxu0 0.0
    %5078 = vmatpush1.msra.mxu0 %v4926
    %5079 = vmatprep.subr.mxu0 0.0
    %5080 = vmatpush2.msra.mxu0 0.0
    %5081 = vmatprep.subr.mxu0 0.0
    %5082 = vmatpush2.msra.mxu0 0.0
    %5083 = vmatprep.subr.mxu0 0.0
    %5084 = vmatpush2.msra.mxu0 0.0
    %5085 = vmatprep.subr.mxu0 0.0
    %5086 = vmatpush2.msra.mxu0 0.0
    %5087 = vmatprep.subr.mxu0 0.0
    %5088 = vmatpush2.msra.mxu0 0.0
    %5089 = vmatprep.subr.mxu0 0.0
    %5090 = vmatpush2.msra.mxu0 0.0
    %5091 = vmatprep.subr.mxu0 0.0
    %5092 = vmatpush2.msra.mxu0 0.0
    %5093 = vmatprep.subr.mxu0 0.0
    %5094 = vmatpush2.msra.mxu0 0.0
    %5095 = vmatprep.subr.mxu0 0.0
    %5096 = vmatpush2.msra.mxu0 0.0
    %5097 = vmatprep.subr.mxu0 0.0
    %5098 = vmatpush2.msra.mxu0 0.0
    %5099 = vmatprep.subr.mxu0 0.0
    %5100 = vmatpush2.msra.mxu0 0.0
    %5101 = vmatprep.subr.mxu0 0.0
    %5102 = vmatpush2.msra.mxu0 0.0
    %5103 = vmatprep.subr.mxu0 0.0
    %5104 = vmatpush2.msra.mxu0 0.0
    %5105 = vmatprep.subr.mxu0 0.0
    %5106 = vmatpush2.msra.mxu0 0.0
    %5107 = vmatprep.subr.mxu0 0.0
    %5108 = vmatpush2.msra.mxu0 0.0
    %5109 = vmatprep.subr.mxu0 0.0
    %5110 = vmatpush2.msra.mxu0 0.0
    %5111 = vmatprep.mubr.f32.mxu0 0.0
    %5112 = vmatmul.mubr.f32.gmra.mxu0 %v895
    %v5113 = vpop.f32.mrf.mxu0
    %v5114 = vadd.f32 0.0, %v5113
    %v5115 = vpop.f32.mrf.mxu0
    %5116 = vmatprep.mubr.f32.mxu0 0.0
    %5117 = vmatmul.mubr.f32.gmra.mxu0 %v898
    %v5118 = vpop.f32.mrf.mxu0
    %v5119 = vadd.f32 0.0, %v5118
    %v5120 = vpop.f32.mrf.mxu0
    %5121 = vmatprep.mubr.f32.mxu0 0.0
    %5122 = vmatmul.mubr.f32.gmra.mxu0 %v901
    %v5123 = vpop.f32.mrf.mxu0
    %v5124 = vadd.f32 0.0, %v5123
    %v5125 = vpop.f32.mrf.mxu0
    %5126 = vmatprep.mubr.f32.mxu0 0.0
    %5127 = vmatmul.mubr.f32.gmra.mxu0 %v904
    %v5128 = vpop.f32.mrf.mxu0
    %v5129 = vadd.f32 0.0, %v5128
    %v5130 = vpop.f32.mrf.mxu0
    %5131 = vmatprep.mubr.f32.mxu0 0.0
    %5132 = vmatmul.mubr.f32.gmra.mxu0 %v907
    %v5133 = vpop.f32.mrf.mxu0
    %v5134 = vadd.f32 0.0, %v5133
    %v5135 = vpop.f32.mrf.mxu0
    %5136 = vmatprep.mubr.f32.mxu0 0.0
    %5137 = vmatmul.mubr.f32.gmra.mxu0 %v910
    %v5138 = vpop.f32.mrf.mxu0
    %v5139 = vadd.f32 0.0, %v5138
    %v5140 = vpop.f32.mrf.mxu0
    %5141 = vmatprep.mubr.f32.mxu0 0.0
    %5142 = vmatmul.mubr.f32.gmra.mxu0 %v913
    %v5143 = vpop.f32.mrf.mxu0
    %v5144 = vadd.f32 0.0, %v5143
    %v5145 = vpop.f32.mrf.mxu0
    %5146 = vmatprep.mubr.f32.mxu0 0.0
    %5147 = vmatmul.mubr.f32.gmra.mxu0 %v916
    %v5148 = vpop.f32.mrf.mxu0
    %v5149 = vadd.f32 0.0, %v5148
    %v5150 = vpop.f32.mrf.mxu0
    %5151 = vdwg.mxu0
    %v5152 = vsub.f32 %v5009, %v5114
    %v5153 = vsub.f32 %v5014, %v5119
    %v5154 = vsub.f32 %v5019, %v5124
    %v5155 = vsub.f32 %v5024, %v5129
    %v5156 = vsub.f32 %v5029, %v5134
    %v5157 = vsub.f32 %v5034, %v5139
    %v5158 = vsub.f32 %v5039, %v5144
    %v5159 = vsub.f32 %v5044, %v5149
    %5160 = vmatprep.subr.mxu0 0.0
    %5161 = vmatpush1.msra.mxu0 0.0
    %5162 = vmatprep.subr.mxu0 0.0
    %5163 = vmatpush1.msra.mxu0 0.0
    %5164 = vmatprep.subr.mxu0 0.0
    %5165 = vmatpush1.msra.mxu0 0.0
    %5166 = vmatprep.subr.mxu0 0.0
    %5167 = vmatpush1.msra.mxu0 0.0
    %5168 = vmatprep.subr.mxu0 0.0
    %5169 = vmatpush1.msra.mxu0 0.0
    %5170 = vmatprep.subr.mxu0 0.0
    %5171 = vmatpush1.msra.mxu0 0.0
    %5172 = vmatprep.subr.mxu0 0.0
    %5173 = vmatpush1.msra.mxu0 0.0
    %5174 = vmatprep.subr.mxu0 0.0
    %5175 = vmatpush1.msra.mxu0 0.0
    %5176 = vmatprep.subr.mxu0 0.0
    %5177 = vmatpush1.msra.mxu0 %v4909
    %5178 = vmatprep.subr.mxu0 0.0
    %5179 = vmatpush1.msra.mxu0 %v4908
    %5180 = vmatprep.subr.mxu0 0.0
    %5181 = vmatpush1.msra.mxu0 %v4907
    %5182 = vmatprep.subr.mxu0 0.0
    %5183 = vmatpush1.msra.mxu0 %v4906
    %5184 = vmatprep.subr.mxu0 0.0
    %5185 = vmatpush1.msra.mxu0 %v4905
    %5186 = vmatprep.subr.mxu0 0.0
    %5187 = vmatpush1.msra.mxu0 %v4904
    %5188 = vmatprep.subr.mxu0 0.0
    %5189 = vmatpush1.msra.mxu0 %v4903
    %5190 = vmatprep.subr.mxu0 0.0
    %5191 = vmatpush1.msra.mxu0 %v4902
    %5192 = vmatprep.subr.mxu0 0.0
    %5193 = vmatpush2.msra.mxu0 0.0
    %5194 = vmatprep.subr.mxu0 0.0
    %5195 = vmatpush2.msra.mxu0 0.0
    %5196 = vmatprep.subr.mxu0 0.0
    %5197 = vmatpush2.msra.mxu0 0.0
    %5198 = vmatprep.subr.mxu0 0.0
    %5199 = vmatpush2.msra.mxu0 0.0
    %5200 = vmatprep.subr.mxu0 0.0
    %5201 = vmatpush2.msra.mxu0 0.0
    %5202 = vmatprep.subr.mxu0 0.0
    %5203 = vmatpush2.msra.mxu0 0.0
    %5204 = vmatprep.subr.mxu0 0.0
    %5205 = vmatpush2.msra.mxu0 0.0
    %5206 = vmatprep.subr.mxu0 0.0
    %5207 = vmatpush2.msra.mxu0 0.0
    %5208 = vmatprep.subr.mxu0 0.0
    %5209 = vmatpush2.msra.mxu0 0.0
    %5210 = vmatprep.subr.mxu0 0.0
    %5211 = vmatpush2.msra.mxu0 0.0
    %5212 = vmatprep.subr.mxu0 0.0
    %5213 = vmatpush2.msra.mxu0 0.0
    %5214 = vmatprep.subr.mxu0 0.0
    %5215 = vmatpush2.msra.mxu0 0.0
    %5216 = vmatprep.subr.mxu0 0.0
    %5217 = vmatpush2.msra.mxu0 0.0
    %5218 = vmatprep.subr.mxu0 0.0
    %5219 = vmatpush2.msra.mxu0 0.0
    %5220 = vmatprep.subr.mxu0 0.0
    %5221 = vmatpush2.msra.mxu0 0.0
    %5222 = vmatprep.subr.mxu0 0.0
    %5223 = vmatpush2.msra.mxu0 0.0
    %5224 = vmatprep.mubr.f32.mxu0 0.0
    %5225 = vmatmul.mubr.f32.gmra.mxu0 %v1032
    %v5226 = vpop.f32.mrf.mxu0
    %v5227 = vadd.f32 0.0, %v5226
    %v5228 = vpop.f32.mrf.mxu0
    %5229 = vmatprep.mubr.f32.mxu0 0.0
    %5230 = vmatmul.mubr.f32.gmra.mxu0 %v1035
    %v5231 = vpop.f32.mrf.mxu0
    %v5232 = vadd.f32 0.0, %v5231
    %v5233 = vpop.f32.mrf.mxu0
    %5234 = vmatprep.mubr.f32.mxu0 0.0
    %5235 = vmatmul.mubr.f32.gmra.mxu0 %v1038
    %v5236 = vpop.f32.mrf.mxu0
    %v5237 = vadd.f32 0.0, %v5236
    %v5238 = vpop.f32.mrf.mxu0
    %5239 = vmatprep.mubr.f32.mxu0 0.0
    %5240 = vmatmul.mubr.f32.gmra.mxu0 %v1041
    %v5241 = vpop.f32.mrf.mxu0
    %v5242 = vadd.f32 0.0, %v5241
    %v5243 = vpop.f32.mrf.mxu0
    %5244 = vmatprep.mubr.f32.mxu0 0.0
    %5245 = vmatmul.mubr.f32.gmra.mxu0 %v1044
    %v5246 = vpop.f32.mrf.mxu0
    %v5247 = vadd.f32 0.0, %v5246
    %v5248 = vpop.f32.mrf.mxu0
    %5249 = vmatprep.mubr.f32.mxu0 0.0
    %5250 = vmatmul.mubr.f32.gmra.mxu0 %v1047
    %v5251 = vpop.f32.mrf.mxu0
    %v5252 = vadd.f32 0.0, %v5251
    %v5253 = vpop.f32.mrf.mxu0
    %5254 = vmatprep.mubr.f32.mxu0 0.0
    %5255 = vmatmul.mubr.f32.gmra.mxu0 %v1050
    %v5256 = vpop.f32.mrf.mxu0
    %v5257 = vadd.f32 0.0, %v5256
    %v5258 = vpop.f32.mrf.mxu0
    %5259 = vmatprep.mubr.f32.mxu0 0.0
    %5260 = vmatmul.mubr.f32.gmra.mxu0 %v1053
    %v5261 = vpop.f32.mrf.mxu0
    %v5262 = vadd.f32 0.0, %v5261
    %v5263 = vpop.f32.mrf.mxu0
    %5264 = vdwg.mxu0
    %v5265 = vadd.f32 %v5009, %v5227
    %v5266 = vadd.f32 %v5014, %v5232
    %v5267 = vadd.f32 %v5019, %v5237
    %v5268 = vadd.f32 %v5024, %v5242
    %v5269 = vadd.f32 %v5029, %v5247
    %v5270 = vadd.f32 %v5034, %v5252
    %v5271 = vadd.f32 %v5039, %v5257
    %v5272 = vadd.f32 %v5044, %v5262
    %5273 = vmatprep.subr.mxu0 %v271
    %5274 = vmatpush1.msra.mxu0 %v270
    %5275 = vmatprep.subr.mxu0 %v269
    %5276 = vmatpush1.msra.mxu0 %v268
    %5277 = vmatprep.subr.mxu0 %v267
    %5278 = vmatpush1.msra.mxu0 %v266
    %5279 = vmatprep.subr.mxu0 %v265
    %5280 = vmatpush1.msra.mxu0 %v264
    %5281 = vmatprep.subr.mxu0 %v263
    %5282 = vmatpush1.msra.mxu0 %v262
    %5283 = vmatprep.subr.mxu0 %v261
    %5284 = vmatpush1.msra.mxu0 %v260
    %5285 = vmatprep.subr.mxu0 %v259
    %5286 = vmatpush1.msra.mxu0 %v258
    %5287 = vmatprep.subr.mxu0 %v257
    %5288 = vmatpush1.msra.mxu0 %v256
    %5289 = vmatprep.subr.mxu0 %v255
    %5290 = vmatpush1.msra.mxu0 %v254
    %5291 = vmatprep.subr.mxu0 %v253
    %5292 = vmatpush1.msra.mxu0 %v252
    %5293 = vmatprep.subr.mxu0 %v251
    %5294 = vmatpush1.msra.mxu0 %v250
    %5295 = vmatprep.subr.mxu0 %v249
    %5296 = vmatpush1.msra.mxu0 %v248
    %5297 = vmatprep.subr.mxu0 %v247
    %5298 = vmatpush1.msra.mxu0 %v246
    %5299 = vmatprep.subr.mxu0 %v245
    %5300 = vmatpush1.msra.mxu0 %v244
    %5301 = vmatprep.subr.mxu0 %v243
    %5302 = vmatpush1.msra.mxu0 %v242
    %5303 = vmatprep.subr.mxu0 %v241
    %5304 = vmatpush1.msra.mxu0 %v240
    %5305 = vmatprep.subr.mxu0 %v303
    %5306 = vmatpush2.msra.mxu0 %v302
    %5307 = vmatprep.subr.mxu0 %v301
    %5308 = vmatpush2.msra.mxu0 %v300
    %5309 = vmatprep.subr.mxu0 %v299
    %5310 = vmatpush2.msra.mxu0 %v298
    %5311 = vmatprep.subr.mxu0 %v297
    %5312 = vmatpush2.msra.mxu0 %v296
    %5313 = vmatprep.subr.mxu0 %v295
    %5314 = vmatpush2.msra.mxu0 %v294
    %5315 = vmatprep.subr.mxu0 %v293
    %5316 = vmatpush2.msra.mxu0 %v292
    %5317 = vmatprep.subr.mxu0 %v291
    %5318 = vmatpush2.msra.mxu0 %v290
    %5319 = vmatprep.subr.mxu0 %v289
    %5320 = vmatpush2.msra.mxu0 %v288
    %5321 = vmatprep.subr.mxu0 %v287
    %5322 = vmatpush2.msra.mxu0 %v286
    %5323 = vmatprep.subr.mxu0 %v285
    %5324 = vmatpush2.msra.mxu0 %v284
    %5325 = vmatprep.subr.mxu0 %v283
    %5326 = vmatpush2.msra.mxu0 %v282
    %5327 = vmatprep.subr.mxu0 %v281
    %5328 = vmatpush2.msra.mxu0 %v280
    %5329 = vmatprep.subr.mxu0 %v279
    %5330 = vmatpush2.msra.mxu0 %v278
    %5331 = vmatprep.subr.mxu0 %v277
    %5332 = vmatpush2.msra.mxu0 %v276
    %5333 = vmatprep.subr.mxu0 %v275
    %5334 = vmatpush2.msra.mxu0 %v274
    %5335 = vmatprep.subr.mxu0 %v273
    %5336 = vmatpush2.msra.mxu0 %v272
    %5337 = vmatprep.mubr.f32.mxu0 %v5265
    %5338 = vmatmul.mubr.f32.gmra.mxu0 %v5152
    %v5339 = vpop.f32.mrf.mxu0
    %v5340 = vadd.f32 0.0, %v5339
    %v5341 = vpop.f32.mrf.mxu0
    %5342 = vmatprep.mubr.f32.mxu0 %v5266
    %5343 = vmatmul.mubr.f32.gmra.mxu0 %v5153
    %v5344 = vpop.f32.mrf.mxu0
    %v5345 = vadd.f32 0.0, %v5344
    %v5346 = vpop.f32.mrf.mxu0
    %5347 = vmatprep.mubr.f32.mxu0 %v5267
    %5348 = vmatmul.mubr.f32.gmra.mxu0 %v5154
    %v5349 = vpop.f32.mrf.mxu0
    %v5350 = vadd.f32 0.0, %v5349
    %v5351 = vpop.f32.mrf.mxu0
    %5352 = vmatprep.mubr.f32.mxu0 %v5268
    %5353 = vmatmul.mubr.f32.gmra.mxu0 %v5155
    %v5354 = vpop.f32.mrf.mxu0
    %v5355 = vadd.f32 0.0, %v5354
    %v5356 = vpop.f32.mrf.mxu0
    %5357 = vmatprep.mubr.f32.mxu0 %v5269
    %5358 = vmatmul.mubr.f32.gmra.mxu0 %v5156
    %v5359 = vpop.f32.mrf.mxu0
    %v5360 = vadd.f32 0.0, %v5359
    %v5361 = vpop.f32.mrf.mxu0
    %5362 = vmatprep.mubr.f32.mxu0 %v5270
    %5363 = vmatmul.mubr.f32.gmra.mxu0 %v5157
    %v5364 = vpop.f32.mrf.mxu0
    %v5365 = vadd.f32 0.0, %v5364
    %v5366 = vpop.f32.mrf.mxu0
    %5367 = vmatprep.mubr.f32.mxu0 %v5271
    %5368 = vmatmul.mubr.f32.gmra.mxu0 %v5158
    %v5369 = vpop.f32.mrf.mxu0
    %v5370 = vadd.f32 0.0, %v5369
    %v5371 = vpop.f32.mrf.mxu0
    %5372 = vmatprep.mubr.f32.mxu0 %v5272
    %5373 = vmatmul.mubr.f32.gmra.mxu0 %v5159
    %v5374 = vpop.f32.mrf.mxu0
    %v5375 = vadd.f32 0.0, %v5374
    %v5376 = vpop.f32.mrf.mxu0
    %5377 = vdwg.mxu0
    %s5378 = scalar_lea.vmem [#allocation11], 128
    %v5379 = vld [vmem:[%s5378] sm:$0xff]
    %v5380 = vld [vmem:[%s5378 + $0x8] sm:$0xff]
    %v5381 = vld [vmem:[%s5378 + $0x10] sm:$0xff]
    %v5382 = vld [vmem:[%s5378 + $0x18] sm:$0xff]
    %v5383 = vld [vmem:[%s5378 + $0x20] sm:$0xff]
    %v5384 = vld [vmem:[%s5378 + $0x28] sm:$0xff]
    %v5385 = vld [vmem:[%s5378 + $0x30] sm:$0xff]
    %v5386 = vld [vmem:[%s5378 + $0x38] sm:$0xff]
    %s5387 = scalar_lea.vmem [#allocation11], 640
    %v5388 = vld [vmem:[%s5387] sm:$0xff]
    %v5389 = vld [vmem:[%s5387 + $0x8] sm:$0xff]
    %v5390 = vld [vmem:[%s5387 + $0x10] sm:$0xff]
    %v5391 = vld [vmem:[%s5387 + $0x18] sm:$0xff]
    %v5392 = vld [vmem:[%s5387 + $0x20] sm:$0xff]
    %v5393 = vld [vmem:[%s5387 + $0x28] sm:$0xff]
    %v5394 = vld [vmem:[%s5387 + $0x30] sm:$0xff]
    %v5395 = vld [vmem:[%s5387 + $0x38] sm:$0xff]
    %v5396 = vmul.f32 %v1235, %v5379
    %v5397 = vmul.f32 %v1241, %v5380
    %v5398 = vmul.f32 %v1247, %v5381
    %v5399 = vmul.f32 %v1253, %v5382
    %v5400 = vmul.f32 %v1259, %v5383
    %v5401 = vmul.f32 %v1265, %v5384
    %v5402 = vmul.f32 %v1271, %v5385
    %v5403 = vmul.f32 %v1277, %v5386
    %v5404 = vmul.f32 %v1237, %v5388
    %v5405 = vmul.f32 %v1243, %v5389
    %v5406 = vmul.f32 %v1249, %v5390
    %v5407 = vmul.f32 %v1255, %v5391
    %v5408 = vmul.f32 %v1261, %v5392
    %v5409 = vmul.f32 %v1267, %v5393
    %v5410 = vmul.f32 %v1273, %v5394
    %v5411 = vmul.f32 %v1279, %v5395
    %v5412 = vsub.f32 %v5396, %v5404
    %v5413 = vsub.f32 %v5397, %v5405
    %v5414 = vsub.f32 %v5398, %v5406
    %v5415 = vsub.f32 %v5399, %v5407
    %v5416 = vsub.f32 %v5400, %v5408
    %v5417 = vsub.f32 %v5401, %v5409
    %v5418 = vsub.f32 %v5402, %v5410
    %v5419 = vsub.f32 %v5403, %v5411
    %v5420 = vmul.f32 %v1235, %v5388
    %v5421 = vmul.f32 %v1241, %v5389
    %v5422 = vmul.f32 %v1247, %v5390
    %v5423 = vmul.f32 %v1253, %v5391
    %v5424 = vmul.f32 %v1259, %v5392
    %v5425 = vmul.f32 %v1265, %v5393
    %v5426 = vmul.f32 %v1271, %v5394
    %v5427 = vmul.f32 %v1277, %v5395
    %v5428 = vmul.f32 %v1237, %v5379
    %v5429 = vmul.f32 %v1243, %v5380
    %v5430 = vmul.f32 %v1249, %v5381
    %v5431 = vmul.f32 %v1255, %v5382
    %v5432 = vmul.f32 %v1261, %v5383
    %v5433 = vmul.f32 %v1267, %v5384
    %v5434 = vmul.f32 %v1273, %v5385
    %v5435 = vmul.f32 %v1279, %v5386
    %v5436 = vadd.f32 %v5420, %v5428
    %v5437 = vadd.f32 %v5421, %v5429
    %v5438 = vadd.f32 %v5422, %v5430
    %v5439 = vadd.f32 %v5423, %v5431
    %v5440 = vadd.f32 %v5424, %v5432
    %v5441 = vadd.f32 %v5425, %v5433
    %v5442 = vadd.f32 %v5426, %v5434
    %v5443 = vadd.f32 %v5427, %v5435
    %v5444 = vadd.f32 %v5412, %v5436
    %v5445 = vadd.f32 %v5413, %v5437
    %v5446 = vadd.f32 %v5414, %v5438
    %v5447 = vadd.f32 %v5415, %v5439
    %v5448 = vadd.f32 %v5416, %v5440
    %v5449 = vadd.f32 %v5417, %v5441
    %v5450 = vadd.f32 %v5418, %v5442
    %v5451 = vadd.f32 %v5419, %v5443
    %5452 = vmatprep.subr.mxu0 0.0
    %5453 = vmatpush1.msra.mxu0 0.0
    %5454 = vmatprep.subr.mxu0 0.0
    %5455 = vmatpush1.msra.mxu0 0.0
    %5456 = vmatprep.subr.mxu0 0.0
    %5457 = vmatpush1.msra.mxu0 0.0
    %5458 = vmatprep.subr.mxu0 0.0
    %5459 = vmatpush1.msra.mxu0 0.0
    %5460 = vmatprep.subr.mxu0 0.0
    %5461 = vmatpush1.msra.mxu0 0.0
    %5462 = vmatprep.subr.mxu0 0.0
    %5463 = vmatpush1.msra.mxu0 0.0
    %5464 = vmatprep.subr.mxu0 0.0
    %5465 = vmatpush1.msra.mxu0 0.0
    %5466 = vmatprep.subr.mxu0 0.0
    %5467 = vmatpush1.msra.mxu0 0.0
    %5468 = vmatprep.subr.mxu0 0.0
    %5469 = vmatpush1.msra.mxu0 %v5451
    %5470 = vmatprep.subr.mxu0 0.0
    %5471 = vmatpush1.msra.mxu0 %v5450
    %5472 = vmatprep.subr.mxu0 0.0
    %5473 = vmatpush1.msra.mxu0 %v5449
    %5474 = vmatprep.subr.mxu0 0.0
    %5475 = vmatpush1.msra.mxu0 %v5448
    %5476 = vmatprep.subr.mxu0 0.0
    %5477 = vmatpush1.msra.mxu0 %v5447
    %5478 = vmatprep.subr.mxu0 0.0
    %5479 = vmatpush1.msra.mxu0 %v5446
    %5480 = vmatprep.subr.mxu0 0.0
    %5481 = vmatpush1.msra.mxu0 %v5445
    %5482 = vmatprep.subr.mxu0 0.0
    %5483 = vmatpush1.msra.mxu0 %v5444
    %5484 = vmatprep.subr.mxu0 0.0
    %5485 = vmatpush2.msra.mxu0 0.0
    %5486 = vmatprep.subr.mxu0 0.0
    %5487 = vmatpush2.msra.mxu0 0.0
    %5488 = vmatprep.subr.mxu0 0.0
    %5489 = vmatpush2.msra.mxu0 0.0
    %5490 = vmatprep.subr.mxu0 0.0
    %5491 = vmatpush2.msra.mxu0 0.0
    %5492 = vmatprep.subr.mxu0 0.0
    %5493 = vmatpush2.msra.mxu0 0.0
    %5494 = vmatprep.subr.mxu0 0.0
    %5495 = vmatpush2.msra.mxu0 0.0
    %5496 = vmatprep.subr.mxu0 0.0
    %5497 = vmatpush2.msra.mxu0 0.0
    %5498 = vmatprep.subr.mxu0 0.0
    %5499 = vmatpush2.msra.mxu0 0.0
    %5500 = vmatprep.subr.mxu0 0.0
    %5501 = vmatpush2.msra.mxu0 0.0
    %5502 = vmatprep.subr.mxu0 0.0
    %5503 = vmatpush2.msra.mxu0 0.0
    %5504 = vmatprep.subr.mxu0 0.0
    %5505 = vmatpush2.msra.mxu0 0.0
    %5506 = vmatprep.subr.mxu0 0.0
    %5507 = vmatpush2.msra.mxu0 0.0
    %5508 = vmatprep.subr.mxu0 0.0
    %5509 = vmatpush2.msra.mxu0 0.0
    %5510 = vmatprep.subr.mxu0 0.0
    %5511 = vmatpush2.msra.mxu0 0.0
    %5512 = vmatprep.subr.mxu0 0.0
    %5513 = vmatpush2.msra.mxu0 0.0
    %5514 = vmatprep.subr.mxu0 0.0
    %5515 = vmatpush2.msra.mxu0 0.0
    %5516 = vmatprep.mubr.f32.mxu0 0.0
    %5517 = vmatmul.mubr.f32.gmra.mxu0 %v314
    %v5518 = vpop.f32.mrf.mxu0
    %v5519 = vadd.f32 0.0, %v5518
    %v5520 = vpop.f32.mrf.mxu0
    %5521 = vmatprep.mubr.f32.mxu0 0.0
    %5522 = vmatmul.mubr.f32.gmra.mxu0 %v317
    %v5523 = vpop.f32.mrf.mxu0
    %v5524 = vadd.f32 0.0, %v5523
    %v5525 = vpop.f32.mrf.mxu0
    %5526 = vmatprep.mubr.f32.mxu0 0.0
    %5527 = vmatmul.mubr.f32.gmra.mxu0 %v320
    %v5528 = vpop.f32.mrf.mxu0
    %v5529 = vadd.f32 0.0, %v5528
    %v5530 = vpop.f32.mrf.mxu0
    %5531 = vmatprep.mubr.f32.mxu0 0.0
    %5532 = vmatmul.mubr.f32.gmra.mxu0 %v323
    %v5533 = vpop.f32.mrf.mxu0
    %v5534 = vadd.f32 0.0, %v5533
    %v5535 = vpop.f32.mrf.mxu0
    %5536 = vmatprep.mubr.f32.mxu0 0.0
    %5537 = vmatmul.mubr.f32.gmra.mxu0 %v326
    %v5538 = vpop.f32.mrf.mxu0
    %v5539 = vadd.f32 0.0, %v5538
    %v5540 = vpop.f32.mrf.mxu0
    %5541 = vmatprep.mubr.f32.mxu0 0.0
    %5542 = vmatmul.mubr.f32.gmra.mxu0 %v329
    %v5543 = vpop.f32.mrf.mxu0
    %v5544 = vadd.f32 0.0, %v5543
    %v5545 = vpop.f32.mrf.mxu0
    %5546 = vmatprep.mubr.f32.mxu0 0.0
    %5547 = vmatmul.mubr.f32.gmra.mxu0 %v332
    %v5548 = vpop.f32.mrf.mxu0
    %v5549 = vadd.f32 0.0, %v5548
    %v5550 = vpop.f32.mrf.mxu0
    %5551 = vmatprep.mubr.f32.mxu0 0.0
    %5552 = vmatmul.mubr.f32.gmra.mxu0 %v335
    %v5553 = vpop.f32.mrf.mxu0
    %v5554 = vadd.f32 0.0, %v5553
    %v5555 = vpop.f32.mrf.mxu0
    %5556 = vdwg.mxu0
    %5557 = vmatprep.subr.mxu0 0.0
    %5558 = vmatpush1.msra.mxu0 0.0
    %5559 = vmatprep.subr.mxu0 0.0
    %5560 = vmatpush1.msra.mxu0 0.0
    %5561 = vmatprep.subr.mxu0 0.0
    %5562 = vmatpush1.msra.mxu0 0.0
    %5563 = vmatprep.subr.mxu0 0.0
    %5564 = vmatpush1.msra.mxu0 0.0
    %5565 = vmatprep.subr.mxu0 0.0
    %5566 = vmatpush1.msra.mxu0 0.0
    %5567 = vmatprep.subr.mxu0 0.0
    %5568 = vmatpush1.msra.mxu0 0.0
    %5569 = vmatprep.subr.mxu0 0.0
    %5570 = vmatpush1.msra.mxu0 0.0
    %5571 = vmatprep.subr.mxu0 0.0
    %5572 = vmatpush1.msra.mxu0 0.0
    %5573 = vmatprep.subr.mxu0 0.0
    %5574 = vmatpush1.msra.mxu0 %v5443
    %5575 = vmatprep.subr.mxu0 0.0
    %5576 = vmatpush1.msra.mxu0 %v5442
    %5577 = vmatprep.subr.mxu0 0.0
    %5578 = vmatpush1.msra.mxu0 %v5441
    %5579 = vmatprep.subr.mxu0 0.0
    %5580 = vmatpush1.msra.mxu0 %v5440
    %5581 = vmatprep.subr.mxu0 0.0
    %5582 = vmatpush1.msra.mxu0 %v5439
    %5583 = vmatprep.subr.mxu0 0.0
    %5584 = vmatpush1.msra.mxu0 %v5438
    %5585 = vmatprep.subr.mxu0 0.0
    %5586 = vmatpush1.msra.mxu0 %v5437
    %5587 = vmatprep.subr.mxu0 0.0
    %5588 = vmatpush1.msra.mxu0 %v5436
    %5589 = vmatprep.subr.mxu0 0.0
    %5590 = vmatpush2.msra.mxu0 0.0
    %5591 = vmatprep.subr.mxu0 0.0
    %5592 = vmatpush2.msra.mxu0 0.0
    %5593 = vmatprep.subr.mxu0 0.0
    %5594 = vmatpush2.msra.mxu0 0.0
    %5595 = vmatprep.subr.mxu0 0.0
    %5596 = vmatpush2.msra.mxu0 0.0
    %5597 = vmatprep.subr.mxu0 0.0
    %5598 = vmatpush2.msra.mxu0 0.0
    %5599 = vmatprep.subr.mxu0 0.0
    %5600 = vmatpush2.msra.mxu0 0.0
    %5601 = vmatprep.subr.mxu0 0.0
    %5602 = vmatpush2.msra.mxu0 0.0
    %5603 = vmatprep.subr.mxu0 0.0
    %5604 = vmatpush2.msra.mxu0 0.0
    %5605 = vmatprep.subr.mxu0 0.0
    %5606 = vmatpush2.msra.mxu0 0.0
    %5607 = vmatprep.subr.mxu0 0.0
    %5608 = vmatpush2.msra.mxu0 0.0
    %5609 = vmatprep.subr.mxu0 0.0
    %5610 = vmatpush2.msra.mxu0 0.0
    %5611 = vmatprep.subr.mxu0 0.0
    %5612 = vmatpush2.msra.mxu0 0.0
    %5613 = vmatprep.subr.mxu0 0.0
    %5614 = vmatpush2.msra.mxu0 0.0
    %5615 = vmatprep.subr.mxu0 0.0
    %5616 = vmatpush2.msra.mxu0 0.0
    %5617 = vmatprep.subr.mxu0 0.0
    %5618 = vmatpush2.msra.mxu0 0.0
    %5619 = vmatprep.subr.mxu0 0.0
    %5620 = vmatpush2.msra.mxu0 0.0
    %5621 = vmatprep.mubr.f32.mxu0 0.0
    %5622 = vmatmul.mubr.f32.gmra.mxu0 %v1478
    %v5623 = vpop.f32.mrf.mxu0
    %v5624 = vadd.f32 0.0, %v5623
    %v5625 = vpop.f32.mrf.mxu0
    %5626 = vmatprep.mubr.f32.mxu0 0.0
    %5627 = vmatmul.mubr.f32.gmra.mxu0 %v1481
    %v5628 = vpop.f32.mrf.mxu0
    %v5629 = vadd.f32 0.0, %v5628
    %v5630 = vpop.f32.mrf.mxu0
    %5631 = vmatprep.mubr.f32.mxu0 0.0
    %5632 = vmatmul.mubr.f32.gmra.mxu0 %v1484
    %v5633 = vpop.f32.mrf.mxu0
    %v5634 = vadd.f32 0.0, %v5633
    %v5635 = vpop.f32.mrf.mxu0
    %5636 = vmatprep.mubr.f32.mxu0 0.0
    %5637 = vmatmul.mubr.f32.gmra.mxu0 %v1487
    %v5638 = vpop.f32.mrf.mxu0
    %v5639 = vadd.f32 0.0, %v5638
    %v5640 = vpop.f32.mrf.mxu0
    %5641 = vmatprep.mubr.f32.mxu0 0.0
    %5642 = vmatmul.mubr.f32.gmra.mxu0 %v1490
    %v5643 = vpop.f32.mrf.mxu0
    %v5644 = vadd.f32 0.0, %v5643
    %v5645 = vpop.f32.mrf.mxu0
    %5646 = vmatprep.mubr.f32.mxu0 0.0
    %5647 = vmatmul.mubr.f32.gmra.mxu0 %v1493
    %v5648 = vpop.f32.mrf.mxu0
    %v5649 = vadd.f32 0.0, %v5648
    %v5650 = vpop.f32.mrf.mxu0
    %5651 = vmatprep.mubr.f32.mxu0 0.0
    %5652 = vmatmul.mubr.f32.gmra.mxu0 %v1496
    %v5653 = vpop.f32.mrf.mxu0
    %v5654 = vadd.f32 0.0, %v5653
    %v5655 = vpop.f32.mrf.mxu0
    %5656 = vmatprep.mubr.f32.mxu0 0.0
    %5657 = vmatmul.mubr.f32.gmra.mxu0 %v1499
    %v5658 = vpop.f32.mrf.mxu0
    %v5659 = vadd.f32 0.0, %v5658
    %v5660 = vpop.f32.mrf.mxu0
    %5661 = vdwg.mxu0
    %v5662 = vsub.f32 %v5519, %v5624
    %v5663 = vsub.f32 %v5524, %v5629
    %v5664 = vsub.f32 %v5529, %v5634
    %v5665 = vsub.f32 %v5534, %v5639
    %v5666 = vsub.f32 %v5539, %v5644
    %v5667 = vsub.f32 %v5544, %v5649
    %v5668 = vsub.f32 %v5549, %v5654
    %v5669 = vsub.f32 %v5554, %v5659
    %5670 = vmatprep.subr.mxu0 0.0
    %5671 = vmatpush1.msra.mxu0 0.0
    %5672 = vmatprep.subr.mxu0 0.0
    %5673 = vmatpush1.msra.mxu0 0.0
    %5674 = vmatprep.subr.mxu0 0.0
    %5675 = vmatpush1.msra.mxu0 0.0
    %5676 = vmatprep.subr.mxu0 0.0
    %5677 = vmatpush1.msra.mxu0 0.0
    %5678 = vmatprep.subr.mxu0 0.0
    %5679 = vmatpush1.msra.mxu0 0.0
    %5680 = vmatprep.subr.mxu0 0.0
    %5681 = vmatpush1.msra.mxu0 0.0
    %5682 = vmatprep.subr.mxu0 0.0
    %5683 = vmatpush1.msra.mxu0 0.0
    %5684 = vmatprep.subr.mxu0 0.0
    %5685 = vmatpush1.msra.mxu0 0.0
    %5686 = vmatprep.subr.mxu0 0.0
    %5687 = vmatpush1.msra.mxu0 %v5419
    %5688 = vmatprep.subr.mxu0 0.0
    %5689 = vmatpush1.msra.mxu0 %v5418
    %5690 = vmatprep.subr.mxu0 0.0
    %5691 = vmatpush1.msra.mxu0 %v5417
    %5692 = vmatprep.subr.mxu0 0.0
    %5693 = vmatpush1.msra.mxu0 %v5416
    %5694 = vmatprep.subr.mxu0 0.0
    %5695 = vmatpush1.msra.mxu0 %v5415
    %5696 = vmatprep.subr.mxu0 0.0
    %5697 = vmatpush1.msra.mxu0 %v5414
    %5698 = vmatprep.subr.mxu0 0.0
    %5699 = vmatpush1.msra.mxu0 %v5413
    %5700 = vmatprep.subr.mxu0 0.0
    %5701 = vmatpush1.msra.mxu0 %v5412
    %5702 = vmatprep.subr.mxu0 0.0
    %5703 = vmatpush2.msra.mxu0 0.0
    %5704 = vmatprep.subr.mxu0 0.0
    %5705 = vmatpush2.msra.mxu0 0.0
    %5706 = vmatprep.subr.mxu0 0.0
    %5707 = vmatpush2.msra.mxu0 0.0
    %5708 = vmatprep.subr.mxu0 0.0
    %5709 = vmatpush2.msra.mxu0 0.0
    %5710 = vmatprep.subr.mxu0 0.0
    %5711 = vmatpush2.msra.mxu0 0.0
    %5712 = vmatprep.subr.mxu0 0.0
    %5713 = vmatpush2.msra.mxu0 0.0
    %5714 = vmatprep.subr.mxu0 0.0
    %5715 = vmatpush2.msra.mxu0 0.0
    %5716 = vmatprep.subr.mxu0 0.0
    %5717 = vmatpush2.msra.mxu0 0.0
    %5718 = vmatprep.subr.mxu0 0.0
    %5719 = vmatpush2.msra.mxu0 0.0
    %5720 = vmatprep.subr.mxu0 0.0
    %5721 = vmatpush2.msra.mxu0 0.0
    %5722 = vmatprep.subr.mxu0 0.0
    %5723 = vmatpush2.msra.mxu0 0.0
    %5724 = vmatprep.subr.mxu0 0.0
    %5725 = vmatpush2.msra.mxu0 0.0
    %5726 = vmatprep.subr.mxu0 0.0
    %5727 = vmatpush2.msra.mxu0 0.0
    %5728 = vmatprep.subr.mxu0 0.0
    %5729 = vmatpush2.msra.mxu0 0.0
    %5730 = vmatprep.subr.mxu0 0.0
    %5731 = vmatpush2.msra.mxu0 0.0
    %5732 = vmatprep.subr.mxu0 0.0
    %5733 = vmatpush2.msra.mxu0 0.0
    %5734 = vmatprep.mubr.f32.mxu0 0.0
    %5735 = vmatmul.mubr.f32.gmra.mxu0 %v443
    %v5736 = vpop.f32.mrf.mxu0
    %v5737 = vadd.f32 0.0, %v5736
    %v5738 = vpop.f32.mrf.mxu0
    %5739 = vmatprep.mubr.f32.mxu0 0.0
    %5740 = vmatmul.mubr.f32.gmra.mxu0 %v446
    %v5741 = vpop.f32.mrf.mxu0
    %v5742 = vadd.f32 0.0, %v5741
    %v5743 = vpop.f32.mrf.mxu0
    %5744 = vmatprep.mubr.f32.mxu0 0.0
    %5745 = vmatmul.mubr.f32.gmra.mxu0 %v449
    %v5746 = vpop.f32.mrf.mxu0
    %v5747 = vadd.f32 0.0, %v5746
    %v5748 = vpop.f32.mrf.mxu0
    %5749 = vmatprep.mubr.f32.mxu0 0.0
    %5750 = vmatmul.mubr.f32.gmra.mxu0 %v452
    %v5751 = vpop.f32.mrf.mxu0
    %v5752 = vadd.f32 0.0, %v5751
    %v5753 = vpop.f32.mrf.mxu0
    %5754 = vmatprep.mubr.f32.mxu0 0.0
    %5755 = vmatmul.mubr.f32.gmra.mxu0 %v455
    %v5756 = vpop.f32.mrf.mxu0
    %v5757 = vadd.f32 0.0, %v5756
    %v5758 = vpop.f32.mrf.mxu0
    %5759 = vmatprep.mubr.f32.mxu0 0.0
    %5760 = vmatmul.mubr.f32.gmra.mxu0 %v458
    %v5761 = vpop.f32.mrf.mxu0
    %v5762 = vadd.f32 0.0, %v5761
    %v5763 = vpop.f32.mrf.mxu0
    %5764 = vmatprep.mubr.f32.mxu0 0.0
    %5765 = vmatmul.mubr.f32.gmra.mxu0 %v461
    %v5766 = vpop.f32.mrf.mxu0
    %v5767 = vadd.f32 0.0, %v5766
    %v5768 = vpop.f32.mrf.mxu0
    %5769 = vmatprep.mubr.f32.mxu0 0.0
    %5770 = vmatmul.mubr.f32.gmra.mxu0 %v464
    %v5771 = vpop.f32.mrf.mxu0
    %v5772 = vadd.f32 0.0, %v5771
    %v5773 = vpop.f32.mrf.mxu0
    %5774 = vdwg.mxu0
    %v5775 = vadd.f32 %v5519, %v5737
    %v5776 = vadd.f32 %v5524, %v5742
    %v5777 = vadd.f32 %v5529, %v5747
    %v5778 = vadd.f32 %v5534, %v5752
    %v5779 = vadd.f32 %v5539, %v5757
    %v5780 = vadd.f32 %v5544, %v5762
    %v5781 = vadd.f32 %v5549, %v5767
    %v5782 = vadd.f32 %v5554, %v5772
    %5783 = vmatprep.subr.mxu0 %v206
    %5784 = vmatpush1.msra.mxu0 %v205
    %5785 = vmatprep.subr.mxu0 %v204
    %5786 = vmatpush1.msra.mxu0 %v203
    %5787 = vmatprep.subr.mxu0 %v202
    %5788 = vmatpush1.msra.mxu0 %v201
    %5789 = vmatprep.subr.mxu0 %v200
    %5790 = vmatpush1.msra.mxu0 %v199
    %5791 = vmatprep.subr.mxu0 %v198
    %5792 = vmatpush1.msra.mxu0 %v197
    %5793 = vmatprep.subr.mxu0 %v196
    %5794 = vmatpush1.msra.mxu0 %v195
    %5795 = vmatprep.subr.mxu0 %v194
    %5796 = vmatpush1.msra.mxu0 %v193
    %5797 = vmatprep.subr.mxu0 %v192
    %5798 = vmatpush1.msra.mxu0 %v191
    %5799 = vmatprep.subr.mxu0 %v190
    %5800 = vmatpush1.msra.mxu0 %v189
    %5801 = vmatprep.subr.mxu0 %v188
    %5802 = vmatpush1.msra.mxu0 %v187
    %5803 = vmatprep.subr.mxu0 %v186
    %5804 = vmatpush1.msra.mxu0 %v185
    %5805 = vmatprep.subr.mxu0 %v184
    %5806 = vmatpush1.msra.mxu0 %v183
    %5807 = vmatprep.subr.mxu0 %v182
    %5808 = vmatpush1.msra.mxu0 %v181
    %5809 = vmatprep.subr.mxu0 %v180
    %5810 = vmatpush1.msra.mxu0 %v179
    %5811 = vmatprep.subr.mxu0 %v178
    %5812 = vmatpush1.msra.mxu0 %v177
    %5813 = vmatprep.subr.mxu0 %v176
    %5814 = vmatpush1.msra.mxu0 %v175
    %5815 = vmatprep.subr.mxu0 %v238
    %5816 = vmatpush2.msra.mxu0 %v237
    %5817 = vmatprep.subr.mxu0 %v236
    %5818 = vmatpush2.msra.mxu0 %v235
    %5819 = vmatprep.subr.mxu0 %v234
    %5820 = vmatpush2.msra.mxu0 %v233
    %5821 = vmatprep.subr.mxu0 %v232
    %5822 = vmatpush2.msra.mxu0 %v231
    %5823 = vmatprep.subr.mxu0 %v230
    %5824 = vmatpush2.msra.mxu0 %v229
    %5825 = vmatprep.subr.mxu0 %v228
    %5826 = vmatpush2.msra.mxu0 %v227
    %5827 = vmatprep.subr.mxu0 %v226
    %5828 = vmatpush2.msra.mxu0 %v225
    %5829 = vmatprep.subr.mxu0 %v224
    %5830 = vmatpush2.msra.mxu0 %v223
    %5831 = vmatprep.subr.mxu0 %v222
    %5832 = vmatpush2.msra.mxu0 %v221
    %5833 = vmatprep.subr.mxu0 %v220
    %5834 = vmatpush2.msra.mxu0 %v219
    %5835 = vmatprep.subr.mxu0 %v218
    %5836 = vmatpush2.msra.mxu0 %v217
    %5837 = vmatprep.subr.mxu0 %v216
    %5838 = vmatpush2.msra.mxu0 %v215
    %5839 = vmatprep.subr.mxu0 %v214
    %5840 = vmatpush2.msra.mxu0 %v213
    %5841 = vmatprep.subr.mxu0 %v212
    %5842 = vmatpush2.msra.mxu0 %v211
    %5843 = vmatprep.subr.mxu0 %v210
    %5844 = vmatpush2.msra.mxu0 %v209
    %5845 = vmatprep.subr.mxu0 %v208
    %5846 = vmatpush2.msra.mxu0 %v207
    %5847 = vmatprep.mubr.f32.mxu0 %v5775
    %5848 = vmatmul.mubr.f32.gmra.mxu0 %v5662
    %v5849 = vpop.f32.mrf.mxu0
    %v5850 = vadd.f32 0.0, %v5849
    %v5851 = vpop.f32.mrf.mxu0
    %v5852 = vadd.f32 0.0, %v5851
    %5853 = vmatprep.mubr.f32.mxu0 %v5776
    %5854 = vmatmul.mubr.f32.gmra.mxu0 %v5663
    %v5855 = vpop.f32.mrf.mxu0
    %v5856 = vadd.f32 0.0, %v5855
    %v5857 = vpop.f32.mrf.mxu0
    %v5858 = vadd.f32 0.0, %v5857
    %5859 = vmatprep.mubr.f32.mxu0 %v5777
    %5860 = vmatmul.mubr.f32.gmra.mxu0 %v5664
    %v5861 = vpop.f32.mrf.mxu0
    %v5862 = vadd.f32 0.0, %v5861
    %v5863 = vpop.f32.mrf.mxu0
    %v5864 = vadd.f32 0.0, %v5863
    %5865 = vmatprep.mubr.f32.mxu0 %v5778
    %5866 = vmatmul.mubr.f32.gmra.mxu0 %v5665
    %v5867 = vpop.f32.mrf.mxu0
    %v5868 = vadd.f32 0.0, %v5867
    %v5869 = vpop.f32.mrf.mxu0
    %v5870 = vadd.f32 0.0, %v5869
    %5871 = vmatprep.mubr.f32.mxu0 %v5779
    %5872 = vmatmul.mubr.f32.gmra.mxu0 %v5666
    %v5873 = vpop.f32.mrf.mxu0
    %v5874 = vadd.f32 0.0, %v5873
    %v5875 = vpop.f32.mrf.mxu0
    %v5876 = vadd.f32 0.0, %v5875
    %5877 = vmatprep.mubr.f32.mxu0 %v5780
    %5878 = vmatmul.mubr.f32.gmra.mxu0 %v5667
    %v5879 = vpop.f32.mrf.mxu0
    %v5880 = vadd.f32 0.0, %v5879
    %v5881 = vpop.f32.mrf.mxu0
    %v5882 = vadd.f32 0.0, %v5881
    %5883 = vmatprep.mubr.f32.mxu0 %v5781
    %5884 = vmatmul.mubr.f32.gmra.mxu0 %v5668
    %v5885 = vpop.f32.mrf.mxu0
    %v5886 = vadd.f32 0.0, %v5885
    %v5887 = vpop.f32.mrf.mxu0
    %v5888 = vadd.f32 0.0, %v5887
    %5889 = vmatprep.mubr.f32.mxu0 %v5782
    %5890 = vmatmul.mubr.f32.gmra.mxu0 %v5669
    %v5891 = vpop.f32.mrf.mxu0
    %v5892 = vadd.f32 0.0, %v5891
    %v5893 = vpop.f32.mrf.mxu0
    %v5894 = vadd.f32 0.0, %v5893
    %5895 = vdwg.mxu0
    %v5896 = vmul.f32 %v5850, %v1282
    %v5897 = vmul.f32 %v5856, %v1283
    %v5898 = vmul.f32 %v5862, %v1284
    %v5899 = vmul.f32 %v5868, %v1285
    %v5900 = vmul.f32 %v5874, %v1286
    %v5901 = vmul.f32 %v5880, %v1287
    %v5902 = vmul.f32 %v5886, %v1288
    %v5903 = vmul.f32 %v5892, %v1289
    %v5904 = vmul.f32 %v5852, %v1291
    %v5905 = vmul.f32 %v5858, %v1292
    %v5906 = vmul.f32 %v5864, %v1293
    %v5907 = vmul.f32 %v5870, %v1294
    %v5908 = vmul.f32 %v5876, %v1295
    %v5909 = vmul.f32 %v5882, %v1296
    %v5910 = vmul.f32 %v5888, %v1297
    %v5911 = vmul.f32 %v5894, %v1298
    %v5912 = vsub.f32 %v5896, %v5904
    %v5913 = vsub.f32 %v5897, %v5905
    %v5914 = vsub.f32 %v5898, %v5906
    %v5915 = vsub.f32 %v5899, %v5907
    %v5916 = vsub.f32 %v5900, %v5908
    %v5917 = vsub.f32 %v5901, %v5909
    %v5918 = vsub.f32 %v5902, %v5910
    %v5919 = vsub.f32 %v5903, %v5911
    %v5920 = vmul.f32 %v5850, %v1291
    %v5921 = vmul.f32 %v5856, %v1292
    %v5922 = vmul.f32 %v5862, %v1293
    %v5923 = vmul.f32 %v5868, %v1294
    %v5924 = vmul.f32 %v5874, %v1295
    %v5925 = vmul.f32 %v5880, %v1296
    %v5926 = vmul.f32 %v5886, %v1297
    %v5927 = vmul.f32 %v5892, %v1298
    %v5928 = vmul.f32 %v5852, %v1282
    %v5929 = vmul.f32 %v5858, %v1283
    %v5930 = vmul.f32 %v5864, %v1284
    %v5931 = vmul.f32 %v5870, %v1285
    %v5932 = vmul.f32 %v5876, %v1286
    %v5933 = vmul.f32 %v5882, %v1287
    %v5934 = vmul.f32 %v5888, %v1288
    %v5935 = vmul.f32 %v5894, %v1289
    %v5936 = vadd.f32 %v5920, %v5928
    %v5937 = vadd.f32 %v5921, %v5929
    %v5938 = vadd.f32 %v5922, %v5930
    %v5939 = vadd.f32 %v5923, %v5931
    %v5940 = vadd.f32 %v5924, %v5932
    %v5941 = vadd.f32 %v5925, %v5933
    %v5942 = vadd.f32 %v5926, %v5934
    %v5943 = vadd.f32 %v5927, %v5935
    %v5944 = vadd.f32 %v5912, %v5936
    %v5945 = vadd.f32 %v5913, %v5937
    %v5946 = vadd.f32 %v5914, %v5938
    %v5947 = vadd.f32 %v5915, %v5939
    %v5948 = vadd.f32 %v5916, %v5940
    %v5949 = vadd.f32 %v5917, %v5941
    %v5950 = vadd.f32 %v5918, %v5942
    %v5951 = vadd.f32 %v5919, %v5943
    %5952 = vmatprep.subr.mxu0 0.0
    %5953 = vmatpush1.msra.mxu0 0.0
    %5954 = vmatprep.subr.mxu0 0.0
    %5955 = vmatpush1.msra.mxu0 0.0
    %5956 = vmatprep.subr.mxu0 0.0
    %5957 = vmatpush1.msra.mxu0 0.0
    %5958 = vmatprep.subr.mxu0 0.0
    %5959 = vmatpush1.msra.mxu0 0.0
    %5960 = vmatprep.subr.mxu0 0.0
    %5961 = vmatpush1.msra.mxu0 0.0
    %5962 = vmatprep.subr.mxu0 0.0
    %5963 = vmatpush1.msra.mxu0 0.0
    %5964 = vmatprep.subr.mxu0 0.0
    %5965 = vmatpush1.msra.mxu0 0.0
    %5966 = vmatprep.subr.mxu0 0.0
    %5967 = vmatpush1.msra.mxu0 0.0
    %5968 = vmatprep.subr.mxu0 0.0
    %5969 = vmatpush1.msra.mxu0 %v5951
    %5970 = vmatprep.subr.mxu0 0.0
    %5971 = vmatpush1.msra.mxu0 %v5950
    %5972 = vmatprep.subr.mxu0 0.0
    %5973 = vmatpush1.msra.mxu0 %v5949
    %5974 = vmatprep.subr.mxu0 0.0
    %5975 = vmatpush1.msra.mxu0 %v5948
    %5976 = vmatprep.subr.mxu0 0.0
    %5977 = vmatpush1.msra.mxu0 %v5947
    %5978 = vmatprep.subr.mxu0 0.0
    %5979 = vmatpush1.msra.mxu0 %v5946
    %5980 = vmatprep.subr.mxu0 0.0
    %5981 = vmatpush1.msra.mxu0 %v5945
    %5982 = vmatprep.subr.mxu0 0.0
    %5983 = vmatpush1.msra.mxu0 %v5944
    %5984 = vmatprep.subr.mxu0 0.0
    %5985 = vmatpush2.msra.mxu0 0.0
    %5986 = vmatprep.subr.mxu0 0.0
    %5987 = vmatpush2.msra.mxu0 0.0
    %5988 = vmatprep.subr.mxu0 0.0
    %5989 = vmatpush2.msra.mxu0 0.0
    %5990 = vmatprep.subr.mxu0 0.0
    %5991 = vmatpush2.msra.mxu0 0.0
    %5992 = vmatprep.subr.mxu0 0.0
    %5993 = vmatpush2.msra.mxu0 0.0
    %5994 = vmatprep.subr.mxu0 0.0
    %5995 = vmatpush2.msra.mxu0 0.0
    %5996 = vmatprep.subr.mxu0 0.0
    %5997 = vmatpush2.msra.mxu0 0.0
    %5998 = vmatprep.subr.mxu0 0.0
    %5999 = vmatpush2.msra.mxu0 0.0
    %6000 = vmatprep.subr.mxu0 0.0
    %6001 = vmatpush2.msra.mxu0 0.0
    %6002 = vmatprep.subr.mxu0 0.0
    %6003 = vmatpush2.msra.mxu0 0.0
    %6004 = vmatprep.subr.mxu0 0.0
    %6005 = vmatpush2.msra.mxu0 0.0
    %6006 = vmatprep.subr.mxu0 0.0
    %6007 = vmatpush2.msra.mxu0 0.0
    %6008 = vmatprep.subr.mxu0 0.0
    %6009 = vmatpush2.msra.mxu0 0.0
    %6010 = vmatprep.subr.mxu0 0.0
    %6011 = vmatpush2.msra.mxu0 0.0
    %6012 = vmatprep.subr.mxu0 0.0
    %6013 = vmatpush2.msra.mxu0 0.0
    %6014 = vmatprep.subr.mxu0 0.0
    %6015 = vmatpush2.msra.mxu0 0.0
    %6016 = vmatprep.mubr.f32.mxu0 0.0
    %6017 = vmatmul.mubr.f32.gmra.mxu0 %v766
    %v6018 = vpop.f32.mrf.mxu0
    %v6019 = vadd.f32 0.0, %v6018
    %v6020 = vpop.f32.mrf.mxu0
    %6021 = vmatprep.mubr.f32.mxu0 0.0
    %6022 = vmatmul.mubr.f32.gmra.mxu0 %v769
    %v6023 = vpop.f32.mrf.mxu0
    %v6024 = vadd.f32 0.0, %v6023
    %v6025 = vpop.f32.mrf.mxu0
    %6026 = vmatprep.mubr.f32.mxu0 0.0
    %6027 = vmatmul.mubr.f32.gmra.mxu0 %v772
    %v6028 = vpop.f32.mrf.mxu0
    %v6029 = vadd.f32 0.0, %v6028
    %v6030 = vpop.f32.mrf.mxu0
    %6031 = vmatprep.mubr.f32.mxu0 0.0
    %6032 = vmatmul.mubr.f32.gmra.mxu0 %v775
    %v6033 = vpop.f32.mrf.mxu0
    %v6034 = vadd.f32 0.0, %v6033
    %v6035 = vpop.f32.mrf.mxu0
    %6036 = vmatprep.mubr.f32.mxu0 0.0
    %6037 = vmatmul.mubr.f32.gmra.mxu0 %v778
    %v6038 = vpop.f32.mrf.mxu0
    %v6039 = vadd.f32 0.0, %v6038
    %v6040 = vpop.f32.mrf.mxu0
    %6041 = vmatprep.mubr.f32.mxu0 0.0
    %6042 = vmatmul.mubr.f32.gmra.mxu0 %v781
    %v6043 = vpop.f32.mrf.mxu0
    %v6044 = vadd.f32 0.0, %v6043
    %v6045 = vpop.f32.mrf.mxu0
    %6046 = vmatprep.mubr.f32.mxu0 0.0
    %6047 = vmatmul.mubr.f32.gmra.mxu0 %v784
    %v6048 = vpop.f32.mrf.mxu0
    %v6049 = vadd.f32 0.0, %v6048
    %v6050 = vpop.f32.mrf.mxu0
    %6051 = vmatprep.mubr.f32.mxu0 0.0
    %6052 = vmatmul.mubr.f32.gmra.mxu0 %v787
    %v6053 = vpop.f32.mrf.mxu0
    %v6054 = vadd.f32 0.0, %v6053
    %v6055 = vpop.f32.mrf.mxu0
    %6056 = vdwg.mxu0
    %6057 = vmatprep.subr.mxu0 0.0
    %6058 = vmatpush1.msra.mxu0 0.0
    %6059 = vmatprep.subr.mxu0 0.0
    %6060 = vmatpush1.msra.mxu0 0.0
    %6061 = vmatprep.subr.mxu0 0.0
    %6062 = vmatpush1.msra.mxu0 0.0
    %6063 = vmatprep.subr.mxu0 0.0
    %6064 = vmatpush1.msra.mxu0 0.0
    %6065 = vmatprep.subr.mxu0 0.0
    %6066 = vmatpush1.msra.mxu0 0.0
    %6067 = vmatprep.subr.mxu0 0.0
    %6068 = vmatpush1.msra.mxu0 0.0
    %6069 = vmatprep.subr.mxu0 0.0
    %6070 = vmatpush1.msra.mxu0 0.0
    %6071 = vmatprep.subr.mxu0 0.0
    %6072 = vmatpush1.msra.mxu0 0.0
    %6073 = vmatprep.subr.mxu0 0.0
    %6074 = vmatpush1.msra.mxu0 %v5943
    %6075 = vmatprep.subr.mxu0 0.0
    %6076 = vmatpush1.msra.mxu0 %v5942
    %6077 = vmatprep.subr.mxu0 0.0
    %6078 = vmatpush1.msra.mxu0 %v5941
    %6079 = vmatprep.subr.mxu0 0.0
    %6080 = vmatpush1.msra.mxu0 %v5940
    %6081 = vmatprep.subr.mxu0 0.0
    %6082 = vmatpush1.msra.mxu0 %v5939
    %6083 = vmatprep.subr.mxu0 0.0
    %6084 = vmatpush1.msra.mxu0 %v5938
    %6085 = vmatprep.subr.mxu0 0.0
    %6086 = vmatpush1.msra.mxu0 %v5937
    %6087 = vmatprep.subr.mxu0 0.0
    %6088 = vmatpush1.msra.mxu0 %v5936
    %6089 = vmatprep.subr.mxu0 0.0
    %6090 = vmatpush2.msra.mxu0 0.0
    %6091 = vmatprep.subr.mxu0 0.0
    %6092 = vmatpush2.msra.mxu0 0.0
    %6093 = vmatprep.subr.mxu0 0.0
    %6094 = vmatpush2.msra.mxu0 0.0
    %6095 = vmatprep.subr.mxu0 0.0
    %6096 = vmatpush2.msra.mxu0 0.0
    %6097 = vmatprep.subr.mxu0 0.0
    %6098 = vmatpush2.msra.mxu0 0.0
    %6099 = vmatprep.subr.mxu0 0.0
    %6100 = vmatpush2.msra.mxu0 0.0
    %6101 = vmatprep.subr.mxu0 0.0
    %6102 = vmatpush2.msra.mxu0 0.0
    %6103 = vmatprep.subr.mxu0 0.0
    %6104 = vmatpush2.msra.mxu0 0.0
    %6105 = vmatprep.subr.mxu0 0.0
    %6106 = vmatpush2.msra.mxu0 0.0
    %6107 = vmatprep.subr.mxu0 0.0
    %6108 = vmatpush2.msra.mxu0 0.0
    %6109 = vmatprep.subr.mxu0 0.0
    %6110 = vmatpush2.msra.mxu0 0.0
    %6111 = vmatprep.subr.mxu0 0.0
    %6112 = vmatpush2.msra.mxu0 0.0
    %6113 = vmatprep.subr.mxu0 0.0
    %6114 = vmatpush2.msra.mxu0 0.0
    %6115 = vmatprep.subr.mxu0 0.0
    %6116 = vmatpush2.msra.mxu0 0.0
    %6117 = vmatprep.subr.mxu0 0.0
    %6118 = vmatpush2.msra.mxu0 0.0
    %6119 = vmatprep.subr.mxu0 0.0
    %6120 = vmatpush2.msra.mxu0 0.0
    %6121 = vmatprep.mubr.f32.mxu0 0.0
    %6122 = vmatmul.mubr.f32.gmra.mxu0 %v895
    %v6123 = vpop.f32.mrf.mxu0
    %v6124 = vadd.f32 0.0, %v6123
    %v6125 = vpop.f32.mrf.mxu0
    %6126 = vmatprep.mubr.f32.mxu0 0.0
    %6127 = vmatmul.mubr.f32.gmra.mxu0 %v898
    %v6128 = vpop.f32.mrf.mxu0
    %v6129 = vadd.f32 0.0, %v6128
    %v6130 = vpop.f32.mrf.mxu0
    %6131 = vmatprep.mubr.f32.mxu0 0.0
    %6132 = vmatmul.mubr.f32.gmra.mxu0 %v901
    %v6133 = vpop.f32.mrf.mxu0
    %v6134 = vadd.f32 0.0, %v6133
    %v6135 = vpop.f32.mrf.mxu0
    %6136 = vmatprep.mubr.f32.mxu0 0.0
    %6137 = vmatmul.mubr.f32.gmra.mxu0 %v904
    %v6138 = vpop.f32.mrf.mxu0
    %v6139 = vadd.f32 0.0, %v6138
    %v6140 = vpop.f32.mrf.mxu0
    %6141 = vmatprep.mubr.f32.mxu0 0.0
    %6142 = vmatmul.mubr.f32.gmra.mxu0 %v907
    %v6143 = vpop.f32.mrf.mxu0
    %v6144 = vadd.f32 0.0, %v6143
    %v6145 = vpop.f32.mrf.mxu0
    %6146 = vmatprep.mubr.f32.mxu0 0.0
    %6147 = vmatmul.mubr.f32.gmra.mxu0 %v910
    %v6148 = vpop.f32.mrf.mxu0
    %v6149 = vadd.f32 0.0, %v6148
    %v6150 = vpop.f32.mrf.mxu0
    %6151 = vmatprep.mubr.f32.mxu0 0.0
    %6152 = vmatmul.mubr.f32.gmra.mxu0 %v913
    %v6153 = vpop.f32.mrf.mxu0
    %v6154 = vadd.f32 0.0, %v6153
    %v6155 = vpop.f32.mrf.mxu0
    %6156 = vmatprep.mubr.f32.mxu0 0.0
    %6157 = vmatmul.mubr.f32.gmra.mxu0 %v916
    %v6158 = vpop.f32.mrf.mxu0
    %v6159 = vadd.f32 0.0, %v6158
    %v6160 = vpop.f32.mrf.mxu0
    %6161 = vdwg.mxu0
    %v6162 = vsub.f32 %v6019, %v6124
    %v6163 = vsub.f32 %v6024, %v6129
    %v6164 = vsub.f32 %v6029, %v6134
    %v6165 = vsub.f32 %v6034, %v6139
    %v6166 = vsub.f32 %v6039, %v6144
    %v6167 = vsub.f32 %v6044, %v6149
    %v6168 = vsub.f32 %v6049, %v6154
    %v6169 = vsub.f32 %v6054, %v6159
    %6170 = vmatprep.subr.mxu0 0.0
    %6171 = vmatpush1.msra.mxu0 0.0
    %6172 = vmatprep.subr.mxu0 0.0
    %6173 = vmatpush1.msra.mxu0 0.0
    %6174 = vmatprep.subr.mxu0 0.0
    %6175 = vmatpush1.msra.mxu0 0.0
    %6176 = vmatprep.subr.mxu0 0.0
    %6177 = vmatpush1.msra.mxu0 0.0
    %6178 = vmatprep.subr.mxu0 0.0
    %6179 = vmatpush1.msra.mxu0 0.0
    %6180 = vmatprep.subr.mxu0 0.0
    %6181 = vmatpush1.msra.mxu0 0.0
    %6182 = vmatprep.subr.mxu0 0.0
    %6183 = vmatpush1.msra.mxu0 0.0
    %6184 = vmatprep.subr.mxu0 0.0
    %6185 = vmatpush1.msra.mxu0 0.0
    %6186 = vmatprep.subr.mxu0 0.0
    %6187 = vmatpush1.msra.mxu0 %v5919
    %6188 = vmatprep.subr.mxu0 0.0
    %6189 = vmatpush1.msra.mxu0 %v5918
    %6190 = vmatprep.subr.mxu0 0.0
    %6191 = vmatpush1.msra.mxu0 %v5917
    %6192 = vmatprep.subr.mxu0 0.0
    %6193 = vmatpush1.msra.mxu0 %v5916
    %6194 = vmatprep.subr.mxu0 0.0
    %6195 = vmatpush1.msra.mxu0 %v5915
    %6196 = vmatprep.subr.mxu0 0.0
    %6197 = vmatpush1.msra.mxu0 %v5914
    %6198 = vmatprep.subr.mxu0 0.0
    %6199 = vmatpush1.msra.mxu0 %v5913
    %6200 = vmatprep.subr.mxu0 0.0
    %6201 = vmatpush1.msra.mxu0 %v5912
    %6202 = vmatprep.subr.mxu0 0.0
    %6203 = vmatpush2.msra.mxu0 0.0
    %6204 = vmatprep.subr.mxu0 0.0
    %6205 = vmatpush2.msra.mxu0 0.0
    %6206 = vmatprep.subr.mxu0 0.0
    %6207 = vmatpush2.msra.mxu0 0.0
    %6208 = vmatprep.subr.mxu0 0.0
    %6209 = vmatpush2.msra.mxu0 0.0
    %6210 = vmatprep.subr.mxu0 0.0
    %6211 = vmatpush2.msra.mxu0 0.0
    %6212 = vmatprep.subr.mxu0 0.0
    %6213 = vmatpush2.msra.mxu0 0.0
    %6214 = vmatprep.subr.mxu0 0.0
    %6215 = vmatpush2.msra.mxu0 0.0
    %6216 = vmatprep.subr.mxu0 0.0
    %6217 = vmatpush2.msra.mxu0 0.0
    %6218 = vmatprep.subr.mxu0 0.0
    %6219 = vmatpush2.msra.mxu0 0.0
    %6220 = vmatprep.subr.mxu0 0.0
    %6221 = vmatpush2.msra.mxu0 0.0
    %6222 = vmatprep.subr.mxu0 0.0
    %6223 = vmatpush2.msra.mxu0 0.0
    %6224 = vmatprep.subr.mxu0 0.0
    %6225 = vmatpush2.msra.mxu0 0.0
    %6226 = vmatprep.subr.mxu0 0.0
    %6227 = vmatpush2.msra.mxu0 0.0
    %6228 = vmatprep.subr.mxu0 0.0
    %6229 = vmatpush2.msra.mxu0 0.0
    %6230 = vmatprep.subr.mxu0 0.0
    %6231 = vmatpush2.msra.mxu0 0.0
    %6232 = vmatprep.subr.mxu0 0.0
    %6233 = vmatpush2.msra.mxu0 0.0
    %6234 = vmatprep.mubr.f32.mxu0 0.0
    %6235 = vmatmul.mubr.f32.gmra.mxu0 %v1032
    %v6236 = vpop.f32.mrf.mxu0
    %v6237 = vadd.f32 0.0, %v6236
    %v6238 = vpop.f32.mrf.mxu0
    %6239 = vmatprep.mubr.f32.mxu0 0.0
    %6240 = vmatmul.mubr.f32.gmra.mxu0 %v1035
    %v6241 = vpop.f32.mrf.mxu0
    %v6242 = vadd.f32 0.0, %v6241
    %v6243 = vpop.f32.mrf.mxu0
    %6244 = vmatprep.mubr.f32.mxu0 0.0
    %6245 = vmatmul.mubr.f32.gmra.mxu0 %v1038
    %v6246 = vpop.f32.mrf.mxu0
    %v6247 = vadd.f32 0.0, %v6246
    %v6248 = vpop.f32.mrf.mxu0
    %6249 = vmatprep.mubr.f32.mxu0 0.0
    %6250 = vmatmul.mubr.f32.gmra.mxu0 %v1041
    %v6251 = vpop.f32.mrf.mxu0
    %v6252 = vadd.f32 0.0, %v6251
    %v6253 = vpop.f32.mrf.mxu0
    %6254 = vmatprep.mubr.f32.mxu0 0.0
    %6255 = vmatmul.mubr.f32.gmra.mxu0 %v1044
    %v6256 = vpop.f32.mrf.mxu0
    %v6257 = vadd.f32 0.0, %v6256
    %v6258 = vpop.f32.mrf.mxu0
    %6259 = vmatprep.mubr.f32.mxu0 0.0
    %6260 = vmatmul.mubr.f32.gmra.mxu0 %v1047
    %v6261 = vpop.f32.mrf.mxu0
    %v6262 = vadd.f32 0.0, %v6261
    %v6263 = vpop.f32.mrf.mxu0
    %6264 = vmatprep.mubr.f32.mxu0 0.0
    %6265 = vmatmul.mubr.f32.gmra.mxu0 %v1050
    %v6266 = vpop.f32.mrf.mxu0
    %v6267 = vadd.f32 0.0, %v6266
    %v6268 = vpop.f32.mrf.mxu0
    %6269 = vmatprep.mubr.f32.mxu0 0.0
    %6270 = vmatmul.mubr.f32.gmra.mxu0 %v1053
    %v6271 = vpop.f32.mrf.mxu0
    %v6272 = vadd.f32 0.0, %v6271
    %v6273 = vpop.f32.mrf.mxu0
    %6274 = vdwg.mxu0
    %v6275 = vadd.f32 %v6019, %v6237
    %v6276 = vadd.f32 %v6024, %v6242
    %v6277 = vadd.f32 %v6029, %v6247
    %v6278 = vadd.f32 %v6034, %v6252
    %v6279 = vadd.f32 %v6039, %v6257
    %v6280 = vadd.f32 %v6044, %v6262
    %v6281 = vadd.f32 %v6049, %v6267
    %v6282 = vadd.f32 %v6054, %v6272
    %6283 = vmatprep.subr.mxu0 %v271
    %6284 = vmatpush1.msra.mxu0 %v270
    %6285 = vmatprep.subr.mxu0 %v269
    %6286 = vmatpush1.msra.mxu0 %v268
    %6287 = vmatprep.subr.mxu0 %v267
    %6288 = vmatpush1.msra.mxu0 %v266
    %6289 = vmatprep.subr.mxu0 %v265
    %6290 = vmatpush1.msra.mxu0 %v264
    %6291 = vmatprep.subr.mxu0 %v263
    %6292 = vmatpush1.msra.mxu0 %v262
    %6293 = vmatprep.subr.mxu0 %v261
    %6294 = vmatpush1.msra.mxu0 %v260
    %6295 = vmatprep.subr.mxu0 %v259
    %6296 = vmatpush1.msra.mxu0 %v258
    %6297 = vmatprep.subr.mxu0 %v257
    %6298 = vmatpush1.msra.mxu0 %v256
    %6299 = vmatprep.subr.mxu0 %v255
    %6300 = vmatpush1.msra.mxu0 %v254
    %6301 = vmatprep.subr.mxu0 %v253
    %6302 = vmatpush1.msra.mxu0 %v252
    %6303 = vmatprep.subr.mxu0 %v251
    %6304 = vmatpush1.msra.mxu0 %v250
    %6305 = vmatprep.subr.mxu0 %v249
    %6306 = vmatpush1.msra.mxu0 %v248
    %6307 = vmatprep.subr.mxu0 %v247
    %6308 = vmatpush1.msra.mxu0 %v246
    %6309 = vmatprep.subr.mxu0 %v245
    %6310 = vmatpush1.msra.mxu0 %v244
    %6311 = vmatprep.subr.mxu0 %v243
    %6312 = vmatpush1.msra.mxu0 %v242
    %6313 = vmatprep.subr.mxu0 %v241
    %6314 = vmatpush1.msra.mxu0 %v240
    %6315 = vmatprep.subr.mxu0 %v303
    %6316 = vmatpush2.msra.mxu0 %v302
    %6317 = vmatprep.subr.mxu0 %v301
    %6318 = vmatpush2.msra.mxu0 %v300
    %6319 = vmatprep.subr.mxu0 %v299
    %6320 = vmatpush2.msra.mxu0 %v298
    %6321 = vmatprep.subr.mxu0 %v297
    %6322 = vmatpush2.msra.mxu0 %v296
    %6323 = vmatprep.subr.mxu0 %v295
    %6324 = vmatpush2.msra.mxu0 %v294
    %6325 = vmatprep.subr.mxu0 %v293
    %6326 = vmatpush2.msra.mxu0 %v292
    %6327 = vmatprep.subr.mxu0 %v291
    %6328 = vmatpush2.msra.mxu0 %v290
    %6329 = vmatprep.subr.mxu0 %v289
    %6330 = vmatpush2.msra.mxu0 %v288
    %6331 = vmatprep.subr.mxu0 %v287
    %6332 = vmatpush2.msra.mxu0 %v286
    %6333 = vmatprep.subr.mxu0 %v285
    %6334 = vmatpush2.msra.mxu0 %v284
    %6335 = vmatprep.subr.mxu0 %v283
    %6336 = vmatpush2.msra.mxu0 %v282
    %6337 = vmatprep.subr.mxu0 %v281
    %6338 = vmatpush2.msra.mxu0 %v280
    %6339 = vmatprep.subr.mxu0 %v279
    %6340 = vmatpush2.msra.mxu0 %v278
    %6341 = vmatprep.subr.mxu0 %v277
    %6342 = vmatpush2.msra.mxu0 %v276
    %6343 = vmatprep.subr.mxu0 %v275
    %6344 = vmatpush2.msra.mxu0 %v274
    %6345 = vmatprep.subr.mxu0 %v273
    %6346 = vmatpush2.msra.mxu0 %v272
    %6347 = vmatprep.mubr.f32.mxu0 %v6275
    %6348 = vmatmul.mubr.f32.gmra.mxu0 %v6162
    %v6349 = vpop.f32.mrf.mxu0
    %v6350 = vadd.f32 0.0, %v6349
    %v6351 = vpop.f32.mrf.mxu0
    %v6352 = vadd.f32 0.0, %v6351
    %6353 = vmatprep.mubr.f32.mxu0 %v6276
    %6354 = vmatmul.mubr.f32.gmra.mxu0 %v6163
    %v6355 = vpop.f32.mrf.mxu0
    %v6356 = vadd.f32 0.0, %v6355
    %v6357 = vpop.f32.mrf.mxu0
    %v6358 = vadd.f32 0.0, %v6357
    %6359 = vmatprep.mubr.f32.mxu0 %v6277
    %6360 = vmatmul.mubr.f32.gmra.mxu0 %v6164
    %v6361 = vpop.f32.mrf.mxu0
    %v6362 = vadd.f32 0.0, %v6361
    %v6363 = vpop.f32.mrf.mxu0
    %v6364 = vadd.f32 0.0, %v6363
    %6365 = vmatprep.mubr.f32.mxu0 %v6278
    %6366 = vmatmul.mubr.f32.gmra.mxu0 %v6165
    %v6367 = vpop.f32.mrf.mxu0
    %v6368 = vadd.f32 0.0, %v6367
    %v6369 = vpop.f32.mrf.mxu0
    %v6370 = vadd.f32 0.0, %v6369
    %6371 = vmatprep.mubr.f32.mxu0 %v6279
    %6372 = vmatmul.mubr.f32.gmra.mxu0 %v6166
    %v6373 = vpop.f32.mrf.mxu0
    %v6374 = vadd.f32 0.0, %v6373
    %v6375 = vpop.f32.mrf.mxu0
    %v6376 = vadd.f32 0.0, %v6375
    %6377 = vmatprep.mubr.f32.mxu0 %v6280
    %6378 = vmatmul.mubr.f32.gmra.mxu0 %v6167
    %v6379 = vpop.f32.mrf.mxu0
    %v6380 = vadd.f32 0.0, %v6379
    %v6381 = vpop.f32.mrf.mxu0
    %v6382 = vadd.f32 0.0, %v6381
    %6383 = vmatprep.mubr.f32.mxu0 %v6281
    %6384 = vmatmul.mubr.f32.gmra.mxu0 %v6168
    %v6385 = vpop.f32.mrf.mxu0
    %v6386 = vadd.f32 0.0, %v6385
    %v6387 = vpop.f32.mrf.mxu0
    %v6388 = vadd.f32 0.0, %v6387
    %6389 = vmatprep.mubr.f32.mxu0 %v6282
    %6390 = vmatmul.mubr.f32.gmra.mxu0 %v6169
    %v6391 = vpop.f32.mrf.mxu0
    %v6392 = vadd.f32 0.0, %v6391
    %v6393 = vpop.f32.mrf.mxu0
    %v6394 = vadd.f32 0.0, %v6393
    %6395 = vdwg.mxu0
    %s6396 = scalar_lea.vmem [#allocation11], 384
    %v6397 = vld [vmem:[%s6396] sm:$0xff]
    %v6398 = vld [vmem:[%s6396 + $0x8] sm:$0xff]
    %v6399 = vld [vmem:[%s6396 + $0x10] sm:$0xff]
    %v6400 = vld [vmem:[%s6396 + $0x18] sm:$0xff]
    %v6401 = vld [vmem:[%s6396 + $0x20] sm:$0xff]
    %v6402 = vld [vmem:[%s6396 + $0x28] sm:$0xff]
    %v6403 = vld [vmem:[%s6396 + $0x30] sm:$0xff]
    %v6404 = vld [vmem:[%s6396 + $0x38] sm:$0xff]
    %s6405 = scalar_lea.vmem [#allocation11], 896
    %v6406 = vld [vmem:[%s6405] sm:$0xff]
    %v6407 = vld [vmem:[%s6405 + $0x8] sm:$0xff]
    %v6408 = vld [vmem:[%s6405 + $0x10] sm:$0xff]
    %v6409 = vld [vmem:[%s6405 + $0x18] sm:$0xff]
    %v6410 = vld [vmem:[%s6405 + $0x20] sm:$0xff]
    %v6411 = vld [vmem:[%s6405 + $0x28] sm:$0xff]
    %v6412 = vld [vmem:[%s6405 + $0x30] sm:$0xff]
    %v6413 = vld [vmem:[%s6405 + $0x38] sm:$0xff]
    %v6414 = vmul.f32 %v6350, %v6397
    %v6415 = vmul.f32 %v6356, %v6398
    %v6416 = vmul.f32 %v6362, %v6399
    %v6417 = vmul.f32 %v6368, %v6400
    %v6418 = vmul.f32 %v6374, %v6401
    %v6419 = vmul.f32 %v6380, %v6402
    %v6420 = vmul.f32 %v6386, %v6403
    %v6421 = vmul.f32 %v6392, %v6404
    %v6422 = vmul.f32 %v6352, %v6406
    %v6423 = vmul.f32 %v6358, %v6407
    %v6424 = vmul.f32 %v6364, %v6408
    %v6425 = vmul.f32 %v6370, %v6409
    %v6426 = vmul.f32 %v6376, %v6410
    %v6427 = vmul.f32 %v6382, %v6411
    %v6428 = vmul.f32 %v6388, %v6412
    %v6429 = vmul.f32 %v6394, %v6413
    %v6430 = vsub.f32 %v6414, %v6422
    %v6431 = vsub.f32 %v6415, %v6423
    %v6432 = vsub.f32 %v6416, %v6424
    %v6433 = vsub.f32 %v6417, %v6425
    %v6434 = vsub.f32 %v6418, %v6426
    %v6435 = vsub.f32 %v6419, %v6427
    %v6436 = vsub.f32 %v6420, %v6428
    %v6437 = vsub.f32 %v6421, %v6429
    %v6438 = vmul.f32 %v6350, %v6406
    %v6439 = vmul.f32 %v6356, %v6407
    %v6440 = vmul.f32 %v6362, %v6408
    %v6441 = vmul.f32 %v6368, %v6409
    %v6442 = vmul.f32 %v6374, %v6410
    %v6443 = vmul.f32 %v6380, %v6411
    %v6444 = vmul.f32 %v6386, %v6412
    %v6445 = vmul.f32 %v6392, %v6413
    %v6446 = vmul.f32 %v6352, %v6397
    %v6447 = vmul.f32 %v6358, %v6398
    %v6448 = vmul.f32 %v6364, %v6399
    %v6449 = vmul.f32 %v6370, %v6400
    %v6450 = vmul.f32 %v6376, %v6401
    %v6451 = vmul.f32 %v6382, %v6402
    %v6452 = vmul.f32 %v6388, %v6403
    %v6453 = vmul.f32 %v6394, %v6404
    %v6454 = vadd.f32 %v6438, %v6446
    %v6455 = vadd.f32 %v6439, %v6447
    %v6456 = vadd.f32 %v6440, %v6448
    %v6457 = vadd.f32 %v6441, %v6449
    %v6458 = vadd.f32 %v6442, %v6450
    %v6459 = vadd.f32 %v6443, %v6451
    %v6460 = vadd.f32 %v6444, %v6452
    %v6461 = vadd.f32 %v6445, %v6453
    %v6462 = vadd.f32 %v6430, %v6454
    %v6463 = vadd.f32 %v6431, %v6455
    %v6464 = vadd.f32 %v6432, %v6456
    %v6465 = vadd.f32 %v6433, %v6457
    %v6466 = vadd.f32 %v6434, %v6458
    %v6467 = vadd.f32 %v6435, %v6459
    %v6468 = vadd.f32 %v6436, %v6460
    %v6469 = vadd.f32 %v6437, %v6461
    %6470 = vmatprep.subr.mxu0 0.0
    %6471 = vmatpush1.msra.mxu0 0.0
    %6472 = vmatprep.subr.mxu0 0.0
    %6473 = vmatpush1.msra.mxu0 0.0
    %6474 = vmatprep.subr.mxu0 0.0
    %6475 = vmatpush1.msra.mxu0 0.0
    %6476 = vmatprep.subr.mxu0 0.0
    %6477 = vmatpush1.msra.mxu0 0.0
    %6478 = vmatprep.subr.mxu0 0.0
    %6479 = vmatpush1.msra.mxu0 0.0
    %6480 = vmatprep.subr.mxu0 0.0
    %6481 = vmatpush1.msra.mxu0 0.0
    %6482 = vmatprep.subr.mxu0 0.0
    %6483 = vmatpush1.msra.mxu0 0.0
    %6484 = vmatprep.subr.mxu0 0.0
    %6485 = vmatpush1.msra.mxu0 0.0
    %6486 = vmatprep.subr.mxu0 0.0
    %6487 = vmatpush1.msra.mxu0 %v6469
    %6488 = vmatprep.subr.mxu0 0.0
    %6489 = vmatpush1.msra.mxu0 %v6468
    %6490 = vmatprep.subr.mxu0 0.0
    %6491 = vmatpush1.msra.mxu0 %v6467
    %6492 = vmatprep.subr.mxu0 0.0
    %6493 = vmatpush1.msra.mxu0 %v6466
    %6494 = vmatprep.subr.mxu0 0.0
    %6495 = vmatpush1.msra.mxu0 %v6465
    %6496 = vmatprep.subr.mxu0 0.0
    %6497 = vmatpush1.msra.mxu0 %v6464
    %6498 = vmatprep.subr.mxu0 0.0
    %6499 = vmatpush1.msra.mxu0 %v6463
    %6500 = vmatprep.subr.mxu0 0.0
    %6501 = vmatpush1.msra.mxu0 %v6462
    %6502 = vmatprep.subr.mxu0 0.0
    %6503 = vmatpush2.msra.mxu0 0.0
    %6504 = vmatprep.subr.mxu0 0.0
    %6505 = vmatpush2.msra.mxu0 0.0
    %6506 = vmatprep.subr.mxu0 0.0
    %6507 = vmatpush2.msra.mxu0 0.0
    %6508 = vmatprep.subr.mxu0 0.0
    %6509 = vmatpush2.msra.mxu0 0.0
    %6510 = vmatprep.subr.mxu0 0.0
    %6511 = vmatpush2.msra.mxu0 0.0
    %6512 = vmatprep.subr.mxu0 0.0
    %6513 = vmatpush2.msra.mxu0 0.0
    %6514 = vmatprep.subr.mxu0 0.0
    %6515 = vmatpush2.msra.mxu0 0.0
    %6516 = vmatprep.subr.mxu0 0.0
    %6517 = vmatpush2.msra.mxu0 0.0
    %6518 = vmatprep.subr.mxu0 0.0
    %6519 = vmatpush2.msra.mxu0 0.0
    %6520 = vmatprep.subr.mxu0 0.0
    %6521 = vmatpush2.msra.mxu0 0.0
    %6522 = vmatprep.subr.mxu0 0.0
    %6523 = vmatpush2.msra.mxu0 0.0
    %6524 = vmatprep.subr.mxu0 0.0
    %6525 = vmatpush2.msra.mxu0 0.0
    %6526 = vmatprep.subr.mxu0 0.0
    %6527 = vmatpush2.msra.mxu0 0.0
    %6528 = vmatprep.subr.mxu0 0.0
    %6529 = vmatpush2.msra.mxu0 0.0
    %6530 = vmatprep.subr.mxu0 0.0
    %6531 = vmatpush2.msra.mxu0 0.0
    %6532 = vmatprep.subr.mxu0 0.0
    %6533 = vmatpush2.msra.mxu0 0.0
    %6534 = vmatprep.mubr.f32.mxu0 0.0
    %6535 = vmatmul.mubr.f32.gmra.mxu0 %v314
    %v6536 = vpop.f32.mrf.mxu0
    %v6537 = vadd.f32 0.0, %v6536
    %v6538 = vpop.f32.mrf.mxu0
    %6539 = vmatprep.mubr.f32.mxu0 0.0
    %6540 = vmatmul.mubr.f32.gmra.mxu0 %v317
    %v6541 = vpop.f32.mrf.mxu0
    %v6542 = vadd.f32 0.0, %v6541
    %v6543 = vpop.f32.mrf.mxu0
    %6544 = vmatprep.mubr.f32.mxu0 0.0
    %6545 = vmatmul.mubr.f32.gmra.mxu0 %v320
    %v6546 = vpop.f32.mrf.mxu0
    %v6547 = vadd.f32 0.0, %v6546
    %v6548 = vpop.f32.mrf.mxu0
    %6549 = vmatprep.mubr.f32.mxu0 0.0
    %6550 = vmatmul.mubr.f32.gmra.mxu0 %v323
    %v6551 = vpop.f32.mrf.mxu0
    %v6552 = vadd.f32 0.0, %v6551
    %v6553 = vpop.f32.mrf.mxu0
    %6554 = vmatprep.mubr.f32.mxu0 0.0
    %6555 = vmatmul.mubr.f32.gmra.mxu0 %v326
    %v6556 = vpop.f32.mrf.mxu0
    %v6557 = vadd.f32 0.0, %v6556
    %v6558 = vpop.f32.mrf.mxu0
    %6559 = vmatprep.mubr.f32.mxu0 0.0
    %6560 = vmatmul.mubr.f32.gmra.mxu0 %v329
    %v6561 = vpop.f32.mrf.mxu0
    %v6562 = vadd.f32 0.0, %v6561
    %v6563 = vpop.f32.mrf.mxu0
    %6564 = vmatprep.mubr.f32.mxu0 0.0
    %6565 = vmatmul.mubr.f32.gmra.mxu0 %v332
    %v6566 = vpop.f32.mrf.mxu0
    %v6567 = vadd.f32 0.0, %v6566
    %v6568 = vpop.f32.mrf.mxu0
    %6569 = vmatprep.mubr.f32.mxu0 0.0
    %6570 = vmatmul.mubr.f32.gmra.mxu0 %v335
    %v6571 = vpop.f32.mrf.mxu0
    %v6572 = vadd.f32 0.0, %v6571
    %v6573 = vpop.f32.mrf.mxu0
    %6574 = vdwg.mxu0
    %6575 = vmatprep.subr.mxu0 0.0
    %6576 = vmatpush1.msra.mxu0 0.0
    %6577 = vmatprep.subr.mxu0 0.0
    %6578 = vmatpush1.msra.mxu0 0.0
    %6579 = vmatprep.subr.mxu0 0.0
    %6580 = vmatpush1.msra.mxu0 0.0
    %6581 = vmatprep.subr.mxu0 0.0
    %6582 = vmatpush1.msra.mxu0 0.0
    %6583 = vmatprep.subr.mxu0 0.0
    %6584 = vmatpush1.msra.mxu0 0.0
    %6585 = vmatprep.subr.mxu0 0.0
    %6586 = vmatpush1.msra.mxu0 0.0
    %6587 = vmatprep.subr.mxu0 0.0
    %6588 = vmatpush1.msra.mxu0 0.0
    %6589 = vmatprep.subr.mxu0 0.0
    %6590 = vmatpush1.msra.mxu0 0.0
    %6591 = vmatprep.subr.mxu0 0.0
    %6592 = vmatpush1.msra.mxu0 %v6461
    %6593 = vmatprep.subr.mxu0 0.0
    %6594 = vmatpush1.msra.mxu0 %v6460
    %6595 = vmatprep.subr.mxu0 0.0
    %6596 = vmatpush1.msra.mxu0 %v6459
    %6597 = vmatprep.subr.mxu0 0.0
    %6598 = vmatpush1.msra.mxu0 %v6458
    %6599 = vmatprep.subr.mxu0 0.0
    %6600 = vmatpush1.msra.mxu0 %v6457
    %6601 = vmatprep.subr.mxu0 0.0
    %6602 = vmatpush1.msra.mxu0 %v6456
    %6603 = vmatprep.subr.mxu0 0.0
    %6604 = vmatpush1.msra.mxu0 %v6455
    %6605 = vmatprep.subr.mxu0 0.0
    %6606 = vmatpush1.msra.mxu0 %v6454
    %6607 = vmatprep.subr.mxu0 0.0
    %6608 = vmatpush2.msra.mxu0 0.0
    %6609 = vmatprep.subr.mxu0 0.0
    %6610 = vmatpush2.msra.mxu0 0.0
    %6611 = vmatprep.subr.mxu0 0.0
    %6612 = vmatpush2.msra.mxu0 0.0
    %6613 = vmatprep.subr.mxu0 0.0
    %6614 = vmatpush2.msra.mxu0 0.0
    %6615 = vmatprep.subr.mxu0 0.0
    %6616 = vmatpush2.msra.mxu0 0.0
    %6617 = vmatprep.subr.mxu0 0.0
    %6618 = vmatpush2.msra.mxu0 0.0
    %6619 = vmatprep.subr.mxu0 0.0
    %6620 = vmatpush2.msra.mxu0 0.0
    %6621 = vmatprep.subr.mxu0 0.0
    %6622 = vmatpush2.msra.mxu0 0.0
    %6623 = vmatprep.subr.mxu0 0.0
    %6624 = vmatpush2.msra.mxu0 0.0
    %6625 = vmatprep.subr.mxu0 0.0
    %6626 = vmatpush2.msra.mxu0 0.0
    %6627 = vmatprep.subr.mxu0 0.0
    %6628 = vmatpush2.msra.mxu0 0.0
    %6629 = vmatprep.subr.mxu0 0.0
    %6630 = vmatpush2.msra.mxu0 0.0
    %6631 = vmatprep.subr.mxu0 0.0
    %6632 = vmatpush2.msra.mxu0 0.0
    %6633 = vmatprep.subr.mxu0 0.0
    %6634 = vmatpush2.msra.mxu0 0.0
    %6635 = vmatprep.subr.mxu0 0.0
    %6636 = vmatpush2.msra.mxu0 0.0
    %6637 = vmatprep.subr.mxu0 0.0
    %6638 = vmatpush2.msra.mxu0 0.0
    %6639 = vmatprep.mubr.f32.mxu0 0.0
    %6640 = vmatmul.mubr.f32.gmra.mxu0 %v1478
    %v6641 = vpop.f32.mrf.mxu0
    %v6642 = vadd.f32 0.0, %v6641
    %v6643 = vpop.f32.mrf.mxu0
    %6644 = vmatprep.mubr.f32.mxu0 0.0
    %6645 = vmatmul.mubr.f32.gmra.mxu0 %v1481
    %v6646 = vpop.f32.mrf.mxu0
    %v6647 = vadd.f32 0.0, %v6646
    %v6648 = vpop.f32.mrf.mxu0
    %6649 = vmatprep.mubr.f32.mxu0 0.0
    %6650 = vmatmul.mubr.f32.gmra.mxu0 %v1484
    %v6651 = vpop.f32.mrf.mxu0
    %v6652 = vadd.f32 0.0, %v6651
    %v6653 = vpop.f32.mrf.mxu0
    %6654 = vmatprep.mubr.f32.mxu0 0.0
    %6655 = vmatmul.mubr.f32.gmra.mxu0 %v1487
    %v6656 = vpop.f32.mrf.mxu0
    %v6657 = vadd.f32 0.0, %v6656
    %v6658 = vpop.f32.mrf.mxu0
    %6659 = vmatprep.mubr.f32.mxu0 0.0
    %6660 = vmatmul.mubr.f32.gmra.mxu0 %v1490
    %v6661 = vpop.f32.mrf.mxu0
    %v6662 = vadd.f32 0.0, %v6661
    %v6663 = vpop.f32.mrf.mxu0
    %6664 = vmatprep.mubr.f32.mxu0 0.0
    %6665 = vmatmul.mubr.f32.gmra.mxu0 %v1493
    %v6666 = vpop.f32.mrf.mxu0
    %v6667 = vadd.f32 0.0, %v6666
    %v6668 = vpop.f32.mrf.mxu0
    %6669 = vmatprep.mubr.f32.mxu0 0.0
    %6670 = vmatmul.mubr.f32.gmra.mxu0 %v1496
    %v6671 = vpop.f32.mrf.mxu0
    %v6672 = vadd.f32 0.0, %v6671
    %v6673 = vpop.f32.mrf.mxu0
    %6674 = vmatprep.mubr.f32.mxu0 0.0
    %6675 = vmatmul.mubr.f32.gmra.mxu0 %v1499
    %v6676 = vpop.f32.mrf.mxu0
    %v6677 = vadd.f32 0.0, %v6676
    %v6678 = vpop.f32.mrf.mxu0
    %6679 = vdwg.mxu0
    %v6680 = vsub.f32 %v6537, %v6642
    %v6681 = vsub.f32 %v6542, %v6647
    %v6682 = vsub.f32 %v6547, %v6652
    %v6683 = vsub.f32 %v6552, %v6657
    %v6684 = vsub.f32 %v6557, %v6662
    %v6685 = vsub.f32 %v6562, %v6667
    %v6686 = vsub.f32 %v6567, %v6672
    %v6687 = vsub.f32 %v6572, %v6677
    %6688 = vmatprep.subr.mxu0 0.0
    %6689 = vmatpush1.msra.mxu0 0.0
    %6690 = vmatprep.subr.mxu0 0.0
    %6691 = vmatpush1.msra.mxu0 0.0
    %6692 = vmatprep.subr.mxu0 0.0
    %6693 = vmatpush1.msra.mxu0 0.0
    %6694 = vmatprep.subr.mxu0 0.0
    %6695 = vmatpush1.msra.mxu0 0.0
    %6696 = vmatprep.subr.mxu0 0.0
    %6697 = vmatpush1.msra.mxu0 0.0
    %6698 = vmatprep.subr.mxu0 0.0
    %6699 = vmatpush1.msra.mxu0 0.0
    %6700 = vmatprep.subr.mxu0 0.0
    %6701 = vmatpush1.msra.mxu0 0.0
    %6702 = vmatprep.subr.mxu0 0.0
    %6703 = vmatpush1.msra.mxu0 0.0
    %6704 = vmatprep.subr.mxu0 0.0
    %6705 = vmatpush1.msra.mxu0 %v6437
    %6706 = vmatprep.subr.mxu0 0.0
    %6707 = vmatpush1.msra.mxu0 %v6436
    %6708 = vmatprep.subr.mxu0 0.0
    %6709 = vmatpush1.msra.mxu0 %v6435
    %6710 = vmatprep.subr.mxu0 0.0
    %6711 = vmatpush1.msra.mxu0 %v6434
    %6712 = vmatprep.subr.mxu0 0.0
    %6713 = vmatpush1.msra.mxu0 %v6433
    %6714 = vmatprep.subr.mxu0 0.0
    %6715 = vmatpush1.msra.mxu0 %v6432
    %6716 = vmatprep.subr.mxu0 0.0
    %6717 = vmatpush1.msra.mxu0 %v6431
    %6718 = vmatprep.subr.mxu0 0.0
    %6719 = vmatpush1.msra.mxu0 %v6430
    %6720 = vmatprep.subr.mxu0 0.0
    %6721 = vmatpush2.msra.mxu0 0.0
    %6722 = vmatprep.subr.mxu0 0.0
    %6723 = vmatpush2.msra.mxu0 0.0
    %6724 = vmatprep.subr.mxu0 0.0
    %6725 = vmatpush2.msra.mxu0 0.0
    %6726 = vmatprep.subr.mxu0 0.0
    %6727 = vmatpush2.msra.mxu0 0.0
    %6728 = vmatprep.subr.mxu0 0.0
    %6729 = vmatpush2.msra.mxu0 0.0
    %6730 = vmatprep.subr.mxu0 0.0
    %6731 = vmatpush2.msra.mxu0 0.0
    %6732 = vmatprep.subr.mxu0 0.0
    %6733 = vmatpush2.msra.mxu0 0.0
    %6734 = vmatprep.subr.mxu0 0.0
    %6735 = vmatpush2.msra.mxu0 0.0
    %6736 = vmatprep.subr.mxu0 0.0
    %6737 = vmatpush2.msra.mxu0 0.0
    %6738 = vmatprep.subr.mxu0 0.0
    %6739 = vmatpush2.msra.mxu0 0.0
    %6740 = vmatprep.subr.mxu0 0.0
    %6741 = vmatpush2.msra.mxu0 0.0
    %6742 = vmatprep.subr.mxu0 0.0
    %6743 = vmatpush2.msra.mxu0 0.0
    %6744 = vmatprep.subr.mxu0 0.0
    %6745 = vmatpush2.msra.mxu0 0.0
    %6746 = vmatprep.subr.mxu0 0.0
    %6747 = vmatpush2.msra.mxu0 0.0
    %6748 = vmatprep.subr.mxu0 0.0
    %6749 = vmatpush2.msra.mxu0 0.0
    %6750 = vmatprep.subr.mxu0 0.0
    %6751 = vmatpush2.msra.mxu0 0.0
    %6752 = vmatprep.mubr.f32.mxu0 0.0
    %6753 = vmatmul.mubr.f32.gmra.mxu0 %v443
    %v6754 = vpop.f32.mrf.mxu0
    %v6755 = vadd.f32 0.0, %v6754
    %v6756 = vpop.f32.mrf.mxu0
    %6757 = vmatprep.mubr.f32.mxu0 0.0
    %6758 = vmatmul.mubr.f32.gmra.mxu0 %v446
    %v6759 = vpop.f32.mrf.mxu0
    %v6760 = vadd.f32 0.0, %v6759
    %v6761 = vpop.f32.mrf.mxu0
    %6762 = vmatprep.mubr.f32.mxu0 0.0
    %6763 = vmatmul.mubr.f32.gmra.mxu0 %v449
    %v6764 = vpop.f32.mrf.mxu0
    %v6765 = vadd.f32 0.0, %v6764
    %v6766 = vpop.f32.mrf.mxu0
    %6767 = vmatprep.mubr.f32.mxu0 0.0
    %6768 = vmatmul.mubr.f32.gmra.mxu0 %v452
    %v6769 = vpop.f32.mrf.mxu0
    %v6770 = vadd.f32 0.0, %v6769
    %v6771 = vpop.f32.mrf.mxu0
    %6772 = vmatprep.mubr.f32.mxu0 0.0
    %6773 = vmatmul.mubr.f32.gmra.mxu0 %v455
    %v6774 = vpop.f32.mrf.mxu0
    %v6775 = vadd.f32 0.0, %v6774
    %v6776 = vpop.f32.mrf.mxu0
    %6777 = vmatprep.mubr.f32.mxu0 0.0
    %6778 = vmatmul.mubr.f32.gmra.mxu0 %v458
    %v6779 = vpop.f32.mrf.mxu0
    %v6780 = vadd.f32 0.0, %v6779
    %v6781 = vpop.f32.mrf.mxu0
    %6782 = vmatprep.mubr.f32.mxu0 0.0
    %6783 = vmatmul.mubr.f32.gmra.mxu0 %v461
    %v6784 = vpop.f32.mrf.mxu0
    %v6785 = vadd.f32 0.0, %v6784
    %v6786 = vpop.f32.mrf.mxu0
    %6787 = vmatprep.mubr.f32.mxu0 0.0
    %6788 = vmatmul.mubr.f32.gmra.mxu0 %v464
    %v6789 = vpop.f32.mrf.mxu0
    %v6790 = vadd.f32 0.0, %v6789
    %v6791 = vpop.f32.mrf.mxu0
    %6792 = vdwg.mxu0
    %v6793 = vadd.f32 %v6537, %v6755
    %v6794 = vadd.f32 %v6542, %v6760
    %v6795 = vadd.f32 %v6547, %v6765
    %v6796 = vadd.f32 %v6552, %v6770
    %v6797 = vadd.f32 %v6557, %v6775
    %v6798 = vadd.f32 %v6562, %v6780
    %v6799 = vadd.f32 %v6567, %v6785
    %v6800 = vadd.f32 %v6572, %v6790
    %6801 = vmatprep.subr.mxu0 %v206
    %6802 = vmatpush1.msra.mxu0 %v205
    %6803 = vmatprep.subr.mxu0 %v204
    %6804 = vmatpush1.msra.mxu0 %v203
    %6805 = vmatprep.subr.mxu0 %v202
    %6806 = vmatpush1.msra.mxu0 %v201
    %6807 = vmatprep.subr.mxu0 %v200
    %6808 = vmatpush1.msra.mxu0 %v199
    %6809 = vmatprep.subr.mxu0 %v198
    %6810 = vmatpush1.msra.mxu0 %v197
    %6811 = vmatprep.subr.mxu0 %v196
    %6812 = vmatpush1.msra.mxu0 %v195
    %6813 = vmatprep.subr.mxu0 %v194
    %6814 = vmatpush1.msra.mxu0 %v193
    %6815 = vmatprep.subr.mxu0 %v192
    %6816 = vmatpush1.msra.mxu0 %v191
    %6817 = vmatprep.subr.mxu0 %v190
    %6818 = vmatpush1.msra.mxu0 %v189
    %6819 = vmatprep.subr.mxu0 %v188
    %6820 = vmatpush1.msra.mxu0 %v187
    %6821 = vmatprep.subr.mxu0 %v186
    %6822 = vmatpush1.msra.mxu0 %v185
    %6823 = vmatprep.subr.mxu0 %v184
    %6824 = vmatpush1.msra.mxu0 %v183
    %6825 = vmatprep.subr.mxu0 %v182
    %6826 = vmatpush1.msra.mxu0 %v181
    %6827 = vmatprep.subr.mxu0 %v180
    %6828 = vmatpush1.msra.mxu0 %v179
    %6829 = vmatprep.subr.mxu0 %v178
    %6830 = vmatpush1.msra.mxu0 %v177
    %6831 = vmatprep.subr.mxu0 %v176
    %6832 = vmatpush1.msra.mxu0 %v175
    %6833 = vmatprep.subr.mxu0 %v238
    %6834 = vmatpush2.msra.mxu0 %v237
    %6835 = vmatprep.subr.mxu0 %v236
    %6836 = vmatpush2.msra.mxu0 %v235
    %6837 = vmatprep.subr.mxu0 %v234
    %6838 = vmatpush2.msra.mxu0 %v233
    %6839 = vmatprep.subr.mxu0 %v232
    %6840 = vmatpush2.msra.mxu0 %v231
    %6841 = vmatprep.subr.mxu0 %v230
    %6842 = vmatpush2.msra.mxu0 %v229
    %6843 = vmatprep.subr.mxu0 %v228
    %6844 = vmatpush2.msra.mxu0 %v227
    %6845 = vmatprep.subr.mxu0 %v226
    %6846 = vmatpush2.msra.mxu0 %v225
    %6847 = vmatprep.subr.mxu0 %v224
    %6848 = vmatpush2.msra.mxu0 %v223
    %6849 = vmatprep.subr.mxu0 %v222
    %6850 = vmatpush2.msra.mxu0 %v221
    %6851 = vmatprep.subr.mxu0 %v220
    %6852 = vmatpush2.msra.mxu0 %v219
    %6853 = vmatprep.subr.mxu0 %v218
    %6854 = vmatpush2.msra.mxu0 %v217
    %6855 = vmatprep.subr.mxu0 %v216
    %6856 = vmatpush2.msra.mxu0 %v215
    %6857 = vmatprep.subr.mxu0 %v214
    %6858 = vmatpush2.msra.mxu0 %v213
    %6859 = vmatprep.subr.mxu0 %v212
    %6860 = vmatpush2.msra.mxu0 %v211
    %6861 = vmatprep.subr.mxu0 %v210
    %6862 = vmatpush2.msra.mxu0 %v209
    %6863 = vmatprep.subr.mxu0 %v208
    %6864 = vmatpush2.msra.mxu0 %v207
    %6865 = vmatprep.mubr.f32.mxu0 %v6793
    %6866 = vmatmul.mubr.f32.gmra.mxu0 %v6680
    %v6867 = vpop.f32.mrf.mxu0
    %v6868 = vadd.f32 0.0, %v6867
    %v6869 = vpop.f32.mrf.mxu0
    %v6870 = vadd.f32 0.0, %v6869
    %6871 = vmatprep.mubr.f32.mxu0 %v6794
    %6872 = vmatmul.mubr.f32.gmra.mxu0 %v6681
    %v6873 = vpop.f32.mrf.mxu0
    %v6874 = vadd.f32 0.0, %v6873
    %v6875 = vpop.f32.mrf.mxu0
    %v6876 = vadd.f32 0.0, %v6875
    %6877 = vmatprep.mubr.f32.mxu0 %v6795
    %6878 = vmatmul.mubr.f32.gmra.mxu0 %v6682
    %v6879 = vpop.f32.mrf.mxu0
    %v6880 = vadd.f32 0.0, %v6879
    %v6881 = vpop.f32.mrf.mxu0
    %v6882 = vadd.f32 0.0, %v6881
    %6883 = vmatprep.mubr.f32.mxu0 %v6796
    %6884 = vmatmul.mubr.f32.gmra.mxu0 %v6683
    %v6885 = vpop.f32.mrf.mxu0
    %v6886 = vadd.f32 0.0, %v6885
    %v6887 = vpop.f32.mrf.mxu0
    %v6888 = vadd.f32 0.0, %v6887
    %6889 = vmatprep.mubr.f32.mxu0 %v6797
    %6890 = vmatmul.mubr.f32.gmra.mxu0 %v6684
    %v6891 = vpop.f32.mrf.mxu0
    %v6892 = vadd.f32 0.0, %v6891
    %v6893 = vpop.f32.mrf.mxu0
    %v6894 = vadd.f32 0.0, %v6893
    %6895 = vmatprep.mubr.f32.mxu0 %v6798
    %6896 = vmatmul.mubr.f32.gmra.mxu0 %v6685
    %v6897 = vpop.f32.mrf.mxu0
    %v6898 = vadd.f32 0.0, %v6897
    %v6899 = vpop.f32.mrf.mxu0
    %v6900 = vadd.f32 0.0, %v6899
    %6901 = vmatprep.mubr.f32.mxu0 %v6799
    %6902 = vmatmul.mubr.f32.gmra.mxu0 %v6686
    %v6903 = vpop.f32.mrf.mxu0
    %v6904 = vadd.f32 0.0, %v6903
    %v6905 = vpop.f32.mrf.mxu0
    %v6906 = vadd.f32 0.0, %v6905
    %6907 = vmatprep.mubr.f32.mxu0 %v6800
    %6908 = vmatmul.mubr.f32.gmra.mxu0 %v6687
    %v6909 = vpop.f32.mrf.mxu0
    %v6910 = vadd.f32 0.0, %v6909
    %v6911 = vpop.f32.mrf.mxu0
    %v6912 = vadd.f32 0.0, %v6911
    %6913 = vdwg.mxu0
    %v6914 = vmul.f32 %v6868, %v1282
    %v6915 = vmul.f32 %v6874, %v1283
    %v6916 = vmul.f32 %v6880, %v1284
    %v6917 = vmul.f32 %v6886, %v1285
    %v6918 = vmul.f32 %v6892, %v1286
    %v6919 = vmul.f32 %v6898, %v1287
    %v6920 = vmul.f32 %v6904, %v1288
    %v6921 = vmul.f32 %v6910, %v1289
    %v6922 = vmul.f32 %v6870, %v1291
    %v6923 = vmul.f32 %v6876, %v1292
    %v6924 = vmul.f32 %v6882, %v1293
    %v6925 = vmul.f32 %v6888, %v1294
    %v6926 = vmul.f32 %v6894, %v1295
    %v6927 = vmul.f32 %v6900, %v1296
    %v6928 = vmul.f32 %v6906, %v1297
    %v6929 = vmul.f32 %v6912, %v1298
    %v6930 = vsub.f32 %v6914, %v6922
    %v6931 = vsub.f32 %v6915, %v6923
    %v6932 = vsub.f32 %v6916, %v6924
    %v6933 = vsub.f32 %v6917, %v6925
    %v6934 = vsub.f32 %v6918, %v6926
    %v6935 = vsub.f32 %v6919, %v6927
    %v6936 = vsub.f32 %v6920, %v6928
    %v6937 = vsub.f32 %v6921, %v6929
    %v6938 = vmul.f32 %v6868, %v1291
    %v6939 = vmul.f32 %v6874, %v1292
    %v6940 = vmul.f32 %v6880, %v1293
    %v6941 = vmul.f32 %v6886, %v1294
    %v6942 = vmul.f32 %v6892, %v1295
    %v6943 = vmul.f32 %v6898, %v1296
    %v6944 = vmul.f32 %v6904, %v1297
    %v6945 = vmul.f32 %v6910, %v1298
    %v6946 = vmul.f32 %v6870, %v1282
    %v6947 = vmul.f32 %v6876, %v1283
    %v6948 = vmul.f32 %v6882, %v1284
    %v6949 = vmul.f32 %v6888, %v1285
    %v6950 = vmul.f32 %v6894, %v1286
    %v6951 = vmul.f32 %v6900, %v1287
    %v6952 = vmul.f32 %v6906, %v1288
    %v6953 = vmul.f32 %v6912, %v1289
    %v6954 = vadd.f32 %v6938, %v6946
    %v6955 = vadd.f32 %v6939, %v6947
    %v6956 = vadd.f32 %v6940, %v6948
    %v6957 = vadd.f32 %v6941, %v6949
    %v6958 = vadd.f32 %v6942, %v6950
    %v6959 = vadd.f32 %v6943, %v6951
    %v6960 = vadd.f32 %v6944, %v6952
    %v6961 = vadd.f32 %v6945, %v6953
    %v6962 = vadd.f32 %v6930, %v6954
    %v6963 = vadd.f32 %v6931, %v6955
    %v6964 = vadd.f32 %v6932, %v6956
    %v6965 = vadd.f32 %v6933, %v6957
    %v6966 = vadd.f32 %v6934, %v6958
    %v6967 = vadd.f32 %v6935, %v6959
    %v6968 = vadd.f32 %v6936, %v6960
    %v6969 = vadd.f32 %v6937, %v6961
    %6970 = vmatprep.subr.mxu0 0.0
    %6971 = vmatpush1.msra.mxu0 0.0
    %6972 = vmatprep.subr.mxu0 0.0
    %6973 = vmatpush1.msra.mxu0 0.0
    %6974 = vmatprep.subr.mxu0 0.0
    %6975 = vmatpush1.msra.mxu0 0.0
    %6976 = vmatprep.subr.mxu0 0.0
    %6977 = vmatpush1.msra.mxu0 0.0
    %6978 = vmatprep.subr.mxu0 0.0
    %6979 = vmatpush1.msra.mxu0 0.0
    %6980 = vmatprep.subr.mxu0 0.0
    %6981 = vmatpush1.msra.mxu0 0.0
    %6982 = vmatprep.subr.mxu0 0.0
    %6983 = vmatpush1.msra.mxu0 0.0
    %6984 = vmatprep.subr.mxu0 0.0
    %6985 = vmatpush1.msra.mxu0 0.0
    %6986 = vmatprep.subr.mxu0 0.0
    %6987 = vmatpush1.msra.mxu0 %v6969
    %6988 = vmatprep.subr.mxu0 0.0
    %6989 = vmatpush1.msra.mxu0 %v6968
    %6990 = vmatprep.subr.mxu0 0.0
    %6991 = vmatpush1.msra.mxu0 %v6967
    %6992 = vmatprep.subr.mxu0 0.0
    %6993 = vmatpush1.msra.mxu0 %v6966
    %6994 = vmatprep.subr.mxu0 0.0
    %6995 = vmatpush1.msra.mxu0 %v6965
    %6996 = vmatprep.subr.mxu0 0.0
    %6997 = vmatpush1.msra.mxu0 %v6964
    %6998 = vmatprep.subr.mxu0 0.0
    %6999 = vmatpush1.msra.mxu0 %v6963
    %7000 = vmatprep.subr.mxu0 0.0
    %7001 = vmatpush1.msra.mxu0 %v6962
    %7002 = vmatprep.subr.mxu0 0.0
    %7003 = vmatpush2.msra.mxu0 0.0
    %7004 = vmatprep.subr.mxu0 0.0
    %7005 = vmatpush2.msra.mxu0 0.0
    %7006 = vmatprep.subr.mxu0 0.0
    %7007 = vmatpush2.msra.mxu0 0.0
    %7008 = vmatprep.subr.mxu0 0.0
    %7009 = vmatpush2.msra.mxu0 0.0
    %7010 = vmatprep.subr.mxu0 0.0
    %7011 = vmatpush2.msra.mxu0 0.0
    %7012 = vmatprep.subr.mxu0 0.0
    %7013 = vmatpush2.msra.mxu0 0.0
    %7014 = vmatprep.subr.mxu0 0.0
    %7015 = vmatpush2.msra.mxu0 0.0
    %7016 = vmatprep.subr.mxu0 0.0
    %7017 = vmatpush2.msra.mxu0 0.0
    %7018 = vmatprep.subr.mxu0 0.0
    %7019 = vmatpush2.msra.mxu0 0.0
    %7020 = vmatprep.subr.mxu0 0.0
    %7021 = vmatpush2.msra.mxu0 0.0
    %7022 = vmatprep.subr.mxu0 0.0
    %7023 = vmatpush2.msra.mxu0 0.0
    %7024 = vmatprep.subr.mxu0 0.0
    %7025 = vmatpush2.msra.mxu0 0.0
    %7026 = vmatprep.subr.mxu0 0.0
    %7027 = vmatpush2.msra.mxu0 0.0
    %7028 = vmatprep.subr.mxu0 0.0
    %7029 = vmatpush2.msra.mxu0 0.0
    %7030 = vmatprep.subr.mxu0 0.0
    %7031 = vmatpush2.msra.mxu0 0.0
    %7032 = vmatprep.subr.mxu0 0.0
    %7033 = vmatpush2.msra.mxu0 0.0
    %7034 = vmatprep.mubr.f32.mxu0 0.0
    %7035 = vmatmul.mubr.f32.gmra.mxu0 %v766
    %v7036 = vpop.f32.mrf.mxu0
    %v7037 = vadd.f32 0.0, %v7036
    %v7038 = vpop.f32.mrf.mxu0
    %7039 = vmatprep.mubr.f32.mxu0 0.0
    %7040 = vmatmul.mubr.f32.gmra.mxu0 %v769
    %v7041 = vpop.f32.mrf.mxu0
    %v7042 = vadd.f32 0.0, %v7041
    %v7043 = vpop.f32.mrf.mxu0
    %7044 = vmatprep.mubr.f32.mxu0 0.0
    %7045 = vmatmul.mubr.f32.gmra.mxu0 %v772
    %v7046 = vpop.f32.mrf.mxu0
    %v7047 = vadd.f32 0.0, %v7046
    %v7048 = vpop.f32.mrf.mxu0
    %7049 = vmatprep.mubr.f32.mxu0 0.0
    %7050 = vmatmul.mubr.f32.gmra.mxu0 %v775
    %v7051 = vpop.f32.mrf.mxu0
    %v7052 = vadd.f32 0.0, %v7051
    %v7053 = vpop.f32.mrf.mxu0
    %7054 = vmatprep.mubr.f32.mxu0 0.0
    %7055 = vmatmul.mubr.f32.gmra.mxu0 %v778
    %v7056 = vpop.f32.mrf.mxu0
    %v7057 = vadd.f32 0.0, %v7056
    %v7058 = vpop.f32.mrf.mxu0
    %7059 = vmatprep.mubr.f32.mxu0 0.0
    %7060 = vmatmul.mubr.f32.gmra.mxu0 %v781
    %v7061 = vpop.f32.mrf.mxu0
    %v7062 = vadd.f32 0.0, %v7061
    %v7063 = vpop.f32.mrf.mxu0
    %7064 = vmatprep.mubr.f32.mxu0 0.0
    %7065 = vmatmul.mubr.f32.gmra.mxu0 %v784
    %v7066 = vpop.f32.mrf.mxu0
    %v7067 = vadd.f32 0.0, %v7066
    %v7068 = vpop.f32.mrf.mxu0
    %7069 = vmatprep.mubr.f32.mxu0 0.0
    %7070 = vmatmul.mubr.f32.gmra.mxu0 %v787
    %v7071 = vpop.f32.mrf.mxu0
    %v7072 = vadd.f32 0.0, %v7071
    %v7073 = vpop.f32.mrf.mxu0
    %7074 = vdwg.mxu0
    %7075 = vmatprep.subr.mxu0 0.0
    %7076 = vmatpush1.msra.mxu0 0.0
    %7077 = vmatprep.subr.mxu0 0.0
    %7078 = vmatpush1.msra.mxu0 0.0
    %7079 = vmatprep.subr.mxu0 0.0
    %7080 = vmatpush1.msra.mxu0 0.0
    %7081 = vmatprep.subr.mxu0 0.0
    %7082 = vmatpush1.msra.mxu0 0.0
    %7083 = vmatprep.subr.mxu0 0.0
    %7084 = vmatpush1.msra.mxu0 0.0
    %7085 = vmatprep.subr.mxu0 0.0
    %7086 = vmatpush1.msra.mxu0 0.0
    %7087 = vmatprep.subr.mxu0 0.0
    %7088 = vmatpush1.msra.mxu0 0.0
    %7089 = vmatprep.subr.mxu0 0.0
    %7090 = vmatpush1.msra.mxu0 0.0
    %7091 = vmatprep.subr.mxu0 0.0
    %7092 = vmatpush1.msra.mxu0 %v6961
    %7093 = vmatprep.subr.mxu0 0.0
    %7094 = vmatpush1.msra.mxu0 %v6960
    %7095 = vmatprep.subr.mxu0 0.0
    %7096 = vmatpush1.msra.mxu0 %v6959
    %7097 = vmatprep.subr.mxu0 0.0
    %7098 = vmatpush1.msra.mxu0 %v6958
    %7099 = vmatprep.subr.mxu0 0.0
    %7100 = vmatpush1.msra.mxu0 %v6957
    %7101 = vmatprep.subr.mxu0 0.0
    %7102 = vmatpush1.msra.mxu0 %v6956
    %7103 = vmatprep.subr.mxu0 0.0
    %7104 = vmatpush1.msra.mxu0 %v6955
    %7105 = vmatprep.subr.mxu0 0.0
    %7106 = vmatpush1.msra.mxu0 %v6954
    %7107 = vmatprep.subr.mxu0 0.0
    %7108 = vmatpush2.msra.mxu0 0.0
    %7109 = vmatprep.subr.mxu0 0.0
    %7110 = vmatpush2.msra.mxu0 0.0
    %7111 = vmatprep.subr.mxu0 0.0
    %7112 = vmatpush2.msra.mxu0 0.0
    %7113 = vmatprep.subr.mxu0 0.0
    %7114 = vmatpush2.msra.mxu0 0.0
    %7115 = vmatprep.subr.mxu0 0.0
    %7116 = vmatpush2.msra.mxu0 0.0
    %7117 = vmatprep.subr.mxu0 0.0
    %7118 = vmatpush2.msra.mxu0 0.0
    %7119 = vmatprep.subr.mxu0 0.0
    %7120 = vmatpush2.msra.mxu0 0.0
    %7121 = vmatprep.subr.mxu0 0.0
    %7122 = vmatpush2.msra.mxu0 0.0
    %7123 = vmatprep.subr.mxu0 0.0
    %7124 = vmatpush2.msra.mxu0 0.0
    %7125 = vmatprep.subr.mxu0 0.0
    %7126 = vmatpush2.msra.mxu0 0.0
    %7127 = vmatprep.subr.mxu0 0.0
    %7128 = vmatpush2.msra.mxu0 0.0
    %7129 = vmatprep.subr.mxu0 0.0
    %7130 = vmatpush2.msra.mxu0 0.0
    %7131 = vmatprep.subr.mxu0 0.0
    %7132 = vmatpush2.msra.mxu0 0.0
    %7133 = vmatprep.subr.mxu0 0.0
    %7134 = vmatpush2.msra.mxu0 0.0
    %7135 = vmatprep.subr.mxu0 0.0
    %7136 = vmatpush2.msra.mxu0 0.0
    %7137 = vmatprep.subr.mxu0 0.0
    %7138 = vmatpush2.msra.mxu0 0.0
    %7139 = vmatprep.mubr.f32.mxu0 0.0
    %7140 = vmatmul.mubr.f32.gmra.mxu0 %v895
    %v7141 = vpop.f32.mrf.mxu0
    %v7142 = vadd.f32 0.0, %v7141
    %v7143 = vpop.f32.mrf.mxu0
    %7144 = vmatprep.mubr.f32.mxu0 0.0
    %7145 = vmatmul.mubr.f32.gmra.mxu0 %v898
    %v7146 = vpop.f32.mrf.mxu0
    %v7147 = vadd.f32 0.0, %v7146
    %v7148 = vpop.f32.mrf.mxu0
    %7149 = vmatprep.mubr.f32.mxu0 0.0
    %7150 = vmatmul.mubr.f32.gmra.mxu0 %v901
    %v7151 = vpop.f32.mrf.mxu0
    %v7152 = vadd.f32 0.0, %v7151
    %v7153 = vpop.f32.mrf.mxu0
    %7154 = vmatprep.mubr.f32.mxu0 0.0
    %7155 = vmatmul.mubr.f32.gmra.mxu0 %v904
    %v7156 = vpop.f32.mrf.mxu0
    %v7157 = vadd.f32 0.0, %v7156
    %v7158 = vpop.f32.mrf.mxu0
    %7159 = vmatprep.mubr.f32.mxu0 0.0
    %7160 = vmatmul.mubr.f32.gmra.mxu0 %v907
    %v7161 = vpop.f32.mrf.mxu0
    %v7162 = vadd.f32 0.0, %v7161
    %v7163 = vpop.f32.mrf.mxu0
    %7164 = vmatprep.mubr.f32.mxu0 0.0
    %7165 = vmatmul.mubr.f32.gmra.mxu0 %v910
    %v7166 = vpop.f32.mrf.mxu0
    %v7167 = vadd.f32 0.0, %v7166
    %v7168 = vpop.f32.mrf.mxu0
    %7169 = vmatprep.mubr.f32.mxu0 0.0
    %7170 = vmatmul.mubr.f32.gmra.mxu0 %v913
    %v7171 = vpop.f32.mrf.mxu0
    %v7172 = vadd.f32 0.0, %v7171
    %v7173 = vpop.f32.mrf.mxu0
    %7174 = vmatprep.mubr.f32.mxu0 0.0
    %7175 = vmatmul.mubr.f32.gmra.mxu0 %v916
    %v7176 = vpop.f32.mrf.mxu0
    %v7177 = vadd.f32 0.0, %v7176
    %v7178 = vpop.f32.mrf.mxu0
    %7179 = vdwg.mxu0
    %v7180 = vsub.f32 %v7037, %v7142
    %v7181 = vsub.f32 %v7042, %v7147
    %v7182 = vsub.f32 %v7047, %v7152
    %v7183 = vsub.f32 %v7052, %v7157
    %v7184 = vsub.f32 %v7057, %v7162
    %v7185 = vsub.f32 %v7062, %v7167
    %v7186 = vsub.f32 %v7067, %v7172
    %v7187 = vsub.f32 %v7072, %v7177
    %7188 = vmatprep.subr.mxu0 0.0
    %7189 = vmatpush1.msra.mxu0 0.0
    %7190 = vmatprep.subr.mxu0 0.0
    %7191 = vmatpush1.msra.mxu0 0.0
    %7192 = vmatprep.subr.mxu0 0.0
    %7193 = vmatpush1.msra.mxu0 0.0
    %7194 = vmatprep.subr.mxu0 0.0
    %7195 = vmatpush1.msra.mxu0 0.0
    %7196 = vmatprep.subr.mxu0 0.0
    %7197 = vmatpush1.msra.mxu0 0.0
    %7198 = vmatprep.subr.mxu0 0.0
    %7199 = vmatpush1.msra.mxu0 0.0
    %7200 = vmatprep.subr.mxu0 0.0
    %7201 = vmatpush1.msra.mxu0 0.0
    %7202 = vmatprep.subr.mxu0 0.0
    %7203 = vmatpush1.msra.mxu0 0.0
    %7204 = vmatprep.subr.mxu0 0.0
    %7205 = vmatpush1.msra.mxu0 %v6937
    %7206 = vmatprep.subr.mxu0 0.0
    %7207 = vmatpush1.msra.mxu0 %v6936
    %7208 = vmatprep.subr.mxu0 0.0
    %7209 = vmatpush1.msra.mxu0 %v6935
    %7210 = vmatprep.subr.mxu0 0.0
    %7211 = vmatpush1.msra.mxu0 %v6934
    %7212 = vmatprep.subr.mxu0 0.0
    %7213 = vmatpush1.msra.mxu0 %v6933
    %7214 = vmatprep.subr.mxu0 0.0
    %7215 = vmatpush1.msra.mxu0 %v6932
    %7216 = vmatprep.subr.mxu0 0.0
    %7217 = vmatpush1.msra.mxu0 %v6931
    %7218 = vmatprep.subr.mxu0 0.0
    %7219 = vmatpush1.msra.mxu0 %v6930
    %7220 = vmatprep.subr.mxu0 0.0
    %7221 = vmatpush2.msra.mxu0 0.0
    %7222 = vmatprep.subr.mxu0 0.0
    %7223 = vmatpush2.msra.mxu0 0.0
    %7224 = vmatprep.subr.mxu0 0.0
    %7225 = vmatpush2.msra.mxu0 0.0
    %7226 = vmatprep.subr.mxu0 0.0
    %7227 = vmatpush2.msra.mxu0 0.0
    %7228 = vmatprep.subr.mxu0 0.0
    %7229 = vmatpush2.msra.mxu0 0.0
    %7230 = vmatprep.subr.mxu0 0.0
    %7231 = vmatpush2.msra.mxu0 0.0
    %7232 = vmatprep.subr.mxu0 0.0
    %7233 = vmatpush2.msra.mxu0 0.0
    %7234 = vmatprep.subr.mxu0 0.0
    %7235 = vmatpush2.msra.mxu0 0.0
    %7236 = vmatprep.subr.mxu0 0.0
    %7237 = vmatpush2.msra.mxu0 0.0
    %7238 = vmatprep.subr.mxu0 0.0
    %7239 = vmatpush2.msra.mxu0 0.0
    %7240 = vmatprep.subr.mxu0 0.0
    %7241 = vmatpush2.msra.mxu0 0.0
    %7242 = vmatprep.subr.mxu0 0.0
    %7243 = vmatpush2.msra.mxu0 0.0
    %7244 = vmatprep.subr.mxu0 0.0
    %7245 = vmatpush2.msra.mxu0 0.0
    %7246 = vmatprep.subr.mxu0 0.0
    %7247 = vmatpush2.msra.mxu0 0.0
    %7248 = vmatprep.subr.mxu0 0.0
    %7249 = vmatpush2.msra.mxu0 0.0
    %7250 = vmatprep.subr.mxu0 0.0
    %7251 = vmatpush2.msra.mxu0 0.0
    %7252 = vmatprep.mubr.f32.mxu0 0.0
    %7253 = vmatmul.mubr.f32.gmra.mxu0 %v1032
    %v7254 = vpop.f32.mrf.mxu0
    %v7255 = vadd.f32 0.0, %v7254
    %v7256 = vpop.f32.mrf.mxu0
    %7257 = vmatprep.mubr.f32.mxu0 0.0
    %7258 = vmatmul.mubr.f32.gmra.mxu0 %v1035
    %v7259 = vpop.f32.mrf.mxu0
    %v7260 = vadd.f32 0.0, %v7259
    %v7261 = vpop.f32.mrf.mxu0
    %7262 = vmatprep.mubr.f32.mxu0 0.0
    %7263 = vmatmul.mubr.f32.gmra.mxu0 %v1038
    %v7264 = vpop.f32.mrf.mxu0
    %v7265 = vadd.f32 0.0, %v7264
    %v7266 = vpop.f32.mrf.mxu0
    %7267 = vmatprep.mubr.f32.mxu0 0.0
    %7268 = vmatmul.mubr.f32.gmra.mxu0 %v1041
    %v7269 = vpop.f32.mrf.mxu0
    %v7270 = vadd.f32 0.0, %v7269
    %v7271 = vpop.f32.mrf.mxu0
    %7272 = vmatprep.mubr.f32.mxu0 0.0
    %7273 = vmatmul.mubr.f32.gmra.mxu0 %v1044
    %v7274 = vpop.f32.mrf.mxu0
    %v7275 = vadd.f32 0.0, %v7274
    %v7276 = vpop.f32.mrf.mxu0
    %7277 = vmatprep.mubr.f32.mxu0 0.0
    %7278 = vmatmul.mubr.f32.gmra.mxu0 %v1047
    %v7279 = vpop.f32.mrf.mxu0
    %v7280 = vadd.f32 0.0, %v7279
    %v7281 = vpop.f32.mrf.mxu0
    %7282 = vmatprep.mubr.f32.mxu0 0.0
    %7283 = vmatmul.mubr.f32.gmra.mxu0 %v1050
    %v7284 = vpop.f32.mrf.mxu0
    %v7285 = vadd.f32 0.0, %v7284
    %v7286 = vpop.f32.mrf.mxu0
    %7287 = vmatprep.mubr.f32.mxu0 0.0
    %7288 = vmatmul.mubr.f32.gmra.mxu0 %v1053
    %v7289 = vpop.f32.mrf.mxu0
    %v7290 = vadd.f32 0.0, %v7289
    %v7291 = vpop.f32.mrf.mxu0
    %7292 = vdwg.mxu0
    %v7293 = vadd.f32 %v7037, %v7255
    %v7294 = vadd.f32 %v7042, %v7260
    %v7295 = vadd.f32 %v7047, %v7265
    %v7296 = vadd.f32 %v7052, %v7270
    %v7297 = vadd.f32 %v7057, %v7275
    %v7298 = vadd.f32 %v7062, %v7280
    %v7299 = vadd.f32 %v7067, %v7285
    %v7300 = vadd.f32 %v7072, %v7290
    %7301 = vmatprep.subr.mxu0 %v271
    %7302 = vmatpush1.msra.mxu0 %v270
    %7303 = vmatprep.subr.mxu0 %v269
    %7304 = vmatpush1.msra.mxu0 %v268
    %7305 = vmatprep.subr.mxu0 %v267
    %7306 = vmatpush1.msra.mxu0 %v266
    %7307 = vmatprep.subr.mxu0 %v265
    %7308 = vmatpush1.msra.mxu0 %v264
    %7309 = vmatprep.subr.mxu0 %v263
    %7310 = vmatpush1.msra.mxu0 %v262
    %7311 = vmatprep.subr.mxu0 %v261
    %7312 = vmatpush1.msra.mxu0 %v260
    %7313 = vmatprep.subr.mxu0 %v259
    %7314 = vmatpush1.msra.mxu0 %v258
    %7315 = vmatprep.subr.mxu0 %v257
    %7316 = vmatpush1.msra.mxu0 %v256
    %7317 = vmatprep.subr.mxu0 %v255
    %7318 = vmatpush1.msra.mxu0 %v254
    %7319 = vmatprep.subr.mxu0 %v253
    %7320 = vmatpush1.msra.mxu0 %v252
    %7321 = vmatprep.subr.mxu0 %v251
    %7322 = vmatpush1.msra.mxu0 %v250
    %7323 = vmatprep.subr.mxu0 %v249
    %7324 = vmatpush1.msra.mxu0 %v248
    %7325 = vmatprep.subr.mxu0 %v247
    %7326 = vmatpush1.msra.mxu0 %v246
    %7327 = vmatprep.subr.mxu0 %v245
    %7328 = vmatpush1.msra.mxu0 %v244
    %7329 = vmatprep.subr.mxu0 %v243
    %7330 = vmatpush1.msra.mxu0 %v242
    %7331 = vmatprep.subr.mxu0 %v241
    %7332 = vmatpush1.msra.mxu0 %v240
    %7333 = vmatprep.subr.mxu0 %v303
    %7334 = vmatpush2.msra.mxu0 %v302
    %7335 = vmatprep.subr.mxu0 %v301
    %7336 = vmatpush2.msra.mxu0 %v300
    %7337 = vmatprep.subr.mxu0 %v299
    %7338 = vmatpush2.msra.mxu0 %v298
    %7339 = vmatprep.subr.mxu0 %v297
    %7340 = vmatpush2.msra.mxu0 %v296
    %7341 = vmatprep.subr.mxu0 %v295
    %7342 = vmatpush2.msra.mxu0 %v294
    %7343 = vmatprep.subr.mxu0 %v293
    %7344 = vmatpush2.msra.mxu0 %v292
    %7345 = vmatprep.subr.mxu0 %v291
    %7346 = vmatpush2.msra.mxu0 %v290
    %7347 = vmatprep.subr.mxu0 %v289
    %7348 = vmatpush2.msra.mxu0 %v288
    %7349 = vmatprep.subr.mxu0 %v287
    %7350 = vmatpush2.msra.mxu0 %v286
    %7351 = vmatprep.subr.mxu0 %v285
    %7352 = vmatpush2.msra.mxu0 %v284
    %7353 = vmatprep.subr.mxu0 %v283
    %7354 = vmatpush2.msra.mxu0 %v282
    %7355 = vmatprep.subr.mxu0 %v281
    %7356 = vmatpush2.msra.mxu0 %v280
    %7357 = vmatprep.subr.mxu0 %v279
    %7358 = vmatpush2.msra.mxu0 %v278
    %7359 = vmatprep.subr.mxu0 %v277
    %7360 = vmatpush2.msra.mxu0 %v276
    %7361 = vmatprep.subr.mxu0 %v275
    %7362 = vmatpush2.msra.mxu0 %v274
    %7363 = vmatprep.subr.mxu0 %v273
    %7364 = vmatpush2.msra.mxu0 %v272
    %7365 = vmatprep.mubr.f32.mxu0 %v7293
    %7366 = vmatmul.mubr.f32.gmra.mxu0 %v7180
    %v7367 = vpop.f32.mrf.mxu0
    %v7368 = vadd.f32 0.0, %v7367
    %v7369 = vpop.f32.mrf.mxu0
    %7370 = vmatprep.mubr.f32.mxu0 %v7294
    %7371 = vmatmul.mubr.f32.gmra.mxu0 %v7181
    %v7372 = vpop.f32.mrf.mxu0
    %v7373 = vadd.f32 0.0, %v7372
    %v7374 = vpop.f32.mrf.mxu0
    %7375 = vmatprep.mubr.f32.mxu0 %v7295
    %7376 = vmatmul.mubr.f32.gmra.mxu0 %v7182
    %v7377 = vpop.f32.mrf.mxu0
    %v7378 = vadd.f32 0.0, %v7377
    %v7379 = vpop.f32.mrf.mxu0
    %7380 = vmatprep.mubr.f32.mxu0 %v7296
    %7381 = vmatmul.mubr.f32.gmra.mxu0 %v7183
    %v7382 = vpop.f32.mrf.mxu0
    %v7383 = vadd.f32 0.0, %v7382
    %v7384 = vpop.f32.mrf.mxu0
    %7385 = vmatprep.mubr.f32.mxu0 %v7297
    %7386 = vmatmul.mubr.f32.gmra.mxu0 %v7184
    %v7387 = vpop.f32.mrf.mxu0
    %v7388 = vadd.f32 0.0, %v7387
    %v7389 = vpop.f32.mrf.mxu0
    %7390 = vmatprep.mubr.f32.mxu0 %v7298
    %7391 = vmatmul.mubr.f32.gmra.mxu0 %v7185
    %v7392 = vpop.f32.mrf.mxu0
    %v7393 = vadd.f32 0.0, %v7392
    %v7394 = vpop.f32.mrf.mxu0
    %7395 = vmatprep.mubr.f32.mxu0 %v7299
    %7396 = vmatmul.mubr.f32.gmra.mxu0 %v7186
    %v7397 = vpop.f32.mrf.mxu0
    %v7398 = vadd.f32 0.0, %v7397
    %v7399 = vpop.f32.mrf.mxu0
    %7400 = vmatprep.mubr.f32.mxu0 %v7300
    %7401 = vmatmul.mubr.f32.gmra.mxu0 %v7187
    %v7402 = vpop.f32.mrf.mxu0
    %v7403 = vadd.f32 0.0, %v7402
    %v7404 = vpop.f32.mrf.mxu0
    %7405 = vdwg.mxu0
    %s7406 = scalar_lea.vmem [#allocation11], 192
    %v7407 = vld [vmem:[%s7406] sm:$0xff]
    %v7408 = vld [vmem:[%s7406 + $0x8] sm:$0xff]
    %v7409 = vld [vmem:[%s7406 + $0x10] sm:$0xff]
    %v7410 = vld [vmem:[%s7406 + $0x18] sm:$0xff]
    %v7411 = vld [vmem:[%s7406 + $0x20] sm:$0xff]
    %v7412 = vld [vmem:[%s7406 + $0x28] sm:$0xff]
    %v7413 = vld [vmem:[%s7406 + $0x30] sm:$0xff]
    %v7414 = vld [vmem:[%s7406 + $0x38] sm:$0xff]
    %s7415 = scalar_lea.vmem [#allocation11], 704
    %v7416 = vld [vmem:[%s7415] sm:$0xff]
    %v7417 = vld [vmem:[%s7415 + $0x8] sm:$0xff]
    %v7418 = vld [vmem:[%s7415 + $0x10] sm:$0xff]
    %v7419 = vld [vmem:[%s7415 + $0x18] sm:$0xff]
    %v7420 = vld [vmem:[%s7415 + $0x20] sm:$0xff]
    %v7421 = vld [vmem:[%s7415 + $0x28] sm:$0xff]
    %v7422 = vld [vmem:[%s7415 + $0x30] sm:$0xff]
    %v7423 = vld [vmem:[%s7415 + $0x38] sm:$0xff]
    %v7424 = vmul.f32 %v1235, %v7407
    %v7425 = vmul.f32 %v1241, %v7408
    %v7426 = vmul.f32 %v1247, %v7409
    %v7427 = vmul.f32 %v1253, %v7410
    %v7428 = vmul.f32 %v1259, %v7411
    %v7429 = vmul.f32 %v1265, %v7412
    %v7430 = vmul.f32 %v1271, %v7413
    %v7431 = vmul.f32 %v1277, %v7414
    %v7432 = vmul.f32 %v1237, %v7416
    %v7433 = vmul.f32 %v1243, %v7417
    %v7434 = vmul.f32 %v1249, %v7418
    %v7435 = vmul.f32 %v1255, %v7419
    %v7436 = vmul.f32 %v1261, %v7420
    %v7437 = vmul.f32 %v1267, %v7421
    %v7438 = vmul.f32 %v1273, %v7422
    %v7439 = vmul.f32 %v1279, %v7423
    %v7440 = vsub.f32 %v7424, %v7432
    %v7441 = vsub.f32 %v7425, %v7433
    %v7442 = vsub.f32 %v7426, %v7434
    %v7443 = vsub.f32 %v7427, %v7435
    %v7444 = vsub.f32 %v7428, %v7436
    %v7445 = vsub.f32 %v7429, %v7437
    %v7446 = vsub.f32 %v7430, %v7438
    %v7447 = vsub.f32 %v7431, %v7439
    %v7448 = vmul.f32 %v1235, %v7416
    %v7449 = vmul.f32 %v1241, %v7417
    %v7450 = vmul.f32 %v1247, %v7418
    %v7451 = vmul.f32 %v1253, %v7419
    %v7452 = vmul.f32 %v1259, %v7420
    %v7453 = vmul.f32 %v1265, %v7421
    %v7454 = vmul.f32 %v1271, %v7422
    %v7455 = vmul.f32 %v1277, %v7423
    %v7456 = vmul.f32 %v1237, %v7407
    %v7457 = vmul.f32 %v1243, %v7408
    %v7458 = vmul.f32 %v1249, %v7409
    %v7459 = vmul.f32 %v1255, %v7410
    %v7460 = vmul.f32 %v1261, %v7411
    %v7461 = vmul.f32 %v1267, %v7412
    %v7462 = vmul.f32 %v1273, %v7413
    %v7463 = vmul.f32 %v1279, %v7414
    %v7464 = vadd.f32 %v7448, %v7456
    %v7465 = vadd.f32 %v7449, %v7457
    %v7466 = vadd.f32 %v7450, %v7458
    %v7467 = vadd.f32 %v7451, %v7459
    %v7468 = vadd.f32 %v7452, %v7460
    %v7469 = vadd.f32 %v7453, %v7461
    %v7470 = vadd.f32 %v7454, %v7462
    %v7471 = vadd.f32 %v7455, %v7463
    %v7472 = vadd.f32 %v7440, %v7464
    %v7473 = vadd.f32 %v7441, %v7465
    %v7474 = vadd.f32 %v7442, %v7466
    %v7475 = vadd.f32 %v7443, %v7467
    %v7476 = vadd.f32 %v7444, %v7468
    %v7477 = vadd.f32 %v7445, %v7469
    %v7478 = vadd.f32 %v7446, %v7470
    %v7479 = vadd.f32 %v7447, %v7471
    %7480 = vmatprep.subr.mxu0 0.0
    %7481 = vmatpush1.msra.mxu0 0.0
    %7482 = vmatprep.subr.mxu0 0.0
    %7483 = vmatpush1.msra.mxu0 0.0
    %7484 = vmatprep.subr.mxu0 0.0
    %7485 = vmatpush1.msra.mxu0 0.0
    %7486 = vmatprep.subr.mxu0 0.0
    %7487 = vmatpush1.msra.mxu0 0.0
    %7488 = vmatprep.subr.mxu0 0.0
    %7489 = vmatpush1.msra.mxu0 0.0
    %7490 = vmatprep.subr.mxu0 0.0
    %7491 = vmatpush1.msra.mxu0 0.0
    %7492 = vmatprep.subr.mxu0 0.0
    %7493 = vmatpush1.msra.mxu0 0.0
    %7494 = vmatprep.subr.mxu0 0.0
    %7495 = vmatpush1.msra.mxu0 0.0
    %7496 = vmatprep.subr.mxu0 0.0
    %7497 = vmatpush1.msra.mxu0 %v7479
    %7498 = vmatprep.subr.mxu0 0.0
    %7499 = vmatpush1.msra.mxu0 %v7478
    %7500 = vmatprep.subr.mxu0 0.0
    %7501 = vmatpush1.msra.mxu0 %v7477
    %7502 = vmatprep.subr.mxu0 0.0
    %7503 = vmatpush1.msra.mxu0 %v7476
    %7504 = vmatprep.subr.mxu0 0.0
    %7505 = vmatpush1.msra.mxu0 %v7475
    %7506 = vmatprep.subr.mxu0 0.0
    %7507 = vmatpush1.msra.mxu0 %v7474
    %7508 = vmatprep.subr.mxu0 0.0
    %7509 = vmatpush1.msra.mxu0 %v7473
    %7510 = vmatprep.subr.mxu0 0.0
    %7511 = vmatpush1.msra.mxu0 %v7472
    %7512 = vmatprep.subr.mxu0 0.0
    %7513 = vmatpush2.msra.mxu0 0.0
    %7514 = vmatprep.subr.mxu0 0.0
    %7515 = vmatpush2.msra.mxu0 0.0
    %7516 = vmatprep.subr.mxu0 0.0
    %7517 = vmatpush2.msra.mxu0 0.0
    %7518 = vmatprep.subr.mxu0 0.0
    %7519 = vmatpush2.msra.mxu0 0.0
    %7520 = vmatprep.subr.mxu0 0.0
    %7521 = vmatpush2.msra.mxu0 0.0
    %7522 = vmatprep.subr.mxu0 0.0
    %7523 = vmatpush2.msra.mxu0 0.0
    %7524 = vmatprep.subr.mxu0 0.0
    %7525 = vmatpush2.msra.mxu0 0.0
    %7526 = vmatprep.subr.mxu0 0.0
    %7527 = vmatpush2.msra.mxu0 0.0
    %7528 = vmatprep.subr.mxu0 0.0
    %7529 = vmatpush2.msra.mxu0 0.0
    %7530 = vmatprep.subr.mxu0 0.0
    %7531 = vmatpush2.msra.mxu0 0.0
    %7532 = vmatprep.subr.mxu0 0.0
    %7533 = vmatpush2.msra.mxu0 0.0
    %7534 = vmatprep.subr.mxu0 0.0
    %7535 = vmatpush2.msra.mxu0 0.0
    %7536 = vmatprep.subr.mxu0 0.0
    %7537 = vmatpush2.msra.mxu0 0.0
    %7538 = vmatprep.subr.mxu0 0.0
    %7539 = vmatpush2.msra.mxu0 0.0
    %7540 = vmatprep.subr.mxu0 0.0
    %7541 = vmatpush2.msra.mxu0 0.0
    %7542 = vmatprep.subr.mxu0 0.0
    %7543 = vmatpush2.msra.mxu0 0.0
    %7544 = vmatprep.mubr.f32.mxu0 0.0
    %7545 = vmatmul.mubr.f32.gmra.mxu0 %v314
    %v7546 = vpop.f32.mrf.mxu0
    %v7547 = vadd.f32 0.0, %v7546
    %v7548 = vpop.f32.mrf.mxu0
    %7549 = vmatprep.mubr.f32.mxu0 0.0
    %7550 = vmatmul.mubr.f32.gmra.mxu0 %v317
    %v7551 = vpop.f32.mrf.mxu0
    %v7552 = vadd.f32 0.0, %v7551
    %v7553 = vpop.f32.mrf.mxu0
    %7554 = vmatprep.mubr.f32.mxu0 0.0
    %7555 = vmatmul.mubr.f32.gmra.mxu0 %v320
    %v7556 = vpop.f32.mrf.mxu0
    %v7557 = vadd.f32 0.0, %v7556
    %v7558 = vpop.f32.mrf.mxu0
    %7559 = vmatprep.mubr.f32.mxu0 0.0
    %7560 = vmatmul.mubr.f32.gmra.mxu0 %v323
    %v7561 = vpop.f32.mrf.mxu0
    %v7562 = vadd.f32 0.0, %v7561
    %v7563 = vpop.f32.mrf.mxu0
    %7564 = vmatprep.mubr.f32.mxu0 0.0
    %7565 = vmatmul.mubr.f32.gmra.mxu0 %v326
    %v7566 = vpop.f32.mrf.mxu0
    %v7567 = vadd.f32 0.0, %v7566
    %v7568 = vpop.f32.mrf.mxu0
    %7569 = vmatprep.mubr.f32.mxu0 0.0
    %7570 = vmatmul.mubr.f32.gmra.mxu0 %v329
    %v7571 = vpop.f32.mrf.mxu0
    %v7572 = vadd.f32 0.0, %v7571
    %v7573 = vpop.f32.mrf.mxu0
    %7574 = vmatprep.mubr.f32.mxu0 0.0
    %7575 = vmatmul.mubr.f32.gmra.mxu0 %v332
    %v7576 = vpop.f32.mrf.mxu0
    %v7577 = vadd.f32 0.0, %v7576
    %v7578 = vpop.f32.mrf.mxu0
    %7579 = vmatprep.mubr.f32.mxu0 0.0
    %7580 = vmatmul.mubr.f32.gmra.mxu0 %v335
    %v7581 = vpop.f32.mrf.mxu0
    %v7582 = vadd.f32 0.0, %v7581
    %v7583 = vpop.f32.mrf.mxu0
    %7584 = vdwg.mxu0
    %7585 = vmatprep.subr.mxu0 0.0
    %7586 = vmatpush1.msra.mxu0 0.0
    %7587 = vmatprep.subr.mxu0 0.0
    %7588 = vmatpush1.msra.mxu0 0.0
    %7589 = vmatprep.subr.mxu0 0.0
    %7590 = vmatpush1.msra.mxu0 0.0
    %7591 = vmatprep.subr.mxu0 0.0
    %7592 = vmatpush1.msra.mxu0 0.0
    %7593 = vmatprep.subr.mxu0 0.0
    %7594 = vmatpush1.msra.mxu0 0.0
    %7595 = vmatprep.subr.mxu0 0.0
    %7596 = vmatpush1.msra.mxu0 0.0
    %7597 = vmatprep.subr.mxu0 0.0
    %7598 = vmatpush1.msra.mxu0 0.0
    %7599 = vmatprep.subr.mxu0 0.0
    %7600 = vmatpush1.msra.mxu0 0.0
    %7601 = vmatprep.subr.mxu0 0.0
    %7602 = vmatpush1.msra.mxu0 %v7471
    %7603 = vmatprep.subr.mxu0 0.0
    %7604 = vmatpush1.msra.mxu0 %v7470
    %7605 = vmatprep.subr.mxu0 0.0
    %7606 = vmatpush1.msra.mxu0 %v7469
    %7607 = vmatprep.subr.mxu0 0.0
    %7608 = vmatpush1.msra.mxu0 %v7468
    %7609 = vmatprep.subr.mxu0 0.0
    %7610 = vmatpush1.msra.mxu0 %v7467
    %7611 = vmatprep.subr.mxu0 0.0
    %7612 = vmatpush1.msra.mxu0 %v7466
    %7613 = vmatprep.subr.mxu0 0.0
    %7614 = vmatpush1.msra.mxu0 %v7465
    %7615 = vmatprep.subr.mxu0 0.0
    %7616 = vmatpush1.msra.mxu0 %v7464
    %7617 = vmatprep.subr.mxu0 0.0
    %7618 = vmatpush2.msra.mxu0 0.0
    %7619 = vmatprep.subr.mxu0 0.0
    %7620 = vmatpush2.msra.mxu0 0.0
    %7621 = vmatprep.subr.mxu0 0.0
    %7622 = vmatpush2.msra.mxu0 0.0
    %7623 = vmatprep.subr.mxu0 0.0
    %7624 = vmatpush2.msra.mxu0 0.0
    %7625 = vmatprep.subr.mxu0 0.0
    %7626 = vmatpush2.msra.mxu0 0.0
    %7627 = vmatprep.subr.mxu0 0.0
    %7628 = vmatpush2.msra.mxu0 0.0
    %7629 = vmatprep.subr.mxu0 0.0
    %7630 = vmatpush2.msra.mxu0 0.0
    %7631 = vmatprep.subr.mxu0 0.0
    %7632 = vmatpush2.msra.mxu0 0.0
    %7633 = vmatprep.subr.mxu0 0.0
    %7634 = vmatpush2.msra.mxu0 0.0
    %7635 = vmatprep.subr.mxu0 0.0
    %7636 = vmatpush2.msra.mxu0 0.0
    %7637 = vmatprep.subr.mxu0 0.0
    %7638 = vmatpush2.msra.mxu0 0.0
    %7639 = vmatprep.subr.mxu0 0.0
    %7640 = vmatpush2.msra.mxu0 0.0
    %7641 = vmatprep.subr.mxu0 0.0
    %7642 = vmatpush2.msra.mxu0 0.0
    %7643 = vmatprep.subr.mxu0 0.0
    %7644 = vmatpush2.msra.mxu0 0.0
    %7645 = vmatprep.subr.mxu0 0.0
    %7646 = vmatpush2.msra.mxu0 0.0
    %7647 = vmatprep.subr.mxu0 0.0
    %7648 = vmatpush2.msra.mxu0 0.0
    %7649 = vmatprep.mubr.f32.mxu0 0.0
    %7650 = vmatmul.mubr.f32.gmra.mxu0 %v1478
    %v7651 = vpop.f32.mrf.mxu0
    %v7652 = vadd.f32 0.0, %v7651
    %v7653 = vpop.f32.mrf.mxu0
    %7654 = vmatprep.mubr.f32.mxu0 0.0
    %7655 = vmatmul.mubr.f32.gmra.mxu0 %v1481
    %v7656 = vpop.f32.mrf.mxu0
    %v7657 = vadd.f32 0.0, %v7656
    %v7658 = vpop.f32.mrf.mxu0
    %7659 = vmatprep.mubr.f32.mxu0 0.0
    %7660 = vmatmul.mubr.f32.gmra.mxu0 %v1484
    %v7661 = vpop.f32.mrf.mxu0
    %v7662 = vadd.f32 0.0, %v7661
    %v7663 = vpop.f32.mrf.mxu0
    %7664 = vmatprep.mubr.f32.mxu0 0.0
    %7665 = vmatmul.mubr.f32.gmra.mxu0 %v1487
    %v7666 = vpop.f32.mrf.mxu0
    %v7667 = vadd.f32 0.0, %v7666
    %v7668 = vpop.f32.mrf.mxu0
    %7669 = vmatprep.mubr.f32.mxu0 0.0
    %7670 = vmatmul.mubr.f32.gmra.mxu0 %v1490
    %v7671 = vpop.f32.mrf.mxu0
    %v7672 = vadd.f32 0.0, %v7671
    %v7673 = vpop.f32.mrf.mxu0
    %7674 = vmatprep.mubr.f32.mxu0 0.0
    %7675 = vmatmul.mubr.f32.gmra.mxu0 %v1493
    %v7676 = vpop.f32.mrf.mxu0
    %v7677 = vadd.f32 0.0, %v7676
    %v7678 = vpop.f32.mrf.mxu0
    %7679 = vmatprep.mubr.f32.mxu0 0.0
    %7680 = vmatmul.mubr.f32.gmra.mxu0 %v1496
    %v7681 = vpop.f32.mrf.mxu0
    %v7682 = vadd.f32 0.0, %v7681
    %v7683 = vpop.f32.mrf.mxu0
    %7684 = vmatprep.mubr.f32.mxu0 0.0
    %7685 = vmatmul.mubr.f32.gmra.mxu0 %v1499
    %v7686 = vpop.f32.mrf.mxu0
    %v7687 = vadd.f32 0.0, %v7686
    %v7688 = vpop.f32.mrf.mxu0
    %7689 = vdwg.mxu0
    %v7690 = vsub.f32 %v7547, %v7652
    %v7691 = vsub.f32 %v7552, %v7657
    %v7692 = vsub.f32 %v7557, %v7662
    %v7693 = vsub.f32 %v7562, %v7667
    %v7694 = vsub.f32 %v7567, %v7672
    %v7695 = vsub.f32 %v7572, %v7677
    %v7696 = vsub.f32 %v7577, %v7682
    %v7697 = vsub.f32 %v7582, %v7687
    %7698 = vmatprep.subr.mxu0 0.0
    %7699 = vmatpush1.msra.mxu0 0.0
    %7700 = vmatprep.subr.mxu0 0.0
    %7701 = vmatpush1.msra.mxu0 0.0
    %7702 = vmatprep.subr.mxu0 0.0
    %7703 = vmatpush1.msra.mxu0 0.0
    %7704 = vmatprep.subr.mxu0 0.0
    %7705 = vmatpush1.msra.mxu0 0.0
    %7706 = vmatprep.subr.mxu0 0.0
    %7707 = vmatpush1.msra.mxu0 0.0
    %7708 = vmatprep.subr.mxu0 0.0
    %7709 = vmatpush1.msra.mxu0 0.0
    %7710 = vmatprep.subr.mxu0 0.0
    %7711 = vmatpush1.msra.mxu0 0.0
    %7712 = vmatprep.subr.mxu0 0.0
    %7713 = vmatpush1.msra.mxu0 0.0
    %7714 = vmatprep.subr.mxu0 0.0
    %7715 = vmatpush1.msra.mxu0 %v7447
    %7716 = vmatprep.subr.mxu0 0.0
    %7717 = vmatpush1.msra.mxu0 %v7446
    %7718 = vmatprep.subr.mxu0 0.0
    %7719 = vmatpush1.msra.mxu0 %v7445
    %7720 = vmatprep.subr.mxu0 0.0
    %7721 = vmatpush1.msra.mxu0 %v7444
    %7722 = vmatprep.subr.mxu0 0.0
    %7723 = vmatpush1.msra.mxu0 %v7443
    %7724 = vmatprep.subr.mxu0 0.0
    %7725 = vmatpush1.msra.mxu0 %v7442
    %7726 = vmatprep.subr.mxu0 0.0
    %7727 = vmatpush1.msra.mxu0 %v7441
    %7728 = vmatprep.subr.mxu0 0.0
    %7729 = vmatpush1.msra.mxu0 %v7440
    %7730 = vmatprep.subr.mxu0 0.0
    %7731 = vmatpush2.msra.mxu0 0.0
    %7732 = vmatprep.subr.mxu0 0.0
    %7733 = vmatpush2.msra.mxu0 0.0
    %7734 = vmatprep.subr.mxu0 0.0
    %7735 = vmatpush2.msra.mxu0 0.0
    %7736 = vmatprep.subr.mxu0 0.0
    %7737 = vmatpush2.msra.mxu0 0.0
    %7738 = vmatprep.subr.mxu0 0.0
    %7739 = vmatpush2.msra.mxu0 0.0
    %7740 = vmatprep.subr.mxu0 0.0
    %7741 = vmatpush2.msra.mxu0 0.0
    %7742 = vmatprep.subr.mxu0 0.0
    %7743 = vmatpush2.msra.mxu0 0.0
    %7744 = vmatprep.subr.mxu0 0.0
    %7745 = vmatpush2.msra.mxu0 0.0
    %7746 = vmatprep.subr.mxu0 0.0
    %7747 = vmatpush2.msra.mxu0 0.0
    %7748 = vmatprep.subr.mxu0 0.0
    %7749 = vmatpush2.msra.mxu0 0.0
    %7750 = vmatprep.subr.mxu0 0.0
    %7751 = vmatpush2.msra.mxu0 0.0
    %7752 = vmatprep.subr.mxu0 0.0
    %7753 = vmatpush2.msra.mxu0 0.0
    %7754 = vmatprep.subr.mxu0 0.0
    %7755 = vmatpush2.msra.mxu0 0.0
    %7756 = vmatprep.subr.mxu0 0.0
    %7757 = vmatpush2.msra.mxu0 0.0
    %7758 = vmatprep.subr.mxu0 0.0
    %7759 = vmatpush2.msra.mxu0 0.0
    %7760 = vmatprep.subr.mxu0 0.0
    %7761 = vmatpush2.msra.mxu0 0.0
    %7762 = vmatprep.mubr.f32.mxu0 0.0
    %7763 = vmatmul.mubr.f32.gmra.mxu0 %v443
    %v7764 = vpop.f32.mrf.mxu0
    %v7765 = vadd.f32 0.0, %v7764
    %v7766 = vpop.f32.mrf.mxu0
    %7767 = vmatprep.mubr.f32.mxu0 0.0
    %7768 = vmatmul.mubr.f32.gmra.mxu0 %v446
    %v7769 = vpop.f32.mrf.mxu0
    %v7770 = vadd.f32 0.0, %v7769
    %v7771 = vpop.f32.mrf.mxu0
    %7772 = vmatprep.mubr.f32.mxu0 0.0
    %7773 = vmatmul.mubr.f32.gmra.mxu0 %v449
    %v7774 = vpop.f32.mrf.mxu0
    %v7775 = vadd.f32 0.0, %v7774
    %v7776 = vpop.f32.mrf.mxu0
    %7777 = vmatprep.mubr.f32.mxu0 0.0
    %7778 = vmatmul.mubr.f32.gmra.mxu0 %v452
    %v7779 = vpop.f32.mrf.mxu0
    %v7780 = vadd.f32 0.0, %v7779
    %v7781 = vpop.f32.mrf.mxu0
    %7782 = vmatprep.mubr.f32.mxu0 0.0
    %7783 = vmatmul.mubr.f32.gmra.mxu0 %v455
    %v7784 = vpop.f32.mrf.mxu0
    %v7785 = vadd.f32 0.0, %v7784
    %v7786 = vpop.f32.mrf.mxu0
    %7787 = vmatprep.mubr.f32.mxu0 0.0
    %7788 = vmatmul.mubr.f32.gmra.mxu0 %v458
    %v7789 = vpop.f32.mrf.mxu0
    %v7790 = vadd.f32 0.0, %v7789
    %v7791 = vpop.f32.mrf.mxu0
    %7792 = vmatprep.mubr.f32.mxu0 0.0
    %7793 = vmatmul.mubr.f32.gmra.mxu0 %v461
    %v7794 = vpop.f32.mrf.mxu0
    %v7795 = vadd.f32 0.0, %v7794
    %v7796 = vpop.f32.mrf.mxu0
    %7797 = vmatprep.mubr.f32.mxu0 0.0
    %7798 = vmatmul.mubr.f32.gmra.mxu0 %v464
    %v7799 = vpop.f32.mrf.mxu0
    %v7800 = vadd.f32 0.0, %v7799
    %v7801 = vpop.f32.mrf.mxu0
    %7802 = vdwg.mxu0
    %v7803 = vadd.f32 %v7547, %v7765
    %v7804 = vadd.f32 %v7552, %v7770
    %v7805 = vadd.f32 %v7557, %v7775
    %v7806 = vadd.f32 %v7562, %v7780
    %v7807 = vadd.f32 %v7567, %v7785
    %v7808 = vadd.f32 %v7572, %v7790
    %v7809 = vadd.f32 %v7577, %v7795
    %v7810 = vadd.f32 %v7582, %v7800
    %7811 = vmatprep.subr.mxu0 %v206
    %7812 = vmatpush1.msra.mxu0 %v205
    %7813 = vmatprep.subr.mxu0 %v204
    %7814 = vmatpush1.msra.mxu0 %v203
    %7815 = vmatprep.subr.mxu0 %v202
    %7816 = vmatpush1.msra.mxu0 %v201
    %7817 = vmatprep.subr.mxu0 %v200
    %7818 = vmatpush1.msra.mxu0 %v199
    %7819 = vmatprep.subr.mxu0 %v198
    %7820 = vmatpush1.msra.mxu0 %v197
    %7821 = vmatprep.subr.mxu0 %v196
    %7822 = vmatpush1.msra.mxu0 %v195
    %7823 = vmatprep.subr.mxu0 %v194
    %7824 = vmatpush1.msra.mxu0 %v193
    %7825 = vmatprep.subr.mxu0 %v192
    %7826 = vmatpush1.msra.mxu0 %v191
    %7827 = vmatprep.subr.mxu0 %v190
    %7828 = vmatpush1.msra.mxu0 %v189
    %7829 = vmatprep.subr.mxu0 %v188
    %7830 = vmatpush1.msra.mxu0 %v187
    %7831 = vmatprep.subr.mxu0 %v186
    %7832 = vmatpush1.msra.mxu0 %v185
    %7833 = vmatprep.subr.mxu0 %v184
    %7834 = vmatpush1.msra.mxu0 %v183
    %7835 = vmatprep.subr.mxu0 %v182
    %7836 = vmatpush1.msra.mxu0 %v181
    %7837 = vmatprep.subr.mxu0 %v180
    %7838 = vmatpush1.msra.mxu0 %v179
    %7839 = vmatprep.subr.mxu0 %v178
    %7840 = vmatpush1.msra.mxu0 %v177
    %7841 = vmatprep.subr.mxu0 %v176
    %7842 = vmatpush1.msra.mxu0 %v175
    %7843 = vmatprep.subr.mxu0 %v238
    %7844 = vmatpush2.msra.mxu0 %v237
    %7845 = vmatprep.subr.mxu0 %v236
    %7846 = vmatpush2.msra.mxu0 %v235
    %7847 = vmatprep.subr.mxu0 %v234
    %7848 = vmatpush2.msra.mxu0 %v233
    %7849 = vmatprep.subr.mxu0 %v232
    %7850 = vmatpush2.msra.mxu0 %v231
    %7851 = vmatprep.subr.mxu0 %v230
    %7852 = vmatpush2.msra.mxu0 %v229
    %7853 = vmatprep.subr.mxu0 %v228
    %7854 = vmatpush2.msra.mxu0 %v227
    %7855 = vmatprep.subr.mxu0 %v226
    %7856 = vmatpush2.msra.mxu0 %v225
    %7857 = vmatprep.subr.mxu0 %v224
    %7858 = vmatpush2.msra.mxu0 %v223
    %7859 = vmatprep.subr.mxu0 %v222
    %7860 = vmatpush2.msra.mxu0 %v221
    %7861 = vmatprep.subr.mxu0 %v220
    %7862 = vmatpush2.msra.mxu0 %v219
    %7863 = vmatprep.subr.mxu0 %v218
    %7864 = vmatpush2.msra.mxu0 %v217
    %7865 = vmatprep.subr.mxu0 %v216
    %7866 = vmatpush2.msra.mxu0 %v215
    %7867 = vmatprep.subr.mxu0 %v214
    %7868 = vmatpush2.msra.mxu0 %v213
    %7869 = vmatprep.subr.mxu0 %v212
    %7870 = vmatpush2.msra.mxu0 %v211
    %7871 = vmatprep.subr.mxu0 %v210
    %7872 = vmatpush2.msra.mxu0 %v209
    %7873 = vmatprep.subr.mxu0 %v208
    %7874 = vmatpush2.msra.mxu0 %v207
    %7875 = vmatprep.mubr.f32.mxu0 %v7803
    %7876 = vmatmul.mubr.f32.gmra.mxu0 %v7690
    %v7877 = vpop.f32.mrf.mxu0
    %v7878 = vadd.f32 0.0, %v7877
    %v7879 = vpop.f32.mrf.mxu0
    %v7880 = vadd.f32 0.0, %v7879
    %7881 = vmatprep.mubr.f32.mxu0 %v7804
    %7882 = vmatmul.mubr.f32.gmra.mxu0 %v7691
    %v7883 = vpop.f32.mrf.mxu0
    %v7884 = vadd.f32 0.0, %v7883
    %v7885 = vpop.f32.mrf.mxu0
    %v7886 = vadd.f32 0.0, %v7885
    %7887 = vmatprep.mubr.f32.mxu0 %v7805
    %7888 = vmatmul.mubr.f32.gmra.mxu0 %v7692
    %v7889 = vpop.f32.mrf.mxu0
    %v7890 = vadd.f32 0.0, %v7889
    %v7891 = vpop.f32.mrf.mxu0
    %v7892 = vadd.f32 0.0, %v7891
    %7893 = vmatprep.mubr.f32.mxu0 %v7806
    %7894 = vmatmul.mubr.f32.gmra.mxu0 %v7693
    %v7895 = vpop.f32.mrf.mxu0
    %v7896 = vadd.f32 0.0, %v7895
    %v7897 = vpop.f32.mrf.mxu0
    %v7898 = vadd.f32 0.0, %v7897
    %7899 = vmatprep.mubr.f32.mxu0 %v7807
    %7900 = vmatmul.mubr.f32.gmra.mxu0 %v7694
    %v7901 = vpop.f32.mrf.mxu0
    %v7902 = vadd.f32 0.0, %v7901
    %v7903 = vpop.f32.mrf.mxu0
    %v7904 = vadd.f32 0.0, %v7903
    %7905 = vmatprep.mubr.f32.mxu0 %v7808
    %7906 = vmatmul.mubr.f32.gmra.mxu0 %v7695
    %v7907 = vpop.f32.mrf.mxu0
    %v7908 = vadd.f32 0.0, %v7907
    %v7909 = vpop.f32.mrf.mxu0
    %v7910 = vadd.f32 0.0, %v7909
    %7911 = vmatprep.mubr.f32.mxu0 %v7809
    %7912 = vmatmul.mubr.f32.gmra.mxu0 %v7696
    %v7913 = vpop.f32.mrf.mxu0
    %v7914 = vadd.f32 0.0, %v7913
    %v7915 = vpop.f32.mrf.mxu0
    %v7916 = vadd.f32 0.0, %v7915
    %7917 = vmatprep.mubr.f32.mxu0 %v7810
    %7918 = vmatmul.mubr.f32.gmra.mxu0 %v7697
    %v7919 = vpop.f32.mrf.mxu0
    %v7920 = vadd.f32 0.0, %v7919
    %v7921 = vpop.f32.mrf.mxu0
    %v7922 = vadd.f32 0.0, %v7921
    %7923 = vdwg.mxu0
    %v7924 = vmul.f32 %v7878, %v1282
    %v7925 = vmul.f32 %v7884, %v1283
    %v7926 = vmul.f32 %v7890, %v1284
    %v7927 = vmul.f32 %v7896, %v1285
    %v7928 = vmul.f32 %v7902, %v1286
    %v7929 = vmul.f32 %v7908, %v1287
    %v7930 = vmul.f32 %v7914, %v1288
    %v7931 = vmul.f32 %v7920, %v1289
    %v7932 = vmul.f32 %v7880, %v1291
    %v7933 = vmul.f32 %v7886, %v1292
    %v7934 = vmul.f32 %v7892, %v1293
    %v7935 = vmul.f32 %v7898, %v1294
    %v7936 = vmul.f32 %v7904, %v1295
    %v7937 = vmul.f32 %v7910, %v1296
    %v7938 = vmul.f32 %v7916, %v1297
    %v7939 = vmul.f32 %v7922, %v1298
    %v7940 = vsub.f32 %v7924, %v7932
    %v7941 = vsub.f32 %v7925, %v7933
    %v7942 = vsub.f32 %v7926, %v7934
    %v7943 = vsub.f32 %v7927, %v7935
    %v7944 = vsub.f32 %v7928, %v7936
    %v7945 = vsub.f32 %v7929, %v7937
    %v7946 = vsub.f32 %v7930, %v7938
    %v7947 = vsub.f32 %v7931, %v7939
    %v7948 = vmul.f32 %v7878, %v1291
    %v7949 = vmul.f32 %v7884, %v1292
    %v7950 = vmul.f32 %v7890, %v1293
    %v7951 = vmul.f32 %v7896, %v1294
    %v7952 = vmul.f32 %v7902, %v1295
    %v7953 = vmul.f32 %v7908, %v1296
    %v7954 = vmul.f32 %v7914, %v1297
    %v7955 = vmul.f32 %v7920, %v1298
    %v7956 = vmul.f32 %v7880, %v1282
    %v7957 = vmul.f32 %v7886, %v1283
    %v7958 = vmul.f32 %v7892, %v1284
    %v7959 = vmul.f32 %v7898, %v1285
    %v7960 = vmul.f32 %v7904, %v1286
    %v7961 = vmul.f32 %v7910, %v1287
    %v7962 = vmul.f32 %v7916, %v1288
    %v7963 = vmul.f32 %v7922, %v1289
    %v7964 = vadd.f32 %v7948, %v7956
    %v7965 = vadd.f32 %v7949, %v7957
    %v7966 = vadd.f32 %v7950, %v7958
    %v7967 = vadd.f32 %v7951, %v7959
    %v7968 = vadd.f32 %v7952, %v7960
    %v7969 = vadd.f32 %v7953, %v7961
    %v7970 = vadd.f32 %v7954, %v7962
    %v7971 = vadd.f32 %v7955, %v7963
    %v7972 = vadd.f32 %v7940, %v7964
    %v7973 = vadd.f32 %v7941, %v7965
    %v7974 = vadd.f32 %v7942, %v7966
    %v7975 = vadd.f32 %v7943, %v7967
    %v7976 = vadd.f32 %v7944, %v7968
    %v7977 = vadd.f32 %v7945, %v7969
    %v7978 = vadd.f32 %v7946, %v7970
    %v7979 = vadd.f32 %v7947, %v7971
    %7980 = vmatprep.subr.mxu0 0.0
    %7981 = vmatpush1.msra.mxu0 0.0
    %7982 = vmatprep.subr.mxu0 0.0
    %7983 = vmatpush1.msra.mxu0 0.0
    %7984 = vmatprep.subr.mxu0 0.0
    %7985 = vmatpush1.msra.mxu0 0.0
    %7986 = vmatprep.subr.mxu0 0.0
    %7987 = vmatpush1.msra.mxu0 0.0
    %7988 = vmatprep.subr.mxu0 0.0
    %7989 = vmatpush1.msra.mxu0 0.0
    %7990 = vmatprep.subr.mxu0 0.0
    %7991 = vmatpush1.msra.mxu0 0.0
    %7992 = vmatprep.subr.mxu0 0.0
    %7993 = vmatpush1.msra.mxu0 0.0
    %7994 = vmatprep.subr.mxu0 0.0
    %7995 = vmatpush1.msra.mxu0 0.0
    %7996 = vmatprep.subr.mxu0 0.0
    %7997 = vmatpush1.msra.mxu0 %v7979
    %7998 = vmatprep.subr.mxu0 0.0
    %7999 = vmatpush1.msra.mxu0 %v7978
    %8000 = vmatprep.subr.mxu0 0.0
    %8001 = vmatpush1.msra.mxu0 %v7977
    %8002 = vmatprep.subr.mxu0 0.0
    %8003 = vmatpush1.msra.mxu0 %v7976
    %8004 = vmatprep.subr.mxu0 0.0
    %8005 = vmatpush1.msra.mxu0 %v7975
    %8006 = vmatprep.subr.mxu0 0.0
    %8007 = vmatpush1.msra.mxu0 %v7974
    %8008 = vmatprep.subr.mxu0 0.0
    %8009 = vmatpush1.msra.mxu0 %v7973
    %8010 = vmatprep.subr.mxu0 0.0
    %8011 = vmatpush1.msra.mxu0 %v7972
    %8012 = vmatprep.subr.mxu0 0.0
    %8013 = vmatpush2.msra.mxu0 0.0
    %8014 = vmatprep.subr.mxu0 0.0
    %8015 = vmatpush2.msra.mxu0 0.0
    %8016 = vmatprep.subr.mxu0 0.0
    %8017 = vmatpush2.msra.mxu0 0.0
    %8018 = vmatprep.subr.mxu0 0.0
    %8019 = vmatpush2.msra.mxu0 0.0
    %8020 = vmatprep.subr.mxu0 0.0
    %8021 = vmatpush2.msra.mxu0 0.0
    %8022 = vmatprep.subr.mxu0 0.0
    %8023 = vmatpush2.msra.mxu0 0.0
    %8024 = vmatprep.subr.mxu0 0.0
    %8025 = vmatpush2.msra.mxu0 0.0
    %8026 = vmatprep.subr.mxu0 0.0
    %8027 = vmatpush2.msra.mxu0 0.0
    %8028 = vmatprep.subr.mxu0 0.0
    %8029 = vmatpush2.msra.mxu0 0.0
    %8030 = vmatprep.subr.mxu0 0.0
    %8031 = vmatpush2.msra.mxu0 0.0
    %8032 = vmatprep.subr.mxu0 0.0
    %8033 = vmatpush2.msra.mxu0 0.0
    %8034 = vmatprep.subr.mxu0 0.0
    %8035 = vmatpush2.msra.mxu0 0.0
    %8036 = vmatprep.subr.mxu0 0.0
    %8037 = vmatpush2.msra.mxu0 0.0
    %8038 = vmatprep.subr.mxu0 0.0
    %8039 = vmatpush2.msra.mxu0 0.0
    %8040 = vmatprep.subr.mxu0 0.0
    %8041 = vmatpush2.msra.mxu0 0.0
    %8042 = vmatprep.subr.mxu0 0.0
    %8043 = vmatpush2.msra.mxu0 0.0
    %8044 = vmatprep.mubr.f32.mxu0 0.0
    %8045 = vmatmul.mubr.f32.gmra.mxu0 %v766
    %v8046 = vpop.f32.mrf.mxu0
    %v8047 = vadd.f32 0.0, %v8046
    %v8048 = vpop.f32.mrf.mxu0
    %8049 = vmatprep.mubr.f32.mxu0 0.0
    %8050 = vmatmul.mubr.f32.gmra.mxu0 %v769
    %v8051 = vpop.f32.mrf.mxu0
    %v8052 = vadd.f32 0.0, %v8051
    %v8053 = vpop.f32.mrf.mxu0
    %8054 = vmatprep.mubr.f32.mxu0 0.0
    %8055 = vmatmul.mubr.f32.gmra.mxu0 %v772
    %v8056 = vpop.f32.mrf.mxu0
    %v8057 = vadd.f32 0.0, %v8056
    %v8058 = vpop.f32.mrf.mxu0
    %8059 = vmatprep.mubr.f32.mxu0 0.0
    %8060 = vmatmul.mubr.f32.gmra.mxu0 %v775
    %v8061 = vpop.f32.mrf.mxu0
    %v8062 = vadd.f32 0.0, %v8061
    %v8063 = vpop.f32.mrf.mxu0
    %8064 = vmatprep.mubr.f32.mxu0 0.0
    %8065 = vmatmul.mubr.f32.gmra.mxu0 %v778
    %v8066 = vpop.f32.mrf.mxu0
    %v8067 = vadd.f32 0.0, %v8066
    %v8068 = vpop.f32.mrf.mxu0
    %8069 = vmatprep.mubr.f32.mxu0 0.0
    %8070 = vmatmul.mubr.f32.gmra.mxu0 %v781
    %v8071 = vpop.f32.mrf.mxu0
    %v8072 = vadd.f32 0.0, %v8071
    %v8073 = vpop.f32.mrf.mxu0
    %8074 = vmatprep.mubr.f32.mxu0 0.0
    %8075 = vmatmul.mubr.f32.gmra.mxu0 %v784
    %v8076 = vpop.f32.mrf.mxu0
    %v8077 = vadd.f32 0.0, %v8076
    %v8078 = vpop.f32.mrf.mxu0
    %8079 = vmatprep.mubr.f32.mxu0 0.0
    %8080 = vmatmul.mubr.f32.gmra.mxu0 %v787
    %v8081 = vpop.f32.mrf.mxu0
    %v8082 = vadd.f32 0.0, %v8081
    %v8083 = vpop.f32.mrf.mxu0
    %8084 = vdwg.mxu0
    %8085 = vmatprep.subr.mxu0 0.0
    %8086 = vmatpush1.msra.mxu0 0.0
    %8087 = vmatprep.subr.mxu0 0.0
    %8088 = vmatpush1.msra.mxu0 0.0
    %8089 = vmatprep.subr.mxu0 0.0
    %8090 = vmatpush1.msra.mxu0 0.0
    %8091 = vmatprep.subr.mxu0 0.0
    %8092 = vmatpush1.msra.mxu0 0.0
    %8093 = vmatprep.subr.mxu0 0.0
    %8094 = vmatpush1.msra.mxu0 0.0
    %8095 = vmatprep.subr.mxu0 0.0
    %8096 = vmatpush1.msra.mxu0 0.0
    %8097 = vmatprep.subr.mxu0 0.0
    %8098 = vmatpush1.msra.mxu0 0.0
    %8099 = vmatprep.subr.mxu0 0.0
    %8100 = vmatpush1.msra.mxu0 0.0
    %8101 = vmatprep.subr.mxu0 0.0
    %8102 = vmatpush1.msra.mxu0 %v7971
    %8103 = vmatprep.subr.mxu0 0.0
    %8104 = vmatpush1.msra.mxu0 %v7970
    %8105 = vmatprep.subr.mxu0 0.0
    %8106 = vmatpush1.msra.mxu0 %v7969
    %8107 = vmatprep.subr.mxu0 0.0
    %8108 = vmatpush1.msra.mxu0 %v7968
    %8109 = vmatprep.subr.mxu0 0.0
    %8110 = vmatpush1.msra.mxu0 %v7967
    %8111 = vmatprep.subr.mxu0 0.0
    %8112 = vmatpush1.msra.mxu0 %v7966
    %8113 = vmatprep.subr.mxu0 0.0
    %8114 = vmatpush1.msra.mxu0 %v7965
    %8115 = vmatprep.subr.mxu0 0.0
    %8116 = vmatpush1.msra.mxu0 %v7964
    %8117 = vmatprep.subr.mxu0 0.0
    %8118 = vmatpush2.msra.mxu0 0.0
    %8119 = vmatprep.subr.mxu0 0.0
    %8120 = vmatpush2.msra.mxu0 0.0
    %8121 = vmatprep.subr.mxu0 0.0
    %8122 = vmatpush2.msra.mxu0 0.0
    %8123 = vmatprep.subr.mxu0 0.0
    %8124 = vmatpush2.msra.mxu0 0.0
    %8125 = vmatprep.subr.mxu0 0.0
    %8126 = vmatpush2.msra.mxu0 0.0
    %8127 = vmatprep.subr.mxu0 0.0
    %8128 = vmatpush2.msra.mxu0 0.0
    %8129 = vmatprep.subr.mxu0 0.0
    %8130 = vmatpush2.msra.mxu0 0.0
    %8131 = vmatprep.subr.mxu0 0.0
    %8132 = vmatpush2.msra.mxu0 0.0
    %8133 = vmatprep.subr.mxu0 0.0
    %8134 = vmatpush2.msra.mxu0 0.0
    %8135 = vmatprep.subr.mxu0 0.0
    %8136 = vmatpush2.msra.mxu0 0.0
    %8137 = vmatprep.subr.mxu0 0.0
    %8138 = vmatpush2.msra.mxu0 0.0
    %8139 = vmatprep.subr.mxu0 0.0
    %8140 = vmatpush2.msra.mxu0 0.0
    %8141 = vmatprep.subr.mxu0 0.0
    %8142 = vmatpush2.msra.mxu0 0.0
    %8143 = vmatprep.subr.mxu0 0.0
    %8144 = vmatpush2.msra.mxu0 0.0
    %8145 = vmatprep.subr.mxu0 0.0
    %8146 = vmatpush2.msra.mxu0 0.0
    %8147 = vmatprep.subr.mxu0 0.0
    %8148 = vmatpush2.msra.mxu0 0.0
    %8149 = vmatprep.mubr.f32.mxu0 0.0
    %8150 = vmatmul.mubr.f32.gmra.mxu0 %v895
    %v8151 = vpop.f32.mrf.mxu0
    %v8152 = vadd.f32 0.0, %v8151
    %v8153 = vpop.f32.mrf.mxu0
    %8154 = vmatprep.mubr.f32.mxu0 0.0
    %8155 = vmatmul.mubr.f32.gmra.mxu0 %v898
    %v8156 = vpop.f32.mrf.mxu0
    %v8157 = vadd.f32 0.0, %v8156
    %v8158 = vpop.f32.mrf.mxu0
    %8159 = vmatprep.mubr.f32.mxu0 0.0
    %8160 = vmatmul.mubr.f32.gmra.mxu0 %v901
    %v8161 = vpop.f32.mrf.mxu0
    %v8162 = vadd.f32 0.0, %v8161
    %v8163 = vpop.f32.mrf.mxu0
    %8164 = vmatprep.mubr.f32.mxu0 0.0
    %8165 = vmatmul.mubr.f32.gmra.mxu0 %v904
    %v8166 = vpop.f32.mrf.mxu0
    %v8167 = vadd.f32 0.0, %v8166
    %v8168 = vpop.f32.mrf.mxu0
    %8169 = vmatprep.mubr.f32.mxu0 0.0
    %8170 = vmatmul.mubr.f32.gmra.mxu0 %v907
    %v8171 = vpop.f32.mrf.mxu0
    %v8172 = vadd.f32 0.0, %v8171
    %v8173 = vpop.f32.mrf.mxu0
    %8174 = vmatprep.mubr.f32.mxu0 0.0
    %8175 = vmatmul.mubr.f32.gmra.mxu0 %v910
    %v8176 = vpop.f32.mrf.mxu0
    %v8177 = vadd.f32 0.0, %v8176
    %v8178 = vpop.f32.mrf.mxu0
    %8179 = vmatprep.mubr.f32.mxu0 0.0
    %8180 = vmatmul.mubr.f32.gmra.mxu0 %v913
    %v8181 = vpop.f32.mrf.mxu0
    %v8182 = vadd.f32 0.0, %v8181
    %v8183 = vpop.f32.mrf.mxu0
    %8184 = vmatprep.mubr.f32.mxu0 0.0
    %8185 = vmatmul.mubr.f32.gmra.mxu0 %v916
    %v8186 = vpop.f32.mrf.mxu0
    %v8187 = vadd.f32 0.0, %v8186
    %v8188 = vpop.f32.mrf.mxu0
    %8189 = vdwg.mxu0
    %v8190 = vsub.f32 %v8047, %v8152
    %v8191 = vsub.f32 %v8052, %v8157
    %v8192 = vsub.f32 %v8057, %v8162
    %v8193 = vsub.f32 %v8062, %v8167
    %v8194 = vsub.f32 %v8067, %v8172
    %v8195 = vsub.f32 %v8072, %v8177
    %v8196 = vsub.f32 %v8077, %v8182
    %v8197 = vsub.f32 %v8082, %v8187
    %8198 = vmatprep.subr.mxu0 0.0
    %8199 = vmatpush1.msra.mxu0 0.0
    %8200 = vmatprep.subr.mxu0 0.0
    %8201 = vmatpush1.msra.mxu0 0.0
    %8202 = vmatprep.subr.mxu0 0.0
    %8203 = vmatpush1.msra.mxu0 0.0
    %8204 = vmatprep.subr.mxu0 0.0
    %8205 = vmatpush1.msra.mxu0 0.0
    %8206 = vmatprep.subr.mxu0 0.0
    %8207 = vmatpush1.msra.mxu0 0.0
    %8208 = vmatprep.subr.mxu0 0.0
    %8209 = vmatpush1.msra.mxu0 0.0
    %8210 = vmatprep.subr.mxu0 0.0
    %8211 = vmatpush1.msra.mxu0 0.0
    %8212 = vmatprep.subr.mxu0 0.0
    %8213 = vmatpush1.msra.mxu0 0.0
    %8214 = vmatprep.subr.mxu0 0.0
    %8215 = vmatpush1.msra.mxu0 %v7947
    %8216 = vmatprep.subr.mxu0 0.0
    %8217 = vmatpush1.msra.mxu0 %v7946
    %8218 = vmatprep.subr.mxu0 0.0
    %8219 = vmatpush1.msra.mxu0 %v7945
    %8220 = vmatprep.subr.mxu0 0.0
    %8221 = vmatpush1.msra.mxu0 %v7944
    %8222 = vmatprep.subr.mxu0 0.0
    %8223 = vmatpush1.msra.mxu0 %v7943
    %8224 = vmatprep.subr.mxu0 0.0
    %8225 = vmatpush1.msra.mxu0 %v7942
    %8226 = vmatprep.subr.mxu0 0.0
    %8227 = vmatpush1.msra.mxu0 %v7941
    %8228 = vmatprep.subr.mxu0 0.0
    %8229 = vmatpush1.msra.mxu0 %v7940
    %8230 = vmatprep.subr.mxu0 0.0
    %8231 = vmatpush2.msra.mxu0 0.0
    %8232 = vmatprep.subr.mxu0 0.0
    %8233 = vmatpush2.msra.mxu0 0.0
    %8234 = vmatprep.subr.mxu0 0.0
    %8235 = vmatpush2.msra.mxu0 0.0
    %8236 = vmatprep.subr.mxu0 0.0
    %8237 = vmatpush2.msra.mxu0 0.0
    %8238 = vmatprep.subr.mxu0 0.0
    %8239 = vmatpush2.msra.mxu0 0.0
    %8240 = vmatprep.subr.mxu0 0.0
    %8241 = vmatpush2.msra.mxu0 0.0
    %8242 = vmatprep.subr.mxu0 0.0
    %8243 = vmatpush2.msra.mxu0 0.0
    %8244 = vmatprep.subr.mxu0 0.0
    %8245 = vmatpush2.msra.mxu0 0.0
    %8246 = vmatprep.subr.mxu0 0.0
    %8247 = vmatpush2.msra.mxu0 0.0
    %8248 = vmatprep.subr.mxu0 0.0
    %8249 = vmatpush2.msra.mxu0 0.0
    %8250 = vmatprep.subr.mxu0 0.0
    %8251 = vmatpush2.msra.mxu0 0.0
    %8252 = vmatprep.subr.mxu0 0.0
    %8253 = vmatpush2.msra.mxu0 0.0
    %8254 = vmatprep.subr.mxu0 0.0
    %8255 = vmatpush2.msra.mxu0 0.0
    %8256 = vmatprep.subr.mxu0 0.0
    %8257 = vmatpush2.msra.mxu0 0.0
    %8258 = vmatprep.subr.mxu0 0.0
    %8259 = vmatpush2.msra.mxu0 0.0
    %8260 = vmatprep.subr.mxu0 0.0
    %8261 = vmatpush2.msra.mxu0 0.0
    %8262 = vmatprep.mubr.f32.mxu0 0.0
    %8263 = vmatmul.mubr.f32.gmra.mxu0 %v1032
    %v8264 = vpop.f32.mrf.mxu0
    %v8265 = vadd.f32 0.0, %v8264
    %v8266 = vpop.f32.mrf.mxu0
    %8267 = vmatprep.mubr.f32.mxu0 0.0
    %8268 = vmatmul.mubr.f32.gmra.mxu0 %v1035
    %v8269 = vpop.f32.mrf.mxu0
    %v8270 = vadd.f32 0.0, %v8269
    %v8271 = vpop.f32.mrf.mxu0
    %8272 = vmatprep.mubr.f32.mxu0 0.0
    %8273 = vmatmul.mubr.f32.gmra.mxu0 %v1038
    %v8274 = vpop.f32.mrf.mxu0
    %v8275 = vadd.f32 0.0, %v8274
    %v8276 = vpop.f32.mrf.mxu0
    %8277 = vmatprep.mubr.f32.mxu0 0.0
    %8278 = vmatmul.mubr.f32.gmra.mxu0 %v1041
    %v8279 = vpop.f32.mrf.mxu0
    %v8280 = vadd.f32 0.0, %v8279
    %v8281 = vpop.f32.mrf.mxu0
    %8282 = vmatprep.mubr.f32.mxu0 0.0
    %8283 = vmatmul.mubr.f32.gmra.mxu0 %v1044
    %v8284 = vpop.f32.mrf.mxu0
    %v8285 = vadd.f32 0.0, %v8284
    %v8286 = vpop.f32.mrf.mxu0
    %8287 = vmatprep.mubr.f32.mxu0 0.0
    %8288 = vmatmul.mubr.f32.gmra.mxu0 %v1047
    %v8289 = vpop.f32.mrf.mxu0
    %v8290 = vadd.f32 0.0, %v8289
    %v8291 = vpop.f32.mrf.mxu0
    %8292 = vmatprep.mubr.f32.mxu0 0.0
    %8293 = vmatmul.mubr.f32.gmra.mxu0 %v1050
    %v8294 = vpop.f32.mrf.mxu0
    %v8295 = vadd.f32 0.0, %v8294
    %v8296 = vpop.f32.mrf.mxu0
    %8297 = vmatprep.mubr.f32.mxu0 0.0
    %8298 = vmatmul.mubr.f32.gmra.mxu0 %v1053
    %v8299 = vpop.f32.mrf.mxu0
    %v8300 = vadd.f32 0.0, %v8299
    %v8301 = vpop.f32.mrf.mxu0
    %8302 = vdwg.mxu0
    %v8303 = vadd.f32 %v8047, %v8265
    %v8304 = vadd.f32 %v8052, %v8270
    %v8305 = vadd.f32 %v8057, %v8275
    %v8306 = vadd.f32 %v8062, %v8280
    %v8307 = vadd.f32 %v8067, %v8285
    %v8308 = vadd.f32 %v8072, %v8290
    %v8309 = vadd.f32 %v8077, %v8295
    %v8310 = vadd.f32 %v8082, %v8300
    %8311 = vmatprep.subr.mxu0 %v271
    %8312 = vmatpush1.msra.mxu0 %v270
    %8313 = vmatprep.subr.mxu0 %v269
    %8314 = vmatpush1.msra.mxu0 %v268
    %8315 = vmatprep.subr.mxu0 %v267
    %8316 = vmatpush1.msra.mxu0 %v266
    %8317 = vmatprep.subr.mxu0 %v265
    %8318 = vmatpush1.msra.mxu0 %v264
    %8319 = vmatprep.subr.mxu0 %v263
    %8320 = vmatpush1.msra.mxu0 %v262
    %8321 = vmatprep.subr.mxu0 %v261
    %8322 = vmatpush1.msra.mxu0 %v260
    %8323 = vmatprep.subr.mxu0 %v259
    %8324 = vmatpush1.msra.mxu0 %v258
    %8325 = vmatprep.subr.mxu0 %v257
    %8326 = vmatpush1.msra.mxu0 %v256
    %8327 = vmatprep.subr.mxu0 %v255
    %8328 = vmatpush1.msra.mxu0 %v254
    %8329 = vmatprep.subr.mxu0 %v253
    %8330 = vmatpush1.msra.mxu0 %v252
    %8331 = vmatprep.subr.mxu0 %v251
    %8332 = vmatpush1.msra.mxu0 %v250
    %8333 = vmatprep.subr.mxu0 %v249
    %8334 = vmatpush1.msra.mxu0 %v248
    %8335 = vmatprep.subr.mxu0 %v247
    %8336 = vmatpush1.msra.mxu0 %v246
    %8337 = vmatprep.subr.mxu0 %v245
    %8338 = vmatpush1.msra.mxu0 %v244
    %8339 = vmatprep.subr.mxu0 %v243
    %8340 = vmatpush1.msra.mxu0 %v242
    %8341 = vmatprep.subr.mxu0 %v241
    %8342 = vmatpush1.msra.mxu0 %v240
    %8343 = vmatprep.subr.mxu0 %v303
    %8344 = vmatpush2.msra.mxu0 %v302
    %8345 = vmatprep.subr.mxu0 %v301
    %8346 = vmatpush2.msra.mxu0 %v300
    %8347 = vmatprep.subr.mxu0 %v299
    %8348 = vmatpush2.msra.mxu0 %v298
    %8349 = vmatprep.subr.mxu0 %v297
    %8350 = vmatpush2.msra.mxu0 %v296
    %8351 = vmatprep.subr.mxu0 %v295
    %8352 = vmatpush2.msra.mxu0 %v294
    %8353 = vmatprep.subr.mxu0 %v293
    %8354 = vmatpush2.msra.mxu0 %v292
    %8355 = vmatprep.subr.mxu0 %v291
    %8356 = vmatpush2.msra.mxu0 %v290
    %8357 = vmatprep.subr.mxu0 %v289
    %8358 = vmatpush2.msra.mxu0 %v288
    %8359 = vmatprep.subr.mxu0 %v287
    %8360 = vmatpush2.msra.mxu0 %v286
    %8361 = vmatprep.subr.mxu0 %v285
    %8362 = vmatpush2.msra.mxu0 %v284
    %8363 = vmatprep.subr.mxu0 %v283
    %8364 = vmatpush2.msra.mxu0 %v282
    %8365 = vmatprep.subr.mxu0 %v281
    %8366 = vmatpush2.msra.mxu0 %v280
    %8367 = vmatprep.subr.mxu0 %v279
    %8368 = vmatpush2.msra.mxu0 %v278
    %8369 = vmatprep.subr.mxu0 %v277
    %8370 = vmatpush2.msra.mxu0 %v276
    %8371 = vmatprep.subr.mxu0 %v275
    %8372 = vmatpush2.msra.mxu0 %v274
    %8373 = vmatprep.subr.mxu0 %v273
    %8374 = vmatpush2.msra.mxu0 %v272
    %8375 = vmatprep.mubr.f32.mxu0 %v8303
    %8376 = vmatmul.mubr.f32.gmra.mxu0 %v8190
    %v8377 = vpop.f32.mrf.mxu0
    %v8378 = vadd.f32 0.0, %v8377
    %v8379 = vpop.f32.mrf.mxu0
    %v8380 = vadd.f32 0.0, %v8379
    %8381 = vmatprep.mubr.f32.mxu0 %v8304
    %8382 = vmatmul.mubr.f32.gmra.mxu0 %v8191
    %v8383 = vpop.f32.mrf.mxu0
    %v8384 = vadd.f32 0.0, %v8383
    %v8385 = vpop.f32.mrf.mxu0
    %v8386 = vadd.f32 0.0, %v8385
    %8387 = vmatprep.mubr.f32.mxu0 %v8305
    %8388 = vmatmul.mubr.f32.gmra.mxu0 %v8192
    %v8389 = vpop.f32.mrf.mxu0
    %v8390 = vadd.f32 0.0, %v8389
    %v8391 = vpop.f32.mrf.mxu0
    %v8392 = vadd.f32 0.0, %v8391
    %8393 = vmatprep.mubr.f32.mxu0 %v8306
    %8394 = vmatmul.mubr.f32.gmra.mxu0 %v8193
    %v8395 = vpop.f32.mrf.mxu0
    %v8396 = vadd.f32 0.0, %v8395
    %v8397 = vpop.f32.mrf.mxu0
    %v8398 = vadd.f32 0.0, %v8397
    %8399 = vmatprep.mubr.f32.mxu0 %v8307
    %8400 = vmatmul.mubr.f32.gmra.mxu0 %v8194
    %v8401 = vpop.f32.mrf.mxu0
    %v8402 = vadd.f32 0.0, %v8401
    %v8403 = vpop.f32.mrf.mxu0
    %v8404 = vadd.f32 0.0, %v8403
    %8405 = vmatprep.mubr.f32.mxu0 %v8308
    %8406 = vmatmul.mubr.f32.gmra.mxu0 %v8195
    %v8407 = vpop.f32.mrf.mxu0
    %v8408 = vadd.f32 0.0, %v8407
    %v8409 = vpop.f32.mrf.mxu0
    %v8410 = vadd.f32 0.0, %v8409
    %8411 = vmatprep.mubr.f32.mxu0 %v8309
    %8412 = vmatmul.mubr.f32.gmra.mxu0 %v8196
    %v8413 = vpop.f32.mrf.mxu0
    %v8414 = vadd.f32 0.0, %v8413
    %v8415 = vpop.f32.mrf.mxu0
    %v8416 = vadd.f32 0.0, %v8415
    %8417 = vmatprep.mubr.f32.mxu0 %v8310
    %8418 = vmatmul.mubr.f32.gmra.mxu0 %v8197
    %v8419 = vpop.f32.mrf.mxu0
    %v8420 = vadd.f32 0.0, %v8419
    %v8421 = vpop.f32.mrf.mxu0
    %v8422 = vadd.f32 0.0, %v8421
    %8423 = vdwg.mxu0
    %s8424 = scalar_lea.vmem [#allocation11], 448
    %v8425 = vld [vmem:[%s8424] sm:$0xff]
    %v8426 = vld [vmem:[%s8424 + $0x8] sm:$0xff]
    %v8427 = vld [vmem:[%s8424 + $0x10] sm:$0xff]
    %v8428 = vld [vmem:[%s8424 + $0x18] sm:$0xff]
    %v8429 = vld [vmem:[%s8424 + $0x20] sm:$0xff]
    %v8430 = vld [vmem:[%s8424 + $0x28] sm:$0xff]
    %v8431 = vld [vmem:[%s8424 + $0x30] sm:$0xff]
    %v8432 = vld [vmem:[%s8424 + $0x38] sm:$0xff]
    %s8433 = scalar_lea.vmem [#allocation11], 960
    %v8434 = vld [vmem:[%s8433] sm:$0xff]
    %v8435 = vld [vmem:[%s8433 + $0x8] sm:$0xff]
    %v8436 = vld [vmem:[%s8433 + $0x10] sm:$0xff]
    %v8437 = vld [vmem:[%s8433 + $0x18] sm:$0xff]
    %v8438 = vld [vmem:[%s8433 + $0x20] sm:$0xff]
    %v8439 = vld [vmem:[%s8433 + $0x28] sm:$0xff]
    %v8440 = vld [vmem:[%s8433 + $0x30] sm:$0xff]
    %v8441 = vld [vmem:[%s8433 + $0x38] sm:$0xff]
    %v8442 = vmul.f32 %v8378, %v8425
    %v8443 = vmul.f32 %v8384, %v8426
    %v8444 = vmul.f32 %v8390, %v8427
    %v8445 = vmul.f32 %v8396, %v8428
    %v8446 = vmul.f32 %v8402, %v8429
    %v8447 = vmul.f32 %v8408, %v8430
    %v8448 = vmul.f32 %v8414, %v8431
    %v8449 = vmul.f32 %v8420, %v8432
    %v8450 = vmul.f32 %v8380, %v8434
    %v8451 = vmul.f32 %v8386, %v8435
    %v8452 = vmul.f32 %v8392, %v8436
    %v8453 = vmul.f32 %v8398, %v8437
    %v8454 = vmul.f32 %v8404, %v8438
    %v8455 = vmul.f32 %v8410, %v8439
    %v8456 = vmul.f32 %v8416, %v8440
    %v8457 = vmul.f32 %v8422, %v8441
    %v8458 = vsub.f32 %v8442, %v8450
    %v8459 = vsub.f32 %v8443, %v8451
    %v8460 = vsub.f32 %v8444, %v8452
    %v8461 = vsub.f32 %v8445, %v8453
    %v8462 = vsub.f32 %v8446, %v8454
    %v8463 = vsub.f32 %v8447, %v8455
    %v8464 = vsub.f32 %v8448, %v8456
    %v8465 = vsub.f32 %v8449, %v8457
    %v8466 = vmul.f32 %v8378, %v8434
    %v8467 = vmul.f32 %v8384, %v8435
    %v8468 = vmul.f32 %v8390, %v8436
    %v8469 = vmul.f32 %v8396, %v8437
    %v8470 = vmul.f32 %v8402, %v8438
    %v8471 = vmul.f32 %v8408, %v8439
    %v8472 = vmul.f32 %v8414, %v8440
    %v8473 = vmul.f32 %v8420, %v8441
    %v8474 = vmul.f32 %v8380, %v8425
    %v8475 = vmul.f32 %v8386, %v8426
    %v8476 = vmul.f32 %v8392, %v8427
    %v8477 = vmul.f32 %v8398, %v8428
    %v8478 = vmul.f32 %v8404, %v8429
    %v8479 = vmul.f32 %v8410, %v8430
    %v8480 = vmul.f32 %v8416, %v8431
    %v8481 = vmul.f32 %v8422, %v8432
    %v8482 = vadd.f32 %v8466, %v8474
    %v8483 = vadd.f32 %v8467, %v8475
    %v8484 = vadd.f32 %v8468, %v8476
    %v8485 = vadd.f32 %v8469, %v8477
    %v8486 = vadd.f32 %v8470, %v8478
    %v8487 = vadd.f32 %v8471, %v8479
    %v8488 = vadd.f32 %v8472, %v8480
    %v8489 = vadd.f32 %v8473, %v8481
    %v8490 = vadd.f32 %v8458, %v8482
    %v8491 = vadd.f32 %v8459, %v8483
    %v8492 = vadd.f32 %v8460, %v8484
    %v8493 = vadd.f32 %v8461, %v8485
    %v8494 = vadd.f32 %v8462, %v8486
    %v8495 = vadd.f32 %v8463, %v8487
    %v8496 = vadd.f32 %v8464, %v8488
    %v8497 = vadd.f32 %v8465, %v8489
    %8498 = vmatprep.subr.mxu0 0.0
    %8499 = vmatpush1.msra.mxu0 0.0
    %8500 = vmatprep.subr.mxu0 0.0
    %8501 = vmatpush1.msra.mxu0 0.0
    %8502 = vmatprep.subr.mxu0 0.0
    %8503 = vmatpush1.msra.mxu0 0.0
    %8504 = vmatprep.subr.mxu0 0.0
    %8505 = vmatpush1.msra.mxu0 0.0
    %8506 = vmatprep.subr.mxu0 0.0
    %8507 = vmatpush1.msra.mxu0 0.0
    %8508 = vmatprep.subr.mxu0 0.0
    %8509 = vmatpush1.msra.mxu0 0.0
    %8510 = vmatprep.subr.mxu0 0.0
    %8511 = vmatpush1.msra.mxu0 0.0
    %8512 = vmatprep.subr.mxu0 0.0
    %8513 = vmatpush1.msra.mxu0 0.0
    %8514 = vmatprep.subr.mxu0 0.0
    %8515 = vmatpush1.msra.mxu0 %v8497
    %8516 = vmatprep.subr.mxu0 0.0
    %8517 = vmatpush1.msra.mxu0 %v8496
    %8518 = vmatprep.subr.mxu0 0.0
    %8519 = vmatpush1.msra.mxu0 %v8495
    %8520 = vmatprep.subr.mxu0 0.0
    %8521 = vmatpush1.msra.mxu0 %v8494
    %8522 = vmatprep.subr.mxu0 0.0
    %8523 = vmatpush1.msra.mxu0 %v8493
    %8524 = vmatprep.subr.mxu0 0.0
    %8525 = vmatpush1.msra.mxu0 %v8492
    %8526 = vmatprep.subr.mxu0 0.0
    %8527 = vmatpush1.msra.mxu0 %v8491
    %8528 = vmatprep.subr.mxu0 0.0
    %8529 = vmatpush1.msra.mxu0 %v8490
    %8530 = vmatprep.subr.mxu0 0.0
    %8531 = vmatpush2.msra.mxu0 0.0
    %8532 = vmatprep.subr.mxu0 0.0
    %8533 = vmatpush2.msra.mxu0 0.0
    %8534 = vmatprep.subr.mxu0 0.0
    %8535 = vmatpush2.msra.mxu0 0.0
    %8536 = vmatprep.subr.mxu0 0.0
    %8537 = vmatpush2.msra.mxu0 0.0
    %8538 = vmatprep.subr.mxu0 0.0
    %8539 = vmatpush2.msra.mxu0 0.0
    %8540 = vmatprep.subr.mxu0 0.0
    %8541 = vmatpush2.msra.mxu0 0.0
    %8542 = vmatprep.subr.mxu0 0.0
    %8543 = vmatpush2.msra.mxu0 0.0
    %8544 = vmatprep.subr.mxu0 0.0
    %8545 = vmatpush2.msra.mxu0 0.0
    %8546 = vmatprep.subr.mxu0 0.0
    %8547 = vmatpush2.msra.mxu0 0.0
    %8548 = vmatprep.subr.mxu0 0.0
    %8549 = vmatpush2.msra.mxu0 0.0
    %8550 = vmatprep.subr.mxu0 0.0
    %8551 = vmatpush2.msra.mxu0 0.0
    %8552 = vmatprep.subr.mxu0 0.0
    %8553 = vmatpush2.msra.mxu0 0.0
    %8554 = vmatprep.subr.mxu0 0.0
    %8555 = vmatpush2.msra.mxu0 0.0
    %8556 = vmatprep.subr.mxu0 0.0
    %8557 = vmatpush2.msra.mxu0 0.0
    %8558 = vmatprep.subr.mxu0 0.0
    %8559 = vmatpush2.msra.mxu0 0.0
    %8560 = vmatprep.subr.mxu0 0.0
    %8561 = vmatpush2.msra.mxu0 0.0
    %8562 = vmatprep.mubr.f32.mxu0 0.0
    %8563 = vmatmul.mubr.f32.gmra.mxu0 %v314
    %v8564 = vpop.f32.mrf.mxu0
    %v8565 = vadd.f32 0.0, %v8564
    %v8566 = vpop.f32.mrf.mxu0
    %8567 = vmatprep.mubr.f32.mxu0 0.0
    %8568 = vmatmul.mubr.f32.gmra.mxu0 %v317
    %v8569 = vpop.f32.mrf.mxu0
    %v8570 = vadd.f32 0.0, %v8569
    %v8571 = vpop.f32.mrf.mxu0
    %8572 = vmatprep.mubr.f32.mxu0 0.0
    %8573 = vmatmul.mubr.f32.gmra.mxu0 %v320
    %v8574 = vpop.f32.mrf.mxu0
    %v8575 = vadd.f32 0.0, %v8574
    %v8576 = vpop.f32.mrf.mxu0
    %8577 = vmatprep.mubr.f32.mxu0 0.0
    %8578 = vmatmul.mubr.f32.gmra.mxu0 %v323
    %v8579 = vpop.f32.mrf.mxu0
    %v8580 = vadd.f32 0.0, %v8579
    %v8581 = vpop.f32.mrf.mxu0
    %8582 = vmatprep.mubr.f32.mxu0 0.0
    %8583 = vmatmul.mubr.f32.gmra.mxu0 %v326
    %v8584 = vpop.f32.mrf.mxu0
    %v8585 = vadd.f32 0.0, %v8584
    %v8586 = vpop.f32.mrf.mxu0
    %8587 = vmatprep.mubr.f32.mxu0 0.0
    %8588 = vmatmul.mubr.f32.gmra.mxu0 %v329
    %v8589 = vpop.f32.mrf.mxu0
    %v8590 = vadd.f32 0.0, %v8589
    %v8591 = vpop.f32.mrf.mxu0
    %8592 = vmatprep.mubr.f32.mxu0 0.0
    %8593 = vmatmul.mubr.f32.gmra.mxu0 %v332
    %v8594 = vpop.f32.mrf.mxu0
    %v8595 = vadd.f32 0.0, %v8594
    %v8596 = vpop.f32.mrf.mxu0
    %8597 = vmatprep.mubr.f32.mxu0 0.0
    %8598 = vmatmul.mubr.f32.gmra.mxu0 %v335
    %v8599 = vpop.f32.mrf.mxu0
    %v8600 = vadd.f32 0.0, %v8599
    %v8601 = vpop.f32.mrf.mxu0
    %8602 = vdwg.mxu0
    %8603 = vmatprep.subr.mxu0 0.0
    %8604 = vmatpush1.msra.mxu0 0.0
    %8605 = vmatprep.subr.mxu0 0.0
    %8606 = vmatpush1.msra.mxu0 0.0
    %8607 = vmatprep.subr.mxu0 0.0
    %8608 = vmatpush1.msra.mxu0 0.0
    %8609 = vmatprep.subr.mxu0 0.0
    %8610 = vmatpush1.msra.mxu0 0.0
    %8611 = vmatprep.subr.mxu0 0.0
    %8612 = vmatpush1.msra.mxu0 0.0
    %8613 = vmatprep.subr.mxu0 0.0
    %8614 = vmatpush1.msra.mxu0 0.0
    %8615 = vmatprep.subr.mxu0 0.0
    %8616 = vmatpush1.msra.mxu0 0.0
    %8617 = vmatprep.subr.mxu0 0.0
    %8618 = vmatpush1.msra.mxu0 0.0
    %8619 = vmatprep.subr.mxu0 0.0
    %8620 = vmatpush1.msra.mxu0 %v8489
    %8621 = vmatprep.subr.mxu0 0.0
    %8622 = vmatpush1.msra.mxu0 %v8488
    %8623 = vmatprep.subr.mxu0 0.0
    %8624 = vmatpush1.msra.mxu0 %v8487
    %8625 = vmatprep.subr.mxu0 0.0
    %8626 = vmatpush1.msra.mxu0 %v8486
    %8627 = vmatprep.subr.mxu0 0.0
    %8628 = vmatpush1.msra.mxu0 %v8485
    %8629 = vmatprep.subr.mxu0 0.0
    %8630 = vmatpush1.msra.mxu0 %v8484
    %8631 = vmatprep.subr.mxu0 0.0
    %8632 = vmatpush1.msra.mxu0 %v8483
    %8633 = vmatprep.subr.mxu0 0.0
    %8634 = vmatpush1.msra.mxu0 %v8482
    %8635 = vmatprep.subr.mxu0 0.0
    %8636 = vmatpush2.msra.mxu0 0.0
    %8637 = vmatprep.subr.mxu0 0.0
    %8638 = vmatpush2.msra.mxu0 0.0
    %8639 = vmatprep.subr.mxu0 0.0
    %8640 = vmatpush2.msra.mxu0 0.0
    %8641 = vmatprep.subr.mxu0 0.0
    %8642 = vmatpush2.msra.mxu0 0.0
    %8643 = vmatprep.subr.mxu0 0.0
    %8644 = vmatpush2.msra.mxu0 0.0
    %8645 = vmatprep.subr.mxu0 0.0
    %8646 = vmatpush2.msra.mxu0 0.0
    %8647 = vmatprep.subr.mxu0 0.0
    %8648 = vmatpush2.msra.mxu0 0.0
    %8649 = vmatprep.subr.mxu0 0.0
    %8650 = vmatpush2.msra.mxu0 0.0
    %8651 = vmatprep.subr.mxu0 0.0
    %8652 = vmatpush2.msra.mxu0 0.0
    %8653 = vmatprep.subr.mxu0 0.0
    %8654 = vmatpush2.msra.mxu0 0.0
    %8655 = vmatprep.subr.mxu0 0.0
    %8656 = vmatpush2.msra.mxu0 0.0
    %8657 = vmatprep.subr.mxu0 0.0
    %8658 = vmatpush2.msra.mxu0 0.0
    %8659 = vmatprep.subr.mxu0 0.0
    %8660 = vmatpush2.msra.mxu0 0.0
    %8661 = vmatprep.subr.mxu0 0.0
    %8662 = vmatpush2.msra.mxu0 0.0
    %8663 = vmatprep.subr.mxu0 0.0
    %8664 = vmatpush2.msra.mxu0 0.0
    %8665 = vmatprep.subr.mxu0 0.0
    %8666 = vmatpush2.msra.mxu0 0.0
    %8667 = vmatprep.mubr.f32.mxu0 0.0
    %8668 = vmatmul.mubr.f32.gmra.mxu0 %v1478
    %v8669 = vpop.f32.mrf.mxu0
    %v8670 = vadd.f32 0.0, %v8669
    %v8671 = vpop.f32.mrf.mxu0
    %8672 = vmatprep.mubr.f32.mxu0 0.0
    %8673 = vmatmul.mubr.f32.gmra.mxu0 %v1481
    %v8674 = vpop.f32.mrf.mxu0
    %v8675 = vadd.f32 0.0, %v8674
    %v8676 = vpop.f32.mrf.mxu0
    %8677 = vmatprep.mubr.f32.mxu0 0.0
    %8678 = vmatmul.mubr.f32.gmra.mxu0 %v1484
    %v8679 = vpop.f32.mrf.mxu0
    %v8680 = vadd.f32 0.0, %v8679
    %v8681 = vpop.f32.mrf.mxu0
    %8682 = vmatprep.mubr.f32.mxu0 0.0
    %8683 = vmatmul.mubr.f32.gmra.mxu0 %v1487
    %v8684 = vpop.f32.mrf.mxu0
    %v8685 = vadd.f32 0.0, %v8684
    %v8686 = vpop.f32.mrf.mxu0
    %8687 = vmatprep.mubr.f32.mxu0 0.0
    %8688 = vmatmul.mubr.f32.gmra.mxu0 %v1490
    %v8689 = vpop.f32.mrf.mxu0
    %v8690 = vadd.f32 0.0, %v8689
    %v8691 = vpop.f32.mrf.mxu0
    %8692 = vmatprep.mubr.f32.mxu0 0.0
    %8693 = vmatmul.mubr.f32.gmra.mxu0 %v1493
    %v8694 = vpop.f32.mrf.mxu0
    %v8695 = vadd.f32 0.0, %v8694
    %v8696 = vpop.f32.mrf.mxu0
    %8697 = vmatprep.mubr.f32.mxu0 0.0
    %8698 = vmatmul.mubr.f32.gmra.mxu0 %v1496
    %v8699 = vpop.f32.mrf.mxu0
    %v8700 = vadd.f32 0.0, %v8699
    %v8701 = vpop.f32.mrf.mxu0
    %8702 = vmatprep.mubr.f32.mxu0 0.0
    %8703 = vmatmul.mubr.f32.gmra.mxu0 %v1499
    %v8704 = vpop.f32.mrf.mxu0
    %v8705 = vadd.f32 0.0, %v8704
    %v8706 = vpop.f32.mrf.mxu0
    %8707 = vdwg.mxu0
    %v8708 = vsub.f32 %v8565, %v8670
    %v8709 = vsub.f32 %v8570, %v8675
    %v8710 = vsub.f32 %v8575, %v8680
    %v8711 = vsub.f32 %v8580, %v8685
    %v8712 = vsub.f32 %v8585, %v8690
    %v8713 = vsub.f32 %v8590, %v8695
    %v8714 = vsub.f32 %v8595, %v8700
    %v8715 = vsub.f32 %v8600, %v8705
    %8716 = vmatprep.subr.mxu0 0.0
    %8717 = vmatpush1.msra.mxu0 0.0
    %8718 = vmatprep.subr.mxu0 0.0
    %8719 = vmatpush1.msra.mxu0 0.0
    %8720 = vmatprep.subr.mxu0 0.0
    %8721 = vmatpush1.msra.mxu0 0.0
    %8722 = vmatprep.subr.mxu0 0.0
    %8723 = vmatpush1.msra.mxu0 0.0
    %8724 = vmatprep.subr.mxu0 0.0
    %8725 = vmatpush1.msra.mxu0 0.0
    %8726 = vmatprep.subr.mxu0 0.0
    %8727 = vmatpush1.msra.mxu0 0.0
    %8728 = vmatprep.subr.mxu0 0.0
    %8729 = vmatpush1.msra.mxu0 0.0
    %8730 = vmatprep.subr.mxu0 0.0
    %8731 = vmatpush1.msra.mxu0 0.0
    %8732 = vmatprep.subr.mxu0 0.0
    %8733 = vmatpush1.msra.mxu0 %v8465
    %8734 = vmatprep.subr.mxu0 0.0
    %8735 = vmatpush1.msra.mxu0 %v8464
    %8736 = vmatprep.subr.mxu0 0.0
    %8737 = vmatpush1.msra.mxu0 %v8463
    %8738 = vmatprep.subr.mxu0 0.0
    %8739 = vmatpush1.msra.mxu0 %v8462
    %8740 = vmatprep.subr.mxu0 0.0
    %8741 = vmatpush1.msra.mxu0 %v8461
    %8742 = vmatprep.subr.mxu0 0.0
    %8743 = vmatpush1.msra.mxu0 %v8460
    %8744 = vmatprep.subr.mxu0 0.0
    %8745 = vmatpush1.msra.mxu0 %v8459
    %8746 = vmatprep.subr.mxu0 0.0
    %8747 = vmatpush1.msra.mxu0 %v8458
    %8748 = vmatprep.subr.mxu0 0.0
    %8749 = vmatpush2.msra.mxu0 0.0
    %8750 = vmatprep.subr.mxu0 0.0
    %8751 = vmatpush2.msra.mxu0 0.0
    %8752 = vmatprep.subr.mxu0 0.0
    %8753 = vmatpush2.msra.mxu0 0.0
    %8754 = vmatprep.subr.mxu0 0.0
    %8755 = vmatpush2.msra.mxu0 0.0
    %8756 = vmatprep.subr.mxu0 0.0
    %8757 = vmatpush2.msra.mxu0 0.0
    %8758 = vmatprep.subr.mxu0 0.0
    %8759 = vmatpush2.msra.mxu0 0.0
    %8760 = vmatprep.subr.mxu0 0.0
    %8761 = vmatpush2.msra.mxu0 0.0
    %8762 = vmatprep.subr.mxu0 0.0
    %8763 = vmatpush2.msra.mxu0 0.0
    %8764 = vmatprep.subr.mxu0 0.0
    %8765 = vmatpush2.msra.mxu0 0.0
    %8766 = vmatprep.subr.mxu0 0.0
    %8767 = vmatpush2.msra.mxu0 0.0
    %8768 = vmatprep.subr.mxu0 0.0
    %8769 = vmatpush2.msra.mxu0 0.0
    %8770 = vmatprep.subr.mxu0 0.0
    %8771 = vmatpush2.msra.mxu0 0.0
    %8772 = vmatprep.subr.mxu0 0.0
    %8773 = vmatpush2.msra.mxu0 0.0
    %8774 = vmatprep.subr.mxu0 0.0
    %8775 = vmatpush2.msra.mxu0 0.0
    %8776 = vmatprep.subr.mxu0 0.0
    %8777 = vmatpush2.msra.mxu0 0.0
    %8778 = vmatprep.subr.mxu0 0.0
    %8779 = vmatpush2.msra.mxu0 0.0
    %8780 = vmatprep.mubr.f32.mxu0 0.0
    %8781 = vmatmul.mubr.f32.gmra.mxu0 %v443
    %v8782 = vpop.f32.mrf.mxu0
    %v8783 = vadd.f32 0.0, %v8782
    %v8784 = vpop.f32.mrf.mxu0
    %8785 = vmatprep.mubr.f32.mxu0 0.0
    %8786 = vmatmul.mubr.f32.gmra.mxu0 %v446
    %v8787 = vpop.f32.mrf.mxu0
    %v8788 = vadd.f32 0.0, %v8787
    %v8789 = vpop.f32.mrf.mxu0
    %8790 = vmatprep.mubr.f32.mxu0 0.0
    %8791 = vmatmul.mubr.f32.gmra.mxu0 %v449
    %v8792 = vpop.f32.mrf.mxu0
    %v8793 = vadd.f32 0.0, %v8792
    %v8794 = vpop.f32.mrf.mxu0
    %8795 = vmatprep.mubr.f32.mxu0 0.0
    %8796 = vmatmul.mubr.f32.gmra.mxu0 %v452
    %v8797 = vpop.f32.mrf.mxu0
    %v8798 = vadd.f32 0.0, %v8797
    %v8799 = vpop.f32.mrf.mxu0
    %8800 = vmatprep.mubr.f32.mxu0 0.0
    %8801 = vmatmul.mubr.f32.gmra.mxu0 %v455
    %v8802 = vpop.f32.mrf.mxu0
    %v8803 = vadd.f32 0.0, %v8802
    %v8804 = vpop.f32.mrf.mxu0
    %8805 = vmatprep.mubr.f32.mxu0 0.0
    %8806 = vmatmul.mubr.f32.gmra.mxu0 %v458
    %v8807 = vpop.f32.mrf.mxu0
    %v8808 = vadd.f32 0.0, %v8807
    %v8809 = vpop.f32.mrf.mxu0
    %8810 = vmatprep.mubr.f32.mxu0 0.0
    %8811 = vmatmul.mubr.f32.gmra.mxu0 %v461
    %v8812 = vpop.f32.mrf.mxu0
    %v8813 = vadd.f32 0.0, %v8812
    %v8814 = vpop.f32.mrf.mxu0
    %8815 = vmatprep.mubr.f32.mxu0 0.0
    %8816 = vmatmul.mubr.f32.gmra.mxu0 %v464
    %v8817 = vpop.f32.mrf.mxu0
    %v8818 = vadd.f32 0.0, %v8817
    %v8819 = vpop.f32.mrf.mxu0
    %8820 = vdwg.mxu0
    %v8821 = vadd.f32 %v8565, %v8783
    %v8822 = vadd.f32 %v8570, %v8788
    %v8823 = vadd.f32 %v8575, %v8793
    %v8824 = vadd.f32 %v8580, %v8798
    %v8825 = vadd.f32 %v8585, %v8803
    %v8826 = vadd.f32 %v8590, %v8808
    %v8827 = vadd.f32 %v8595, %v8813
    %v8828 = vadd.f32 %v8600, %v8818
    %8829 = vmatprep.subr.mxu0 %v206
    %8830 = vmatpush1.msra.mxu0 %v205
    %8831 = vmatprep.subr.mxu0 %v204
    %8832 = vmatpush1.msra.mxu0 %v203
    %8833 = vmatprep.subr.mxu0 %v202
    %8834 = vmatpush1.msra.mxu0 %v201
    %8835 = vmatprep.subr.mxu0 %v200
    %8836 = vmatpush1.msra.mxu0 %v199
    %8837 = vmatprep.subr.mxu0 %v198
    %8838 = vmatpush1.msra.mxu0 %v197
    %8839 = vmatprep.subr.mxu0 %v196
    %8840 = vmatpush1.msra.mxu0 %v195
    %8841 = vmatprep.subr.mxu0 %v194
    %8842 = vmatpush1.msra.mxu0 %v193
    %8843 = vmatprep.subr.mxu0 %v192
    %8844 = vmatpush1.msra.mxu0 %v191
    %8845 = vmatprep.subr.mxu0 %v190
    %8846 = vmatpush1.msra.mxu0 %v189
    %8847 = vmatprep.subr.mxu0 %v188
    %8848 = vmatpush1.msra.mxu0 %v187
    %8849 = vmatprep.subr.mxu0 %v186
    %8850 = vmatpush1.msra.mxu0 %v185
    %8851 = vmatprep.subr.mxu0 %v184
    %8852 = vmatpush1.msra.mxu0 %v183
    %8853 = vmatprep.subr.mxu0 %v182
    %8854 = vmatpush1.msra.mxu0 %v181
    %8855 = vmatprep.subr.mxu0 %v180
    %8856 = vmatpush1.msra.mxu0 %v179
    %8857 = vmatprep.subr.mxu0 %v178
    %8858 = vmatpush1.msra.mxu0 %v177
    %8859 = vmatprep.subr.mxu0 %v176
    %8860 = vmatpush1.msra.mxu0 %v175
    %8861 = vmatprep.subr.mxu0 %v238
    %8862 = vmatpush2.msra.mxu0 %v237
    %8863 = vmatprep.subr.mxu0 %v236
    %8864 = vmatpush2.msra.mxu0 %v235
    %8865 = vmatprep.subr.mxu0 %v234
    %8866 = vmatpush2.msra.mxu0 %v233
    %8867 = vmatprep.subr.mxu0 %v232
    %8868 = vmatpush2.msra.mxu0 %v231
    %8869 = vmatprep.subr.mxu0 %v230
    %8870 = vmatpush2.msra.mxu0 %v229
    %8871 = vmatprep.subr.mxu0 %v228
    %8872 = vmatpush2.msra.mxu0 %v227
    %8873 = vmatprep.subr.mxu0 %v226
    %8874 = vmatpush2.msra.mxu0 %v225
    %8875 = vmatprep.subr.mxu0 %v224
    %8876 = vmatpush2.msra.mxu0 %v223
    %8877 = vmatprep.subr.mxu0 %v222
    %8878 = vmatpush2.msra.mxu0 %v221
    %8879 = vmatprep.subr.mxu0 %v220
    %8880 = vmatpush2.msra.mxu0 %v219
    %8881 = vmatprep.subr.mxu0 %v218
    %8882 = vmatpush2.msra.mxu0 %v217
    %8883 = vmatprep.subr.mxu0 %v216
    %8884 = vmatpush2.msra.mxu0 %v215
    %8885 = vmatprep.subr.mxu0 %v214
    %8886 = vmatpush2.msra.mxu0 %v213
    %8887 = vmatprep.subr.mxu0 %v212
    %8888 = vmatpush2.msra.mxu0 %v211
    %8889 = vmatprep.subr.mxu0 %v210
    %8890 = vmatpush2.msra.mxu0 %v209
    %8891 = vmatprep.subr.mxu0 %v208
    %8892 = vmatpush2.msra.mxu0 %v207
    %8893 = vmatprep.mubr.f32.mxu0 %v8821
    %8894 = vmatmul.mubr.f32.gmra.mxu0 %v8708
    %v8895 = vpop.f32.mrf.mxu0
    %v8896 = vadd.f32 0.0, %v8895
    %v8897 = vpop.f32.mrf.mxu0
    %v8898 = vadd.f32 0.0, %v8897
    %8899 = vmatprep.mubr.f32.mxu0 %v8822
    %8900 = vmatmul.mubr.f32.gmra.mxu0 %v8709
    %v8901 = vpop.f32.mrf.mxu0
    %v8902 = vadd.f32 0.0, %v8901
    %v8903 = vpop.f32.mrf.mxu0
    %v8904 = vadd.f32 0.0, %v8903
    %8905 = vmatprep.mubr.f32.mxu0 %v8823
    %8906 = vmatmul.mubr.f32.gmra.mxu0 %v8710
    %v8907 = vpop.f32.mrf.mxu0
    %v8908 = vadd.f32 0.0, %v8907
    %v8909 = vpop.f32.mrf.mxu0
    %v8910 = vadd.f32 0.0, %v8909
    %8911 = vmatprep.mubr.f32.mxu0 %v8824
    %8912 = vmatmul.mubr.f32.gmra.mxu0 %v8711
    %v8913 = vpop.f32.mrf.mxu0
    %v8914 = vadd.f32 0.0, %v8913
    %v8915 = vpop.f32.mrf.mxu0
    %v8916 = vadd.f32 0.0, %v8915
    %8917 = vmatprep.mubr.f32.mxu0 %v8825
    %8918 = vmatmul.mubr.f32.gmra.mxu0 %v8712
    %v8919 = vpop.f32.mrf.mxu0
    %v8920 = vadd.f32 0.0, %v8919
    %v8921 = vpop.f32.mrf.mxu0
    %v8922 = vadd.f32 0.0, %v8921
    %8923 = vmatprep.mubr.f32.mxu0 %v8826
    %8924 = vmatmul.mubr.f32.gmra.mxu0 %v8713
    %v8925 = vpop.f32.mrf.mxu0
    %v8926 = vadd.f32 0.0, %v8925
    %v8927 = vpop.f32.mrf.mxu0
    %v8928 = vadd.f32 0.0, %v8927
    %8929 = vmatprep.mubr.f32.mxu0 %v8827
    %8930 = vmatmul.mubr.f32.gmra.mxu0 %v8714
    %v8931 = vpop.f32.mrf.mxu0
    %v8932 = vadd.f32 0.0, %v8931
    %v8933 = vpop.f32.mrf.mxu0
    %v8934 = vadd.f32 0.0, %v8933
    %8935 = vmatprep.mubr.f32.mxu0 %v8828
    %8936 = vmatmul.mubr.f32.gmra.mxu0 %v8715
    %v8937 = vpop.f32.mrf.mxu0
    %v8938 = vadd.f32 0.0, %v8937
    %v8939 = vpop.f32.mrf.mxu0
    %v8940 = vadd.f32 0.0, %v8939
    %8941 = vdwg.mxu0
    %v8942 = vmul.f32 %v8896, %v1282
    %v8943 = vmul.f32 %v8902, %v1283
    %v8944 = vmul.f32 %v8908, %v1284
    %v8945 = vmul.f32 %v8914, %v1285
    %v8946 = vmul.f32 %v8920, %v1286
    %v8947 = vmul.f32 %v8926, %v1287
    %v8948 = vmul.f32 %v8932, %v1288
    %v8949 = vmul.f32 %v8938, %v1289
    %v8950 = vmul.f32 %v8898, %v1291
    %v8951 = vmul.f32 %v8904, %v1292
    %v8952 = vmul.f32 %v8910, %v1293
    %v8953 = vmul.f32 %v8916, %v1294
    %v8954 = vmul.f32 %v8922, %v1295
    %v8955 = vmul.f32 %v8928, %v1296
    %v8956 = vmul.f32 %v8934, %v1297
    %v8957 = vmul.f32 %v8940, %v1298
    %v8958 = vsub.f32 %v8942, %v8950
    %v8959 = vsub.f32 %v8943, %v8951
    %v8960 = vsub.f32 %v8944, %v8952
    %v8961 = vsub.f32 %v8945, %v8953
    %v8962 = vsub.f32 %v8946, %v8954
    %v8963 = vsub.f32 %v8947, %v8955
    %v8964 = vsub.f32 %v8948, %v8956
    %v8965 = vsub.f32 %v8949, %v8957
    %v8966 = vmul.f32 %v8896, %v1291
    %v8967 = vmul.f32 %v8902, %v1292
    %v8968 = vmul.f32 %v8908, %v1293
    %v8969 = vmul.f32 %v8914, %v1294
    %v8970 = vmul.f32 %v8920, %v1295
    %v8971 = vmul.f32 %v8926, %v1296
    %v8972 = vmul.f32 %v8932, %v1297
    %v8973 = vmul.f32 %v8938, %v1298
    %v8974 = vmul.f32 %v8898, %v1282
    %v8975 = vmul.f32 %v8904, %v1283
    %v8976 = vmul.f32 %v8910, %v1284
    %v8977 = vmul.f32 %v8916, %v1285
    %v8978 = vmul.f32 %v8922, %v1286
    %v8979 = vmul.f32 %v8928, %v1287
    %v8980 = vmul.f32 %v8934, %v1288
    %v8981 = vmul.f32 %v8940, %v1289
    %v8982 = vadd.f32 %v8966, %v8974
    %v8983 = vadd.f32 %v8967, %v8975
    %v8984 = vadd.f32 %v8968, %v8976
    %v8985 = vadd.f32 %v8969, %v8977
    %v8986 = vadd.f32 %v8970, %v8978
    %v8987 = vadd.f32 %v8971, %v8979
    %v8988 = vadd.f32 %v8972, %v8980
    %v8989 = vadd.f32 %v8973, %v8981
    %v8990 = vadd.f32 %v8958, %v8982
    %v8991 = vadd.f32 %v8959, %v8983
    %v8992 = vadd.f32 %v8960, %v8984
    %v8993 = vadd.f32 %v8961, %v8985
    %v8994 = vadd.f32 %v8962, %v8986
    %v8995 = vadd.f32 %v8963, %v8987
    %v8996 = vadd.f32 %v8964, %v8988
    %v8997 = vadd.f32 %v8965, %v8989
    %8998 = vmatprep.subr.mxu0 0.0
    %8999 = vmatpush1.msra.mxu0 0.0
    %9000 = vmatprep.subr.mxu0 0.0
    %9001 = vmatpush1.msra.mxu0 0.0
    %9002 = vmatprep.subr.mxu0 0.0
    %9003 = vmatpush1.msra.mxu0 0.0
    %9004 = vmatprep.subr.mxu0 0.0
    %9005 = vmatpush1.msra.mxu0 0.0
    %9006 = vmatprep.subr.mxu0 0.0
    %9007 = vmatpush1.msra.mxu0 0.0
    %9008 = vmatprep.subr.mxu0 0.0
    %9009 = vmatpush1.msra.mxu0 0.0
    %9010 = vmatprep.subr.mxu0 0.0
    %9011 = vmatpush1.msra.mxu0 0.0
    %9012 = vmatprep.subr.mxu0 0.0
    %9013 = vmatpush1.msra.mxu0 0.0
    %9014 = vmatprep.subr.mxu0 0.0
    %9015 = vmatpush1.msra.mxu0 %v8997
    %9016 = vmatprep.subr.mxu0 0.0
    %9017 = vmatpush1.msra.mxu0 %v8996
    %9018 = vmatprep.subr.mxu0 0.0
    %9019 = vmatpush1.msra.mxu0 %v8995
    %9020 = vmatprep.subr.mxu0 0.0
    %9021 = vmatpush1.msra.mxu0 %v8994
    %9022 = vmatprep.subr.mxu0 0.0
    %9023 = vmatpush1.msra.mxu0 %v8993
    %9024 = vmatprep.subr.mxu0 0.0
    %9025 = vmatpush1.msra.mxu0 %v8992
    %9026 = vmatprep.subr.mxu0 0.0
    %9027 = vmatpush1.msra.mxu0 %v8991
    %9028 = vmatprep.subr.mxu0 0.0
    %9029 = vmatpush1.msra.mxu0 %v8990
    %9030 = vmatprep.subr.mxu0 0.0
    %9031 = vmatpush2.msra.mxu0 0.0
    %9032 = vmatprep.subr.mxu0 0.0
    %9033 = vmatpush2.msra.mxu0 0.0
    %9034 = vmatprep.subr.mxu0 0.0
    %9035 = vmatpush2.msra.mxu0 0.0
    %9036 = vmatprep.subr.mxu0 0.0
    %9037 = vmatpush2.msra.mxu0 0.0
    %9038 = vmatprep.subr.mxu0 0.0
    %9039 = vmatpush2.msra.mxu0 0.0
    %9040 = vmatprep.subr.mxu0 0.0
    %9041 = vmatpush2.msra.mxu0 0.0
    %9042 = vmatprep.subr.mxu0 0.0
    %9043 = vmatpush2.msra.mxu0 0.0
    %9044 = vmatprep.subr.mxu0 0.0
    %9045 = vmatpush2.msra.mxu0 0.0
    %9046 = vmatprep.subr.mxu0 0.0
    %9047 = vmatpush2.msra.mxu0 0.0
    %9048 = vmatprep.subr.mxu0 0.0
    %9049 = vmatpush2.msra.mxu0 0.0
    %9050 = vmatprep.subr.mxu0 0.0
    %9051 = vmatpush2.msra.mxu0 0.0
    %9052 = vmatprep.subr.mxu0 0.0
    %9053 = vmatpush2.msra.mxu0 0.0
    %9054 = vmatprep.subr.mxu0 0.0
    %9055 = vmatpush2.msra.mxu0 0.0
    %9056 = vmatprep.subr.mxu0 0.0
    %9057 = vmatpush2.msra.mxu0 0.0
    %9058 = vmatprep.subr.mxu0 0.0
    %9059 = vmatpush2.msra.mxu0 0.0
    %9060 = vmatprep.subr.mxu0 0.0
    %9061 = vmatpush2.msra.mxu0 0.0
    %9062 = vmatprep.mubr.f32.mxu0 0.0
    %9063 = vmatmul.mubr.f32.gmra.mxu0 %v766
    %v9064 = vpop.f32.mrf.mxu0
    %v9065 = vadd.f32 0.0, %v9064
    %v9066 = vpop.f32.mrf.mxu0
    %9067 = vmatprep.mubr.f32.mxu0 0.0
    %9068 = vmatmul.mubr.f32.gmra.mxu0 %v769
    %v9069 = vpop.f32.mrf.mxu0
    %v9070 = vadd.f32 0.0, %v9069
    %v9071 = vpop.f32.mrf.mxu0
    %9072 = vmatprep.mubr.f32.mxu0 0.0
    %9073 = vmatmul.mubr.f32.gmra.mxu0 %v772
    %v9074 = vpop.f32.mrf.mxu0
    %v9075 = vadd.f32 0.0, %v9074
    %v9076 = vpop.f32.mrf.mxu0
    %9077 = vmatprep.mubr.f32.mxu0 0.0
    %9078 = vmatmul.mubr.f32.gmra.mxu0 %v775
    %v9079 = vpop.f32.mrf.mxu0
    %v9080 = vadd.f32 0.0, %v9079
    %v9081 = vpop.f32.mrf.mxu0
    %9082 = vmatprep.mubr.f32.mxu0 0.0
    %9083 = vmatmul.mubr.f32.gmra.mxu0 %v778
    %v9084 = vpop.f32.mrf.mxu0
    %v9085 = vadd.f32 0.0, %v9084
    %v9086 = vpop.f32.mrf.mxu0
    %9087 = vmatprep.mubr.f32.mxu0 0.0
    %9088 = vmatmul.mubr.f32.gmra.mxu0 %v781
    %v9089 = vpop.f32.mrf.mxu0
    %v9090 = vadd.f32 0.0, %v9089
    %v9091 = vpop.f32.mrf.mxu0
    %9092 = vmatprep.mubr.f32.mxu0 0.0
    %9093 = vmatmul.mubr.f32.gmra.mxu0 %v784
    %v9094 = vpop.f32.mrf.mxu0
    %v9095 = vadd.f32 0.0, %v9094
    %v9096 = vpop.f32.mrf.mxu0
    %9097 = vmatprep.mubr.f32.mxu0 0.0
    %9098 = vmatmul.mubr.f32.gmra.mxu0 %v787
    %v9099 = vpop.f32.mrf.mxu0
    %v9100 = vadd.f32 0.0, %v9099
    %v9101 = vpop.f32.mrf.mxu0
    %9102 = vdwg.mxu0
    %9103 = vmatprep.subr.mxu0 0.0
    %9104 = vmatpush1.msra.mxu0 0.0
    %9105 = vmatprep.subr.mxu0 0.0
    %9106 = vmatpush1.msra.mxu0 0.0
    %9107 = vmatprep.subr.mxu0 0.0
    %9108 = vmatpush1.msra.mxu0 0.0
    %9109 = vmatprep.subr.mxu0 0.0
    %9110 = vmatpush1.msra.mxu0 0.0
    %9111 = vmatprep.subr.mxu0 0.0
    %9112 = vmatpush1.msra.mxu0 0.0
    %9113 = vmatprep.subr.mxu0 0.0
    %9114 = vmatpush1.msra.mxu0 0.0
    %9115 = vmatprep.subr.mxu0 0.0
    %9116 = vmatpush1.msra.mxu0 0.0
    %9117 = vmatprep.subr.mxu0 0.0
    %9118 = vmatpush1.msra.mxu0 0.0
    %9119 = vmatprep.subr.mxu0 0.0
    %9120 = vmatpush1.msra.mxu0 %v8989
    %9121 = vmatprep.subr.mxu0 0.0
    %9122 = vmatpush1.msra.mxu0 %v8988
    %9123 = vmatprep.subr.mxu0 0.0
    %9124 = vmatpush1.msra.mxu0 %v8987
    %9125 = vmatprep.subr.mxu0 0.0
    %9126 = vmatpush1.msra.mxu0 %v8986
    %9127 = vmatprep.subr.mxu0 0.0
    %9128 = vmatpush1.msra.mxu0 %v8985
    %9129 = vmatprep.subr.mxu0 0.0
    %9130 = vmatpush1.msra.mxu0 %v8984
    %9131 = vmatprep.subr.mxu0 0.0
    %9132 = vmatpush1.msra.mxu0 %v8983
    %9133 = vmatprep.subr.mxu0 0.0
    %9134 = vmatpush1.msra.mxu0 %v8982
    %9135 = vmatprep.subr.mxu0 0.0
    %9136 = vmatpush2.msra.mxu0 0.0
    %9137 = vmatprep.subr.mxu0 0.0
    %9138 = vmatpush2.msra.mxu0 0.0
    %9139 = vmatprep.subr.mxu0 0.0
    %9140 = vmatpush2.msra.mxu0 0.0
    %9141 = vmatprep.subr.mxu0 0.0
    %9142 = vmatpush2.msra.mxu0 0.0
    %9143 = vmatprep.subr.mxu0 0.0
    %9144 = vmatpush2.msra.mxu0 0.0
    %9145 = vmatprep.subr.mxu0 0.0
    %9146 = vmatpush2.msra.mxu0 0.0
    %9147 = vmatprep.subr.mxu0 0.0
    %9148 = vmatpush2.msra.mxu0 0.0
    %9149 = vmatprep.subr.mxu0 0.0
    %9150 = vmatpush2.msra.mxu0 0.0
    %9151 = vmatprep.subr.mxu0 0.0
    %9152 = vmatpush2.msra.mxu0 0.0
    %9153 = vmatprep.subr.mxu0 0.0
    %9154 = vmatpush2.msra.mxu0 0.0
    %9155 = vmatprep.subr.mxu0 0.0
    %9156 = vmatpush2.msra.mxu0 0.0
    %9157 = vmatprep.subr.mxu0 0.0
    %9158 = vmatpush2.msra.mxu0 0.0
    %9159 = vmatprep.subr.mxu0 0.0
    %9160 = vmatpush2.msra.mxu0 0.0
    %9161 = vmatprep.subr.mxu0 0.0
    %9162 = vmatpush2.msra.mxu0 0.0
    %9163 = vmatprep.subr.mxu0 0.0
    %9164 = vmatpush2.msra.mxu0 0.0
    %9165 = vmatprep.subr.mxu0 0.0
    %9166 = vmatpush2.msra.mxu0 0.0
    %9167 = vmatprep.mubr.f32.mxu0 0.0
    %9168 = vmatmul.mubr.f32.gmra.mxu0 %v895
    %v9169 = vpop.f32.mrf.mxu0
    %v9170 = vadd.f32 0.0, %v9169
    %v9171 = vpop.f32.mrf.mxu0
    %9172 = vmatprep.mubr.f32.mxu0 0.0
    %9173 = vmatmul.mubr.f32.gmra.mxu0 %v898
    %v9174 = vpop.f32.mrf.mxu0
    %v9175 = vadd.f32 0.0, %v9174
    %v9176 = vpop.f32.mrf.mxu0
    %9177 = vmatprep.mubr.f32.mxu0 0.0
    %9178 = vmatmul.mubr.f32.gmra.mxu0 %v901
    %v9179 = vpop.f32.mrf.mxu0
    %v9180 = vadd.f32 0.0, %v9179
    %v9181 = vpop.f32.mrf.mxu0
    %9182 = vmatprep.mubr.f32.mxu0 0.0
    %9183 = vmatmul.mubr.f32.gmra.mxu0 %v904
    %v9184 = vpop.f32.mrf.mxu0
    %v9185 = vadd.f32 0.0, %v9184
    %v9186 = vpop.f32.mrf.mxu0
    %9187 = vmatprep.mubr.f32.mxu0 0.0
    %9188 = vmatmul.mubr.f32.gmra.mxu0 %v907
    %v9189 = vpop.f32.mrf.mxu0
    %v9190 = vadd.f32 0.0, %v9189
    %v9191 = vpop.f32.mrf.mxu0
    %9192 = vmatprep.mubr.f32.mxu0 0.0
    %9193 = vmatmul.mubr.f32.gmra.mxu0 %v910
    %v9194 = vpop.f32.mrf.mxu0
    %v9195 = vadd.f32 0.0, %v9194
    %v9196 = vpop.f32.mrf.mxu0
    %9197 = vmatprep.mubr.f32.mxu0 0.0
    %9198 = vmatmul.mubr.f32.gmra.mxu0 %v913
    %v9199 = vpop.f32.mrf.mxu0
    %v9200 = vadd.f32 0.0, %v9199
    %v9201 = vpop.f32.mrf.mxu0
    %9202 = vmatprep.mubr.f32.mxu0 0.0
    %9203 = vmatmul.mubr.f32.gmra.mxu0 %v916
    %v9204 = vpop.f32.mrf.mxu0
    %v9205 = vadd.f32 0.0, %v9204
    %v9206 = vpop.f32.mrf.mxu0
    %9207 = vdwg.mxu0
    %v9208 = vsub.f32 %v9065, %v9170
    %v9209 = vsub.f32 %v9070, %v9175
    %v9210 = vsub.f32 %v9075, %v9180
    %v9211 = vsub.f32 %v9080, %v9185
    %v9212 = vsub.f32 %v9085, %v9190
    %v9213 = vsub.f32 %v9090, %v9195
    %v9214 = vsub.f32 %v9095, %v9200
    %v9215 = vsub.f32 %v9100, %v9205
    %9216 = vmatprep.subr.mxu0 0.0
    %9217 = vmatpush1.msra.mxu0 0.0
    %9218 = vmatprep.subr.mxu0 0.0
    %9219 = vmatpush1.msra.mxu0 0.0
    %9220 = vmatprep.subr.mxu0 0.0
    %9221 = vmatpush1.msra.mxu0 0.0
    %9222 = vmatprep.subr.mxu0 0.0
    %9223 = vmatpush1.msra.mxu0 0.0
    %9224 = vmatprep.subr.mxu0 0.0
    %9225 = vmatpush1.msra.mxu0 0.0
    %9226 = vmatprep.subr.mxu0 0.0
    %9227 = vmatpush1.msra.mxu0 0.0
    %9228 = vmatprep.subr.mxu0 0.0
    %9229 = vmatpush1.msra.mxu0 0.0
    %9230 = vmatprep.subr.mxu0 0.0
    %9231 = vmatpush1.msra.mxu0 0.0
    %9232 = vmatprep.subr.mxu0 0.0
    %9233 = vmatpush1.msra.mxu0 %v8965
    %9234 = vmatprep.subr.mxu0 0.0
    %9235 = vmatpush1.msra.mxu0 %v8964
    %9236 = vmatprep.subr.mxu0 0.0
    %9237 = vmatpush1.msra.mxu0 %v8963
    %9238 = vmatprep.subr.mxu0 0.0
    %9239 = vmatpush1.msra.mxu0 %v8962
    %9240 = vmatprep.subr.mxu0 0.0
    %9241 = vmatpush1.msra.mxu0 %v8961
    %9242 = vmatprep.subr.mxu0 0.0
    %9243 = vmatpush1.msra.mxu0 %v8960
    %9244 = vmatprep.subr.mxu0 0.0
    %9245 = vmatpush1.msra.mxu0 %v8959
    %9246 = vmatprep.subr.mxu0 0.0
    %9247 = vmatpush1.msra.mxu0 %v8958
    %9248 = vmatprep.subr.mxu0 0.0
    %9249 = vmatpush2.msra.mxu0 0.0
    %9250 = vmatprep.subr.mxu0 0.0
    %9251 = vmatpush2.msra.mxu0 0.0
    %9252 = vmatprep.subr.mxu0 0.0
    %9253 = vmatpush2.msra.mxu0 0.0
    %9254 = vmatprep.subr.mxu0 0.0
    %9255 = vmatpush2.msra.mxu0 0.0
    %9256 = vmatprep.subr.mxu0 0.0
    %9257 = vmatpush2.msra.mxu0 0.0
    %9258 = vmatprep.subr.mxu0 0.0
    %9259 = vmatpush2.msra.mxu0 0.0
    %9260 = vmatprep.subr.mxu0 0.0
    %9261 = vmatpush2.msra.mxu0 0.0
    %9262 = vmatprep.subr.mxu0 0.0
    %9263 = vmatpush2.msra.mxu0 0.0
    %9264 = vmatprep.subr.mxu0 0.0
    %9265 = vmatpush2.msra.mxu0 0.0
    %9266 = vmatprep.subr.mxu0 0.0
    %9267 = vmatpush2.msra.mxu0 0.0
    %9268 = vmatprep.subr.mxu0 0.0
    %9269 = vmatpush2.msra.mxu0 0.0
    %9270 = vmatprep.subr.mxu0 0.0
    %9271 = vmatpush2.msra.mxu0 0.0
    %9272 = vmatprep.subr.mxu0 0.0
    %9273 = vmatpush2.msra.mxu0 0.0
    %9274 = vmatprep.subr.mxu0 0.0
    %9275 = vmatpush2.msra.mxu0 0.0
    %9276 = vmatprep.subr.mxu0 0.0
    %9277 = vmatpush2.msra.mxu0 0.0
    %9278 = vmatprep.subr.mxu0 0.0
    %9279 = vmatpush2.msra.mxu0 0.0
    %9280 = vmatprep.mubr.f32.mxu0 0.0
    %9281 = vmatmul.mubr.f32.gmra.mxu0 %v1032
    %v9282 = vpop.f32.mrf.mxu0
    %v9283 = vadd.f32 0.0, %v9282
    %v9284 = vpop.f32.mrf.mxu0
    %9285 = vmatprep.mubr.f32.mxu0 0.0
    %9286 = vmatmul.mubr.f32.gmra.mxu0 %v1035
    %v9287 = vpop.f32.mrf.mxu0
    %v9288 = vadd.f32 0.0, %v9287
    %v9289 = vpop.f32.mrf.mxu0
    %9290 = vmatprep.mubr.f32.mxu0 0.0
    %9291 = vmatmul.mubr.f32.gmra.mxu0 %v1038
    %v9292 = vpop.f32.mrf.mxu0
    %v9293 = vadd.f32 0.0, %v9292
    %v9294 = vpop.f32.mrf.mxu0
    %9295 = vmatprep.mubr.f32.mxu0 0.0
    %9296 = vmatmul.mubr.f32.gmra.mxu0 %v1041
    %v9297 = vpop.f32.mrf.mxu0
    %v9298 = vadd.f32 0.0, %v9297
    %v9299 = vpop.f32.mrf.mxu0
    %9300 = vmatprep.mubr.f32.mxu0 0.0
    %9301 = vmatmul.mubr.f32.gmra.mxu0 %v1044
    %v9302 = vpop.f32.mrf.mxu0
    %v9303 = vadd.f32 0.0, %v9302
    %v9304 = vpop.f32.mrf.mxu0
    %9305 = vmatprep.mubr.f32.mxu0 0.0
    %9306 = vmatmul.mubr.f32.gmra.mxu0 %v1047
    %v9307 = vpop.f32.mrf.mxu0
    %v9308 = vadd.f32 0.0, %v9307
    %v9309 = vpop.f32.mrf.mxu0
    %9310 = vmatprep.mubr.f32.mxu0 0.0
    %9311 = vmatmul.mubr.f32.gmra.mxu0 %v1050
    %v9312 = vpop.f32.mrf.mxu0
    %v9313 = vadd.f32 0.0, %v9312
    %v9314 = vpop.f32.mrf.mxu0
    %9315 = vmatprep.mubr.f32.mxu0 0.0
    %9316 = vmatmul.mubr.f32.gmra.mxu0 %v1053
    %v9317 = vpop.f32.mrf.mxu0
    %v9318 = vadd.f32 0.0, %v9317
    %v9319 = vpop.f32.mrf.mxu0
    %9320 = vdwg.mxu0
    %v9321 = vadd.f32 %v9065, %v9283
    %v9322 = vadd.f32 %v9070, %v9288
    %v9323 = vadd.f32 %v9075, %v9293
    %v9324 = vadd.f32 %v9080, %v9298
    %v9325 = vadd.f32 %v9085, %v9303
    %v9326 = vadd.f32 %v9090, %v9308
    %v9327 = vadd.f32 %v9095, %v9313
    %v9328 = vadd.f32 %v9100, %v9318
    %9329 = vmatprep.subr.mxu0 %v271
    %9330 = vmatpush1.msra.mxu0 %v270
    %9331 = vmatprep.subr.mxu0 %v269
    %9332 = vmatpush1.msra.mxu0 %v268
    %9333 = vmatprep.subr.mxu0 %v267
    %9334 = vmatpush1.msra.mxu0 %v266
    %9335 = vmatprep.subr.mxu0 %v265
    %9336 = vmatpush1.msra.mxu0 %v264
    %9337 = vmatprep.subr.mxu0 %v263
    %9338 = vmatpush1.msra.mxu0 %v262
    %9339 = vmatprep.subr.mxu0 %v261
    %9340 = vmatpush1.msra.mxu0 %v260
    %9341 = vmatprep.subr.mxu0 %v259
    %9342 = vmatpush1.msra.mxu0 %v258
    %9343 = vmatprep.subr.mxu0 %v257
    %9344 = vmatpush1.msra.mxu0 %v256
    %9345 = vmatprep.subr.mxu0 %v255
    %9346 = vmatpush1.msra.mxu0 %v254
    %9347 = vmatprep.subr.mxu0 %v253
    %9348 = vmatpush1.msra.mxu0 %v252
    %9349 = vmatprep.subr.mxu0 %v251
    %9350 = vmatpush1.msra.mxu0 %v250
    %9351 = vmatprep.subr.mxu0 %v249
    %9352 = vmatpush1.msra.mxu0 %v248
    %9353 = vmatprep.subr.mxu0 %v247
    %9354 = vmatpush1.msra.mxu0 %v246
    %9355 = vmatprep.subr.mxu0 %v245
    %9356 = vmatpush1.msra.mxu0 %v244
    %9357 = vmatprep.subr.mxu0 %v243
    %9358 = vmatpush1.msra.mxu0 %v242
    %9359 = vmatprep.subr.mxu0 %v241
    %9360 = vmatpush1.msra.mxu0 %v240
    %9361 = vmatprep.subr.mxu0 %v303
    %9362 = vmatpush2.msra.mxu0 %v302
    %9363 = vmatprep.subr.mxu0 %v301
    %9364 = vmatpush2.msra.mxu0 %v300
    %9365 = vmatprep.subr.mxu0 %v299
    %9366 = vmatpush2.msra.mxu0 %v298
    %9367 = vmatprep.subr.mxu0 %v297
    %9368 = vmatpush2.msra.mxu0 %v296
    %9369 = vmatprep.subr.mxu0 %v295
    %9370 = vmatpush2.msra.mxu0 %v294
    %9371 = vmatprep.subr.mxu0 %v293
    %9372 = vmatpush2.msra.mxu0 %v292
    %9373 = vmatprep.subr.mxu0 %v291
    %9374 = vmatpush2.msra.mxu0 %v290
    %9375 = vmatprep.subr.mxu0 %v289
    %9376 = vmatpush2.msra.mxu0 %v288
    %9377 = vmatprep.subr.mxu0 %v287
    %9378 = vmatpush2.msra.mxu0 %v286
    %9379 = vmatprep.subr.mxu0 %v285
    %9380 = vmatpush2.msra.mxu0 %v284
    %9381 = vmatprep.subr.mxu0 %v283
    %9382 = vmatpush2.msra.mxu0 %v282
    %9383 = vmatprep.subr.mxu0 %v281
    %9384 = vmatpush2.msra.mxu0 %v280
    %9385 = vmatprep.subr.mxu0 %v279
    %9386 = vmatpush2.msra.mxu0 %v278
    %9387 = vmatprep.subr.mxu0 %v277
    %9388 = vmatpush2.msra.mxu0 %v276
    %9389 = vmatprep.subr.mxu0 %v275
    %9390 = vmatpush2.msra.mxu0 %v274
    %9391 = vmatprep.subr.mxu0 %v273
    %9392 = vmatpush2.msra.mxu0 %v272
    %9393 = vmatprep.mubr.f32.mxu0 %v9321
    %9394 = vmatmul.mubr.f32.gmra.mxu0 %v9208
    %v9395 = vpop.f32.mrf.mxu0
    %v9396 = vadd.f32 0.0, %v9395
    %v9397 = vpop.f32.mrf.mxu0
    %9398 = vmatprep.mubr.f32.mxu0 %v9322
    %9399 = vmatmul.mubr.f32.gmra.mxu0 %v9209
    %v9400 = vpop.f32.mrf.mxu0
    %v9401 = vadd.f32 0.0, %v9400
    %v9402 = vpop.f32.mrf.mxu0
    %9403 = vmatprep.mubr.f32.mxu0 %v9323
    %9404 = vmatmul.mubr.f32.gmra.mxu0 %v9210
    %v9405 = vpop.f32.mrf.mxu0
    %v9406 = vadd.f32 0.0, %v9405
    %v9407 = vpop.f32.mrf.mxu0
    %9408 = vmatprep.mubr.f32.mxu0 %v9324
    %9409 = vmatmul.mubr.f32.gmra.mxu0 %v9211
    %v9410 = vpop.f32.mrf.mxu0
    %v9411 = vadd.f32 0.0, %v9410
    %v9412 = vpop.f32.mrf.mxu0
    %9413 = vmatprep.mubr.f32.mxu0 %v9325
    %9414 = vmatmul.mubr.f32.gmra.mxu0 %v9212
    %v9415 = vpop.f32.mrf.mxu0
    %v9416 = vadd.f32 0.0, %v9415
    %v9417 = vpop.f32.mrf.mxu0
    %9418 = vmatprep.mubr.f32.mxu0 %v9326
    %9419 = vmatmul.mubr.f32.gmra.mxu0 %v9213
    %v9420 = vpop.f32.mrf.mxu0
    %v9421 = vadd.f32 0.0, %v9420
    %v9422 = vpop.f32.mrf.mxu0
    %9423 = vmatprep.mubr.f32.mxu0 %v9327
    %9424 = vmatmul.mubr.f32.gmra.mxu0 %v9214
    %v9425 = vpop.f32.mrf.mxu0
    %v9426 = vadd.f32 0.0, %v9425
    %v9427 = vpop.f32.mrf.mxu0
    %9428 = vmatprep.mubr.f32.mxu0 %v9328
    %9429 = vmatmul.mubr.f32.gmra.mxu0 %v9215
    %v9430 = vpop.f32.mrf.mxu0
    %v9431 = vadd.f32 0.0, %v9430
    %v9432 = vpop.f32.mrf.mxu0
    %9433 = vdwg.mxu0
    %v9434 = vld [vmem:[#allocation12] sm:$0xff]
    %v9435 = vld [vmem:[#allocation12 + $0x8] sm:$0xff]
    %v9436 = vld [vmem:[#allocation12 + $0x10] sm:$0xff]
    %v9437 = vld [vmem:[#allocation12 + $0x18] sm:$0xff]
    %v9438 = vld [vmem:[#allocation12 + $0x20] sm:$0xff]
    %v9439 = vld [vmem:[#allocation12 + $0x28] sm:$0xff]
    %v9440 = vld [vmem:[#allocation12 + $0x30] sm:$0xff]
    %v9441 = vld [vmem:[#allocation12 + $0x38] sm:$0xff]
    %v9442 = vld [vmem:[#allocation12 + $0x40] sm:$0xff]
    %v9443 = vld [vmem:[#allocation12 + $0x48] sm:$0xff]
    %v9444 = vld [vmem:[#allocation12 + $0x50] sm:$0xff]
    %v9445 = vld [vmem:[#allocation12 + $0x58] sm:$0xff]
    %v9446 = vld [vmem:[#allocation12 + $0x60] sm:$0xff]
    %v9447 = vld [vmem:[#allocation12 + $0x68] sm:$0xff]
    %v9448 = vld [vmem:[#allocation12 + $0x70] sm:$0xff]
    %v9449 = vld [vmem:[#allocation12 + $0x78] sm:$0xff]
    %v9450 = vld [vmem:[#allocation12 + $0x80] sm:$0xff]
    %v9451 = vld [vmem:[#allocation12 + $0x88] sm:$0xff]
    %v9452 = vld [vmem:[#allocation12 + $0x90] sm:$0xff]
    %v9453 = vld [vmem:[#allocation12 + $0x98] sm:$0xff]
    %v9454 = vld [vmem:[#allocation12 + $0xa0] sm:$0xff]
    %v9455 = vld [vmem:[#allocation12 + $0xa8] sm:$0xff]
    %v9456 = vld [vmem:[#allocation12 + $0xb0] sm:$0xff]
    %v9457 = vld [vmem:[#allocation12 + $0xb8] sm:$0xff]
    %v9458 = vld [vmem:[#allocation12 + $0xc0] sm:$0xff]
    %v9459 = vld [vmem:[#allocation12 + $0xc8] sm:$0xff]
    %v9460 = vld [vmem:[#allocation12 + $0xd0] sm:$0xff]
    %v9461 = vld [vmem:[#allocation12 + $0xd8] sm:$0xff]
    %v9462 = vld [vmem:[#allocation12 + $0xe0] sm:$0xff]
    %v9463 = vld [vmem:[#allocation12 + $0xe8] sm:$0xff]
    %v9464 = vld [vmem:[#allocation12 + $0xf0] sm:$0xff]
    %v9465 = vld [vmem:[#allocation12 + $0xf8] sm:$0xff]
    %v9466 = vld [vmem:[#allocation12 + $0x100] sm:$0xff]
    %v9467 = vld [vmem:[#allocation12 + $0x108] sm:$0xff]
    %v9468 = vld [vmem:[#allocation12 + $0x110] sm:$0xff]
    %v9469 = vld [vmem:[#allocation12 + $0x118] sm:$0xff]
    %v9470 = vld [vmem:[#allocation12 + $0x120] sm:$0xff]
    %v9471 = vld [vmem:[#allocation12 + $0x128] sm:$0xff]
    %v9472 = vld [vmem:[#allocation12 + $0x130] sm:$0xff]
    %v9473 = vld [vmem:[#allocation12 + $0x138] sm:$0xff]
    %v9474 = vld [vmem:[#allocation12 + $0x140] sm:$0xff]
    %v9475 = vld [vmem:[#allocation12 + $0x148] sm:$0xff]
    %v9476 = vld [vmem:[#allocation12 + $0x150] sm:$0xff]
    %v9477 = vld [vmem:[#allocation12 + $0x158] sm:$0xff]
    %v9478 = vld [vmem:[#allocation12 + $0x160] sm:$0xff]
    %v9479 = vld [vmem:[#allocation12 + $0x168] sm:$0xff]
    %v9480 = vld [vmem:[#allocation12 + $0x170] sm:$0xff]
    %v9481 = vld [vmem:[#allocation12 + $0x178] sm:$0xff]
    %v9482 = vld [vmem:[#allocation12 + $0x180] sm:$0xff]
    %v9483 = vld [vmem:[#allocation12 + $0x188] sm:$0xff]
    %v9484 = vld [vmem:[#allocation12 + $0x190] sm:$0xff]
    %v9485 = vld [vmem:[#allocation12 + $0x198] sm:$0xff]
    %v9486 = vld [vmem:[#allocation12 + $0x1a0] sm:$0xff]
    %v9487 = vld [vmem:[#allocation12 + $0x1a8] sm:$0xff]
    %v9488 = vld [vmem:[#allocation12 + $0x1b0] sm:$0xff]
    %v9489 = vld [vmem:[#allocation12 + $0x1b8] sm:$0xff]
    %v9490 = vld [vmem:[#allocation12 + $0x1c0] sm:$0xff]
    %v9491 = vld [vmem:[#allocation12 + $0x1c8] sm:$0xff]
    %v9492 = vld [vmem:[#allocation12 + $0x1d0] sm:$0xff]
    %v9493 = vld [vmem:[#allocation12 + $0x1d8] sm:$0xff]
    %v9494 = vld [vmem:[#allocation12 + $0x1e0] sm:$0xff]
    %v9495 = vld [vmem:[#allocation12 + $0x1e8] sm:$0xff]
    %v9496 = vld [vmem:[#allocation12 + $0x1f0] sm:$0xff]
    %v9497 = vld [vmem:[#allocation12 + $0x1f8] sm:$0xff]
    %9498 = vmatprep.subr.mxu0 0.0
    %9499 = vmatpush1.msra.mxu0 %v9449
    %9500 = vmatprep.subr.mxu0 0.0
    %9501 = vmatpush1.msra.mxu0 %v9448
    %9502 = vmatprep.subr.mxu0 0.0
    %9503 = vmatpush1.msra.mxu0 %v9447
    %9504 = vmatprep.subr.mxu0 0.0
    %9505 = vmatpush1.msra.mxu0 %v9446
    %9506 = vmatprep.subr.mxu0 0.0
    %9507 = vmatpush1.msra.mxu0 %v9445
    %9508 = vmatprep.subr.mxu0 0.0
    %9509 = vmatpush1.msra.mxu0 %v9444
    %9510 = vmatprep.subr.mxu0 0.0
    %9511 = vmatpush1.msra.mxu0 %v9443
    %9512 = vmatprep.subr.mxu0 0.0
    %9513 = vmatpush1.msra.mxu0 %v9442
    %9514 = vmatprep.subr.mxu0 0.0
    %9515 = vmatpush1.msra.mxu0 %v9441
    %9516 = vmatprep.subr.mxu0 0.0
    %9517 = vmatpush1.msra.mxu0 %v9440
    %9518 = vmatprep.subr.mxu0 0.0
    %9519 = vmatpush1.msra.mxu0 %v9439
    %9520 = vmatprep.subr.mxu0 0.0
    %9521 = vmatpush1.msra.mxu0 %v9438
    %9522 = vmatprep.subr.mxu0 0.0
    %9523 = vmatpush1.msra.mxu0 %v9437
    %9524 = vmatprep.subr.mxu0 0.0
    %9525 = vmatpush1.msra.mxu0 %v9436
    %9526 = vmatprep.subr.mxu0 0.0
    %9527 = vmatpush1.msra.mxu0 %v9435
    %9528 = vmatprep.subr.mxu0 0.0
    %9529 = vmatpush1.msra.mxu0 %v9434
    %9530 = vmatprep.subr.mxu0 0.0
    %9531 = vmatpush2.msra.mxu0 %v9465
    %9532 = vmatprep.subr.mxu0 0.0
    %9533 = vmatpush2.msra.mxu0 %v9464
    %9534 = vmatprep.subr.mxu0 0.0
    %9535 = vmatpush2.msra.mxu0 %v9463
    %9536 = vmatprep.subr.mxu0 0.0
    %9537 = vmatpush2.msra.mxu0 %v9462
    %9538 = vmatprep.subr.mxu0 0.0
    %9539 = vmatpush2.msra.mxu0 %v9461
    %9540 = vmatprep.subr.mxu0 0.0
    %9541 = vmatpush2.msra.mxu0 %v9460
    %9542 = vmatprep.subr.mxu0 0.0
    %9543 = vmatpush2.msra.mxu0 %v9459
    %9544 = vmatprep.subr.mxu0 0.0
    %9545 = vmatpush2.msra.mxu0 %v9458
    %9546 = vmatprep.subr.mxu0 0.0
    %9547 = vmatpush2.msra.mxu0 %v9457
    %9548 = vmatprep.subr.mxu0 0.0
    %9549 = vmatpush2.msra.mxu0 %v9456
    %9550 = vmatprep.subr.mxu0 0.0
    %9551 = vmatpush2.msra.mxu0 %v9455
    %9552 = vmatprep.subr.mxu0 0.0
    %9553 = vmatpush2.msra.mxu0 %v9454
    %9554 = vmatprep.subr.mxu0 0.0
    %9555 = vmatpush2.msra.mxu0 %v9453
    %9556 = vmatprep.subr.mxu0 0.0
    %9557 = vmatpush2.msra.mxu0 %v9452
    %9558 = vmatprep.subr.mxu0 0.0
    %9559 = vmatpush2.msra.mxu0 %v9451
    %9560 = vmatprep.subr.mxu0 0.0
    %9561 = vmatpush2.msra.mxu0 %v9450
    %9562 = vmatprep.mubr.f32.mxu0 %v5340
    %9563 = vmatmul.mubr.f32.gmra.mxu0 %v3312
    %v9564 = vpop.f32.mrf.mxu0
    %v9565 = vadd.f32 0.0, %v9564
    %v9566 = vpop.f32.mrf.mxu0
    %9567 = vmatprep.mubr.f32.mxu0 %v5345
    %9568 = vmatmul.mubr.f32.gmra.mxu0 %v3317
    %v9569 = vpop.f32.mrf.mxu0
    %v9570 = vadd.f32 0.0, %v9569
    %v9571 = vpop.f32.mrf.mxu0
    %9572 = vmatprep.mubr.f32.mxu0 %v5350
    %9573 = vmatmul.mubr.f32.gmra.mxu0 %v3322
    %v9574 = vpop.f32.mrf.mxu0
    %v9575 = vadd.f32 0.0, %v9574
    %v9576 = vpop.f32.mrf.mxu0
    %9577 = vmatprep.mubr.f32.mxu0 %v5355
    %9578 = vmatmul.mubr.f32.gmra.mxu0 %v3327
    %v9579 = vpop.f32.mrf.mxu0
    %v9580 = vadd.f32 0.0, %v9579
    %v9581 = vpop.f32.mrf.mxu0
    %9582 = vmatprep.mubr.f32.mxu0 %v5360
    %9583 = vmatmul.mubr.f32.gmra.mxu0 %v3332
    %v9584 = vpop.f32.mrf.mxu0
    %v9585 = vadd.f32 0.0, %v9584
    %v9586 = vpop.f32.mrf.mxu0
    %9587 = vmatprep.mubr.f32.mxu0 %v5365
    %9588 = vmatmul.mubr.f32.gmra.mxu0 %v3337
    %v9589 = vpop.f32.mrf.mxu0
    %v9590 = vadd.f32 0.0, %v9589
    %v9591 = vpop.f32.mrf.mxu0
    %9592 = vmatprep.mubr.f32.mxu0 %v5370
    %9593 = vmatmul.mubr.f32.gmra.mxu0 %v3342
    %v9594 = vpop.f32.mrf.mxu0
    %v9595 = vadd.f32 0.0, %v9594
    %v9596 = vpop.f32.mrf.mxu0
    %9597 = vmatprep.mubr.f32.mxu0 %v5375
    %9598 = vmatmul.mubr.f32.gmra.mxu0 %v3347
    %v9599 = vpop.f32.mrf.mxu0
    %v9600 = vadd.f32 0.0, %v9599
    %v9601 = vpop.f32.mrf.mxu0
    %9602 = vdwg.mxu0
    %9603 = vmatprep.subr.mxu0 0.0
    %9604 = vmatpush1.msra.mxu0 %v9481
    %9605 = vmatprep.subr.mxu0 0.0
    %9606 = vmatpush1.msra.mxu0 %v9480
    %9607 = vmatprep.subr.mxu0 0.0
    %9608 = vmatpush1.msra.mxu0 %v9479
    %9609 = vmatprep.subr.mxu0 0.0
    %9610 = vmatpush1.msra.mxu0 %v9478
    %9611 = vmatprep.subr.mxu0 0.0
    %9612 = vmatpush1.msra.mxu0 %v9477
    %9613 = vmatprep.subr.mxu0 0.0
    %9614 = vmatpush1.msra.mxu0 %v9476
    %9615 = vmatprep.subr.mxu0 0.0
    %9616 = vmatpush1.msra.mxu0 %v9475
    %9617 = vmatprep.subr.mxu0 0.0
    %9618 = vmatpush1.msra.mxu0 %v9474
    %9619 = vmatprep.subr.mxu0 0.0
    %9620 = vmatpush1.msra.mxu0 %v9473
    %9621 = vmatprep.subr.mxu0 0.0
    %9622 = vmatpush1.msra.mxu0 %v9472
    %9623 = vmatprep.subr.mxu0 0.0
    %9624 = vmatpush1.msra.mxu0 %v9471
    %9625 = vmatprep.subr.mxu0 0.0
    %9626 = vmatpush1.msra.mxu0 %v9470
    %9627 = vmatprep.subr.mxu0 0.0
    %9628 = vmatpush1.msra.mxu0 %v9469
    %9629 = vmatprep.subr.mxu0 0.0
    %9630 = vmatpush1.msra.mxu0 %v9468
    %9631 = vmatprep.subr.mxu0 0.0
    %9632 = vmatpush1.msra.mxu0 %v9467
    %9633 = vmatprep.subr.mxu0 0.0
    %9634 = vmatpush1.msra.mxu0 %v9466
    %9635 = vmatprep.subr.mxu0 0.0
    %9636 = vmatpush2.msra.mxu0 %v9497
    %9637 = vmatprep.subr.mxu0 0.0
    %9638 = vmatpush2.msra.mxu0 %v9496
    %9639 = vmatprep.subr.mxu0 0.0
    %9640 = vmatpush2.msra.mxu0 %v9495
    %9641 = vmatprep.subr.mxu0 0.0
    %9642 = vmatpush2.msra.mxu0 %v9494
    %9643 = vmatprep.subr.mxu0 0.0
    %9644 = vmatpush2.msra.mxu0 %v9493
    %9645 = vmatprep.subr.mxu0 0.0
    %9646 = vmatpush2.msra.mxu0 %v9492
    %9647 = vmatprep.subr.mxu0 0.0
    %9648 = vmatpush2.msra.mxu0 %v9491
    %9649 = vmatprep.subr.mxu0 0.0
    %9650 = vmatpush2.msra.mxu0 %v9490
    %9651 = vmatprep.subr.mxu0 0.0
    %9652 = vmatpush2.msra.mxu0 %v9489
    %9653 = vmatprep.subr.mxu0 0.0
    %9654 = vmatpush2.msra.mxu0 %v9488
    %9655 = vmatprep.subr.mxu0 0.0
    %9656 = vmatpush2.msra.mxu0 %v9487
    %9657 = vmatprep.subr.mxu0 0.0
    %9658 = vmatpush2.msra.mxu0 %v9486
    %9659 = vmatprep.subr.mxu0 0.0
    %9660 = vmatpush2.msra.mxu0 %v9485
    %9661 = vmatprep.subr.mxu0 0.0
    %9662 = vmatpush2.msra.mxu0 %v9484
    %9663 = vmatprep.subr.mxu0 0.0
    %9664 = vmatpush2.msra.mxu0 %v9483
    %9665 = vmatprep.subr.mxu0 0.0
    %9666 = vmatpush2.msra.mxu0 %v9482
    %9667 = vmatprep.mubr.f32.mxu0 %v9396
    %9668 = vmatmul.mubr.f32.gmra.mxu0 %v7368
    %v9669 = vpop.f32.mrf.mxu0
    %v9670 = vadd.f32 %v9565, %v9669
    %v9671 = vpop.f32.mrf.mxu0
    %9672 = vmatprep.mubr.f32.mxu0 %v9401
    %9673 = vmatmul.mubr.f32.gmra.mxu0 %v7373
    %v9674 = vpop.f32.mrf.mxu0
    %v9675 = vadd.f32 %v9570, %v9674
    %v9676 = vpop.f32.mrf.mxu0
    %9677 = vmatprep.mubr.f32.mxu0 %v9406
    %9678 = vmatmul.mubr.f32.gmra.mxu0 %v7378
    %v9679 = vpop.f32.mrf.mxu0
    %v9680 = vadd.f32 %v9575, %v9679
    %v9681 = vpop.f32.mrf.mxu0
    %9682 = vmatprep.mubr.f32.mxu0 %v9411
    %9683 = vmatmul.mubr.f32.gmra.mxu0 %v7383
    %v9684 = vpop.f32.mrf.mxu0
    %v9685 = vadd.f32 %v9580, %v9684
    %v9686 = vpop.f32.mrf.mxu0
    %9687 = vmatprep.mubr.f32.mxu0 %v9416
    %9688 = vmatmul.mubr.f32.gmra.mxu0 %v7388
    %v9689 = vpop.f32.mrf.mxu0
    %v9690 = vadd.f32 %v9585, %v9689
    %v9691 = vpop.f32.mrf.mxu0
    %9692 = vmatprep.mubr.f32.mxu0 %v9421
    %9693 = vmatmul.mubr.f32.gmra.mxu0 %v7393
    %v9694 = vpop.f32.mrf.mxu0
    %v9695 = vadd.f32 %v9590, %v9694
    %v9696 = vpop.f32.mrf.mxu0
    %9697 = vmatprep.mubr.f32.mxu0 %v9426
    %9698 = vmatmul.mubr.f32.gmra.mxu0 %v7398
    %v9699 = vpop.f32.mrf.mxu0
    %v9700 = vadd.f32 %v9595, %v9699
    %v9701 = vpop.f32.mrf.mxu0
    %9702 = vmatprep.mubr.f32.mxu0 %v9431
    %9703 = vmatmul.mubr.f32.gmra.mxu0 %v7403
    %v9704 = vpop.f32.mrf.mxu0
    %v9705 = vadd.f32 %v9600, %v9704
    %v9706 = vpop.f32.mrf.mxu0
    %9707 = vdwg.mxu0
    %9708 = vst [vmem:[#allocation15] sm:$0xff] %v9670
    %9709 = vst [vmem:[#allocation15 + $0x8] sm:$0xff] %v9675
    %9710 = vst [vmem:[#allocation15 + $0x10] sm:$0xff] %v9680
    %9711 = vst [vmem:[#allocation15 + $0x18] sm:$0xff] %v9685
    %9712 = vst [vmem:[#allocation15 + $0x20] sm:$0xff] %v9690
    %9713 = vst [vmem:[#allocation15 + $0x28] sm:$0xff] %v9695
    %9714 = vst [vmem:[#allocation15 + $0x30] sm:$0xff] %v9700
    %9715 = vst [vmem:[#allocation15 + $0x38] sm:$0xff] %v9705
    // Predicated region
    $region58: #{tpu_custom_call.1} parent=1 // pred_check
      _
    $region59: #{tpu_custom_call.1} parent=1 // pred_check_branch
      %9717 = sbr.rel (0) target = $region61
    $region60: #{tpu_custom_call.1} parent=1 // pred_region
      %s9719 = ssub.s32 1024, 1024
      %9720 = vsyncadd [#allocation4], %s9719
      %s9721 = sshll.u32 [#allocation15], 4
      %s9722 = int_to_ptr.vmem [resolvable:$true] %s9721
      %9727 = dma.vmem_to_hbm [thread:$0]  %s9722, 1024, %s7, [#allocation4], 128, 128, 8
    $region61: #{tpu_custom_call.1} parent=1 // pred_fallthru
      _
    // Predicated region
    $region62: #{tpu_custom_call.1} parent=1 // pred_check
      _
    $region63: #{tpu_custom_call.1} parent=1 // pred_check_branch
      %9729 = sbr.rel (0) target = $region65
    $region64: #{tpu_custom_call.1} parent=1 // pred_region
      %9730 = dma.done [#allocation4], 1024
    $region65: #{tpu_custom_call.1} parent=1 // pred_fallthru
      _
    %9731 = vsyncpa [#allocation3], 1
    %9732 = vsyncpa [#allocation7], 1
    %9733 = vsyncpa [#allocation10], 1
    %9734 = vsyncpa [#allocation13], 1
    %9735 = vsyncpa [#allocation4], 1
    %9736 = vsyncpa [#allocation5], 1

</llo_original>
